<compile_context>
chip_gen: v7x
topology: tpu7x:2x2x1
jax: 0.10.0
libtpu: 0.0.40
codegen_flags: <defaults>
</compile_context>

<pallas_src>
import functools

import jax
import jax.numpy as jnp
from jax.experimental import pallas as pl
from jax.experimental.pallas import tpu as pltpu


# ---------------------------------------------------------------------------
# Fused Pallas kernel: one batch element per grid step.
# ---------------------------------------------------------------------------
def _fused_block_kernel(x_ref, w1_ref, b1_ref, wsa_ref, wd_ref, bd_ref,
                        wc_ref, bc_ref, wfa_ref, wfb_ref, bf_ref, o_ref,
                        *, H, W, cmid):
    HW = H * W

    # --- conv1x1: ch_in -> ch_out/2 (+bias) ----------------------------------
    xb = x_ref[0].astype(jnp.bfloat16)                               # (HW, Cin)
    h = jnp.dot(xb, w1_ref[...],
                preferred_element_type=jnp.float32) + b1_ref[...]    # (HW, cmid) f32

    # --- SpatialAttention: sigmoid(conv1x1(avgpool(x) + x)) * x + x ----------
    avg = jnp.mean(h, axis=0, keepdims=True)                         # (1, cmid)
    s = jnp.sum((avg + h) * wsa_ref[...], axis=-1, keepdims=True)    # (HW, 1)
    h_sa = jax.nn.sigmoid(s) * h + h                                 # (HW, cmid) f32

    # column index of each flattened pixel, for 3x3 left/right edge masking
    col = jax.lax.broadcasted_iota(jnp.int32, (HW, 1), 0) % W

    def conv3x3_relu(a, w9_ref, b_ref):
        """3x3 conv (pad=1) + folded-BN bias + ReLU as nine shifted MXU dots."""
        pad = ((W + 1 + 7) // 8) * 8                 # >= max |row shift|, 8-aligned
        zeros = jnp.zeros((pad, cmid), jnp.float32)
        ap = jnp.concatenate([zeros, a, zeros], axis=0)        # (HW + 2*pad, cmid)
        acc = jnp.zeros((HW, cmid), jnp.float32)
        for dy in (-1, 0, 1):
            for dx in (-1, 0, 1):
                k = (dy + 1) * 3 + (dx + 1)                    # im2col tap index
                shift = dy * W + dx
                tap = jax.lax.slice(ap, (pad + shift, 0),
                                    (pad + shift + HW, cmid))  # (HW, cmid)
                if dx == -1:                                   # left image edge
                    tap = jnp.where(col >= 1, tap, 0.0)
                elif dx == 1:                                  # right image edge
                    tap = jnp.where(col <= W - 2, tap, 0.0)
                acc += jnp.dot(tap.astype(jnp.bfloat16),
                               w9_ref[k * cmid:(k + 1) * cmid, :],
                               preferred_element_type=jnp.float32)
        return jnp.maximum(acc + b_ref[...], 0.0)

    # TODO(synk): DeformConv2d (offset prediction + bilinear sampling) is not
    # provided in the source module; approximated with a standard 3x3 conv.
    o1 = conv3x3_relu(h_sa, wd_ref, bd_ref)          # conv_Deform1 + BN + ReLU
    o2 = conv3x3_relu(o1, wc_ref, bc_ref)            # conv1       + BN + ReLU

    # --- final 1x1 over concat(h_sa, o2), computed as W @ act^T so the single
    #     HBM write is a lane-dense (ch_out, HW) slab --------------------------
    def mm_t(w_ref, act_f32):
        # (ch_out, cmid) x (HW, cmid) -> (ch_out, HW)   ('mk,nk->mn', q.k^T style)
        return jax.lax.dot_general(
            w_ref[...], act_f32.astype(jnp.bfloat16),
            dimension_numbers=(((1,), (1,)), ((), ())),
            preferred_element_type=jnp.float32)

    out_t = mm_t(wfa_ref, h_sa) + mm_t(wfb_ref, o2) + bf_ref[...]    # (ch_out, HW)
    o_ref[0] = out_t.astype(o_ref.dtype)


def fused_block(x_flat, fp, *, H, W):
    """x_flat: (B, H*W, Cin) f32  ->  (B, ch_out, H*W) f32."""
    B, HW, Cin = x_flat.shape
    cmid = fp["w1"].shape[1]
    ch_out = fp["wfa_t"].shape[0]
    kern = functools.partial(_fused_block_kernel, H=H, W=W, cmid=cmid)
    return pl.pallas_call(
        kern,
        out_shape=jax.ShapeDtypeStruct((B, ch_out, HW), jnp.float32),
        grid_spec=pltpu.PrefetchScalarGridSpec(
            num_scalar_prefetch=0,
            grid=(B,),
            in_specs=[
                pl.BlockSpec((1, HW, Cin), lambda b: (b, 0, 0)),     # x (per batch)
                pl.BlockSpec((Cin, cmid), lambda b: (0, 0)),         # w1 (bf16)
                pl.BlockSpec((1, cmid), lambda b: (0, 0)),           # b1
                pl.BlockSpec((1, cmid), lambda b: (0, 0)),           # w_sa
                pl.BlockSpec((9 * cmid, cmid), lambda b: (0, 0)),    # wd (BN folded, bf16)
                pl.BlockSpec((1, cmid), lambda b: (0, 0)),           # bd (BN folded)
                pl.BlockSpec((9 * cmid, cmid), lambda b: (0, 0)),    # wc (BN folded, bf16)
                pl.BlockSpec((1, cmid), lambda b: (0, 0)),           # bc (BN folded)
                pl.BlockSpec((ch_out, cmid), lambda b: (0, 0)),      # wf[:cmid]^T (bf16)
                pl.BlockSpec((ch_out, cmid), lambda b: (0, 0)),      # wf[cmid:]^T (bf16)
                pl.BlockSpec((ch_out, 1), lambda b: (0, 0)),         # bf (column)
            ],
            out_specs=pl.BlockSpec((1, ch_out, HW), lambda b: (b, 0, 0)),
        ),
        compiler_params=pltpu.CompilerParams(
            dimension_semantics=("parallel",),   # B>=2: one batch per v7x TensorCore
            vmem_limit_bytes=32 * 1024 * 1024,
        ),
    )(x_flat, fp["w1"], fp["b1"], fp["wsa"], fp["wd"], fp["bd"],
      fp["wc"], fp["bc"], fp["wfa_t"], fp["wfb_t"], fp["bf"])


# ---------------------------------------------------------------------------
# Parameters (synthetic, deterministic) + one-time folding for the kernel
# ---------------------------------------------------------------------------
def init_params(ch_in, ch_out, keys):
    """Shapes implied by My_Conv_block1.__init__; conv weights stored in matmul
    form (K, N); BatchNorm is eval-mode with PyTorch defaults."""
    cmid = ch_out // 2
    eps = 1e-5

    def rnd(k, shape):
        return 0.1 * jax.random.normal(k, shape, jnp.float32)

    bn_scale = jnp.full((cmid,), 1.0 / jnp.sqrt(1.0 + eps), jnp.float32)
    bn_shift = jnp.zeros((cmid,), jnp.float32)
    return dict(
        w1x1=rnd(keys[0], (ch_in, cmid)), b1x1=rnd(keys[1], (cmid,)),     # conv1x1
        w_sa=rnd(keys[2], (1, cmid)),                                      # sa.conv1 (no bias)
        wd=rnd(keys[3], (9 * cmid, cmid)), bd=rnd(keys[4], (cmid,)),       # conv_Deform1 (approx)
        bn_d_scale=bn_scale, bn_d_shift=bn_shift,
        wc=rnd(keys[5], (9 * cmid, cmid)), bc=rnd(keys[6], (cmid,)),       # conv1
        bn_c_scale=bn_scale, bn_c_shift=bn_shift,
        wf=rnd(keys[7], (ch_out, ch_out)), bf=rnd(keys[8], (ch_out,)),     # final Conv1x1
    )


def fold_params(p):
    """Fold eval-mode BN into the conv weights/biases ((y+b)*s+t == y*(w*s)+(b*s+t)),
    cast matmul weights to bf16, and pre-transpose the final 1x1 weights."""
    cmid = p["w1x1"].shape[1]
    wd = p["wd"] * p["bn_d_scale"][None, :]
    bd = p["bd"] * p["bn_d_scale"] + p["bn_d_shift"]
    wc = p["wc"] * p["bn_c_scale"][None, :]
    bc = p["bc"] * p["bn_c_scale"] + p["bn_c_shift"]
    return dict(
        w1=p["w1x1"].astype(jnp.bfloat16),
        b1=p["b1x1"].reshape(1, -1).astype(jnp.float32),
        wsa=p["w_sa"].astype(jnp.float32),                      # (1, cmid)
        wd=wd.astype(jnp.bfloat16),
        bd=bd.reshape(1, -1).astype(jnp.float32),
        wc=wc.astype(jnp.bfloat16),
        bc=bc.reshape(1, -1).astype(jnp.float32),
        wfa_t=p["wf"][:cmid].T.astype(jnp.bfloat16),            # (ch_out, cmid)
        wfb_t=p["wf"][cmid:].T.astype(jnp.bfloat16),            # (ch_out, cmid)
        bf=p["bf"].reshape(-1, 1).astype(jnp.float32),          # (ch_out, 1)
    )


def my_conv_block1(x_nchw, p, stride=1):
    """Forward pass of the block (input/output NCHW, like PyTorch)."""
    # nn.MaxPool2d(stride): identity for the default stride=1.
    if stride > 1:
        x_nchw = jax.lax.reduce_window(
            x_nchw, -jnp.inf, jax.lax.max,
            (1, 1, stride, stride), (1, 1, stride, stride), "VALID")
    x = jnp.transpose(x_nchw, (0, 2, 3, 1)).astype(jnp.float32)   # NHWC
    B, H, W, Cin = x.shape
    fp = fold_params(p)
    ch_out = fp["wfa_t"].shape[0]
    out_t = fused_block(x.reshape(B, H * W, Cin), fp, H=H, W=W)   # (B, ch_out, HW)
    return out_t.reshape(B, ch_out, H, W)                          # NCHW, no transpose


# ---------------------------------------------------------------------------
# Pure-JAX reference (same math: BN folded, bf16 matmul operands, f32 accum)
# ---------------------------------------------------------------------------
def im2col3x3(x):
    """(B, H, W, C) -> (B*H*W, 9*C) patches for a 3x3, pad=1 conv."""
    B, H, W, C = x.shape
    xp = jnp.pad(x, ((0, 0), (1, 1), (1, 1), (0, 0)))
    cols = [xp[:, i:i + H, j:j + W, :] for i in range(3) for j in range(3)]
    return jnp.concatenate(cols, axis=-1).reshape(B * H * W, 9 * C)


def ref_forward(x_nchw, p):
    fp = fold_params(p)
    x = jnp.transpose(x_nchw, (0, 2, 3, 1)).astype(jnp.float32)
    B, H, W, Cin = x.shape
    cmid = p["w1x1"].shape[1]

    def mm(a, w):
        return jnp.dot(a.astype(jnp.bfloat16), w, preferred_element_type=jnp.float32)

    h = (mm(x.reshape(-1, Cin), fp["w1"]) + fp["b1"]).reshape(B, H * W, cmid)
    avg = jnp.mean(h, axis=1, keepdims=True)
    s = jnp.sum((avg + h) * fp["wsa"], axis=-1, keepdims=True)
    h_sa = jax.nn.sigmoid(s) * h + h

    def c3(z, w, b):
        cols = im2col3x3(z.reshape(B, H, W, cmid))
        return jnp.maximum(mm(cols, w) + b, 0.0)

    o1 = c3(h_sa, fp["wd"], fp["bd"])
    o2 = c3(o1, fp["wc"], fp["bc"])
    out = (mm(h_sa.reshape(-1, cmid), fp["wfa_t"].T)
           + mm(o2, fp["wfb_t"].T) + fp["bf"].T)
    return jnp.transpose(out.reshape(B, H, W, -1), (0, 3, 1, 2))


if __name__ == "__main__":
    B, CH_IN, CH_OUT, H, W = 2, 4, 32, 16, 16
    key = jax.random.PRNGKey(0)
    kx, *kp = jax.random.split(key, 10)
    x = jax.random.normal(kx, (B, CH_IN, H, W), jnp.float32)
    params = init_params(CH_IN, CH_OUT, kp)

    fwd = jax.jit(my_conv_block1, static_argnames=("stride",))
    out = jax.block_until_ready(fwd(x, params, stride=1))
    assert out.shape == (B, CH_OUT, H, W), out.shape

    ref = ref_forward(x, params)
    err = float(jnp.max(jnp.abs(out - ref)))
    assert jnp.allclose(out, ref, atol=1e-2, rtol=1e-2), err

    print("KERNEL_OK")
</pallas_src>

<mosaic_0001>
module attributes {stable_mosaic.version = 11 : i64} {
  func.func @_fused_block_kernel(%arg0: i32, %arg1: memref<1x256x4xf32, #tpu.memory_space<vmem>>, %arg2: memref<4x16xbf16, #tpu.memory_space<vmem>>, %arg3: memref<1x16xf32, #tpu.memory_space<vmem>>, %arg4: memref<1x16xf32, #tpu.memory_space<vmem>>, %arg5: memref<144x16xbf16, #tpu.memory_space<vmem>>, %arg6: memref<1x16xf32, #tpu.memory_space<vmem>>, %arg7: memref<144x16xbf16, #tpu.memory_space<vmem>>, %arg8: memref<1x16xf32, #tpu.memory_space<vmem>>, %arg9: memref<32x16xbf16, #tpu.memory_space<vmem>>, %arg10: memref<32x16xbf16, #tpu.memory_space<vmem>>, %arg11: memref<32x1xf32, #tpu.memory_space<vmem>>, %arg12: memref<1x32x256xf32, #tpu.memory_space<vmem>>) attributes {dimension_semantics = [#tpu.dimension_semantics<parallel>], iteration_bounds = array<i64: 2>, scalar_prefetch = 0 : i64, scratch_operands = 0 : i64, tpu.core_type = #tpu.core_type<tc>, window_params = [{transform_indices = @transform_0, window_bounds = array<i64: 1, 256, 4>}, {pipeline_mode = #tpu.pipeline_mode<synchronous>, transform_indices = @transform_1, window_bounds = array<i64: 4, 16>}, {pipeline_mode = #tpu.pipeline_mode<synchronous>, transform_indices = @transform_2, window_bounds = array<i64: 1, 16>}, {pipeline_mode = #tpu.pipeline_mode<synchronous>, transform_indices = @transform_3, window_bounds = array<i64: 1, 16>}, {pipeline_mode = #tpu.pipeline_mode<synchronous>, transform_indices = @transform_4, window_bounds = array<i64: 144, 16>}, {pipeline_mode = #tpu.pipeline_mode<synchronous>, transform_indices = @transform_5, window_bounds = array<i64: 1, 16>}, {pipeline_mode = #tpu.pipeline_mode<synchronous>, transform_indices = @transform_6, window_bounds = array<i64: 144, 16>}, {pipeline_mode = #tpu.pipeline_mode<synchronous>, transform_indices = @transform_7, window_bounds = array<i64: 1, 16>}, {pipeline_mode = #tpu.pipeline_mode<synchronous>, transform_indices = @transform_8, window_bounds = array<i64: 32, 16>}, {pipeline_mode = #tpu.pipeline_mode<synchronous>, transform_indices = @transform_9, window_bounds = array<i64: 32, 16>}, {pipeline_mode = #tpu.pipeline_mode<synchronous>, transform_indices = @transform_10, window_bounds = array<i64: 32, 1>}, {transform_indices = @transform_11, window_bounds = array<i64: 1, 32, 256>}]} {
    %c0 = arith.constant 0 : index
    %c0_0 = arith.constant 0 : index
    %c0_1 = arith.constant 0 : index
    %0 = vector.load %arg1[%c0, %c0_0, %c0_1] : memref<1x256x4xf32, #tpu.memory_space<vmem>>, vector<1x256x4xf32>
    %1 = vector.shape_cast %0 : vector<1x256x4xf32> to vector<256x4xf32>
    %2 = arith.truncf %1 : vector<256x4xf32> to vector<256x4xbf16>
    %c0_2 = arith.constant 0 : index
    %c0_3 = arith.constant 0 : index
    %3 = vector.load %arg2[%c0_2, %c0_3] : memref<4x16xbf16, #tpu.memory_space<vmem>>, vector<4x16xbf16>
    %cst = arith.constant dense<0.000000e+00> : vector<256x16xf32>
    %4 = tpu.matmul %2, %3, %cst {dimension_numbers = #tpu.dot_dimension_numbers<[1], [0], [0], [1], [0, 0, 1, 1], [], []>} : vector<256x4xbf16>, vector<4x16xbf16>, vector<256x16xf32> -> vector<256x16xf32>
    %c0_4 = arith.constant 0 : index
    %c0_5 = arith.constant 0 : index
    %5 = vector.load %arg3[%c0_4, %c0_5] : memref<1x16xf32, #tpu.memory_space<vmem>>, vector<1x16xf32>
    %6 = vector.broadcast %5 : vector<1x16xf32> to vector<256x16xf32>
    %7 = arith.addf %4, %6 : vector<256x16xf32>
    %cst_6 = arith.constant dense<0.000000e+00> : vector<16xf32>
    %8 = vector.multi_reduction <add>, %7, %cst_6 [0] : vector<256x16xf32> to vector<16xf32>
    %9 = vector.shape_cast %8 : vector<16xf32> to vector<1x16xf32>
    %cst_7 = arith.constant 2.560000e+02 : f32
    %10 = vector.broadcast %cst_7 : f32 to vector<1x16xf32>
    %11 = arith.divf %9, %10 : vector<1x16xf32>
    %12 = vector.broadcast %11 : vector<1x16xf32> to vector<256x16xf32>
    %13 = arith.addf %12, %7 : vector<256x16xf32>
    %c0_8 = arith.constant 0 : index
    %c0_9 = arith.constant 0 : index
    %14 = vector.load %arg4[%c0_8, %c0_9] : memref<1x16xf32, #tpu.memory_space<vmem>>, vector<1x16xf32>
    %15 = vector.broadcast %14 : vector<1x16xf32> to vector<256x16xf32>
    %16 = arith.mulf %13, %15 : vector<256x16xf32>
    %cst_10 = arith.constant dense<0.000000e+00> : vector<256xf32>
    %17 = vector.multi_reduction <add>, %16, %cst_10 [1] : vector<256x16xf32> to vector<256xf32>
    %18 = vector.shape_cast %17 : vector<256xf32> to vector<256x1xf32>
    %19 = arith.negf %18 : vector<256x1xf32>
    %20 = math.exp %19 : vector<256x1xf32>
    %cst_11 = arith.constant 1.000000e+00 : f32
    %21 = vector.broadcast %cst_11 : f32 to vector<256x1xf32>
    %22 = arith.addf %21, %20 : vector<256x1xf32>
    %23 = arith.divf %21, %22 : vector<256x1xf32>
    %24 = vector.broadcast %23 : vector<256x1xf32> to vector<256x16xf32>
    %25 = arith.mulf %24, %7 : vector<256x16xf32>
    %26 = arith.addf %25, %7 : vector<256x16xf32>
    %27 = tpu.iota {dimensions = array<i32: 0>} : vector<256x1xi32>
    %c16_i32 = arith.constant 16 : i32
    %c0_i32 = arith.constant 0 : i32
    %28 = arith.cmpi eq, %c16_i32, %c0_i32 : i32
    %c1_i32 = arith.constant 1 : i32
    %29 = arith.select %28, %c1_i32, %c16_i32 : i32
    %30 = vector.broadcast %29 : i32 to vector<256x1xi32>
    %31 = arith.remsi %27, %30 : vector<256x1xi32>
    %c0_i32_12 = arith.constant 0 : i32
    %32 = vector.broadcast %c0_i32_12 : i32 to vector<256x1xi32>
    %33 = arith.cmpi ne, %31, %32 : vector<256x1xi32>
    %c0_i32_13 = arith.constant 0 : i32
    %34 = vector.broadcast %c0_i32_13 : i32 to vector<256x1xi32>
    %35 = arith.cmpi slt, %31, %34 : vector<256x1xi32>
    %c0_i32_14 = arith.constant 0 : i32
    %36 = arith.cmpi slt, %29, %c0_i32_14 : i32
    %37 = vector.broadcast %36 : i1 to vector<256x1xi1>
    %38 = vector.broadcast %37 : vector<256x1xi1> to vector<256x1xi1>
    %39 = arith.xori %35, %38 : vector<256x1xi1>
    %40 = arith.andi %39, %33 : vector<256x1xi1>
    %41 = vector.broadcast %29 : i32 to vector<256x1xi32>
    %42 = arith.addi %31, %41 : vector<256x1xi32>
    %43 = arith.select %40, %42, %31 : vector<256x1xi1>, vector<256x1xi32>
    %cst_15 = arith.constant 0.000000e+00 : f32
    %44 = vector.broadcast %cst_15 : f32 to vector<24x16xf32>
    %45 = tpu.concatenate %44, %26, %44 in 0 : vector<24x16xf32>, vector<256x16xf32>, vector<24x16xf32> -> vector<304x16xf32>
    %cst_16 = arith.constant 0.000000e+00 : f32
    %46 = vector.broadcast %cst_16 : f32 to vector<256x16xf32>
    %47 = vector.extract_strided_slice %45 {offsets = [7, 0], sizes = [256, 16], strides = [1, 1]} : vector<304x16xf32> to vector<256x16xf32>
    %c1_i32_17 = arith.constant 1 : i32
    %48 = vector.broadcast %c1_i32_17 : i32 to vector<256x1xi32>
    %49 = arith.cmpi sge, %43, %48 : vector<256x1xi32>
    %cst_18 = arith.constant 0.000000e+00 : f32
    %50 = vector.shape_cast %49 : vector<256x1xi1> to vector<256x1xi1>
    %51 = vector.broadcast %50 : vector<256x1xi1> to vector<256x16xi1>
    %52 = vector.broadcast %cst_18 : f32 to vector<256x16xf32>
    %53 = arith.select %51, %47, %52 : vector<256x16xi1>, vector<256x16xf32>
    %54 = arith.truncf %53 : vector<256x16xf32> to vector<256x16xbf16>
    %c0_19 = arith.constant 0 : index
    %c0_20 = arith.constant 0 : index
    %55 = vector.load %arg5[%c0_19, %c0_20] : memref<144x16xbf16, #tpu.memory_space<vmem>>, vector<16x16xbf16>
    %cst_21 = arith.constant dense<0.000000e+00> : vector<256x16xf32>
    %56 = tpu.matmul %54, %55, %cst_21 {dimension_numbers = #tpu.dot_dimension_numbers<[1], [0], [0], [1], [0, 0, 1, 1], [], []>} : vector<256x16xbf16>, vector<16x16xbf16>, vector<256x16xf32> -> vector<256x16xf32>
    %57 = arith.addf %46, %56 : vector<256x16xf32>
    %58 = vector.extract_strided_slice %45 {offsets = [8, 0], sizes = [256, 16], strides = [1, 1]} : vector<304x16xf32> to vector<256x16xf32>
    %59 = arith.truncf %58 : vector<256x16xf32> to vector<256x16xbf16>
    %c16 = arith.constant 16 : index
    %c0_22 = arith.constant 0 : index
    %60 = vector.load %arg5[%c16, %c0_22] : memref<144x16xbf16, #tpu.memory_space<vmem>>, vector<16x16xbf16>
    %cst_23 = arith.constant dense<0.000000e+00> : vector<256x16xf32>
    %61 = tpu.matmul %59, %60, %cst_23 {dimension_numbers = #tpu.dot_dimension_numbers<[1], [0], [0], [1], [0, 0, 1, 1], [], []>} : vector<256x16xbf16>, vector<16x16xbf16>, vector<256x16xf32> -> vector<256x16xf32>
    %62 = arith.addf %57, %61 : vector<256x16xf32>
    %63 = vector.extract_strided_slice %45 {offsets = [9, 0], sizes = [256, 16], strides = [1, 1]} : vector<304x16xf32> to vector<256x16xf32>
    %c14_i32 = arith.constant 14 : i32
    %64 = vector.broadcast %c14_i32 : i32 to vector<256x1xi32>
    %65 = arith.cmpi sle, %43, %64 : vector<256x1xi32>
    %cst_24 = arith.constant 0.000000e+00 : f32
    %66 = vector.shape_cast %65 : vector<256x1xi1> to vector<256x1xi1>
    %67 = vector.broadcast %66 : vector<256x1xi1> to vector<256x16xi1>
    %68 = vector.broadcast %cst_24 : f32 to vector<256x16xf32>
    %69 = arith.select %67, %63, %68 : vector<256x16xi1>, vector<256x16xf32>
    %70 = arith.truncf %69 : vector<256x16xf32> to vector<256x16xbf16>
    %c32 = arith.constant 32 : index
    %c0_25 = arith.constant 0 : index
    %71 = vector.load %arg5[%c32, %c0_25] : memref<144x16xbf16, #tpu.memory_space<vmem>>, vector<16x16xbf16>
    %cst_26 = arith.constant dense<0.000000e+00> : vector<256x16xf32>
    %72 = tpu.matmul %70, %71, %cst_26 {dimension_numbers = #tpu.dot_dimension_numbers<[1], [0], [0], [1], [0, 0, 1, 1], [], []>} : vector<256x16xbf16>, vector<16x16xbf16>, vector<256x16xf32> -> vector<256x16xf32>
    %73 = arith.addf %62, %72 : vector<256x16xf32>
    %74 = vector.extract_strided_slice %45 {offsets = [23, 0], sizes = [256, 16], strides = [1, 1]} : vector<304x16xf32> to vector<256x16xf32>
    %c1_i32_27 = arith.constant 1 : i32
    %75 = vector.broadcast %c1_i32_27 : i32 to vector<256x1xi32>
    %76 = arith.cmpi sge, %43, %75 : vector<256x1xi32>
    %cst_28 = arith.constant 0.000000e+00 : f32
    %77 = vector.shape_cast %76 : vector<256x1xi1> to vector<256x1xi1>
    %78 = vector.broadcast %77 : vector<256x1xi1> to vector<256x16xi1>
    %79 = vector.broadcast %cst_28 : f32 to vector<256x16xf32>
    %80 = arith.select %78, %74, %79 : vector<256x16xi1>, vector<256x16xf32>
    %81 = arith.truncf %80 : vector<256x16xf32> to vector<256x16xbf16>
    %c48 = arith.constant 48 : index
    %c0_29 = arith.constant 0 : index
    %82 = vector.load %arg5[%c48, %c0_29] : memref<144x16xbf16, #tpu.memory_space<vmem>>, vector<16x16xbf16>
    %cst_30 = arith.constant dense<0.000000e+00> : vector<256x16xf32>
    %83 = tpu.matmul %81, %82, %cst_30 {dimension_numbers = #tpu.dot_dimension_numbers<[1], [0], [0], [1], [0, 0, 1, 1], [], []>} : vector<256x16xbf16>, vector<16x16xbf16>, vector<256x16xf32> -> vector<256x16xf32>
    %84 = arith.addf %73, %83 : vector<256x16xf32>
    %85 = vector.extract_strided_slice %45 {offsets = [24, 0], sizes = [256, 16], strides = [1, 1]} : vector<304x16xf32> to vector<256x16xf32>
    %86 = arith.truncf %85 : vector<256x16xf32> to vector<256x16xbf16>
    %c64 = arith.constant 64 : index
    %c0_31 = arith.constant 0 : index
    %87 = vector.load %arg5[%c64, %c0_31] : memref<144x16xbf16, #tpu.memory_space<vmem>>, vector<16x16xbf16>
    %cst_32 = arith.constant dense<0.000000e+00> : vector<256x16xf32>
    %88 = tpu.matmul %86, %87, %cst_32 {dimension_numbers = #tpu.dot_dimension_numbers<[1], [0], [0], [1], [0, 0, 1, 1], [], []>} : vector<256x16xbf16>, vector<16x16xbf16>, vector<256x16xf32> -> vector<256x16xf32>
    %89 = arith.addf %84, %88 : vector<256x16xf32>
    %90 = vector.extract_strided_slice %45 {offsets = [25, 0], sizes = [256, 16], strides = [1, 1]} : vector<304x16xf32> to vector<256x16xf32>
    %c14_i32_33 = arith.constant 14 : i32
    %91 = vector.broadcast %c14_i32_33 : i32 to vector<256x1xi32>
    %92 = arith.cmpi sle, %43, %91 : vector<256x1xi32>
    %cst_34 = arith.constant 0.000000e+00 : f32
    %93 = vector.shape_cast %92 : vector<256x1xi1> to vector<256x1xi1>
    %94 = vector.broadcast %93 : vector<256x1xi1> to vector<256x16xi1>
    %95 = vector.broadcast %cst_34 : f32 to vector<256x16xf32>
    %96 = arith.select %94, %90, %95 : vector<256x16xi1>, vector<256x16xf32>
    %97 = arith.truncf %96 : vector<256x16xf32> to vector<256x16xbf16>
    %c80 = arith.constant 80 : index
    %c0_35 = arith.constant 0 : index
    %98 = vector.load %arg5[%c80, %c0_35] : memref<144x16xbf16, #tpu.memory_space<vmem>>, vector<16x16xbf16>
    %cst_36 = arith.constant dense<0.000000e+00> : vector<256x16xf32>
    %99 = tpu.matmul %97, %98, %cst_36 {dimension_numbers = #tpu.dot_dimension_numbers<[1], [0], [0], [1], [0, 0, 1, 1], [], []>} : vector<256x16xbf16>, vector<16x16xbf16>, vector<256x16xf32> -> vector<256x16xf32>
    %100 = arith.addf %89, %99 : vector<256x16xf32>
    %101 = vector.extract_strided_slice %45 {offsets = [39, 0], sizes = [256, 16], strides = [1, 1]} : vector<304x16xf32> to vector<256x16xf32>
    %c1_i32_37 = arith.constant 1 : i32
    %102 = vector.broadcast %c1_i32_37 : i32 to vector<256x1xi32>
    %103 = arith.cmpi sge, %43, %102 : vector<256x1xi32>
    %cst_38 = arith.constant 0.000000e+00 : f32
    %104 = vector.shape_cast %103 : vector<256x1xi1> to vector<256x1xi1>
    %105 = vector.broadcast %104 : vector<256x1xi1> to vector<256x16xi1>
    %106 = vector.broadcast %cst_38 : f32 to vector<256x16xf32>
    %107 = arith.select %105, %101, %106 : vector<256x16xi1>, vector<256x16xf32>
    %108 = arith.truncf %107 : vector<256x16xf32> to vector<256x16xbf16>
    %c96 = arith.constant 96 : index
    %c0_39 = arith.constant 0 : index
    %109 = vector.load %arg5[%c96, %c0_39] : memref<144x16xbf16, #tpu.memory_space<vmem>>, vector<16x16xbf16>
    %cst_40 = arith.constant dense<0.000000e+00> : vector<256x16xf32>
    %110 = tpu.matmul %108, %109, %cst_40 {dimension_numbers = #tpu.dot_dimension_numbers<[1], [0], [0], [1], [0, 0, 1, 1], [], []>} : vector<256x16xbf16>, vector<16x16xbf16>, vector<256x16xf32> -> vector<256x16xf32>
    %111 = arith.addf %100, %110 : vector<256x16xf32>
    %112 = vector.extract_strided_slice %45 {offsets = [40, 0], sizes = [256, 16], strides = [1, 1]} : vector<304x16xf32> to vector<256x16xf32>
    %113 = arith.truncf %112 : vector<256x16xf32> to vector<256x16xbf16>
    %c112 = arith.constant 112 : index
    %c0_41 = arith.constant 0 : index
    %114 = vector.load %arg5[%c112, %c0_41] : memref<144x16xbf16, #tpu.memory_space<vmem>>, vector<16x16xbf16>
    %cst_42 = arith.constant dense<0.000000e+00> : vector<256x16xf32>
    %115 = tpu.matmul %113, %114, %cst_42 {dimension_numbers = #tpu.dot_dimension_numbers<[1], [0], [0], [1], [0, 0, 1, 1], [], []>} : vector<256x16xbf16>, vector<16x16xbf16>, vector<256x16xf32> -> vector<256x16xf32>
    %116 = arith.addf %111, %115 : vector<256x16xf32>
    %117 = vector.extract_strided_slice %45 {offsets = [41, 0], sizes = [256, 16], strides = [1, 1]} : vector<304x16xf32> to vector<256x16xf32>
    %c14_i32_43 = arith.constant 14 : i32
    %118 = vector.broadcast %c14_i32_43 : i32 to vector<256x1xi32>
    %119 = arith.cmpi sle, %43, %118 : vector<256x1xi32>
    %cst_44 = arith.constant 0.000000e+00 : f32
    %120 = vector.shape_cast %119 : vector<256x1xi1> to vector<256x1xi1>
    %121 = vector.broadcast %120 : vector<256x1xi1> to vector<256x16xi1>
    %122 = vector.broadcast %cst_44 : f32 to vector<256x16xf32>
    %123 = arith.select %121, %117, %122 : vector<256x16xi1>, vector<256x16xf32>
    %124 = arith.truncf %123 : vector<256x16xf32> to vector<256x16xbf16>
    %c128 = arith.constant 128 : index
    %c0_45 = arith.constant 0 : index
    %125 = vector.load %arg5[%c128, %c0_45] : memref<144x16xbf16, #tpu.memory_space<vmem>>, vector<16x16xbf16>
    %cst_46 = arith.constant dense<0.000000e+00> : vector<256x16xf32>
    %126 = tpu.matmul %124, %125, %cst_46 {dimension_numbers = #tpu.dot_dimension_numbers<[1], [0], [0], [1], [0, 0, 1, 1], [], []>} : vector<256x16xbf16>, vector<16x16xbf16>, vector<256x16xf32> -> vector<256x16xf32>
    %127 = arith.addf %116, %126 : vector<256x16xf32>
    %c0_47 = arith.constant 0 : index
    %c0_48 = arith.constant 0 : index
    %128 = vector.load %arg6[%c0_47, %c0_48] : memref<1x16xf32, #tpu.memory_space<vmem>>, vector<1x16xf32>
    %129 = vector.broadcast %128 : vector<1x16xf32> to vector<256x16xf32>
    %130 = arith.addf %127, %129 : vector<256x16xf32>
    %cst_49 = arith.constant 0.000000e+00 : f32
    %131 = vector.broadcast %cst_49 : f32 to vector<256x16xf32>
    %132 = arith.maximumf %130, %131 : vector<256x16xf32>
    %cst_50 = arith.constant 0.000000e+00 : f32
    %133 = vector.broadcast %cst_50 : f32 to vector<24x16xf32>
    %134 = tpu.concatenate %133, %132, %133 in 0 : vector<24x16xf32>, vector<256x16xf32>, vector<24x16xf32> -> vector<304x16xf32>
    %cst_51 = arith.constant 0.000000e+00 : f32
    %135 = vector.broadcast %cst_51 : f32 to vector<256x16xf32>
    %136 = vector.extract_strided_slice %134 {offsets = [7, 0], sizes = [256, 16], strides = [1, 1]} : vector<304x16xf32> to vector<256x16xf32>
    %c1_i32_52 = arith.constant 1 : i32
    %137 = vector.broadcast %c1_i32_52 : i32 to vector<256x1xi32>
    %138 = arith.cmpi sge, %43, %137 : vector<256x1xi32>
    %cst_53 = arith.constant 0.000000e+00 : f32
    %139 = vector.shape_cast %138 : vector<256x1xi1> to vector<256x1xi1>
    %140 = vector.broadcast %139 : vector<256x1xi1> to vector<256x16xi1>
    %141 = vector.broadcast %cst_53 : f32 to vector<256x16xf32>
    %142 = arith.select %140, %136, %141 : vector<256x16xi1>, vector<256x16xf32>
    %143 = arith.truncf %142 : vector<256x16xf32> to vector<256x16xbf16>
    %c0_54 = arith.constant 0 : index
    %c0_55 = arith.constant 0 : index
    %144 = vector.load %arg7[%c0_54, %c0_55] : memref<144x16xbf16, #tpu.memory_space<vmem>>, vector<16x16xbf16>
    %cst_56 = arith.constant dense<0.000000e+00> : vector<256x16xf32>
    %145 = tpu.matmul %143, %144, %cst_56 {dimension_numbers = #tpu.dot_dimension_numbers<[1], [0], [0], [1], [0, 0, 1, 1], [], []>} : vector<256x16xbf16>, vector<16x16xbf16>, vector<256x16xf32> -> vector<256x16xf32>
    %146 = arith.addf %135, %145 : vector<256x16xf32>
    %147 = vector.extract_strided_slice %134 {offsets = [8, 0], sizes = [256, 16], strides = [1, 1]} : vector<304x16xf32> to vector<256x16xf32>
    %148 = arith.truncf %147 : vector<256x16xf32> to vector<256x16xbf16>
    %c16_57 = arith.constant 16 : index
    %c0_58 = arith.constant 0 : index
    %149 = vector.load %arg7[%c16_57, %c0_58] : memref<144x16xbf16, #tpu.memory_space<vmem>>, vector<16x16xbf16>
    %cst_59 = arith.constant dense<0.000000e+00> : vector<256x16xf32>
    %150 = tpu.matmul %148, %149, %cst_59 {dimension_numbers = #tpu.dot_dimension_numbers<[1], [0], [0], [1], [0, 0, 1, 1], [], []>} : vector<256x16xbf16>, vector<16x16xbf16>, vector<256x16xf32> -> vector<256x16xf32>
    %151 = arith.addf %146, %150 : vector<256x16xf32>
    %152 = vector.extract_strided_slice %134 {offsets = [9, 0], sizes = [256, 16], strides = [1, 1]} : vector<304x16xf32> to vector<256x16xf32>
    %c14_i32_60 = arith.constant 14 : i32
    %153 = vector.broadcast %c14_i32_60 : i32 to vector<256x1xi32>
    %154 = arith.cmpi sle, %43, %153 : vector<256x1xi32>
    %cst_61 = arith.constant 0.000000e+00 : f32
    %155 = vector.shape_cast %154 : vector<256x1xi1> to vector<256x1xi1>
    %156 = vector.broadcast %155 : vector<256x1xi1> to vector<256x16xi1>
    %157 = vector.broadcast %cst_61 : f32 to vector<256x16xf32>
    %158 = arith.select %156, %152, %157 : vector<256x16xi1>, vector<256x16xf32>
    %159 = arith.truncf %158 : vector<256x16xf32> to vector<256x16xbf16>
    %c32_62 = arith.constant 32 : index
    %c0_63 = arith.constant 0 : index
    %160 = vector.load %arg7[%c32_62, %c0_63] : memref<144x16xbf16, #tpu.memory_space<vmem>>, vector<16x16xbf16>
    %cst_64 = arith.constant dense<0.000000e+00> : vector<256x16xf32>
    %161 = tpu.matmul %159, %160, %cst_64 {dimension_numbers = #tpu.dot_dimension_numbers<[1], [0], [0], [1], [0, 0, 1, 1], [], []>} : vector<256x16xbf16>, vector<16x16xbf16>, vector<256x16xf32> -> vector<256x16xf32>
    %162 = arith.addf %151, %161 : vector<256x16xf32>
    %163 = vector.extract_strided_slice %134 {offsets = [23, 0], sizes = [256, 16], strides = [1, 1]} : vector<304x16xf32> to vector<256x16xf32>
    %c1_i32_65 = arith.constant 1 : i32
    %164 = vector.broadcast %c1_i32_65 : i32 to vector<256x1xi32>
    %165 = arith.cmpi sge, %43, %164 : vector<256x1xi32>
    %cst_66 = arith.constant 0.000000e+00 : f32
    %166 = vector.shape_cast %165 : vector<256x1xi1> to vector<256x1xi1>
    %167 = vector.broadcast %166 : vector<256x1xi1> to vector<256x16xi1>
    %168 = vector.broadcast %cst_66 : f32 to vector<256x16xf32>
    %169 = arith.select %167, %163, %168 : vector<256x16xi1>, vector<256x16xf32>
    %170 = arith.truncf %169 : vector<256x16xf32> to vector<256x16xbf16>
    %c48_67 = arith.constant 48 : index
    %c0_68 = arith.constant 0 : index
    %171 = vector.load %arg7[%c48_67, %c0_68] : memref<144x16xbf16, #tpu.memory_space<vmem>>, vector<16x16xbf16>
    %cst_69 = arith.constant dense<0.000000e+00> : vector<256x16xf32>
    %172 = tpu.matmul %170, %171, %cst_69 {dimension_numbers = #tpu.dot_dimension_numbers<[1], [0], [0], [1], [0, 0, 1, 1], [], []>} : vector<256x16xbf16>, vector<16x16xbf16>, vector<256x16xf32> -> vector<256x16xf32>
    %173 = arith.addf %162, %172 : vector<256x16xf32>
    %174 = vector.extract_strided_slice %134 {offsets = [24, 0], sizes = [256, 16], strides = [1, 1]} : vector<304x16xf32> to vector<256x16xf32>
    %175 = arith.truncf %174 : vector<256x16xf32> to vector<256x16xbf16>
    %c64_70 = arith.constant 64 : index
    %c0_71 = arith.constant 0 : index
    %176 = vector.load %arg7[%c64_70, %c0_71] : memref<144x16xbf16, #tpu.memory_space<vmem>>, vector<16x16xbf16>
    %cst_72 = arith.constant dense<0.000000e+00> : vector<256x16xf32>
    %177 = tpu.matmul %175, %176, %cst_72 {dimension_numbers = #tpu.dot_dimension_numbers<[1], [0], [0], [1], [0, 0, 1, 1], [], []>} : vector<256x16xbf16>, vector<16x16xbf16>, vector<256x16xf32> -> vector<256x16xf32>
    %178 = arith.addf %173, %177 : vector<256x16xf32>
    %179 = vector.extract_strided_slice %134 {offsets = [25, 0], sizes = [256, 16], strides = [1, 1]} : vector<304x16xf32> to vector<256x16xf32>
    %c14_i32_73 = arith.constant 14 : i32
    %180 = vector.broadcast %c14_i32_73 : i32 to vector<256x1xi32>
    %181 = arith.cmpi sle, %43, %180 : vector<256x1xi32>
    %cst_74 = arith.constant 0.000000e+00 : f32
    %182 = vector.shape_cast %181 : vector<256x1xi1> to vector<256x1xi1>
    %183 = vector.broadcast %182 : vector<256x1xi1> to vector<256x16xi1>
    %184 = vector.broadcast %cst_74 : f32 to vector<256x16xf32>
    %185 = arith.select %183, %179, %184 : vector<256x16xi1>, vector<256x16xf32>
    %186 = arith.truncf %185 : vector<256x16xf32> to vector<256x16xbf16>
    %c80_75 = arith.constant 80 : index
    %c0_76 = arith.constant 0 : index
    %187 = vector.load %arg7[%c80_75, %c0_76] : memref<144x16xbf16, #tpu.memory_space<vmem>>, vector<16x16xbf16>
    %cst_77 = arith.constant dense<0.000000e+00> : vector<256x16xf32>
    %188 = tpu.matmul %186, %187, %cst_77 {dimension_numbers = #tpu.dot_dimension_numbers<[1], [0], [0], [1], [0, 0, 1, 1], [], []>} : vector<256x16xbf16>, vector<16x16xbf16>, vector<256x16xf32> -> vector<256x16xf32>
    %189 = arith.addf %178, %188 : vector<256x16xf32>
    %190 = vector.extract_strided_slice %134 {offsets = [39, 0], sizes = [256, 16], strides = [1, 1]} : vector<304x16xf32> to vector<256x16xf32>
    %c1_i32_78 = arith.constant 1 : i32
    %191 = vector.broadcast %c1_i32_78 : i32 to vector<256x1xi32>
    %192 = arith.cmpi sge, %43, %191 : vector<256x1xi32>
    %cst_79 = arith.constant 0.000000e+00 : f32
    %193 = vector.shape_cast %192 : vector<256x1xi1> to vector<256x1xi1>
    %194 = vector.broadcast %193 : vector<256x1xi1> to vector<256x16xi1>
    %195 = vector.broadcast %cst_79 : f32 to vector<256x16xf32>
    %196 = arith.select %194, %190, %195 : vector<256x16xi1>, vector<256x16xf32>
    %197 = arith.truncf %196 : vector<256x16xf32> to vector<256x16xbf16>
    %c96_80 = arith.constant 96 : index
    %c0_81 = arith.constant 0 : index
    %198 = vector.load %arg7[%c96_80, %c0_81] : memref<144x16xbf16, #tpu.memory_space<vmem>>, vector<16x16xbf16>
    %cst_82 = arith.constant dense<0.000000e+00> : vector<256x16xf32>
    %199 = tpu.matmul %197, %198, %cst_82 {dimension_numbers = #tpu.dot_dimension_numbers<[1], [0], [0], [1], [0, 0, 1, 1], [], []>} : vector<256x16xbf16>, vector<16x16xbf16>, vector<256x16xf32> -> vector<256x16xf32>
    %200 = arith.addf %189, %199 : vector<256x16xf32>
    %201 = vector.extract_strided_slice %134 {offsets = [40, 0], sizes = [256, 16], strides = [1, 1]} : vector<304x16xf32> to vector<256x16xf32>
    %202 = arith.truncf %201 : vector<256x16xf32> to vector<256x16xbf16>
    %c112_83 = arith.constant 112 : index
    %c0_84 = arith.constant 0 : index
    %203 = vector.load %arg7[%c112_83, %c0_84] : memref<144x16xbf16, #tpu.memory_space<vmem>>, vector<16x16xbf16>
    %cst_85 = arith.constant dense<0.000000e+00> : vector<256x16xf32>
    %204 = tpu.matmul %202, %203, %cst_85 {dimension_numbers = #tpu.dot_dimension_numbers<[1], [0], [0], [1], [0, 0, 1, 1], [], []>} : vector<256x16xbf16>, vector<16x16xbf16>, vector<256x16xf32> -> vector<256x16xf32>
    %205 = arith.addf %200, %204 : vector<256x16xf32>
    %206 = vector.extract_strided_slice %134 {offsets = [41, 0], sizes = [256, 16], strides = [1, 1]} : vector<304x16xf32> to vector<256x16xf32>
    %c14_i32_86 = arith.constant 14 : i32
    %207 = vector.broadcast %c14_i32_86 : i32 to vector<256x1xi32>
    %208 = arith.cmpi sle, %43, %207 : vector<256x1xi32>
    %cst_87 = arith.constant 0.000000e+00 : f32
    %209 = vector.shape_cast %208 : vector<256x1xi1> to vector<256x1xi1>
    %210 = vector.broadcast %209 : vector<256x1xi1> to vector<256x16xi1>
    %211 = vector.broadcast %cst_87 : f32 to vector<256x16xf32>
    %212 = arith.select %210, %206, %211 : vector<256x16xi1>, vector<256x16xf32>
    %213 = arith.truncf %212 : vector<256x16xf32> to vector<256x16xbf16>
    %c128_88 = arith.constant 128 : index
    %c0_89 = arith.constant 0 : index
    %214 = vector.load %arg7[%c128_88, %c0_89] : memref<144x16xbf16, #tpu.memory_space<vmem>>, vector<16x16xbf16>
    %cst_90 = arith.constant dense<0.000000e+00> : vector<256x16xf32>
    %215 = tpu.matmul %213, %214, %cst_90 {dimension_numbers = #tpu.dot_dimension_numbers<[1], [0], [0], [1], [0, 0, 1, 1], [], []>} : vector<256x16xbf16>, vector<16x16xbf16>, vector<256x16xf32> -> vector<256x16xf32>
    %216 = arith.addf %205, %215 : vector<256x16xf32>
    %c0_91 = arith.constant 0 : index
    %c0_92 = arith.constant 0 : index
    %217 = vector.load %arg8[%c0_91, %c0_92] : memref<1x16xf32, #tpu.memory_space<vmem>>, vector<1x16xf32>
    %218 = vector.broadcast %217 : vector<1x16xf32> to vector<256x16xf32>
    %219 = arith.addf %216, %218 : vector<256x16xf32>
    %cst_93 = arith.constant 0.000000e+00 : f32
    %220 = vector.broadcast %cst_93 : f32 to vector<256x16xf32>
    %221 = arith.maximumf %219, %220 : vector<256x16xf32>
    %c0_94 = arith.constant 0 : index
    %c0_95 = arith.constant 0 : index
    %222 = vector.load %arg9[%c0_94, %c0_95] : memref<32x16xbf16, #tpu.memory_space<vmem>>, vector<32x16xbf16>
    %223 = arith.truncf %26 : vector<256x16xf32> to vector<256x16xbf16>
    %cst_96 = arith.constant dense<0.000000e+00> : vector<32x256xf32>
    %224 = tpu.matmul %222, %223, %cst_96 {dimension_numbers = #tpu.dot_dimension_numbers<[1], [1], [0], [0], [0, 0, 1, 0], [], []>} : vector<32x16xbf16>, vector<256x16xbf16>, vector<32x256xf32> -> vector<32x256xf32>
    %c0_97 = arith.constant 0 : index
    %c0_98 = arith.constant 0 : index
    %225 = vector.load %arg10[%c0_97, %c0_98] : memref<32x16xbf16, #tpu.memory_space<vmem>>, vector<32x16xbf16>
    %226 = arith.truncf %221 : vector<256x16xf32> to vector<256x16xbf16>
    %cst_99 = arith.constant dense<0.000000e+00> : vector<32x256xf32>
    %227 = tpu.matmul %225, %226, %cst_99 {dimension_numbers = #tpu.dot_dimension_numbers<[1], [1], [0], [0], [0, 0, 1, 0], [], []>} : vector<32x16xbf16>, vector<256x16xbf16>, vector<32x256xf32> -> vector<32x256xf32>
    %228 = arith.addf %224, %227 : vector<32x256xf32>
    %c0_100 = arith.constant 0 : index
    %c0_101 = arith.constant 0 : index
    %229 = vector.load %arg11[%c0_100, %c0_101] : memref<32x1xf32, #tpu.memory_space<vmem>>, vector<32x1xf32>
    %230 = vector.broadcast %229 : vector<32x1xf32> to vector<32x256xf32>
    %231 = arith.addf %228, %230 : vector<32x256xf32>
    %c0_102 = arith.constant 0 : index
    %c0_103 = arith.constant 0 : index
    %c0_104 = arith.constant 0 : index
    %232 = vector.load %arg12[%c0_102, %c0_103, %c0_104] : memref<1x32x256xf32, #tpu.memory_space<vmem>>, vector<1x32x256xf32>
    %233 = vector.shape_cast %232 : vector<1x32x256xf32> to vector<32x256xf32>
    %234 = vector.shape_cast %231 : vector<32x256xf32> to vector<1x32x256xf32>
    tpu.vector_store %arg12[%c0_102, %c0_103, %c0_104], %234 {strides = array<i32>} : memref<1x32x256xf32, #tpu.memory_space<vmem>>, vector<1x32x256xf32>,
    return
  }
  func.func @transform_0(%arg0: i32) -> (i32, i32, i32) {
    %c0_i32 = arith.constant 0 : i32
    %c0_i32_0 = arith.constant 0 : i32
    %c0_i32_1 = arith.constant 0 : i32
    return %arg0, %c0_i32, %c0_i32_0 : i32, i32, i32
  }
  func.func @transform_1(%arg0: i32) -> (i32, i32) {
    %c0_i32 = arith.constant 0 : i32
    %c0_i32_0 = arith.constant 0 : i32
    %c0_i32_1 = arith.constant 0 : i32
    return %c0_i32, %c0_i32_0 : i32, i32
  }
  func.func @transform_2(%arg0: i32) -> (i32, i32) {
    %c0_i32 = arith.constant 0 : i32
    %c0_i32_0 = arith.constant 0 : i32
    %c0_i32_1 = arith.constant 0 : i32
    return %c0_i32, %c0_i32_0 : i32, i32
  }
  func.func @transform_3(%arg0: i32) -> (i32, i32) {
    %c0_i32 = arith.constant 0 : i32
    %c0_i32_0 = arith.constant 0 : i32
    %c0_i32_1 = arith.constant 0 : i32
    return %c0_i32, %c0_i32_0 : i32, i32
  }
  func.func @transform_4(%arg0: i32) -> (i32, i32) {
    %c0_i32 = arith.constant 0 : i32
    %c0_i32_0 = arith.constant 0 : i32
    %c0_i32_1 = arith.constant 0 : i32
    return %c0_i32, %c0_i32_0 : i32, i32
  }
  func.func @transform_5(%arg0: i32) -> (i32, i32) {
    %c0_i32 = arith.constant 0 : i32
    %c0_i32_0 = arith.constant 0 : i32
    %c0_i32_1 = arith.constant 0 : i32
    return %c0_i32, %c0_i32_0 : i32, i32
  }
  func.func @transform_6(%arg0: i32) -> (i32, i32) {
    %c0_i32 = arith.constant 0 : i32
    %c0_i32_0 = arith.constant 0 : i32
    %c0_i32_1 = arith.constant 0 : i32
    return %c0_i32, %c0_i32_0 : i32, i32
  }
  func.func @transform_7(%arg0: i32) -> (i32, i32) {
    %c0_i32 = arith.constant 0 : i32
    %c0_i32_0 = arith.constant 0 : i32
    %c0_i32_1 = arith.constant 0 : i32
    return %c0_i32, %c0_i32_0 : i32, i32
  }
  func.func @transform_8(%arg0: i32) -> (i32, i32) {
    %c0_i32 = arith.constant 0 : i32
    %c0_i32_0 = arith.constant 0 : i32
    %c0_i32_1 = arith.constant 0 : i32
    return %c0_i32, %c0_i32_0 : i32, i32
  }
  func.func @transform_9(%arg0: i32) -> (i32, i32) {
    %c0_i32 = arith.constant 0 : i32
    %c0_i32_0 = arith.constant 0 : i32
    %c0_i32_1 = arith.constant 0 : i32
    return %c0_i32, %c0_i32_0 : i32, i32
  }
  func.func @transform_10(%arg0: i32) -> (i32, i32) {
    %c0_i32 = arith.constant 0 : i32
    %c0_i32_0 = arith.constant 0 : i32
    %c0_i32_1 = arith.constant 0 : i32
    return %c0_i32, %c0_i32_0 : i32, i32
  }
  func.func @transform_11(%arg0: i32) -> (i32, i32, i32) {
    %c0_i32 = arith.constant 0 : i32
    %c0_i32_0 = arith.constant 0 : i32
    %c0_i32_1 = arith.constant 0 : i32
    return %arg0, %c0_i32, %c0_i32_0 : i32, i32, i32
  }
}

</mosaic_0001>

<llo_original>
// kernel: my_conv_block1.1
$region0: #{my_conv_block1.1}
  #allocation0 [shape = 'u32[]', space=smem, size = 0x4, offset = 0x4, fixed_abs, tag = 'smem constant byte address 0x4 - core index']
  #allocation1 [shape = 'u32[144,128]{1,0:T(1,128)}', space=vmem, size = 0x12000, scoped, tag = 'internal scratch']
  %s0 = inlined_call_operand.vmem [shape: f32[2,256,4], index: 0, kind: input, shape index: {}]
  %s1 = inlined_call_operand.vmem [shape: bf16[4,16], index: 1, kind: input, shape index: {}]
  %s2 = inlined_call_operand.vmem [shape: f32[1,16], index: 2, kind: input, shape index: {}]
  %s3 = inlined_call_operand.vmem [shape: f32[1,16], index: 3, kind: input, shape index: {}]
  %s4 = inlined_call_operand.vmem [shape: bf16[144,16], index: 4, kind: input, shape index: {}]
  %s5 = inlined_call_operand.vmem [shape: f32[1,16], index: 5, kind: input, shape index: {}]
  %s6 = inlined_call_operand.vmem [shape: bf16[144,16], index: 6, kind: input, shape index: {}]
  %s7 = inlined_call_operand.vmem [shape: f32[1,16], index: 7, kind: input, shape index: {}]
  %s8 = inlined_call_operand.vmem [shape: bf16[32,16], index: 8, kind: input, shape index: {}]
  %s9 = inlined_call_operand.vmem [shape: bf16[32,16], index: 9, kind: input, shape index: {}]
  %s10 = inlined_call_operand.vmem [shape: f32[32,1], index: 10, kind: input, shape index: {}]
  %s11 = inlined_call_operand.vmem [shape: f32[2,32,256], index: 11, kind: output, shape index: {}]
  %s12 = sld [smem:[#allocation0]]
  $region77: #{my_conv_block1.1} parent=0
    _
  %s14 = ssub.s32 1, %s12
  %s15 = scalar_select 0, %s14, %s12
  loop: start=0, step=1, limit=4
  $region2: #{my_conv_block1.1} parent=0 // loop_pre_header
    _
  $region3: #{my_conv_block1.1} parent=0 // loop_header
    %s17 = sphi 0, %s21
    %p18 = scmp.ge.s32.totalorder %s17, 4
    %s27 = sphi 0, %s29
    %s30 = sphi 0, %s27
    %s31 = sphi 0, %s30
    %s47 = sphi 0, %s31
    %s51 = sphi 0, %s51
    %s53 = sphi 0, %s51
    %s54 = sphi 0, %s53
    %s68 = sphi 0, %s54
    %s72 = sphi 0, %s72
    %s74 = sphi 0, %s72
    %s75 = sphi 0, %s74
    %s89 = sphi 0, %s75
    %s93 = sphi 0, %s93
    %s95 = sphi 0, %s93
    %s96 = sphi 0, %s95
    %s110 = sphi 0, %s96
    %s114 = sphi 0, %s114
    %s116 = sphi 0, %s114
    %s117 = sphi 0, %s116
    %s131 = sphi 0, %s117
    %s135 = sphi 0, %s135
    %s137 = sphi 0, %s135
    %s138 = sphi 0, %s137
    %s152 = sphi 0, %s138
    %s156 = sphi 0, %s156
    %s158 = sphi 0, %s156
    %s159 = sphi 0, %s158
    %s173 = sphi 0, %s159
    %s177 = sphi 0, %s177
    %s179 = sphi 0, %s177
    %s180 = sphi 0, %s179
    %s194 = sphi 0, %s180
    %s198 = sphi 0, %s198
    %s200 = sphi 0, %s198
    %s201 = sphi 0, %s200
    %s215 = sphi 0, %s201
    %s219 = sphi 0, %s219
    %s221 = sphi 0, %s219
    %s222 = sphi 0, %s221
    %s236 = sphi 0, %s222
    %s240 = sphi 0, %s240
    %s242 = sphi 0, %s240
    %s243 = sphi 0, %s242
    %s257 = sphi 0, %s243
    %s263 = sphi 0, %s265
    %s266 = sphi 0, %s263
    %s267 = sphi 0, %s266
    %s283 = sphi 0, %s267
  $region4: #{my_conv_block1.1} parent=0 // loop_header_branch
    %20 = sbr.rel (%p18) target = $region8
  $region5: #{my_conv_block1.1} parent=0 // loop_body
    %s22 = ssub.s32 %s17, 1
    %s23 = ssub.s32 %s17, 2
    %s24 = sadd.s32 %s17, 1
    %s25 = ssub.s32 %s17, %s24
    %p26 = scmp.eq.s32.totalorder %s25, 0
    %s28 = sadd.s32 %s27, 1
    %s29 = scalar_select %p26, %s27, %s28
    %p32 = pneg %p26
    %p33 = scmp.eq.s32.totalorder %s17, 1
    %p34 = por %p32, %p33
    %p35 = scmp.ne.s32.totalorder %s27, %s30
    %p36 = scmp.eq.s32.totalorder %s17, 0
    %p37 = por %p35, %p36
    %p38 = scmp.ne.s32.totalorder %s27, %s30
    %p39 = scmp.eq.s32.totalorder %s22, 1
    %p40 = por %p38, %p39
    %p41 = scmp.ne.s32.totalorder %s30, %s31
    %p42 = scmp.eq.s32.totalorder %s22, 0
    %p43 = por %p41, %p42
    %p44 = scmp.ne.s32.totalorder %s30, %s31
    %p45 = scmp.eq.s32.totalorder %s23, 1
    %p46 = por %p44, %p45
    %p48 = scmp.ne.s32.totalorder %s31, %s47
    %p49 = scmp.eq.s32.totalorder %s23, 0
    %p50 = por %p48, %p49
    %s52 = sadd.s32 %s51, 1
    %p55 = scmp.eq.s32.totalorder %s17, 1
    %p56 = scmp.ne.s32.totalorder %s51, %s53
    %p57 = scmp.eq.s32.totalorder %s17, 0
    %p58 = por %p56, %p57
    %p59 = scmp.ne.s32.totalorder %s51, %s53
    %p60 = scmp.eq.s32.totalorder %s22, 1
    %p61 = por %p59, %p60
    %p62 = scmp.ne.s32.totalorder %s53, %s54
    %p63 = scmp.eq.s32.totalorder %s22, 0
    %p64 = por %p62, %p63
    %p65 = scmp.ne.s32.totalorder %s53, %s54
    %p66 = scmp.eq.s32.totalorder %s23, 1
    %p67 = por %p65, %p66
    %p69 = scmp.ne.s32.totalorder %s54, %s68
    %p70 = scmp.eq.s32.totalorder %s23, 0
    %p71 = por %p69, %p70
    %s73 = sadd.s32 %s72, 1
    %p76 = scmp.eq.s32.totalorder %s17, 1
    %p77 = scmp.ne.s32.totalorder %s72, %s74
    %p78 = scmp.eq.s32.totalorder %s17, 0
    %p79 = por %p77, %p78
    %p80 = scmp.ne.s32.totalorder %s72, %s74
    %p81 = scmp.eq.s32.totalorder %s22, 1
    %p82 = por %p80, %p81
    %p83 = scmp.ne.s32.totalorder %s74, %s75
    %p84 = scmp.eq.s32.totalorder %s22, 0
    %p85 = por %p83, %p84
    %p86 = scmp.ne.s32.totalorder %s74, %s75
    %p87 = scmp.eq.s32.totalorder %s23, 1
    %p88 = por %p86, %p87
    %p90 = scmp.ne.s32.totalorder %s75, %s89
    %p91 = scmp.eq.s32.totalorder %s23, 0
    %p92 = por %p90, %p91
    %s94 = sadd.s32 %s93, 1
    %p97 = scmp.eq.s32.totalorder %s17, 1
    %p98 = scmp.ne.s32.totalorder %s93, %s95
    %p99 = scmp.eq.s32.totalorder %s17, 0
    %p100 = por %p98, %p99
    %p101 = scmp.ne.s32.totalorder %s93, %s95
    %p102 = scmp.eq.s32.totalorder %s22, 1
    %p103 = por %p101, %p102
    %p104 = scmp.ne.s32.totalorder %s95, %s96
    %p105 = scmp.eq.s32.totalorder %s22, 0
    %p106 = por %p104, %p105
    %p107 = scmp.ne.s32.totalorder %s95, %s96
    %p108 = scmp.eq.s32.totalorder %s23, 1
    %p109 = por %p107, %p108
    %p111 = scmp.ne.s32.totalorder %s96, %s110
    %p112 = scmp.eq.s32.totalorder %s23, 0
    %p113 = por %p111, %p112
    %s115 = sadd.s32 %s114, 1
    %p118 = scmp.eq.s32.totalorder %s17, 1
    %p119 = scmp.ne.s32.totalorder %s114, %s116
    %p120 = scmp.eq.s32.totalorder %s17, 0
    %p121 = por %p119, %p120
    %p122 = scmp.ne.s32.totalorder %s114, %s116
    %p123 = scmp.eq.s32.totalorder %s22, 1
    %p124 = por %p122, %p123
    %p125 = scmp.ne.s32.totalorder %s116, %s117
    %p126 = scmp.eq.s32.totalorder %s22, 0
    %p127 = por %p125, %p126
    %p128 = scmp.ne.s32.totalorder %s116, %s117
    %p129 = scmp.eq.s32.totalorder %s23, 1
    %p130 = por %p128, %p129
    %p132 = scmp.ne.s32.totalorder %s117, %s131
    %p133 = scmp.eq.s32.totalorder %s23, 0
    %p134 = por %p132, %p133
    %s136 = sadd.s32 %s135, 1
    %p139 = scmp.eq.s32.totalorder %s17, 1
    %p140 = scmp.ne.s32.totalorder %s135, %s137
    %p141 = scmp.eq.s32.totalorder %s17, 0
    %p142 = por %p140, %p141
    %p143 = scmp.ne.s32.totalorder %s135, %s137
    %p144 = scmp.eq.s32.totalorder %s22, 1
    %p145 = por %p143, %p144
    %p146 = scmp.ne.s32.totalorder %s137, %s138
    %p147 = scmp.eq.s32.totalorder %s22, 0
    %p148 = por %p146, %p147
    %p149 = scmp.ne.s32.totalorder %s137, %s138
    %p150 = scmp.eq.s32.totalorder %s23, 1
    %p151 = por %p149, %p150
    %p153 = scmp.ne.s32.totalorder %s138, %s152
    %p154 = scmp.eq.s32.totalorder %s23, 0
    %p155 = por %p153, %p154
    %s157 = sadd.s32 %s156, 1
    %p160 = scmp.eq.s32.totalorder %s17, 1
    %p161 = scmp.ne.s32.totalorder %s156, %s158
    %p162 = scmp.eq.s32.totalorder %s17, 0
    %p163 = por %p161, %p162
    %p164 = scmp.ne.s32.totalorder %s156, %s158
    %p165 = scmp.eq.s32.totalorder %s22, 1
    %p166 = por %p164, %p165
    %p167 = scmp.ne.s32.totalorder %s158, %s159
    %p168 = scmp.eq.s32.totalorder %s22, 0
    %p169 = por %p167, %p168
    %p170 = scmp.ne.s32.totalorder %s158, %s159
    %p171 = scmp.eq.s32.totalorder %s23, 1
    %p172 = por %p170, %p171
    %p174 = scmp.ne.s32.totalorder %s159, %s173
    %p175 = scmp.eq.s32.totalorder %s23, 0
    %p176 = por %p174, %p175
    %s178 = sadd.s32 %s177, 1
    %p181 = scmp.eq.s32.totalorder %s17, 1
    %p182 = scmp.ne.s32.totalorder %s177, %s179
    %p183 = scmp.eq.s32.totalorder %s17, 0
    %p184 = por %p182, %p183
    %p185 = scmp.ne.s32.totalorder %s177, %s179
    %p186 = scmp.eq.s32.totalorder %s22, 1
    %p187 = por %p185, %p186
    %p188 = scmp.ne.s32.totalorder %s179, %s180
    %p189 = scmp.eq.s32.totalorder %s22, 0
    %p190 = por %p188, %p189
    %p191 = scmp.ne.s32.totalorder %s179, %s180
    %p192 = scmp.eq.s32.totalorder %s23, 1
    %p193 = por %p191, %p192
    %p195 = scmp.ne.s32.totalorder %s180, %s194
    %p196 = scmp.eq.s32.totalorder %s23, 0
    %p197 = por %p195, %p196
    %s199 = sadd.s32 %s198, 1
    %p202 = scmp.eq.s32.totalorder %s17, 1
    %p203 = scmp.ne.s32.totalorder %s198, %s200
    %p204 = scmp.eq.s32.totalorder %s17, 0
    %p205 = por %p203, %p204
    %p206 = scmp.ne.s32.totalorder %s198, %s200
    %p207 = scmp.eq.s32.totalorder %s22, 1
    %p208 = por %p206, %p207
    %p209 = scmp.ne.s32.totalorder %s200, %s201
    %p210 = scmp.eq.s32.totalorder %s22, 0
    %p211 = por %p209, %p210
    %p212 = scmp.ne.s32.totalorder %s200, %s201
    %p213 = scmp.eq.s32.totalorder %s23, 1
    %p214 = por %p212, %p213
    %p216 = scmp.ne.s32.totalorder %s201, %s215
    %p217 = scmp.eq.s32.totalorder %s23, 0
    %p218 = por %p216, %p217
    %s220 = sadd.s32 %s219, 1
    %p223 = scmp.eq.s32.totalorder %s17, 1
    %p224 = scmp.ne.s32.totalorder %s219, %s221
    %p225 = scmp.eq.s32.totalorder %s17, 0
    %p226 = por %p224, %p225
    %p227 = scmp.ne.s32.totalorder %s219, %s221
    %p228 = scmp.eq.s32.totalorder %s22, 1
    %p229 = por %p227, %p228
    %p230 = scmp.ne.s32.totalorder %s221, %s222
    %p231 = scmp.eq.s32.totalorder %s22, 0
    %p232 = por %p230, %p231
    %p233 = scmp.ne.s32.totalorder %s221, %s222
    %p234 = scmp.eq.s32.totalorder %s23, 1
    %p235 = por %p233, %p234
    %p237 = scmp.ne.s32.totalorder %s222, %s236
    %p238 = scmp.eq.s32.totalorder %s23, 0
    %p239 = por %p237, %p238
    %s241 = sadd.s32 %s240, 1
    %p244 = scmp.eq.s32.totalorder %s17, 1
    %p245 = scmp.ne.s32.totalorder %s240, %s242
    %p246 = scmp.eq.s32.totalorder %s17, 0
    %p247 = por %p245, %p246
    %p248 = scmp.ne.s32.totalorder %s240, %s242
    %p249 = scmp.eq.s32.totalorder %s22, 1
    %p250 = por %p248, %p249
    %p251 = scmp.ne.s32.totalorder %s242, %s243
    %p252 = scmp.eq.s32.totalorder %s22, 0
    %p253 = por %p251, %p252
    %p254 = scmp.ne.s32.totalorder %s242, %s243
    %p255 = scmp.eq.s32.totalorder %s23, 1
    %p256 = por %p254, %p255
    %p258 = scmp.ne.s32.totalorder %s243, %s257
    %p259 = scmp.eq.s32.totalorder %s23, 0
    %p260 = por %p258, %p259
    %s261 = ssub.s32 %s17, %s24
    %p262 = scmp.eq.s32.totalorder %s261, 0
    %s264 = sadd.s32 %s263, 1
    %s265 = scalar_select %p262, %s263, %s264
    %p268 = pneg %p262
    %p269 = scmp.eq.s32.totalorder %s17, 1
    %p270 = por %p268, %p269
    %p271 = scmp.ne.s32.totalorder %s263, %s266
    %p272 = scmp.eq.s32.totalorder %s17, 0
    %p273 = por %p271, %p272
    %p274 = scmp.ne.s32.totalorder %s263, %s266
    %p275 = scmp.eq.s32.totalorder %s22, 1
    %p276 = por %p274, %p275
    %p277 = scmp.ne.s32.totalorder %s266, %s267
    %p278 = scmp.eq.s32.totalorder %s22, 0
    %p279 = por %p277, %p278
    %p280 = scmp.ne.s32.totalorder %s266, %s267
    %p281 = scmp.eq.s32.totalorder %s23, 1
    %p282 = por %p280, %p281
    %p284 = scmp.ne.s32.totalorder %s267, %s283
    %p285 = scmp.eq.s32.totalorder %s23, 0
    %p286 = por %p284, %p285
    %p287 = scmp.le.s32.totalorder 1, %s17
    %p288 = scmp.lt.s32.totalorder %s17, 3
    %p289 = pnand %p287, %p288
    %p290 = pneg %p289
    // Predicated region
    $region9: #{my_conv_block1.1} parent=5 // pred_check
      _
    $region10: #{my_conv_block1.1} parent=5 // pred_check_branch
      %292 = sbr.rel (%p289) target = $region12
    $region11: #{my_conv_block1.1} parent=5 // pred_region
      %s293 = ssub.s32 %s17, 1
      // Predicated region
      $region13: #{my_conv_block1.1} parent=11 // pred_check
        %p294 = pneg %p64
      $region14: #{my_conv_block1.1} parent=11 // pred_check_branch
        %296 = sbr.rel (%p294) target = $region16
      $region15: #{my_conv_block1.1} parent=11 // pred_region
        _
      $region16: #{my_conv_block1.1} parent=11 // pred_fallthru
        _
      // Predicated region
      $region17: #{my_conv_block1.1} parent=11 // pred_check
        %p297 = pneg %p85
      $region18: #{my_conv_block1.1} parent=11 // pred_check_branch
        %299 = sbr.rel (%p297) target = $region20
      $region19: #{my_conv_block1.1} parent=11 // pred_region
        _
      $region20: #{my_conv_block1.1} parent=11 // pred_fallthru
        _
      // Predicated region
      $region21: #{my_conv_block1.1} parent=11 // pred_check
        %p300 = pneg %p106
      $region22: #{my_conv_block1.1} parent=11 // pred_check_branch
        %302 = sbr.rel (%p300) target = $region24
      $region23: #{my_conv_block1.1} parent=11 // pred_region
        _
      $region24: #{my_conv_block1.1} parent=11 // pred_fallthru
        _
      // Predicated region
      $region25: #{my_conv_block1.1} parent=11 // pred_check
        %p303 = pneg %p127
      $region26: #{my_conv_block1.1} parent=11 // pred_check_branch
        %305 = sbr.rel (%p303) target = $region28
      $region27: #{my_conv_block1.1} parent=11 // pred_region
        _
      $region28: #{my_conv_block1.1} parent=11 // pred_fallthru
        _
      // Predicated region
      $region29: #{my_conv_block1.1} parent=11 // pred_check
        %p306 = pneg %p148
      $region30: #{my_conv_block1.1} parent=11 // pred_check_branch
        %308 = sbr.rel (%p306) target = $region32
      $region31: #{my_conv_block1.1} parent=11 // pred_region
        _
      $region32: #{my_conv_block1.1} parent=11 // pred_fallthru
        _
      // Predicated region
      $region33: #{my_conv_block1.1} parent=11 // pred_check
        %p309 = pneg %p169
      $region34: #{my_conv_block1.1} parent=11 // pred_check_branch
        %311 = sbr.rel (%p309) target = $region36
      $region35: #{my_conv_block1.1} parent=11 // pred_region
        _
      $region36: #{my_conv_block1.1} parent=11 // pred_fallthru
        _
      // Predicated region
      $region37: #{my_conv_block1.1} parent=11 // pred_check
        %p312 = pneg %p190
      $region38: #{my_conv_block1.1} parent=11 // pred_check_branch
        %314 = sbr.rel (%p312) target = $region40
      $region39: #{my_conv_block1.1} parent=11 // pred_region
        _
      $region40: #{my_conv_block1.1} parent=11 // pred_fallthru
        _
      // Predicated region
      $region41: #{my_conv_block1.1} parent=11 // pred_check
        %p315 = pneg %p211
      $region42: #{my_conv_block1.1} parent=11 // pred_check_branch
        %317 = sbr.rel (%p315) target = $region44
      $region43: #{my_conv_block1.1} parent=11 // pred_region
        _
      $region44: #{my_conv_block1.1} parent=11 // pred_fallthru
        _
      // Predicated region
      $region45: #{my_conv_block1.1} parent=11 // pred_check
        %p318 = pneg %p232
      $region46: #{my_conv_block1.1} parent=11 // pred_check_branch
        %320 = sbr.rel (%p318) target = $region48
      $region47: #{my_conv_block1.1} parent=11 // pred_region
        _
      $region48: #{my_conv_block1.1} parent=11 // pred_fallthru
        _
      // Predicated region
      $region49: #{my_conv_block1.1} parent=11 // pred_check
        %p321 = pneg %p253
      $region50: #{my_conv_block1.1} parent=11 // pred_check_branch
        %323 = sbr.rel (%p321) target = $region52
      $region51: #{my_conv_block1.1} parent=11 // pred_region
        _
      $region52: #{my_conv_block1.1} parent=11 // pred_fallthru
        _
    $region12: #{my_conv_block1.1} parent=5 // pred_fallthru
      _
    %p324 = scmp.lt.s32.totalorder %s17, 2
    // Predicated region
    $region53: #{my_conv_block1.1} parent=5 // pred_check
      %p325 = pneg %p324
    $region54: #{my_conv_block1.1} parent=5 // pred_check_branch
      %327 = sbr.rel (%p325) target = $region56
    $region55: #{my_conv_block1.1} parent=5 // pred_region
      // Predicated region
      $region57: #{my_conv_block1.1} parent=55 // pred_check
        %p328 = pneg %p37
      $region58: #{my_conv_block1.1} parent=55 // pred_check_branch
        %330 = sbr.rel (%p328) target = $region60
      $region59: #{my_conv_block1.1} parent=55 // pred_region
        %p331 = scmp.lt.s32.totalorder %s17, 1
        %s332 = scalar_select %p331, %s17, 1
        %s333 = smul.addr %s332, 32
        %s334 = smul.addr %s333, 8
        %s335 = scalar_lea.vmem %s0, %s334
      $region60: #{my_conv_block1.1} parent=55 // pred_fallthru
        _
    $region56: #{my_conv_block1.1} parent=5 // pred_fallthru
      _
    %p336 = scmp.le.s32.totalorder 1, %s17
    %p337 = scmp.lt.s32.totalorder %s17, 3
    %p338 = pnand %p336, %p337
    %p339 = pneg %p338
    // Predicated region
    $region61: #{my_conv_block1.1} parent=5 // pred_check
      _
    $region62: #{my_conv_block1.1} parent=5 // pred_check_branch
      %341 = sbr.rel (%p338) target = $region64
    $region63: #{my_conv_block1.1} parent=5 // pred_region
      %s342 = ssub.s32 %s17, 1
      %p343 = scmp.lt.s32.totalorder %s22, 1
      %s344 = scalar_select %p343, %s22, 1
      %s345 = smul.addr %s344, 32
      %s346 = smul.addr %s345, 8
      %s347 = scalar_lea.vmem %s0, %s346
      %p348 = pneg %p43
      %p349 = pneg %p40
      %p350 = pneg %p64
      %p351 = pneg %p61
      %p352 = pneg %p85
      %p353 = pneg %p82
      %p354 = pneg %p106
      %p355 = pneg %p103
      %p356 = pneg %p127
      %p357 = pneg %p124
      %p358 = pneg %p148
      %p359 = pneg %p145
      %p360 = pneg %p169
      %p361 = pneg %p166
      %p362 = pneg %p190
      %p363 = pneg %p187
      %p364 = pneg %p211
      %p365 = pneg %p208
      %p366 = pneg %p232
      %p367 = pneg %p229
      %p368 = pneg %p253
      %p369 = pneg %p250
      %p370 = pneg %p279
      %p371 = pneg %p276
      %p372 = scmp.lt.s32.totalorder %s22, 1
      %s373 = scalar_select %p372, %s22, 1
      %s374 = smul.addr %s373, 8
      %s375 = smul.addr %s374, 8
      %s376 = scalar_lea.vmem %s11, %s375
      %p377 = scmp.lt.s32.totalorder %s22, 1
      %s378 = scalar_select %p377, %s22, 1
      %s379 = smul.addr %s378, 32
      %s380 = smul.addr %s379, 8
      %s381 = scalar_lea.vmem %s0, %s380
      %p382 = scmp.lt.s32.totalorder %s22, 1
      %s383 = scalar_select %p382, %s22, 1
      %s384 = smul.addr %s383, 8
      %s385 = smul.addr %s384, 8
      %s386 = scalar_lea.vmem %s11, %s385
      %v388 = vld [vmem:[%s381] sm:$0xff]
      %v389 = vld [vmem:[%s381 + $0x8] sm:$0xff]
      %v390 = vld [vmem:[%s381 + $0x10] sm:$0xff]
      %v391 = vld [vmem:[%s381 + $0x18] sm:$0xff]
      %v392 = vld [vmem:[%s381 + $0x20] sm:$0xff]
      %v393 = vld [vmem:[%s381 + $0x28] sm:$0xff]
      %v394 = vld [vmem:[%s381 + $0x30] sm:$0xff]
      %v395 = vld [vmem:[%s381 + $0x38] sm:$0xff]
      %v396 = vld [vmem:[%s381 + $0x40] sm:$0xff]
      %v397 = vld [vmem:[%s381 + $0x48] sm:$0xff]
      %v398 = vld [vmem:[%s381 + $0x50] sm:$0xff]
      %v399 = vld [vmem:[%s381 + $0x58] sm:$0xff]
      %v400 = vld [vmem:[%s381 + $0x60] sm:$0xff]
      %v401 = vld [vmem:[%s381 + $0x68] sm:$0xff]
      %v402 = vld [vmem:[%s381 + $0x70] sm:$0xff]
      %v403 = vld [vmem:[%s381 + $0x78] sm:$0xff]
      %v404 = vld [vmem:[%s381 + $0x80] sm:$0xff]
      %v405 = vld [vmem:[%s381 + $0x88] sm:$0xff]
      %v406 = vld [vmem:[%s381 + $0x90] sm:$0xff]
      %v407 = vld [vmem:[%s381 + $0x98] sm:$0xff]
      %v408 = vld [vmem:[%s381 + $0xa0] sm:$0xff]
      %v409 = vld [vmem:[%s381 + $0xa8] sm:$0xff]
      %v410 = vld [vmem:[%s381 + $0xb0] sm:$0xff]
      %v411 = vld [vmem:[%s381 + $0xb8] sm:$0xff]
      %v412 = vld [vmem:[%s381 + $0xc0] sm:$0xff]
      %v413 = vld [vmem:[%s381 + $0xc8] sm:$0xff]
      %v414 = vld [vmem:[%s381 + $0xd0] sm:$0xff]
      %v415 = vld [vmem:[%s381 + $0xd8] sm:$0xff]
      %v416 = vld [vmem:[%s381 + $0xe0] sm:$0xff]
      %v417 = vld [vmem:[%s381 + $0xe8] sm:$0xff]
      %v418 = vld [vmem:[%s381 + $0xf0] sm:$0xff]
      %v419 = vld [vmem:[%s381 + $0xf8] sm:$0xff]
      %v420 = vpack.c.bf16 %v389, %v388
      %v421 = vpack.c.bf16 %v391, %v390
      %v422 = vpack.c.bf16 %v393, %v392
      %v423 = vpack.c.bf16 %v395, %v394
      %v424 = vpack.c.bf16 %v397, %v396
      %v425 = vpack.c.bf16 %v399, %v398
      %v426 = vpack.c.bf16 %v401, %v400
      %v427 = vpack.c.bf16 %v403, %v402
      %v428 = vpack.c.bf16 %v405, %v404
      %v429 = vpack.c.bf16 %v407, %v406
      %v430 = vpack.c.bf16 %v409, %v408
      %v431 = vpack.c.bf16 %v411, %v410
      %v432 = vpack.c.bf16 %v413, %v412
      %v433 = vpack.c.bf16 %v415, %v414
      %v434 = vpack.c.bf16 %v417, %v416
      %v435 = vpack.c.bf16 %v419, %v418
      %v436 = vld [vmem:[%s1] sm:$0x3]
      %v437 = vld [vmem:[%s2] sm:$0x1]
      %v439 = vlaneseq
      %v440 = vshrl.u32 %v439, 7
      %v441 = vsub.s32 0, %v440
      %v442 = vrot.slane %v437, %v441
      %vm444 = vcmask 31744
      %v446 = vsel %vm444, %v420, 0
      %v449 = vsel %vm444, %v421, 0
      %v452 = vsel %vm444, %v422, 0
      %v455 = vsel %vm444, %v423, 0
      %v458 = vsel %vm444, %v424, 0
      %v461 = vsel %vm444, %v425, 0
      %v464 = vsel %vm444, %v426, 0
      %v467 = vsel %vm444, %v427, 0
      %v470 = vsel %vm444, %v428, 0
      %v473 = vsel %vm444, %v429, 0
      %v476 = vsel %vm444, %v430, 0
      %v479 = vsel %vm444, %v431, 0
      %v482 = vsel %vm444, %v432, 0
      %v485 = vsel %vm444, %v433, 0
      %v488 = vsel %vm444, %v434, 0
      %v491 = vsel %vm444, %v435, 0
      %vm493 = vcmask 1041408
      %v495 = vsel %vm493, %v436, 0
      %497 = vmatprep.subr.bf16.mxu0 0
      %498 = vmatpush1.bf16.msra.mxu0 %v495
      %499 = vmatprep.subr.bf16.mxu0 0
      %500 = vmatpush1.bf16.msra.mxu0 0
      %501 = vmatprep.subr.bf16.mxu0 0
      %502 = vmatpush1.bf16.msra.mxu0 0
      %503 = vmatprep.subr.bf16.mxu0 0
      %504 = vmatpush1.bf16.msra.mxu0 0
      %505 = vmatprep.subr.bf16.mxu0 0
      %506 = vmatpush1.bf16.msra.mxu0 0
      %507 = vmatprep.subr.bf16.mxu0 0
      %508 = vmatpush1.bf16.msra.mxu0 0
      %509 = vmatprep.subr.bf16.mxu0 0
      %510 = vmatpush1.bf16.msra.mxu0 0
      %511 = vmatprep.subr.bf16.mxu0 0
      %512 = vmatpush1.bf16.msra.mxu0 0
      %513 = vmatprep.subr.bf16.mxu0 0
      %514 = vmatpush1.bf16.msra.mxu0 0
      %515 = vmatprep.subr.bf16.mxu0 0
      %516 = vmatpush1.bf16.msra.mxu0 0
      %517 = vmatprep.subr.bf16.mxu0 0
      %518 = vmatpush1.bf16.msra.mxu0 0
      %519 = vmatprep.subr.bf16.mxu0 0
      %520 = vmatpush1.bf16.msra.mxu0 0
      %521 = vmatprep.subr.bf16.mxu0 0
      %522 = vmatpush1.bf16.msra.mxu0 0
      %523 = vmatprep.subr.bf16.mxu0 0
      %524 = vmatpush1.bf16.msra.mxu0 0
      %525 = vmatprep.subr.bf16.mxu0 0
      %526 = vmatpush1.bf16.msra.mxu0 0
      %527 = vmatprep.subr.bf16.mxu0 0
      %528 = vmatpush1.bf16.msra.mxu0 0
      %529 = vmatprep.mubr.bf16.mxu0 0
      %530 = vmatmul.mubr.bf16.gmra.mrb[0].mxu0 %v446
      %v531 = vpop.f32.mrb[0].mxu0
      %v532 = vadd.f32 %v442, %v531
      %v533 = vpop.f32.mrb[0].mxu0
      %v534 = vpop.f32.mrb[0].mxu0
      %v535 = vadd.f32 %v442, %v534
      %v536 = vpop.f32.mrb[0].mxu0
      %537 = vmatprep.mubr.bf16.mxu0 0
      %538 = vmatmul.mubr.bf16.gmra.mrb[0].mxu0 %v449
      %v539 = vpop.f32.mrb[0].mxu0
      %v540 = vadd.f32 %v442, %v539
      %v541 = vpop.f32.mrb[0].mxu0
      %v542 = vpop.f32.mrb[0].mxu0
      %v543 = vadd.f32 %v442, %v542
      %v544 = vpop.f32.mrb[0].mxu0
      %545 = vmatprep.mubr.bf16.mxu0 0
      %546 = vmatmul.mubr.bf16.gmra.mrb[0].mxu0 %v452
      %v547 = vpop.f32.mrb[0].mxu0
      %v548 = vadd.f32 %v442, %v547
      %v549 = vpop.f32.mrb[0].mxu0
      %v550 = vpop.f32.mrb[0].mxu0
      %v551 = vadd.f32 %v442, %v550
      %v552 = vpop.f32.mrb[0].mxu0
      %553 = vmatprep.mubr.bf16.mxu0 0
      %554 = vmatmul.mubr.bf16.gmra.mrb[0].mxu0 %v455
      %v555 = vpop.f32.mrb[0].mxu0
      %v556 = vadd.f32 %v442, %v555
      %v557 = vpop.f32.mrb[0].mxu0
      %v558 = vpop.f32.mrb[0].mxu0
      %v559 = vadd.f32 %v442, %v558
      %v560 = vpop.f32.mrb[0].mxu0
      %561 = vmatprep.mubr.bf16.mxu0 0
      %562 = vmatmul.mubr.bf16.gmra.mrb[0].mxu0 %v458
      %v563 = vpop.f32.mrb[0].mxu0
      %v564 = vadd.f32 %v442, %v563
      %v565 = vpop.f32.mrb[0].mxu0
      %v566 = vpop.f32.mrb[0].mxu0
      %v567 = vadd.f32 %v442, %v566
      %v568 = vpop.f32.mrb[0].mxu0
      %569 = vmatprep.mubr.bf16.mxu0 0
      %570 = vmatmul.mubr.bf16.gmra.mrb[0].mxu0 %v461
      %v571 = vpop.f32.mrb[0].mxu0
      %v572 = vadd.f32 %v442, %v571
      %v573 = vpop.f32.mrb[0].mxu0
      %v574 = vpop.f32.mrb[0].mxu0
      %v575 = vadd.f32 %v442, %v574
      %v576 = vpop.f32.mrb[0].mxu0
      %577 = vmatprep.mubr.bf16.mxu0 0
      %578 = vmatmul.mubr.bf16.gmra.mrb[0].mxu0 %v464
      %v579 = vpop.f32.mrb[0].mxu0
      %v580 = vadd.f32 %v442, %v579
      %v581 = vpop.f32.mrb[0].mxu0
      %v582 = vpop.f32.mrb[0].mxu0
      %v583 = vadd.f32 %v442, %v582
      %v584 = vpop.f32.mrb[0].mxu0
      %585 = vmatprep.mubr.bf16.mxu0 0
      %586 = vmatmul.mubr.bf16.gmra.mrb[0].mxu0 %v467
      %v587 = vpop.f32.mrb[0].mxu0
      %v588 = vadd.f32 %v442, %v587
      %v589 = vpop.f32.mrb[0].mxu0
      %v590 = vpop.f32.mrb[0].mxu0
      %v591 = vadd.f32 %v442, %v590
      %v592 = vpop.f32.mrb[0].mxu0
      %593 = vmatprep.mubr.bf16.mxu0 0
      %594 = vmatmul.mubr.bf16.gmra.mrb[0].mxu0 %v470
      %v595 = vpop.f32.mrb[0].mxu0
      %v596 = vadd.f32 %v442, %v595
      %v597 = vpop.f32.mrb[0].mxu0
      %v598 = vpop.f32.mrb[0].mxu0
      %v599 = vadd.f32 %v442, %v598
      %v600 = vpop.f32.mrb[0].mxu0
      %601 = vmatprep.mubr.bf16.mxu0 0
      %602 = vmatmul.mubr.bf16.gmra.mrb[0].mxu0 %v473
      %v603 = vpop.f32.mrb[0].mxu0
      %v604 = vadd.f32 %v442, %v603
      %v605 = vpop.f32.mrb[0].mxu0
      %v606 = vpop.f32.mrb[0].mxu0
      %v607 = vadd.f32 %v442, %v606
      %v608 = vpop.f32.mrb[0].mxu0
      %609 = vmatprep.mubr.bf16.mxu0 0
      %610 = vmatmul.mubr.bf16.gmra.mrb[0].mxu0 %v476
      %v611 = vpop.f32.mrb[0].mxu0
      %v612 = vadd.f32 %v442, %v611
      %v613 = vpop.f32.mrb[0].mxu0
      %v614 = vpop.f32.mrb[0].mxu0
      %v615 = vadd.f32 %v442, %v614
      %v616 = vpop.f32.mrb[0].mxu0
      %617 = vmatprep.mubr.bf16.mxu0 0
      %618 = vmatmul.mubr.bf16.gmra.mrb[0].mxu0 %v479
      %v619 = vpop.f32.mrb[0].mxu0
      %v620 = vadd.f32 %v442, %v619
      %v621 = vpop.f32.mrb[0].mxu0
      %v622 = vpop.f32.mrb[0].mxu0
      %v623 = vadd.f32 %v442, %v622
      %v624 = vpop.f32.mrb[0].mxu0
      %625 = vmatprep.mubr.bf16.mxu0 0
      %626 = vmatmul.mubr.bf16.gmra.mrb[0].mxu0 %v482
      %v627 = vpop.f32.mrb[0].mxu0
      %v628 = vadd.f32 %v442, %v627
      %v629 = vpop.f32.mrb[0].mxu0
      %v630 = vpop.f32.mrb[0].mxu0
      %v631 = vadd.f32 %v442, %v630
      %v632 = vpop.f32.mrb[0].mxu0
      %633 = vmatprep.mubr.bf16.mxu0 0
      %634 = vmatmul.mubr.bf16.gmra.mrb[0].mxu0 %v485
      %v635 = vpop.f32.mrb[0].mxu0
      %v636 = vadd.f32 %v442, %v635
      %v637 = vpop.f32.mrb[0].mxu0
      %v638 = vpop.f32.mrb[0].mxu0
      %v639 = vadd.f32 %v442, %v638
      %v640 = vpop.f32.mrb[0].mxu0
      %641 = vmatprep.mubr.bf16.mxu0 0
      %642 = vmatmul.mubr.bf16.gmra.mrb[0].mxu0 %v488
      %v643 = vpop.f32.mrb[0].mxu0
      %v644 = vadd.f32 %v442, %v643
      %v645 = vpop.f32.mrb[0].mxu0
      %v646 = vpop.f32.mrb[0].mxu0
      %v647 = vadd.f32 %v442, %v646
      %v648 = vpop.f32.mrb[0].mxu0
      %649 = vmatprep.mubr.bf16.mxu0 0
      %650 = vmatmul.mubr.bf16.gmra.mrb[0].mxu0 %v491
      %v651 = vpop.f32.mrb[0].mxu0
      %v652 = vadd.f32 %v442, %v651
      %v653 = vpop.f32.mrb[0].mxu0
      %v654 = vpop.f32.mrb[0].mxu0
      %v655 = vadd.f32 %v442, %v654
      %v656 = vpop.f32.mrb[0].mxu0
      %657 = vdwg.mxu0
      %vm658 = vcmask 130048
      %v659 = vsel %vm658, %v532, 0.0
      %v660 = vsel %vm658, %v535, 0.0
      %v661 = vadd.f32 %v659, %v660
      %v662 = vsel %vm658, %v540, 0.0
      %v663 = vadd.f32 %v661, %v662
      %v664 = vsel %vm658, %v543, 0.0
      %v665 = vadd.f32 %v663, %v664
      %v666 = vsel %vm658, %v548, 0.0
      %v667 = vadd.f32 %v665, %v666
      %v668 = vsel %vm658, %v551, 0.0
      %v669 = vadd.f32 %v667, %v668
      %v670 = vsel %vm658, %v556, 0.0
      %v671 = vadd.f32 %v669, %v670
      %v672 = vsel %vm658, %v559, 0.0
      %v673 = vadd.f32 %v671, %v672
      %v674 = vsel %vm658, %v564, 0.0
      %v675 = vadd.f32 %v673, %v674
      %v676 = vsel %vm658, %v567, 0.0
      %v677 = vadd.f32 %v675, %v676
      %v678 = vsel %vm658, %v572, 0.0
      %v679 = vadd.f32 %v677, %v678
      %v680 = vsel %vm658, %v575, 0.0
      %v681 = vadd.f32 %v679, %v680
      %v682 = vsel %vm658, %v580, 0.0
      %v683 = vadd.f32 %v681, %v682
      %v684 = vsel %vm658, %v583, 0.0
      %v685 = vadd.f32 %v683, %v684
      %v686 = vsel %vm658, %v588, 0.0
      %v687 = vadd.f32 %v685, %v686
      %v688 = vsel %vm658, %v591, 0.0
      %v689 = vadd.f32 %v687, %v688
      %v690 = vsel %vm658, %v596, 0.0
      %v691 = vadd.f32 %v689, %v690
      %v692 = vsel %vm658, %v599, 0.0
      %v693 = vadd.f32 %v691, %v692
      %v694 = vsel %vm658, %v604, 0.0
      %v695 = vadd.f32 %v693, %v694
      %v696 = vsel %vm658, %v607, 0.0
      %v697 = vadd.f32 %v695, %v696
      %v698 = vsel %vm658, %v612, 0.0
      %v699 = vadd.f32 %v697, %v698
      %v700 = vsel %vm658, %v615, 0.0
      %v701 = vadd.f32 %v699, %v700
      %v702 = vsel %vm658, %v620, 0.0
      %v703 = vadd.f32 %v701, %v702
      %v704 = vsel %vm658, %v623, 0.0
      %v705 = vadd.f32 %v703, %v704
      %v706 = vsel %vm658, %v628, 0.0
      %v707 = vadd.f32 %v705, %v706
      %v708 = vsel %vm658, %v631, 0.0
      %v709 = vadd.f32 %v707, %v708
      %v710 = vsel %vm658, %v636, 0.0
      %v711 = vadd.f32 %v709, %v710
      %v712 = vsel %vm658, %v639, 0.0
      %v713 = vadd.f32 %v711, %v712
      %v714 = vsel %vm658, %v644, 0.0
      %v715 = vadd.f32 %v713, %v714
      %v716 = vsel %vm658, %v647, 0.0
      %v717 = vadd.f32 %v715, %v716
      %v718 = vsel %vm658, %v652, 0.0
      %v719 = vadd.f32 %v717, %v718
      %v720 = vsel %vm658, %v655, 0.0
      %v721 = vadd.f32 %v719, %v720
      %v722 = vrot.slane %v721, 4
      %v723 = vadd.f32 %v721, %v722
      %v724 = vrot.slane %v723, 2
      %v725 = vadd.f32 %v723, %v724
      %v726 = vrot.slane %v725, 1
      %v727 = vadd.f32 %v725, %v726
      %v728 = vrcp.pop 256.0
      %v729 = vmul.f32 %v727, %v728
      %v730 = vadd.f32 %v729, %v532
      %v731 = vadd.f32 %v729, %v535
      %v732 = vadd.f32 %v729, %v540
      %v733 = vadd.f32 %v729, %v543
      %v734 = vadd.f32 %v729, %v548
      %v735 = vadd.f32 %v729, %v551
      %v736 = vadd.f32 %v729, %v556
      %v737 = vadd.f32 %v729, %v559
      %v738 = vadd.f32 %v729, %v564
      %v739 = vadd.f32 %v729, %v567
      %v740 = vadd.f32 %v729, %v572
      %v741 = vadd.f32 %v729, %v575
      %v742 = vadd.f32 %v729, %v580
      %v743 = vadd.f32 %v729, %v583
      %v744 = vadd.f32 %v729, %v588
      %v745 = vadd.f32 %v729, %v591
      %v746 = vadd.f32 %v729, %v596
      %v747 = vadd.f32 %v729, %v599
      %v748 = vadd.f32 %v729, %v604
      %v749 = vadd.f32 %v729, %v607
      %v750 = vadd.f32 %v729, %v612
      %v751 = vadd.f32 %v729, %v615
      %v752 = vadd.f32 %v729, %v620
      %v753 = vadd.f32 %v729, %v623
      %v754 = vadd.f32 %v729, %v628
      %v755 = vadd.f32 %v729, %v631
      %v756 = vadd.f32 %v729, %v636
      %v757 = vadd.f32 %v729, %v639
      %v758 = vadd.f32 %v729, %v644
      %v759 = vadd.f32 %v729, %v647
      %v760 = vadd.f32 %v729, %v652
      %v761 = vadd.f32 %v729, %v655
      %v762 = vld [vmem:[%s3] sm:$0x1]
      %v764 = vlaneseq
      %v765 = vshrl.u32 %v764, 7
      %v766 = vsub.s32 0, %v765
      %v767 = vrot.slane %v762, %v766
      %v769 = vmul.f32 %v730, %v767
      %v770 = vmul.f32 %v731, %v767
      %v771 = vmul.f32 %v732, %v767
      %v772 = vmul.f32 %v733, %v767
      %v773 = vmul.f32 %v734, %v767
      %v774 = vmul.f32 %v735, %v767
      %v775 = vmul.f32 %v736, %v767
      %v776 = vmul.f32 %v737, %v767
      %v777 = vmul.f32 %v738, %v767
      %v778 = vmul.f32 %v739, %v767
      %v779 = vmul.f32 %v740, %v767
      %v780 = vmul.f32 %v741, %v767
      %v781 = vmul.f32 %v742, %v767
      %v782 = vmul.f32 %v743, %v767
      %v783 = vmul.f32 %v744, %v767
      %v784 = vmul.f32 %v745, %v767
      %v785 = vmul.f32 %v746, %v767
      %v786 = vmul.f32 %v747, %v767
      %v787 = vmul.f32 %v748, %v767
      %v788 = vmul.f32 %v749, %v767
      %v789 = vmul.f32 %v750, %v767
      %v790 = vmul.f32 %v751, %v767
      %v791 = vmul.f32 %v752, %v767
      %v792 = vmul.f32 %v753, %v767
      %v793 = vmul.f32 %v754, %v767
      %v794 = vmul.f32 %v755, %v767
      %v795 = vmul.f32 %v756, %v767
      %v796 = vmul.f32 %v757, %v767
      %v797 = vmul.f32 %v758, %v767
      %v798 = vmul.f32 %v759, %v767
      %v799 = vmul.f32 %v760, %v767
      %v800 = vmul.f32 %v761, %v767
      %v801 = vsel %vm658, %v769, 0.0
      %802 = vadd.xlane.f32.xlu0 %v801
      %v803 = vpop.xlane.xlu0 %802
      %v804 = vsel %vm658, %v770, 0.0
      %805 = vadd.xlane.f32.xlu0 %v804
      %v806 = vpop.xlane.xlu0 %805
      %v807 = vsel %vm658, %v771, 0.0
      %808 = vadd.xlane.f32.xlu0 %v807
      %v809 = vpop.xlane.xlu0 %808
      %v810 = vsel %vm658, %v772, 0.0
      %811 = vadd.xlane.f32.xlu0 %v810
      %v812 = vpop.xlane.xlu0 %811
      %v813 = vsel %vm658, %v773, 0.0
      %814 = vadd.xlane.f32.xlu0 %v813
      %v815 = vpop.xlane.xlu0 %814
      %v816 = vsel %vm658, %v774, 0.0
      %817 = vadd.xlane.f32.xlu0 %v816
      %v818 = vpop.xlane.xlu0 %817
      %v819 = vsel %vm658, %v775, 0.0
      %820 = vadd.xlane.f32.xlu0 %v819
      %v821 = vpop.xlane.xlu0 %820
      %v822 = vsel %vm658, %v776, 0.0
      %823 = vadd.xlane.f32.xlu0 %v822
      %v824 = vpop.xlane.xlu0 %823
      %v825 = vsel %vm658, %v777, 0.0
      %826 = vadd.xlane.f32.xlu0 %v825
      %v827 = vpop.xlane.xlu0 %826
      %v828 = vsel %vm658, %v778, 0.0
      %829 = vadd.xlane.f32.xlu0 %v828
      %v830 = vpop.xlane.xlu0 %829
      %v831 = vsel %vm658, %v779, 0.0
      %832 = vadd.xlane.f32.xlu0 %v831
      %v833 = vpop.xlane.xlu0 %832
      %v834 = vsel %vm658, %v780, 0.0
      %835 = vadd.xlane.f32.xlu0 %v834
      %v836 = vpop.xlane.xlu0 %835
      %v837 = vsel %vm658, %v781, 0.0
      %838 = vadd.xlane.f32.xlu0 %v837
      %v839 = vpop.xlane.xlu0 %838
      %v840 = vsel %vm658, %v782, 0.0
      %841 = vadd.xlane.f32.xlu0 %v840
      %v842 = vpop.xlane.xlu0 %841
      %v843 = vsel %vm658, %v783, 0.0
      %844 = vadd.xlane.f32.xlu0 %v843
      %v845 = vpop.xlane.xlu0 %844
      %v846 = vsel %vm658, %v784, 0.0
      %847 = vadd.xlane.f32.xlu0 %v846
      %v848 = vpop.xlane.xlu0 %847
      %v849 = vsel %vm658, %v785, 0.0
      %850 = vadd.xlane.f32.xlu0 %v849
      %v851 = vpop.xlane.xlu0 %850
      %v852 = vsel %vm658, %v786, 0.0
      %853 = vadd.xlane.f32.xlu0 %v852
      %v854 = vpop.xlane.xlu0 %853
      %v855 = vsel %vm658, %v787, 0.0
      %856 = vadd.xlane.f32.xlu0 %v855
      %v857 = vpop.xlane.xlu0 %856
      %v858 = vsel %vm658, %v788, 0.0
      %859 = vadd.xlane.f32.xlu0 %v858
      %v860 = vpop.xlane.xlu0 %859
      %v861 = vsel %vm658, %v789, 0.0
      %862 = vadd.xlane.f32.xlu0 %v861
      %v863 = vpop.xlane.xlu0 %862
      %v864 = vsel %vm658, %v790, 0.0
      %865 = vadd.xlane.f32.xlu0 %v864
      %v866 = vpop.xlane.xlu0 %865
      %v867 = vsel %vm658, %v791, 0.0
      %868 = vadd.xlane.f32.xlu0 %v867
      %v869 = vpop.xlane.xlu0 %868
      %v870 = vsel %vm658, %v792, 0.0
      %871 = vadd.xlane.f32.xlu0 %v870
      %v872 = vpop.xlane.xlu0 %871
      %v873 = vsel %vm658, %v793, 0.0
      %874 = vadd.xlane.f32.xlu0 %v873
      %v875 = vpop.xlane.xlu0 %874
      %v876 = vsel %vm658, %v794, 0.0
      %877 = vadd.xlane.f32.xlu0 %v876
      %v878 = vpop.xlane.xlu0 %877
      %v879 = vsel %vm658, %v795, 0.0
      %880 = vadd.xlane.f32.xlu0 %v879
      %v881 = vpop.xlane.xlu0 %880
      %v882 = vsel %vm658, %v796, 0.0
      %883 = vadd.xlane.f32.xlu0 %v882
      %v884 = vpop.xlane.xlu0 %883
      %v885 = vsel %vm658, %v797, 0.0
      %886 = vadd.xlane.f32.xlu0 %v885
      %v887 = vpop.xlane.xlu0 %886
      %v888 = vsel %vm658, %v798, 0.0
      %889 = vadd.xlane.f32.xlu0 %v888
      %v890 = vpop.xlane.xlu0 %889
      %v891 = vsel %vm658, %v799, 0.0
      %892 = vadd.xlane.f32.xlu0 %v891
      %v893 = vpop.xlane.xlu0 %892
      %v894 = vsel %vm658, %v800, 0.0
      %895 = vadd.xlane.f32.xlu0 %v894
      %v896 = vpop.xlane.xlu0 %895
      %v897 = vxor.u32 %v803, 2147483648
      %v898 = vxor.u32 %v806, 2147483648
      %v899 = vxor.u32 %v809, 2147483648
      %v900 = vxor.u32 %v812, 2147483648
      %v901 = vxor.u32 %v815, 2147483648
      %v902 = vxor.u32 %v818, 2147483648
      %v903 = vxor.u32 %v821, 2147483648
      %v904 = vxor.u32 %v824, 2147483648
      %v905 = vxor.u32 %v827, 2147483648
      %v906 = vxor.u32 %v830, 2147483648
      %v907 = vxor.u32 %v833, 2147483648
      %v908 = vxor.u32 %v836, 2147483648
      %v909 = vxor.u32 %v839, 2147483648
      %v910 = vxor.u32 %v842, 2147483648
      %v911 = vxor.u32 %v845, 2147483648
      %v912 = vxor.u32 %v848, 2147483648
      %v913 = vxor.u32 %v851, 2147483648
      %v914 = vxor.u32 %v854, 2147483648
      %v915 = vxor.u32 %v857, 2147483648
      %v916 = vxor.u32 %v860, 2147483648
      %v917 = vxor.u32 %v863, 2147483648
      %v918 = vxor.u32 %v866, 2147483648
      %v919 = vxor.u32 %v869, 2147483648
      %v920 = vxor.u32 %v872, 2147483648
      %v921 = vxor.u32 %v875, 2147483648
      %v922 = vxor.u32 %v878, 2147483648
      %v923 = vxor.u32 %v881, 2147483648
      %v924 = vxor.u32 %v884, 2147483648
      %v925 = vxor.u32 %v887, 2147483648
      %v926 = vxor.u32 %v890, 2147483648
      %v927 = vxor.u32 %v893, 2147483648
      %v928 = vxor.u32 %v896, 2147483648
      %v929 = vmul.f32 %v897, 1.442695
      %v930 = vpow.pop %v929
      %v931 = vmul.f32 %v898, 1.442695
      %v932 = vpow.pop %v931
      %v933 = vmul.f32 %v899, 1.442695
      %v934 = vpow.pop %v933
      %v935 = vmul.f32 %v900, 1.442695
      %v936 = vpow.pop %v935
      %v937 = vmul.f32 %v901, 1.442695
      %v938 = vpow.pop %v937
      %v939 = vmul.f32 %v902, 1.442695
      %v940 = vpow.pop %v939
      %v941 = vmul.f32 %v903, 1.442695
      %v942 = vpow.pop %v941
      %v943 = vmul.f32 %v904, 1.442695
      %v944 = vpow.pop %v943
      %v945 = vmul.f32 %v905, 1.442695
      %v946 = vpow.pop %v945
      %v947 = vmul.f32 %v906, 1.442695
      %v948 = vpow.pop %v947
      %v949 = vmul.f32 %v907, 1.442695
      %v950 = vpow.pop %v949
      %v951 = vmul.f32 %v908, 1.442695
      %v952 = vpow.pop %v951
      %v953 = vmul.f32 %v909, 1.442695
      %v954 = vpow.pop %v953
      %v955 = vmul.f32 %v910, 1.442695
      %v956 = vpow.pop %v955
      %v957 = vmul.f32 %v911, 1.442695
      %v958 = vpow.pop %v957
      %v959 = vmul.f32 %v912, 1.442695
      %v960 = vpow.pop %v959
      %v961 = vmul.f32 %v913, 1.442695
      %v962 = vpow.pop %v961
      %v963 = vmul.f32 %v914, 1.442695
      %v964 = vpow.pop %v963
      %v965 = vmul.f32 %v915, 1.442695
      %v966 = vpow.pop %v965
      %v967 = vmul.f32 %v916, 1.442695
      %v968 = vpow.pop %v967
      %v969 = vmul.f32 %v917, 1.442695
      %v970 = vpow.pop %v969
      %v971 = vmul.f32 %v918, 1.442695
      %v972 = vpow.pop %v971
      %v973 = vmul.f32 %v919, 1.442695
      %v974 = vpow.pop %v973
      %v975 = vmul.f32 %v920, 1.442695
      %v976 = vpow.pop %v975
      %v977 = vmul.f32 %v921, 1.442695
      %v978 = vpow.pop %v977
      %v979 = vmul.f32 %v922, 1.442695
      %v980 = vpow.pop %v979
      %v981 = vmul.f32 %v923, 1.442695
      %v982 = vpow.pop %v981
      %v983 = vmul.f32 %v924, 1.442695
      %v984 = vpow.pop %v983
      %v985 = vmul.f32 %v925, 1.442695
      %v986 = vpow.pop %v985
      %v987 = vmul.f32 %v926, 1.442695
      %v988 = vpow.pop %v987
      %v989 = vmul.f32 %v927, 1.442695
      %v990 = vpow.pop %v989
      %v991 = vmul.f32 %v928, 1.442695
      %v992 = vpow.pop %v991
      %v993 = vadd.f32 %v930, 1.0
      %v994 = vadd.f32 %v932, 1.0
      %v995 = vadd.f32 %v934, 1.0
      %v996 = vadd.f32 %v936, 1.0
      %v997 = vadd.f32 %v938, 1.0
      %v998 = vadd.f32 %v940, 1.0
      %v999 = vadd.f32 %v942, 1.0
      %v1000 = vadd.f32 %v944, 1.0
      %v1001 = vadd.f32 %v946, 1.0
      %v1002 = vadd.f32 %v948, 1.0
      %v1003 = vadd.f32 %v950, 1.0
      %v1004 = vadd.f32 %v952, 1.0
      %v1005 = vadd.f32 %v954, 1.0
      %v1006 = vadd.f32 %v956, 1.0
      %v1007 = vadd.f32 %v958, 1.0
      %v1008 = vadd.f32 %v960, 1.0
      %v1009 = vadd.f32 %v962, 1.0
      %v1010 = vadd.f32 %v964, 1.0
      %v1011 = vadd.f32 %v966, 1.0
      %v1012 = vadd.f32 %v968, 1.0
      %v1013 = vadd.f32 %v970, 1.0
      %v1014 = vadd.f32 %v972, 1.0
      %v1015 = vadd.f32 %v974, 1.0
      %v1016 = vadd.f32 %v976, 1.0
      %v1017 = vadd.f32 %v978, 1.0
      %v1018 = vadd.f32 %v980, 1.0
      %v1019 = vadd.f32 %v982, 1.0
      %v1020 = vadd.f32 %v984, 1.0
      %v1021 = vadd.f32 %v986, 1.0
      %v1022 = vadd.f32 %v988, 1.0
      %v1023 = vadd.f32 %v990, 1.0
      %v1024 = vadd.f32 %v992, 1.0
      %v1025 = vrcp.pop %v993
      %v1026 = vmul.f32 1.0, %v1025
      %v1027 = vrcp.pop %v994
      %v1028 = vmul.f32 1.0, %v1027
      %v1029 = vrcp.pop %v995
      %v1030 = vmul.f32 1.0, %v1029
      %v1031 = vrcp.pop %v996
      %v1032 = vmul.f32 1.0, %v1031
      %v1033 = vrcp.pop %v997
      %v1034 = vmul.f32 1.0, %v1033
      %v1035 = vrcp.pop %v998
      %v1036 = vmul.f32 1.0, %v1035
      %v1037 = vrcp.pop %v999
      %v1038 = vmul.f32 1.0, %v1037
      %v1039 = vrcp.pop %v1000
      %v1040 = vmul.f32 1.0, %v1039
      %v1041 = vrcp.pop %v1001
      %v1042 = vmul.f32 1.0, %v1041
      %v1043 = vrcp.pop %v1002
      %v1044 = vmul.f32 1.0, %v1043
      %v1045 = vrcp.pop %v1003
      %v1046 = vmul.f32 1.0, %v1045
      %v1047 = vrcp.pop %v1004
      %v1048 = vmul.f32 1.0, %v1047
      %v1049 = vrcp.pop %v1005
      %v1050 = vmul.f32 1.0, %v1049
      %v1051 = vrcp.pop %v1006
      %v1052 = vmul.f32 1.0, %v1051
      %v1053 = vrcp.pop %v1007
      %v1054 = vmul.f32 1.0, %v1053
      %v1055 = vrcp.pop %v1008
      %v1056 = vmul.f32 1.0, %v1055
      %v1057 = vrcp.pop %v1009
      %v1058 = vmul.f32 1.0, %v1057
      %v1059 = vrcp.pop %v1010
      %v1060 = vmul.f32 1.0, %v1059
      %v1061 = vrcp.pop %v1011
      %v1062 = vmul.f32 1.0, %v1061
      %v1063 = vrcp.pop %v1012
      %v1064 = vmul.f32 1.0, %v1063
      %v1065 = vrcp.pop %v1013
      %v1066 = vmul.f32 1.0, %v1065
      %v1067 = vrcp.pop %v1014
      %v1068 = vmul.f32 1.0, %v1067
      %v1069 = vrcp.pop %v1015
      %v1070 = vmul.f32 1.0, %v1069
      %v1071 = vrcp.pop %v1016
      %v1072 = vmul.f32 1.0, %v1071
      %v1073 = vrcp.pop %v1017
      %v1074 = vmul.f32 1.0, %v1073
      %v1075 = vrcp.pop %v1018
      %v1076 = vmul.f32 1.0, %v1075
      %v1077 = vrcp.pop %v1019
      %v1078 = vmul.f32 1.0, %v1077
      %v1079 = vrcp.pop %v1020
      %v1080 = vmul.f32 1.0, %v1079
      %v1081 = vrcp.pop %v1021
      %v1082 = vmul.f32 1.0, %v1081
      %v1083 = vrcp.pop %v1022
      %v1084 = vmul.f32 1.0, %v1083
      %v1085 = vrcp.pop %v1023
      %v1086 = vmul.f32 1.0, %v1085
      %v1087 = vrcp.pop %v1024
      %v1088 = vmul.f32 1.0, %v1087
      %v1089 = vmul.f32 %v1026, %v532
      %v1090 = vmul.f32 %v1028, %v535
      %v1091 = vmul.f32 %v1030, %v540
      %v1092 = vmul.f32 %v1032, %v543
      %v1093 = vmul.f32 %v1034, %v548
      %v1094 = vmul.f32 %v1036, %v551
      %v1095 = vmul.f32 %v1038, %v556
      %v1096 = vmul.f32 %v1040, %v559
      %v1097 = vmul.f32 %v1042, %v564
      %v1098 = vmul.f32 %v1044, %v567
      %v1099 = vmul.f32 %v1046, %v572
      %v1100 = vmul.f32 %v1048, %v575
      %v1101 = vmul.f32 %v1050, %v580
      %v1102 = vmul.f32 %v1052, %v583
      %v1103 = vmul.f32 %v1054, %v588
      %v1104 = vmul.f32 %v1056, %v591
      %v1105 = vmul.f32 %v1058, %v596
      %v1106 = vmul.f32 %v1060, %v599
      %v1107 = vmul.f32 %v1062, %v604
      %v1108 = vmul.f32 %v1064, %v607
      %v1109 = vmul.f32 %v1066, %v612
      %v1110 = vmul.f32 %v1068, %v615
      %v1111 = vmul.f32 %v1070, %v620
      %v1112 = vmul.f32 %v1072, %v623
      %v1113 = vmul.f32 %v1074, %v628
      %v1114 = vmul.f32 %v1076, %v631
      %v1115 = vmul.f32 %v1078, %v636
      %v1116 = vmul.f32 %v1080, %v639
      %v1117 = vmul.f32 %v1082, %v644
      %v1118 = vmul.f32 %v1084, %v647
      %v1119 = vmul.f32 %v1086, %v652
      %v1120 = vmul.f32 %v1088, %v655
      %v1121 = vadd.f32 %v1089, %v532
      %v1122 = vadd.f32 %v1090, %v535
      %v1123 = vadd.f32 %v1091, %v540
      %v1124 = vadd.f32 %v1092, %v543
      %v1125 = vadd.f32 %v1093, %v548
      %v1126 = vadd.f32 %v1094, %v551
      %v1127 = vadd.f32 %v1095, %v556
      %v1128 = vadd.f32 %v1096, %v559
      %v1129 = vadd.f32 %v1097, %v564
      %v1130 = vadd.f32 %v1098, %v567
      %v1131 = vadd.f32 %v1099, %v572
      %v1132 = vadd.f32 %v1100, %v575
      %v1133 = vadd.f32 %v1101, %v580
      %v1134 = vadd.f32 %v1102, %v583
      %v1135 = vadd.f32 %v1103, %v588
      %v1136 = vadd.f32 %v1104, %v591
      %v1137 = vadd.f32 %v1105, %v596
      %v1138 = vadd.f32 %v1106, %v599
      %v1139 = vadd.f32 %v1107, %v604
      %v1140 = vadd.f32 %v1108, %v607
      %v1141 = vadd.f32 %v1109, %v612
      %v1142 = vadd.f32 %v1110, %v615
      %v1143 = vadd.f32 %v1111, %v620
      %v1144 = vadd.f32 %v1112, %v623
      %v1145 = vadd.f32 %v1113, %v628
      %v1146 = vadd.f32 %v1114, %v631
      %v1147 = vadd.f32 %v1115, %v636
      %v1148 = vadd.f32 %v1116, %v639
      %v1149 = vadd.f32 %v1117, %v644
      %v1150 = vadd.f32 %v1118, %v647
      %v1151 = vadd.f32 %v1119, %v652
      %v1152 = vadd.f32 %v1120, %v655
      %v1153 = vlaneseq
      %v1154 = vshrl.u32 %v1153, 7
      %v1155 = vadd.s32 %v1154, 8
      %v1156 = vadd.s32 %v1154, 16
      %v1157 = vadd.s32 %v1154, 24
      %v1158 = vadd.s32 %v1154, 32
      %v1159 = vadd.s32 %v1154, 40
      %v1160 = vadd.s32 %v1154, 48
      %v1161 = vadd.s32 %v1154, 56
      %v1162 = vadd.s32 %v1154, 64
      %v1163 = vadd.s32 %v1154, 72
      %v1164 = vadd.s32 %v1154, 80
      %v1165 = vadd.s32 %v1154, 88
      %v1166 = vadd.s32 %v1154, 96
      %v1167 = vadd.s32 %v1154, 104
      %v1168 = vadd.s32 %v1154, 112
      %v1169 = vadd.s32 %v1154, 120
      %v1170 = vadd.s32 %v1154, 128
      %v1171 = vadd.s32 %v1154, 136
      %v1172 = vadd.s32 %v1154, 144
      %v1173 = vadd.s32 %v1154, 152
      %v1174 = vadd.s32 %v1154, 160
      %v1175 = vadd.s32 %v1154, 168
      %v1176 = vadd.s32 %v1154, 176
      %v1177 = vadd.s32 %v1154, 184
      %v1178 = vadd.s32 %v1154, 192
      %v1179 = vadd.s32 %v1154, 200
      %v1180 = vadd.s32 %v1154, 208
      %v1181 = vadd.s32 %v1154, 216
      %v1182 = vadd.s32 %v1154, 224
      %v1183 = vadd.s32 %v1154, 232
      %v1184 = vadd.s32 %v1154, 240
      %v1185 = vadd.s32 %v1154, 248
      %vm1186 = vcmp.lt.s32.totalorder %v1154, 0
      %v1187 = vsub.s32 0, %v1154
      %v1188 = vsel %vm1186, %v1187, %v1154
      %v1189 = vshrl.u32 %v1188, 4
      %v1190 = vand.u32 %v1188, 15
      %v1191 = vsub.s32 0, %v1190
      %v1192 = vsel %vm1186, %v1191, %v1190
      %vm1193 = vcmp.lt.s32.totalorder %v1155, 0
      %v1194 = vsub.s32 0, %v1155
      %v1195 = vsel %vm1193, %v1194, %v1155
      %v1196 = vshrl.u32 %v1195, 4
      %v1197 = vand.u32 %v1195, 15
      %v1198 = vsub.s32 0, %v1197
      %v1199 = vsel %vm1193, %v1198, %v1197
      %vm1200 = vcmp.lt.s32.totalorder %v1156, 0
      %v1201 = vsub.s32 0, %v1156
      %v1202 = vsel %vm1200, %v1201, %v1156
      %v1203 = vshrl.u32 %v1202, 4
      %v1204 = vand.u32 %v1202, 15
      %v1205 = vsub.s32 0, %v1204
      %v1206 = vsel %vm1200, %v1205, %v1204
      %vm1207 = vcmp.lt.s32.totalorder %v1157, 0
      %v1208 = vsub.s32 0, %v1157
      %v1209 = vsel %vm1207, %v1208, %v1157
      %v1210 = vshrl.u32 %v1209, 4
      %v1211 = vand.u32 %v1209, 15
      %v1212 = vsub.s32 0, %v1211
      %v1213 = vsel %vm1207, %v1212, %v1211
      %vm1214 = vcmp.lt.s32.totalorder %v1158, 0
      %v1215 = vsub.s32 0, %v1158
      %v1216 = vsel %vm1214, %v1215, %v1158
      %v1217 = vshrl.u32 %v1216, 4
      %v1218 = vand.u32 %v1216, 15
      %v1219 = vsub.s32 0, %v1218
      %v1220 = vsel %vm1214, %v1219, %v1218
      %vm1221 = vcmp.lt.s32.totalorder %v1159, 0
      %v1222 = vsub.s32 0, %v1159
      %v1223 = vsel %vm1221, %v1222, %v1159
      %v1224 = vshrl.u32 %v1223, 4
      %v1225 = vand.u32 %v1223, 15
      %v1226 = vsub.s32 0, %v1225
      %v1227 = vsel %vm1221, %v1226, %v1225
      %vm1228 = vcmp.lt.s32.totalorder %v1160, 0
      %v1229 = vsub.s32 0, %v1160
      %v1230 = vsel %vm1228, %v1229, %v1160
      %v1231 = vshrl.u32 %v1230, 4
      %v1232 = vand.u32 %v1230, 15
      %v1233 = vsub.s32 0, %v1232
      %v1234 = vsel %vm1228, %v1233, %v1232
      %vm1235 = vcmp.lt.s32.totalorder %v1161, 0
      %v1236 = vsub.s32 0, %v1161
      %v1237 = vsel %vm1235, %v1236, %v1161
      %v1238 = vshrl.u32 %v1237, 4
      %v1239 = vand.u32 %v1237, 15
      %v1240 = vsub.s32 0, %v1239
      %v1241 = vsel %vm1235, %v1240, %v1239
      %vm1242 = vcmp.lt.s32.totalorder %v1162, 0
      %v1243 = vsub.s32 0, %v1162
      %v1244 = vsel %vm1242, %v1243, %v1162
      %v1245 = vshrl.u32 %v1244, 4
      %v1246 = vand.u32 %v1244, 15
      %v1247 = vsub.s32 0, %v1246
      %v1248 = vsel %vm1242, %v1247, %v1246
      %vm1249 = vcmp.lt.s32.totalorder %v1163, 0
      %v1250 = vsub.s32 0, %v1163
      %v1251 = vsel %vm1249, %v1250, %v1163
      %v1252 = vshrl.u32 %v1251, 4
      %v1253 = vand.u32 %v1251, 15
      %v1254 = vsub.s32 0, %v1253
      %v1255 = vsel %vm1249, %v1254, %v1253
      %vm1256 = vcmp.lt.s32.totalorder %v1164, 0
      %v1257 = vsub.s32 0, %v1164
      %v1258 = vsel %vm1256, %v1257, %v1164
      %v1259 = vshrl.u32 %v1258, 4
      %v1260 = vand.u32 %v1258, 15
      %v1261 = vsub.s32 0, %v1260
      %v1262 = vsel %vm1256, %v1261, %v1260
      %vm1263 = vcmp.lt.s32.totalorder %v1165, 0
      %v1264 = vsub.s32 0, %v1165
      %v1265 = vsel %vm1263, %v1264, %v1165
      %v1266 = vshrl.u32 %v1265, 4
      %v1267 = vand.u32 %v1265, 15
      %v1268 = vsub.s32 0, %v1267
      %v1269 = vsel %vm1263, %v1268, %v1267
      %vm1270 = vcmp.lt.s32.totalorder %v1166, 0
      %v1271 = vsub.s32 0, %v1166
      %v1272 = vsel %vm1270, %v1271, %v1166
      %v1273 = vshrl.u32 %v1272, 4
      %v1274 = vand.u32 %v1272, 15
      %v1275 = vsub.s32 0, %v1274
      %v1276 = vsel %vm1270, %v1275, %v1274
      %vm1277 = vcmp.lt.s32.totalorder %v1167, 0
      %v1278 = vsub.s32 0, %v1167
      %v1279 = vsel %vm1277, %v1278, %v1167
      %v1280 = vshrl.u32 %v1279, 4
      %v1281 = vand.u32 %v1279, 15
      %v1282 = vsub.s32 0, %v1281
      %v1283 = vsel %vm1277, %v1282, %v1281
      %vm1284 = vcmp.lt.s32.totalorder %v1168, 0
      %v1285 = vsub.s32 0, %v1168
      %v1286 = vsel %vm1284, %v1285, %v1168
      %v1287 = vshrl.u32 %v1286, 4
      %v1288 = vand.u32 %v1286, 15
      %v1289 = vsub.s32 0, %v1288
      %v1290 = vsel %vm1284, %v1289, %v1288
      %vm1291 = vcmp.lt.s32.totalorder %v1169, 0
      %v1292 = vsub.s32 0, %v1169
      %v1293 = vsel %vm1291, %v1292, %v1169
      %v1294 = vshrl.u32 %v1293, 4
      %v1295 = vand.u32 %v1293, 15
      %v1296 = vsub.s32 0, %v1295
      %v1297 = vsel %vm1291, %v1296, %v1295
      %vm1298 = vcmp.lt.s32.totalorder %v1170, 0
      %v1299 = vsub.s32 0, %v1170
      %v1300 = vsel %vm1298, %v1299, %v1170
      %v1301 = vshrl.u32 %v1300, 4
      %v1302 = vand.u32 %v1300, 15
      %v1303 = vsub.s32 0, %v1302
      %v1304 = vsel %vm1298, %v1303, %v1302
      %vm1305 = vcmp.lt.s32.totalorder %v1171, 0
      %v1306 = vsub.s32 0, %v1171
      %v1307 = vsel %vm1305, %v1306, %v1171
      %v1308 = vshrl.u32 %v1307, 4
      %v1309 = vand.u32 %v1307, 15
      %v1310 = vsub.s32 0, %v1309
      %v1311 = vsel %vm1305, %v1310, %v1309
      %vm1312 = vcmp.lt.s32.totalorder %v1172, 0
      %v1313 = vsub.s32 0, %v1172
      %v1314 = vsel %vm1312, %v1313, %v1172
      %v1315 = vshrl.u32 %v1314, 4
      %v1316 = vand.u32 %v1314, 15
      %v1317 = vsub.s32 0, %v1316
      %v1318 = vsel %vm1312, %v1317, %v1316
      %vm1319 = vcmp.lt.s32.totalorder %v1173, 0
      %v1320 = vsub.s32 0, %v1173
      %v1321 = vsel %vm1319, %v1320, %v1173
      %v1322 = vshrl.u32 %v1321, 4
      %v1323 = vand.u32 %v1321, 15
      %v1324 = vsub.s32 0, %v1323
      %v1325 = vsel %vm1319, %v1324, %v1323
      %vm1326 = vcmp.lt.s32.totalorder %v1174, 0
      %v1327 = vsub.s32 0, %v1174
      %v1328 = vsel %vm1326, %v1327, %v1174
      %v1329 = vshrl.u32 %v1328, 4
      %v1330 = vand.u32 %v1328, 15
      %v1331 = vsub.s32 0, %v1330
      %v1332 = vsel %vm1326, %v1331, %v1330
      %vm1333 = vcmp.lt.s32.totalorder %v1175, 0
      %v1334 = vsub.s32 0, %v1175
      %v1335 = vsel %vm1333, %v1334, %v1175
      %v1336 = vshrl.u32 %v1335, 4
      %v1337 = vand.u32 %v1335, 15
      %v1338 = vsub.s32 0, %v1337
      %v1339 = vsel %vm1333, %v1338, %v1337
      %vm1340 = vcmp.lt.s32.totalorder %v1176, 0
      %v1341 = vsub.s32 0, %v1176
      %v1342 = vsel %vm1340, %v1341, %v1176
      %v1343 = vshrl.u32 %v1342, 4
      %v1344 = vand.u32 %v1342, 15
      %v1345 = vsub.s32 0, %v1344
      %v1346 = vsel %vm1340, %v1345, %v1344
      %vm1347 = vcmp.lt.s32.totalorder %v1177, 0
      %v1348 = vsub.s32 0, %v1177
      %v1349 = vsel %vm1347, %v1348, %v1177
      %v1350 = vshrl.u32 %v1349, 4
      %v1351 = vand.u32 %v1349, 15
      %v1352 = vsub.s32 0, %v1351
      %v1353 = vsel %vm1347, %v1352, %v1351
      %vm1354 = vcmp.lt.s32.totalorder %v1178, 0
      %v1355 = vsub.s32 0, %v1178
      %v1356 = vsel %vm1354, %v1355, %v1178
      %v1357 = vshrl.u32 %v1356, 4
      %v1358 = vand.u32 %v1356, 15
      %v1359 = vsub.s32 0, %v1358
      %v1360 = vsel %vm1354, %v1359, %v1358
      %vm1361 = vcmp.lt.s32.totalorder %v1179, 0
      %v1362 = vsub.s32 0, %v1179
      %v1363 = vsel %vm1361, %v1362, %v1179
      %v1364 = vshrl.u32 %v1363, 4
      %v1365 = vand.u32 %v1363, 15
      %v1366 = vsub.s32 0, %v1365
      %v1367 = vsel %vm1361, %v1366, %v1365
      %vm1368 = vcmp.lt.s32.totalorder %v1180, 0
      %v1369 = vsub.s32 0, %v1180
      %v1370 = vsel %vm1368, %v1369, %v1180
      %v1371 = vshrl.u32 %v1370, 4
      %v1372 = vand.u32 %v1370, 15
      %v1373 = vsub.s32 0, %v1372
      %v1374 = vsel %vm1368, %v1373, %v1372
      %vm1375 = vcmp.lt.s32.totalorder %v1181, 0
      %v1376 = vsub.s32 0, %v1181
      %v1377 = vsel %vm1375, %v1376, %v1181
      %v1378 = vshrl.u32 %v1377, 4
      %v1379 = vand.u32 %v1377, 15
      %v1380 = vsub.s32 0, %v1379
      %v1381 = vsel %vm1375, %v1380, %v1379
      %vm1382 = vcmp.lt.s32.totalorder %v1182, 0
      %v1383 = vsub.s32 0, %v1182
      %v1384 = vsel %vm1382, %v1383, %v1182
      %v1385 = vshrl.u32 %v1384, 4
      %v1386 = vand.u32 %v1384, 15
      %v1387 = vsub.s32 0, %v1386
      %v1388 = vsel %vm1382, %v1387, %v1386
      %vm1389 = vcmp.lt.s32.totalorder %v1183, 0
      %v1390 = vsub.s32 0, %v1183
      %v1391 = vsel %vm1389, %v1390, %v1183
      %v1392 = vshrl.u32 %v1391, 4
      %v1393 = vand.u32 %v1391, 15
      %v1394 = vsub.s32 0, %v1393
      %v1395 = vsel %vm1389, %v1394, %v1393
      %vm1396 = vcmp.lt.s32.totalorder %v1184, 0
      %v1397 = vsub.s32 0, %v1184
      %v1398 = vsel %vm1396, %v1397, %v1184
      %v1399 = vshrl.u32 %v1398, 4
      %v1400 = vand.u32 %v1398, 15
      %v1401 = vsub.s32 0, %v1400
      %v1402 = vsel %vm1396, %v1401, %v1400
      %vm1403 = vcmp.lt.s32.totalorder %v1185, 0
      %v1404 = vsub.s32 0, %v1185
      %v1405 = vsel %vm1403, %v1404, %v1185
      %v1406 = vshrl.u32 %v1405, 4
      %v1407 = vand.u32 %v1405, 15
      %v1408 = vsub.s32 0, %v1407
      %v1409 = vsel %vm1403, %v1408, %v1407
      %vm1410 = vcmp.ne.s32.totalorder %v1192, 0
      %vm1411 = vcmp.ne.s32.totalorder %v1199, 0
      %vm1412 = vcmp.ne.s32.totalorder %v1206, 0
      %vm1413 = vcmp.ne.s32.totalorder %v1213, 0
      %vm1414 = vcmp.ne.s32.totalorder %v1220, 0
      %vm1415 = vcmp.ne.s32.totalorder %v1227, 0
      %vm1416 = vcmp.ne.s32.totalorder %v1234, 0
      %vm1417 = vcmp.ne.s32.totalorder %v1241, 0
      %vm1418 = vcmp.ne.s32.totalorder %v1248, 0
      %vm1419 = vcmp.ne.s32.totalorder %v1255, 0
      %vm1420 = vcmp.ne.s32.totalorder %v1262, 0
      %vm1421 = vcmp.ne.s32.totalorder %v1269, 0
      %vm1422 = vcmp.ne.s32.totalorder %v1276, 0
      %vm1423 = vcmp.ne.s32.totalorder %v1283, 0
      %vm1424 = vcmp.ne.s32.totalorder %v1290, 0
      %vm1425 = vcmp.ne.s32.totalorder %v1297, 0
      %vm1426 = vcmp.ne.s32.totalorder %v1304, 0
      %vm1427 = vcmp.ne.s32.totalorder %v1311, 0
      %vm1428 = vcmp.ne.s32.totalorder %v1318, 0
      %vm1429 = vcmp.ne.s32.totalorder %v1325, 0
      %vm1430 = vcmp.ne.s32.totalorder %v1332, 0
      %vm1431 = vcmp.ne.s32.totalorder %v1339, 0
      %vm1432 = vcmp.ne.s32.totalorder %v1346, 0
      %vm1433 = vcmp.ne.s32.totalorder %v1353, 0
      %vm1434 = vcmp.ne.s32.totalorder %v1360, 0
      %vm1435 = vcmp.ne.s32.totalorder %v1367, 0
      %vm1436 = vcmp.ne.s32.totalorder %v1374, 0
      %vm1437 = vcmp.ne.s32.totalorder %v1381, 0
      %vm1438 = vcmp.ne.s32.totalorder %v1388, 0
      %vm1439 = vcmp.ne.s32.totalorder %v1395, 0
      %vm1440 = vcmp.ne.s32.totalorder %v1402, 0
      %vm1441 = vcmp.ne.s32.totalorder %v1409, 0
      %vm1442 = vcmp.lt.s32.totalorder %v1192, 0
      %vm1443 = vcmp.lt.s32.totalorder %v1199, 0
      %vm1444 = vcmp.lt.s32.totalorder %v1206, 0
      %vm1445 = vcmp.lt.s32.totalorder %v1213, 0
      %vm1446 = vcmp.lt.s32.totalorder %v1220, 0
      %vm1447 = vcmp.lt.s32.totalorder %v1227, 0
      %vm1448 = vcmp.lt.s32.totalorder %v1234, 0
      %vm1449 = vcmp.lt.s32.totalorder %v1241, 0
      %vm1450 = vcmp.lt.s32.totalorder %v1248, 0
      %vm1451 = vcmp.lt.s32.totalorder %v1255, 0
      %vm1452 = vcmp.lt.s32.totalorder %v1262, 0
      %vm1453 = vcmp.lt.s32.totalorder %v1269, 0
      %vm1454 = vcmp.lt.s32.totalorder %v1276, 0
      %vm1455 = vcmp.lt.s32.totalorder %v1283, 0
      %vm1456 = vcmp.lt.s32.totalorder %v1290, 0
      %vm1457 = vcmp.lt.s32.totalorder %v1297, 0
      %vm1458 = vcmp.lt.s32.totalorder %v1304, 0
      %vm1459 = vcmp.lt.s32.totalorder %v1311, 0
      %vm1460 = vcmp.lt.s32.totalorder %v1318, 0
      %vm1461 = vcmp.lt.s32.totalorder %v1325, 0
      %vm1462 = vcmp.lt.s32.totalorder %v1332, 0
      %vm1463 = vcmp.lt.s32.totalorder %v1339, 0
      %vm1464 = vcmp.lt.s32.totalorder %v1346, 0
      %vm1465 = vcmp.lt.s32.totalorder %v1353, 0
      %vm1466 = vcmp.lt.s32.totalorder %v1360, 0
      %vm1467 = vcmp.lt.s32.totalorder %v1367, 0
      %vm1468 = vcmp.lt.s32.totalorder %v1374, 0
      %vm1469 = vcmp.lt.s32.totalorder %v1381, 0
      %vm1470 = vcmp.lt.s32.totalorder %v1388, 0
      %vm1471 = vcmp.lt.s32.totalorder %v1395, 0
      %vm1472 = vcmp.lt.s32.totalorder %v1402, 0
      %vm1473 = vcmp.lt.s32.totalorder %v1409, 0
      %vm1474 = vmand %vm1442, %vm1410
      %vm1475 = vmand %vm1443, %vm1411
      %vm1476 = vmand %vm1444, %vm1412
      %vm1477 = vmand %vm1445, %vm1413
      %vm1478 = vmand %vm1446, %vm1414
      %vm1479 = vmand %vm1447, %vm1415
      %vm1480 = vmand %vm1448, %vm1416
      %vm1481 = vmand %vm1449, %vm1417
      %vm1482 = vmand %vm1450, %vm1418
      %vm1483 = vmand %vm1451, %vm1419
      %vm1484 = vmand %vm1452, %vm1420
      %vm1485 = vmand %vm1453, %vm1421
      %vm1486 = vmand %vm1454, %vm1422
      %vm1487 = vmand %vm1455, %vm1423
      %vm1488 = vmand %vm1456, %vm1424
      %vm1489 = vmand %vm1457, %vm1425
      %vm1490 = vmand %vm1458, %vm1426
      %vm1491 = vmand %vm1459, %vm1427
      %vm1492 = vmand %vm1460, %vm1428
      %vm1493 = vmand %vm1461, %vm1429
      %vm1494 = vmand %vm1462, %vm1430
      %vm1495 = vmand %vm1463, %vm1431
      %vm1496 = vmand %vm1464, %vm1432
      %vm1497 = vmand %vm1465, %vm1433
      %vm1498 = vmand %vm1466, %vm1434
      %vm1499 = vmand %vm1467, %vm1435
      %vm1500 = vmand %vm1468, %vm1436
      %vm1501 = vmand %vm1469, %vm1437
      %vm1502 = vmand %vm1470, %vm1438
      %vm1503 = vmand %vm1471, %vm1439
      %vm1504 = vmand %vm1472, %vm1440
      %vm1505 = vmand %vm1473, %vm1441
      %v1506 = vadd.s32 %v1192, 16
      %v1507 = vadd.s32 %v1199, 16
      %v1508 = vadd.s32 %v1206, 16
      %v1509 = vadd.s32 %v1213, 16
      %v1510 = vadd.s32 %v1220, 16
      %v1511 = vadd.s32 %v1227, 16
      %v1512 = vadd.s32 %v1234, 16
      %v1513 = vadd.s32 %v1241, 16
      %v1514 = vadd.s32 %v1248, 16
      %v1515 = vadd.s32 %v1255, 16
      %v1516 = vadd.s32 %v1262, 16
      %v1517 = vadd.s32 %v1269, 16
      %v1518 = vadd.s32 %v1276, 16
      %v1519 = vadd.s32 %v1283, 16
      %v1520 = vadd.s32 %v1290, 16
      %v1521 = vadd.s32 %v1297, 16
      %v1522 = vadd.s32 %v1304, 16
      %v1523 = vadd.s32 %v1311, 16
      %v1524 = vadd.s32 %v1318, 16
      %v1525 = vadd.s32 %v1325, 16
      %v1526 = vadd.s32 %v1332, 16
      %v1527 = vadd.s32 %v1339, 16
      %v1528 = vadd.s32 %v1346, 16
      %v1529 = vadd.s32 %v1353, 16
      %v1530 = vadd.s32 %v1360, 16
      %v1531 = vadd.s32 %v1367, 16
      %v1532 = vadd.s32 %v1374, 16
      %v1533 = vadd.s32 %v1381, 16
      %v1534 = vadd.s32 %v1388, 16
      %v1535 = vadd.s32 %v1395, 16
      %v1536 = vadd.s32 %v1402, 16
      %v1537 = vadd.s32 %v1409, 16
      %v1538 = vsel %vm1474, %v1506, %v1192
      %v1539 = vsel %vm1475, %v1507, %v1199
      %v1540 = vsel %vm1476, %v1508, %v1206
      %v1541 = vsel %vm1477, %v1509, %v1213
      %v1542 = vsel %vm1478, %v1510, %v1220
      %v1543 = vsel %vm1479, %v1511, %v1227
      %v1544 = vsel %vm1480, %v1512, %v1234
      %v1545 = vsel %vm1481, %v1513, %v1241
      %v1546 = vsel %vm1482, %v1514, %v1248
      %v1547 = vsel %vm1483, %v1515, %v1255
      %v1548 = vsel %vm1484, %v1516, %v1262
      %v1549 = vsel %vm1485, %v1517, %v1269
      %v1550 = vsel %vm1486, %v1518, %v1276
      %v1551 = vsel %vm1487, %v1519, %v1283
      %v1552 = vsel %vm1488, %v1520, %v1290
      %v1553 = vsel %vm1489, %v1521, %v1297
      %v1554 = vsel %vm1490, %v1522, %v1304
      %v1555 = vsel %vm1491, %v1523, %v1311
      %v1556 = vsel %vm1492, %v1524, %v1318
      %v1557 = vsel %vm1493, %v1525, %v1325
      %v1558 = vsel %vm1494, %v1526, %v1332
      %v1559 = vsel %vm1495, %v1527, %v1339
      %v1560 = vsel %vm1496, %v1528, %v1346
      %v1561 = vsel %vm1497, %v1529, %v1353
      %v1562 = vsel %vm1498, %v1530, %v1360
      %v1563 = vsel %vm1499, %v1531, %v1367
      %v1564 = vsel %vm1500, %v1532, %v1374
      %v1565 = vsel %vm1501, %v1533, %v1381
      %v1566 = vsel %vm1502, %v1534, %v1388
      %v1567 = vsel %vm1503, %v1535, %v1395
      %v1568 = vsel %vm1504, %v1536, %v1402
      %v1569 = vsel %vm1505, %v1537, %v1409
      %vm1570 = vcmp.ge.s32.totalorder %v1538, 1
      %vm1571 = vcmp.ge.s32.totalorder %v1539, 1
      %vm1572 = vcmp.ge.s32.totalorder %v1540, 1
      %vm1573 = vcmp.ge.s32.totalorder %v1541, 1
      %vm1574 = vcmp.ge.s32.totalorder %v1542, 1
      %vm1575 = vcmp.ge.s32.totalorder %v1543, 1
      %vm1576 = vcmp.ge.s32.totalorder %v1544, 1
      %vm1577 = vcmp.ge.s32.totalorder %v1545, 1
      %vm1578 = vcmp.ge.s32.totalorder %v1546, 1
      %vm1579 = vcmp.ge.s32.totalorder %v1547, 1
      %vm1580 = vcmp.ge.s32.totalorder %v1548, 1
      %vm1581 = vcmp.ge.s32.totalorder %v1549, 1
      %vm1582 = vcmp.ge.s32.totalorder %v1550, 1
      %vm1583 = vcmp.ge.s32.totalorder %v1551, 1
      %vm1584 = vcmp.ge.s32.totalorder %v1552, 1
      %vm1585 = vcmp.ge.s32.totalorder %v1553, 1
      %vm1586 = vcmp.ge.s32.totalorder %v1554, 1
      %vm1587 = vcmp.ge.s32.totalorder %v1555, 1
      %vm1588 = vcmp.ge.s32.totalorder %v1556, 1
      %vm1589 = vcmp.ge.s32.totalorder %v1557, 1
      %vm1590 = vcmp.ge.s32.totalorder %v1558, 1
      %vm1591 = vcmp.ge.s32.totalorder %v1559, 1
      %vm1592 = vcmp.ge.s32.totalorder %v1560, 1
      %vm1593 = vcmp.ge.s32.totalorder %v1561, 1
      %vm1594 = vcmp.ge.s32.totalorder %v1562, 1
      %vm1595 = vcmp.ge.s32.totalorder %v1563, 1
      %vm1596 = vcmp.ge.s32.totalorder %v1564, 1
      %vm1597 = vcmp.ge.s32.totalorder %v1565, 1
      %vm1598 = vcmp.ge.s32.totalorder %v1566, 1
      %vm1599 = vcmp.ge.s32.totalorder %v1567, 1
      %vm1600 = vcmp.ge.s32.totalorder %v1568, 1
      %vm1601 = vcmp.ge.s32.totalorder %v1569, 1
      %v1602 = vsel %vm1570, 1, 0
      %v1603 = vsel %vm1571, 1, 0
      %v1604 = vsel %vm1572, 1, 0
      %v1605 = vsel %vm1573, 1, 0
      %v1606 = vsel %vm1574, 1, 0
      %v1607 = vsel %vm1575, 1, 0
      %v1608 = vsel %vm1576, 1, 0
      %v1609 = vsel %vm1577, 1, 0
      %v1610 = vsel %vm1578, 1, 0
      %v1611 = vsel %vm1579, 1, 0
      %v1612 = vsel %vm1580, 1, 0
      %v1613 = vsel %vm1581, 1, 0
      %v1614 = vsel %vm1582, 1, 0
      %v1615 = vsel %vm1583, 1, 0
      %v1616 = vsel %vm1584, 1, 0
      %v1617 = vsel %vm1585, 1, 0
      %v1618 = vsel %vm1586, 1, 0
      %v1619 = vsel %vm1587, 1, 0
      %v1620 = vsel %vm1588, 1, 0
      %v1621 = vsel %vm1589, 1, 0
      %v1622 = vsel %vm1590, 1, 0
      %v1623 = vsel %vm1591, 1, 0
      %v1624 = vsel %vm1592, 1, 0
      %v1625 = vsel %vm1593, 1, 0
      %v1626 = vsel %vm1594, 1, 0
      %v1627 = vsel %vm1595, 1, 0
      %v1628 = vsel %vm1596, 1, 0
      %v1629 = vsel %vm1597, 1, 0
      %v1630 = vsel %vm1598, 1, 0
      %v1631 = vsel %vm1599, 1, 0
      %v1632 = vsel %vm1600, 1, 0
      %v1633 = vsel %vm1601, 1, 0
      %vm1634 = vcmp.eq.s32.totalorder %v1602, 1
      %vm1635 = vcmp.eq.s32.totalorder %v1603, 1
      %vm1636 = vcmp.eq.s32.totalorder %v1604, 1
      %vm1637 = vcmp.eq.s32.totalorder %v1605, 1
      %vm1638 = vcmp.eq.s32.totalorder %v1606, 1
      %vm1639 = vcmp.eq.s32.totalorder %v1607, 1
      %vm1640 = vcmp.eq.s32.totalorder %v1608, 1
      %vm1641 = vcmp.eq.s32.totalorder %v1609, 1
      %vm1642 = vcmp.eq.s32.totalorder %v1610, 1
      %vm1643 = vcmp.eq.s32.totalorder %v1611, 1
      %vm1644 = vcmp.eq.s32.totalorder %v1612, 1
      %vm1645 = vcmp.eq.s32.totalorder %v1613, 1
      %vm1646 = vcmp.eq.s32.totalorder %v1614, 1
      %vm1647 = vcmp.eq.s32.totalorder %v1615, 1
      %vm1648 = vcmp.eq.s32.totalorder %v1616, 1
      %vm1649 = vcmp.eq.s32.totalorder %v1617, 1
      %vm1650 = vcmp.eq.s32.totalorder %v1618, 1
      %vm1651 = vcmp.eq.s32.totalorder %v1619, 1
      %vm1652 = vcmp.eq.s32.totalorder %v1620, 1
      %vm1653 = vcmp.eq.s32.totalorder %v1621, 1
      %vm1654 = vcmp.eq.s32.totalorder %v1622, 1
      %vm1655 = vcmp.eq.s32.totalorder %v1623, 1
      %vm1656 = vcmp.eq.s32.totalorder %v1624, 1
      %vm1657 = vcmp.eq.s32.totalorder %v1625, 1
      %vm1658 = vcmp.eq.s32.totalorder %v1626, 1
      %vm1659 = vcmp.eq.s32.totalorder %v1627, 1
      %vm1660 = vcmp.eq.s32.totalorder %v1628, 1
      %vm1661 = vcmp.eq.s32.totalorder %v1629, 1
      %vm1662 = vcmp.eq.s32.totalorder %v1630, 1
      %vm1663 = vcmp.eq.s32.totalorder %v1631, 1
      %vm1664 = vcmp.eq.s32.totalorder %v1632, 1
      %vm1665 = vcmp.eq.s32.totalorder %v1633, 1
      %vm1697 = vcmask 1040384
      %v1698 = vrot.slane 0.0, 7
      %v1699 = vsel %vm1697, %v1698, %v1698
      %v1700 = vrot.slane %v1121, 7
      %v1701 = vsel %vm1697, %v1698, %v1700
      %v1702 = vrot.slane %v1122, 7
      %v1703 = vsel %vm1697, %v1700, %v1702
      %v1704 = vrot.slane %v1123, 7
      %v1705 = vsel %vm1697, %v1702, %v1704
      %v1706 = vrot.slane %v1124, 7
      %v1707 = vsel %vm1697, %v1704, %v1706
      %v1708 = vrot.slane %v1125, 7
      %v1709 = vsel %vm1697, %v1706, %v1708
      %v1710 = vrot.slane %v1126, 7
      %v1711 = vsel %vm1697, %v1708, %v1710
      %v1712 = vrot.slane %v1127, 7
      %v1713 = vsel %vm1697, %v1710, %v1712
      %v1714 = vrot.slane %v1128, 7
      %v1715 = vsel %vm1697, %v1712, %v1714
      %v1716 = vrot.slane %v1129, 7
      %v1717 = vsel %vm1697, %v1714, %v1716
      %v1718 = vrot.slane %v1130, 7
      %v1719 = vsel %vm1697, %v1716, %v1718
      %v1720 = vrot.slane %v1131, 7
      %v1721 = vsel %vm1697, %v1718, %v1720
      %v1722 = vrot.slane %v1132, 7
      %v1723 = vsel %vm1697, %v1720, %v1722
      %v1724 = vrot.slane %v1133, 7
      %v1725 = vsel %vm1697, %v1722, %v1724
      %v1726 = vrot.slane %v1134, 7
      %v1727 = vsel %vm1697, %v1724, %v1726
      %v1728 = vrot.slane %v1135, 7
      %v1729 = vsel %vm1697, %v1726, %v1728
      %v1730 = vrot.slane %v1136, 7
      %v1731 = vsel %vm1697, %v1728, %v1730
      %v1732 = vrot.slane %v1137, 7
      %v1733 = vsel %vm1697, %v1730, %v1732
      %v1734 = vrot.slane %v1138, 7
      %v1735 = vsel %vm1697, %v1732, %v1734
      %v1736 = vrot.slane %v1139, 7
      %v1737 = vsel %vm1697, %v1734, %v1736
      %v1738 = vrot.slane %v1140, 7
      %v1739 = vsel %vm1697, %v1736, %v1738
      %v1740 = vrot.slane %v1141, 7
      %v1741 = vsel %vm1697, %v1738, %v1740
      %v1742 = vrot.slane %v1142, 7
      %v1743 = vsel %vm1697, %v1740, %v1742
      %v1744 = vrot.slane %v1143, 7
      %v1745 = vsel %vm1697, %v1742, %v1744
      %v1746 = vrot.slane %v1144, 7
      %v1747 = vsel %vm1697, %v1744, %v1746
      %v1748 = vrot.slane %v1145, 7
      %v1749 = vsel %vm1697, %v1746, %v1748
      %v1750 = vrot.slane %v1146, 7
      %v1751 = vsel %vm1697, %v1748, %v1750
      %v1752 = vrot.slane %v1147, 7
      %v1753 = vsel %vm1697, %v1750, %v1752
      %v1754 = vrot.slane %v1148, 7
      %v1755 = vsel %vm1697, %v1752, %v1754
      %v1756 = vrot.slane %v1149, 7
      %v1757 = vsel %vm1697, %v1754, %v1756
      %v1758 = vrot.slane %v1150, 7
      %v1759 = vsel %vm1697, %v1756, %v1758
      %v1791 = vsel %vm1634, %v1699, 0.0
      %v1792 = vsel %vm1635, %v1699, 0.0
      %v1793 = vsel %vm1636, %v1701, 0.0
      %v1794 = vsel %vm1637, %v1703, 0.0
      %v1795 = vsel %vm1638, %v1705, 0.0
      %v1796 = vsel %vm1639, %v1707, 0.0
      %v1797 = vsel %vm1640, %v1709, 0.0
      %v1798 = vsel %vm1641, %v1711, 0.0
      %v1799 = vsel %vm1642, %v1713, 0.0
      %v1800 = vsel %vm1643, %v1715, 0.0
      %v1801 = vsel %vm1644, %v1717, 0.0
      %v1802 = vsel %vm1645, %v1719, 0.0
      %v1803 = vsel %vm1646, %v1721, 0.0
      %v1804 = vsel %vm1647, %v1723, 0.0
      %v1805 = vsel %vm1648, %v1725, 0.0
      %v1806 = vsel %vm1649, %v1727, 0.0
      %v1807 = vsel %vm1650, %v1729, 0.0
      %v1808 = vsel %vm1651, %v1731, 0.0
      %v1809 = vsel %vm1652, %v1733, 0.0
      %v1810 = vsel %vm1653, %v1735, 0.0
      %v1811 = vsel %vm1654, %v1737, 0.0
      %v1812 = vsel %vm1655, %v1739, 0.0
      %v1813 = vsel %vm1656, %v1741, 0.0
      %v1814 = vsel %vm1657, %v1743, 0.0
      %v1815 = vsel %vm1658, %v1745, 0.0
      %v1816 = vsel %vm1659, %v1747, 0.0
      %v1817 = vsel %vm1660, %v1749, 0.0
      %v1818 = vsel %vm1661, %v1751, 0.0
      %v1819 = vsel %vm1662, %v1753, 0.0
      %v1820 = vsel %vm1663, %v1755, 0.0
      %v1821 = vsel %vm1664, %v1757, 0.0
      %v1822 = vsel %vm1665, %v1759, 0.0
      %v1823 = vpack.c.bf16 %v1792, %v1791
      %v1824 = vpack.c.bf16 %v1794, %v1793
      %v1825 = vpack.c.bf16 %v1796, %v1795
      %v1826 = vpack.c.bf16 %v1798, %v1797
      %v1827 = vpack.c.bf16 %v1800, %v1799
      %v1828 = vpack.c.bf16 %v1802, %v1801
      %v1829 = vpack.c.bf16 %v1804, %v1803
      %v1830 = vpack.c.bf16 %v1806, %v1805
      %v1831 = vpack.c.bf16 %v1808, %v1807
      %v1832 = vpack.c.bf16 %v1810, %v1809
      %v1833 = vpack.c.bf16 %v1812, %v1811
      %v1834 = vpack.c.bf16 %v1814, %v1813
      %v1835 = vpack.c.bf16 %v1816, %v1815
      %v1836 = vpack.c.bf16 %v1818, %v1817
      %v1837 = vpack.c.bf16 %v1820, %v1819
      %v1838 = vpack.c.bf16 %v1822, %v1821
      %v1839 = vld [vmem:[%s4] sm:$0xf]
      %v1840 = vld [vmem:[%s4 + $0x4] sm:$0xf]
      %v1841 = vpack.c.bf16 0.0, 0.0
      %v1842 = vpack.c.bf16 %v1122, %v1121
      %v1843 = vpack.c.bf16 %v1124, %v1123
      %v1844 = vpack.c.bf16 %v1126, %v1125
      %v1845 = vpack.c.bf16 %v1128, %v1127
      %v1846 = vpack.c.bf16 %v1130, %v1129
      %v1847 = vpack.c.bf16 %v1132, %v1131
      %v1848 = vpack.c.bf16 %v1134, %v1133
      %v1849 = vpack.c.bf16 %v1136, %v1135
      %v1850 = vpack.c.bf16 %v1138, %v1137
      %v1851 = vpack.c.bf16 %v1140, %v1139
      %v1852 = vpack.c.bf16 %v1142, %v1141
      %v1853 = vpack.c.bf16 %v1144, %v1143
      %v1854 = vpack.c.bf16 %v1146, %v1145
      %v1855 = vpack.c.bf16 %v1148, %v1147
      %v1856 = vpack.c.bf16 %v1150, %v1149
      %v1857 = vld [vmem:[%s4 + $0x8] sm:$0xf]
      %v1858 = vld [vmem:[%s4 + $0xc] sm:$0xf]
      %v1861 = vunpack.c.l.b16 %v1857
      %v1862 = vunpack.c.l.b16 %v1858
      %v1863 = vpack.c.b16 %v1862, %v1861
      %v1866 = vsel %vm658, %v1841, 0
      %v1869 = vsel %vm658, %v1842, 0
      %v1872 = vsel %vm658, %v1843, 0
      %v1875 = vsel %vm658, %v1844, 0
      %v1878 = vsel %vm658, %v1845, 0
      %v1881 = vsel %vm658, %v1846, 0
      %v1884 = vsel %vm658, %v1847, 0
      %v1887 = vsel %vm658, %v1848, 0
      %v1890 = vsel %vm658, %v1849, 0
      %v1893 = vsel %vm658, %v1850, 0
      %v1896 = vsel %vm658, %v1851, 0
      %v1899 = vsel %vm658, %v1852, 0
      %v1902 = vsel %vm658, %v1853, 0
      %v1905 = vsel %vm658, %v1854, 0
      %v1908 = vsel %vm658, %v1855, 0
      %v1911 = vsel %vm658, %v1856, 0
      %1913 = vmatprep.subr.bf16.mxu0 0
      %1914 = vmatpush1.bf16.msra.mxu0 %v1863
      %1915 = vmatprep.subr.bf16.mxu0 0
      %1916 = vmatpush1.bf16.msra.mxu0 0
      %1917 = vmatprep.subr.bf16.mxu0 0
      %1918 = vmatpush1.bf16.msra.mxu0 0
      %1919 = vmatprep.subr.bf16.mxu0 0
      %1920 = vmatpush1.bf16.msra.mxu0 0
      %1921 = vmatprep.subr.bf16.mxu0 0
      %1922 = vmatpush1.bf16.msra.mxu0 0
      %1923 = vmatprep.subr.bf16.mxu0 0
      %1924 = vmatpush1.bf16.msra.mxu0 0
      %1925 = vmatprep.subr.bf16.mxu0 0
      %1926 = vmatpush1.bf16.msra.mxu0 0
      %1927 = vmatprep.subr.bf16.mxu0 0
      %1928 = vmatpush1.bf16.msra.mxu0 0
      %1929 = vmatprep.subr.bf16.mxu0 0
      %1930 = vmatpush1.bf16.msra.mxu0 0
      %1931 = vmatprep.subr.bf16.mxu0 0
      %1932 = vmatpush1.bf16.msra.mxu0 0
      %1933 = vmatprep.subr.bf16.mxu0 0
      %1934 = vmatpush1.bf16.msra.mxu0 0
      %1935 = vmatprep.subr.bf16.mxu0 0
      %1936 = vmatpush1.bf16.msra.mxu0 0
      %1937 = vmatprep.subr.bf16.mxu0 0
      %1938 = vmatpush1.bf16.msra.mxu0 0
      %1939 = vmatprep.subr.bf16.mxu0 0
      %1940 = vmatpush1.bf16.msra.mxu0 0
      %1941 = vmatprep.subr.bf16.mxu0 0
      %1942 = vmatpush1.bf16.msra.mxu0 0
      %1943 = vmatprep.subr.bf16.mxu0 0
      %1944 = vmatpush1.bf16.msra.mxu0 0
      %1945 = vmatprep.mubr.bf16.mxu0 0
      %1946 = vmatmul.mubr.bf16.gmra.mrb[0].mxu0 %v1866
      %v1947 = vpop.f32.mrb[0].mxu0
      %v1948 = vadd.f32 0.0, %v1947
      %v1949 = vpop.f32.mrb[0].mxu0
      %v1950 = vpop.f32.mrb[0].mxu0
      %v1951 = vadd.f32 0.0, %v1950
      %v1952 = vpop.f32.mrb[0].mxu0
      %1953 = vmatprep.mubr.bf16.mxu0 0
      %1954 = vmatmul.mubr.bf16.gmra.mrb[0].mxu0 %v1869
      %v1955 = vpop.f32.mrb[0].mxu0
      %v1956 = vadd.f32 0.0, %v1955
      %v1957 = vpop.f32.mrb[0].mxu0
      %v1958 = vpop.f32.mrb[0].mxu0
      %v1959 = vadd.f32 0.0, %v1958
      %v1960 = vpop.f32.mrb[0].mxu0
      %1961 = vmatprep.mubr.bf16.mxu0 0
      %1962 = vmatmul.mubr.bf16.gmra.mrb[0].mxu0 %v1872
      %v1963 = vpop.f32.mrb[0].mxu0
      %v1964 = vadd.f32 0.0, %v1963
      %v1965 = vpop.f32.mrb[0].mxu0
      %v1966 = vpop.f32.mrb[0].mxu0
      %v1967 = vadd.f32 0.0, %v1966
      %v1968 = vpop.f32.mrb[0].mxu0
      %1969 = vmatprep.mubr.bf16.mxu0 0
      %1970 = vmatmul.mubr.bf16.gmra.mrb[0].mxu0 %v1875
      %v1971 = vpop.f32.mrb[0].mxu0
      %v1972 = vadd.f32 0.0, %v1971
      %v1973 = vpop.f32.mrb[0].mxu0
      %v1974 = vpop.f32.mrb[0].mxu0
      %v1975 = vadd.f32 0.0, %v1974
      %v1976 = vpop.f32.mrb[0].mxu0
      %1977 = vmatprep.mubr.bf16.mxu0 0
      %1978 = vmatmul.mubr.bf16.gmra.mrb[0].mxu0 %v1878
      %v1979 = vpop.f32.mrb[0].mxu0
      %v1980 = vadd.f32 0.0, %v1979
      %v1981 = vpop.f32.mrb[0].mxu0
      %v1982 = vpop.f32.mrb[0].mxu0
      %v1983 = vadd.f32 0.0, %v1982
      %v1984 = vpop.f32.mrb[0].mxu0
      %1985 = vmatprep.mubr.bf16.mxu0 0
      %1986 = vmatmul.mubr.bf16.gmra.mrb[0].mxu0 %v1881
      %v1987 = vpop.f32.mrb[0].mxu0
      %v1988 = vadd.f32 0.0, %v1987
      %v1989 = vpop.f32.mrb[0].mxu0
      %v1990 = vpop.f32.mrb[0].mxu0
      %v1991 = vadd.f32 0.0, %v1990
      %v1992 = vpop.f32.mrb[0].mxu0
      %1993 = vmatprep.mubr.bf16.mxu0 0
      %1994 = vmatmul.mubr.bf16.gmra.mrb[0].mxu0 %v1884
      %v1995 = vpop.f32.mrb[0].mxu0
      %v1996 = vadd.f32 0.0, %v1995
      %v1997 = vpop.f32.mrb[0].mxu0
      %v1998 = vpop.f32.mrb[0].mxu0
      %v1999 = vadd.f32 0.0, %v1998
      %v2000 = vpop.f32.mrb[0].mxu0
      %2001 = vmatprep.mubr.bf16.mxu0 0
      %2002 = vmatmul.mubr.bf16.gmra.mrb[0].mxu0 %v1887
      %v2003 = vpop.f32.mrb[0].mxu0
      %v2004 = vadd.f32 0.0, %v2003
      %v2005 = vpop.f32.mrb[0].mxu0
      %v2006 = vpop.f32.mrb[0].mxu0
      %v2007 = vadd.f32 0.0, %v2006
      %v2008 = vpop.f32.mrb[0].mxu0
      %2009 = vmatprep.mubr.bf16.mxu0 0
      %2010 = vmatmul.mubr.bf16.gmra.mrb[0].mxu0 %v1890
      %v2011 = vpop.f32.mrb[0].mxu0
      %v2012 = vadd.f32 0.0, %v2011
      %v2013 = vpop.f32.mrb[0].mxu0
      %v2014 = vpop.f32.mrb[0].mxu0
      %v2015 = vadd.f32 0.0, %v2014
      %v2016 = vpop.f32.mrb[0].mxu0
      %2017 = vmatprep.mubr.bf16.mxu0 0
      %2018 = vmatmul.mubr.bf16.gmra.mrb[0].mxu0 %v1893
      %v2019 = vpop.f32.mrb[0].mxu0
      %v2020 = vadd.f32 0.0, %v2019
      %v2021 = vpop.f32.mrb[0].mxu0
      %v2022 = vpop.f32.mrb[0].mxu0
      %v2023 = vadd.f32 0.0, %v2022
      %v2024 = vpop.f32.mrb[0].mxu0
      %2025 = vmatprep.mubr.bf16.mxu0 0
      %2026 = vmatmul.mubr.bf16.gmra.mrb[0].mxu0 %v1896
      %v2027 = vpop.f32.mrb[0].mxu0
      %v2028 = vadd.f32 0.0, %v2027
      %v2029 = vpop.f32.mrb[0].mxu0
      %v2030 = vpop.f32.mrb[0].mxu0
      %v2031 = vadd.f32 0.0, %v2030
      %v2032 = vpop.f32.mrb[0].mxu0
      %2033 = vmatprep.mubr.bf16.mxu0 0
      %2034 = vmatmul.mubr.bf16.gmra.mrb[0].mxu0 %v1899
      %v2035 = vpop.f32.mrb[0].mxu0
      %v2036 = vadd.f32 0.0, %v2035
      %v2037 = vpop.f32.mrb[0].mxu0
      %v2038 = vpop.f32.mrb[0].mxu0
      %v2039 = vadd.f32 0.0, %v2038
      %v2040 = vpop.f32.mrb[0].mxu0
      %2041 = vmatprep.mubr.bf16.mxu0 0
      %2042 = vmatmul.mubr.bf16.gmra.mrb[0].mxu0 %v1902
      %v2043 = vpop.f32.mrb[0].mxu0
      %v2044 = vadd.f32 0.0, %v2043
      %v2045 = vpop.f32.mrb[0].mxu0
      %v2046 = vpop.f32.mrb[0].mxu0
      %v2047 = vadd.f32 0.0, %v2046
      %v2048 = vpop.f32.mrb[0].mxu0
      %2049 = vmatprep.mubr.bf16.mxu0 0
      %2050 = vmatmul.mubr.bf16.gmra.mrb[0].mxu0 %v1905
      %v2051 = vpop.f32.mrb[0].mxu0
      %v2052 = vadd.f32 0.0, %v2051
      %v2053 = vpop.f32.mrb[0].mxu0
      %v2054 = vpop.f32.mrb[0].mxu0
      %v2055 = vadd.f32 0.0, %v2054
      %v2056 = vpop.f32.mrb[0].mxu0
      %2057 = vmatprep.mubr.bf16.mxu0 0
      %2058 = vmatmul.mubr.bf16.gmra.mrb[0].mxu0 %v1908
      %v2059 = vpop.f32.mrb[0].mxu0
      %v2060 = vadd.f32 0.0, %v2059
      %v2061 = vpop.f32.mrb[0].mxu0
      %v2062 = vpop.f32.mrb[0].mxu0
      %v2063 = vadd.f32 0.0, %v2062
      %v2064 = vpop.f32.mrb[0].mxu0
      %2065 = vmatprep.mubr.bf16.mxu0 0
      %2066 = vmatmul.mubr.bf16.gmra.mrb[0].mxu0 %v1911
      %v2067 = vpop.f32.mrb[0].mxu0
      %v2068 = vadd.f32 0.0, %v2067
      %v2069 = vpop.f32.mrb[0].mxu0
      %v2070 = vpop.f32.mrb[0].mxu0
      %v2071 = vadd.f32 0.0, %v2070
      %v2072 = vpop.f32.mrb[0].mxu0
      %2073 = vdwg.mxu0
      %v2076 = vunpack.c.l.b16 %v1839
      %v2077 = vunpack.c.l.b16 %v1840
      %v2078 = vpack.c.b16 %v2077, %v2076
      %v2081 = vsel %vm658, %v1823, 0
      %v2084 = vsel %vm658, %v1824, 0
      %v2087 = vsel %vm658, %v1825, 0
      %v2090 = vsel %vm658, %v1826, 0
      %v2093 = vsel %vm658, %v1827, 0
      %v2096 = vsel %vm658, %v1828, 0
      %v2099 = vsel %vm658, %v1829, 0
      %v2102 = vsel %vm658, %v1830, 0
      %v2105 = vsel %vm658, %v1831, 0
      %v2108 = vsel %vm658, %v1832, 0
      %v2111 = vsel %vm658, %v1833, 0
      %v2114 = vsel %vm658, %v1834, 0
      %v2117 = vsel %vm658, %v1835, 0
      %v2120 = vsel %vm658, %v1836, 0
      %v2123 = vsel %vm658, %v1837, 0
      %v2126 = vsel %vm658, %v1838, 0
      %2128 = vmatprep.subr.bf16.mxu0 0
      %2129 = vmatpush1.bf16.msra.mxu0 %v2078
      %2130 = vmatprep.subr.bf16.mxu0 0
      %2131 = vmatpush1.bf16.msra.mxu0 0
      %2132 = vmatprep.subr.bf16.mxu0 0
      %2133 = vmatpush1.bf16.msra.mxu0 0
      %2134 = vmatprep.subr.bf16.mxu0 0
      %2135 = vmatpush1.bf16.msra.mxu0 0
      %2136 = vmatprep.subr.bf16.mxu0 0
      %2137 = vmatpush1.bf16.msra.mxu0 0
      %2138 = vmatprep.subr.bf16.mxu0 0
      %2139 = vmatpush1.bf16.msra.mxu0 0
      %2140 = vmatprep.subr.bf16.mxu0 0
      %2141 = vmatpush1.bf16.msra.mxu0 0
      %2142 = vmatprep.subr.bf16.mxu0 0
      %2143 = vmatpush1.bf16.msra.mxu0 0
      %2144 = vmatprep.subr.bf16.mxu0 0
      %2145 = vmatpush1.bf16.msra.mxu0 0
      %2146 = vmatprep.subr.bf16.mxu0 0
      %2147 = vmatpush1.bf16.msra.mxu0 0
      %2148 = vmatprep.subr.bf16.mxu0 0
      %2149 = vmatpush1.bf16.msra.mxu0 0
      %2150 = vmatprep.subr.bf16.mxu0 0
      %2151 = vmatpush1.bf16.msra.mxu0 0
      %2152 = vmatprep.subr.bf16.mxu0 0
      %2153 = vmatpush1.bf16.msra.mxu0 0
      %2154 = vmatprep.subr.bf16.mxu0 0
      %2155 = vmatpush1.bf16.msra.mxu0 0
      %2156 = vmatprep.subr.bf16.mxu0 0
      %2157 = vmatpush1.bf16.msra.mxu0 0
      %2158 = vmatprep.subr.bf16.mxu0 0
      %2159 = vmatpush1.bf16.msra.mxu0 0
      %2160 = vmatprep.mubr.bf16.mxu0 0
      %2161 = vmatmul.mubr.bf16.gmra.mrb[0].mxu0 %v2081
      %v2162 = vpop.f32.mrb[0].mxu0
      %v2163 = vadd.f32 %v1948, %v2162
      %v2164 = vpop.f32.mrb[0].mxu0
      %v2165 = vpop.f32.mrb[0].mxu0
      %v2166 = vadd.f32 %v1951, %v2165
      %v2167 = vpop.f32.mrb[0].mxu0
      %2168 = vmatprep.mubr.bf16.mxu0 0
      %2169 = vmatmul.mubr.bf16.gmra.mrb[0].mxu0 %v2084
      %v2170 = vpop.f32.mrb[0].mxu0
      %v2171 = vadd.f32 %v1956, %v2170
      %v2172 = vpop.f32.mrb[0].mxu0
      %v2173 = vpop.f32.mrb[0].mxu0
      %v2174 = vadd.f32 %v1959, %v2173
      %v2175 = vpop.f32.mrb[0].mxu0
      %2176 = vmatprep.mubr.bf16.mxu0 0
      %2177 = vmatmul.mubr.bf16.gmra.mrb[0].mxu0 %v2087
      %v2178 = vpop.f32.mrb[0].mxu0
      %v2179 = vadd.f32 %v1964, %v2178
      %v2180 = vpop.f32.mrb[0].mxu0
      %v2181 = vpop.f32.mrb[0].mxu0
      %v2182 = vadd.f32 %v1967, %v2181
      %v2183 = vpop.f32.mrb[0].mxu0
      %2184 = vmatprep.mubr.bf16.mxu0 0
      %2185 = vmatmul.mubr.bf16.gmra.mrb[0].mxu0 %v2090
      %v2186 = vpop.f32.mrb[0].mxu0
      %v2187 = vadd.f32 %v1972, %v2186
      %v2188 = vpop.f32.mrb[0].mxu0
      %v2189 = vpop.f32.mrb[0].mxu0
      %v2190 = vadd.f32 %v1975, %v2189
      %v2191 = vpop.f32.mrb[0].mxu0
      %2192 = vmatprep.mubr.bf16.mxu0 0
      %2193 = vmatmul.mubr.bf16.gmra.mrb[0].mxu0 %v2093
      %v2194 = vpop.f32.mrb[0].mxu0
      %v2195 = vadd.f32 %v1980, %v2194
      %v2196 = vpop.f32.mrb[0].mxu0
      %v2197 = vpop.f32.mrb[0].mxu0
      %v2198 = vadd.f32 %v1983, %v2197
      %v2199 = vpop.f32.mrb[0].mxu0
      %2200 = vmatprep.mubr.bf16.mxu0 0
      %2201 = vmatmul.mubr.bf16.gmra.mrb[0].mxu0 %v2096
      %v2202 = vpop.f32.mrb[0].mxu0
      %v2203 = vadd.f32 %v1988, %v2202
      %v2204 = vpop.f32.mrb[0].mxu0
      %v2205 = vpop.f32.mrb[0].mxu0
      %v2206 = vadd.f32 %v1991, %v2205
      %v2207 = vpop.f32.mrb[0].mxu0
      %2208 = vmatprep.mubr.bf16.mxu0 0
      %2209 = vmatmul.mubr.bf16.gmra.mrb[0].mxu0 %v2099
      %v2210 = vpop.f32.mrb[0].mxu0
      %v2211 = vadd.f32 %v1996, %v2210
      %v2212 = vpop.f32.mrb[0].mxu0
      %v2213 = vpop.f32.mrb[0].mxu0
      %v2214 = vadd.f32 %v1999, %v2213
      %v2215 = vpop.f32.mrb[0].mxu0
      %2216 = vmatprep.mubr.bf16.mxu0 0
      %2217 = vmatmul.mubr.bf16.gmra.mrb[0].mxu0 %v2102
      %v2218 = vpop.f32.mrb[0].mxu0
      %v2219 = vadd.f32 %v2004, %v2218
      %v2220 = vpop.f32.mrb[0].mxu0
      %v2221 = vpop.f32.mrb[0].mxu0
      %v2222 = vadd.f32 %v2007, %v2221
      %v2223 = vpop.f32.mrb[0].mxu0
      %2224 = vmatprep.mubr.bf16.mxu0 0
      %2225 = vmatmul.mubr.bf16.gmra.mrb[0].mxu0 %v2105
      %v2226 = vpop.f32.mrb[0].mxu0
      %v2227 = vadd.f32 %v2012, %v2226
      %v2228 = vpop.f32.mrb[0].mxu0
      %v2229 = vpop.f32.mrb[0].mxu0
      %v2230 = vadd.f32 %v2015, %v2229
      %v2231 = vpop.f32.mrb[0].mxu0
      %2232 = vmatprep.mubr.bf16.mxu0 0
      %2233 = vmatmul.mubr.bf16.gmra.mrb[0].mxu0 %v2108
      %v2234 = vpop.f32.mrb[0].mxu0
      %v2235 = vadd.f32 %v2020, %v2234
      %v2236 = vpop.f32.mrb[0].mxu0
      %v2237 = vpop.f32.mrb[0].mxu0
      %v2238 = vadd.f32 %v2023, %v2237
      %v2239 = vpop.f32.mrb[0].mxu0
      %2240 = vmatprep.mubr.bf16.mxu0 0
      %2241 = vmatmul.mubr.bf16.gmra.mrb[0].mxu0 %v2111
      %v2242 = vpop.f32.mrb[0].mxu0
      %v2243 = vadd.f32 %v2028, %v2242
      %v2244 = vpop.f32.mrb[0].mxu0
      %v2245 = vpop.f32.mrb[0].mxu0
      %v2246 = vadd.f32 %v2031, %v2245
      %v2247 = vpop.f32.mrb[0].mxu0
      %2248 = vmatprep.mubr.bf16.mxu0 0
      %2249 = vmatmul.mubr.bf16.gmra.mrb[0].mxu0 %v2114
      %v2250 = vpop.f32.mrb[0].mxu0
      %v2251 = vadd.f32 %v2036, %v2250
      %v2252 = vpop.f32.mrb[0].mxu0
      %v2253 = vpop.f32.mrb[0].mxu0
      %v2254 = vadd.f32 %v2039, %v2253
      %v2255 = vpop.f32.mrb[0].mxu0
      %2256 = vmatprep.mubr.bf16.mxu0 0
      %2257 = vmatmul.mubr.bf16.gmra.mrb[0].mxu0 %v2117
      %v2258 = vpop.f32.mrb[0].mxu0
      %v2259 = vadd.f32 %v2044, %v2258
      %v2260 = vpop.f32.mrb[0].mxu0
      %v2261 = vpop.f32.mrb[0].mxu0
      %v2262 = vadd.f32 %v2047, %v2261
      %v2263 = vpop.f32.mrb[0].mxu0
      %2264 = vmatprep.mubr.bf16.mxu0 0
      %2265 = vmatmul.mubr.bf16.gmra.mrb[0].mxu0 %v2120
      %v2266 = vpop.f32.mrb[0].mxu0
      %v2267 = vadd.f32 %v2052, %v2266
      %v2268 = vpop.f32.mrb[0].mxu0
      %v2269 = vpop.f32.mrb[0].mxu0
      %v2270 = vadd.f32 %v2055, %v2269
      %v2271 = vpop.f32.mrb[0].mxu0
      %2272 = vmatprep.mubr.bf16.mxu0 0
      %2273 = vmatmul.mubr.bf16.gmra.mrb[0].mxu0 %v2123
      %v2274 = vpop.f32.mrb[0].mxu0
      %v2275 = vadd.f32 %v2060, %v2274
      %v2276 = vpop.f32.mrb[0].mxu0
      %v2277 = vpop.f32.mrb[0].mxu0
      %v2278 = vadd.f32 %v2063, %v2277
      %v2279 = vpop.f32.mrb[0].mxu0
      %2280 = vmatprep.mubr.bf16.mxu0 0
      %2281 = vmatmul.mubr.bf16.gmra.mrb[0].mxu0 %v2126
      %v2282 = vpop.f32.mrb[0].mxu0
      %v2283 = vadd.f32 %v2068, %v2282
      %v2284 = vpop.f32.mrb[0].mxu0
      %v2285 = vpop.f32.mrb[0].mxu0
      %v2286 = vadd.f32 %v2071, %v2285
      %v2287 = vpop.f32.mrb[0].mxu0
      %2288 = vdwg.mxu0
      %vm2289 = vcmp.le.s32.totalorder %v1538, 14
      %vm2290 = vcmp.le.s32.totalorder %v1539, 14
      %vm2291 = vcmp.le.s32.totalorder %v1540, 14
      %vm2292 = vcmp.le.s32.totalorder %v1541, 14
      %vm2293 = vcmp.le.s32.totalorder %v1542, 14
      %vm2294 = vcmp.le.s32.totalorder %v1543, 14
      %vm2295 = vcmp.le.s32.totalorder %v1544, 14
      %vm2296 = vcmp.le.s32.totalorder %v1545, 14
      %vm2297 = vcmp.le.s32.totalorder %v1546, 14
      %vm2298 = vcmp.le.s32.totalorder %v1547, 14
      %vm2299 = vcmp.le.s32.totalorder %v1548, 14
      %vm2300 = vcmp.le.s32.totalorder %v1549, 14
      %vm2301 = vcmp.le.s32.totalorder %v1550, 14
      %vm2302 = vcmp.le.s32.totalorder %v1551, 14
      %vm2303 = vcmp.le.s32.totalorder %v1552, 14
      %vm2304 = vcmp.le.s32.totalorder %v1553, 14
      %vm2305 = vcmp.le.s32.totalorder %v1554, 14
      %vm2306 = vcmp.le.s32.totalorder %v1555, 14
      %vm2307 = vcmp.le.s32.totalorder %v1556, 14
      %vm2308 = vcmp.le.s32.totalorder %v1557, 14
      %vm2309 = vcmp.le.s32.totalorder %v1558, 14
      %vm2310 = vcmp.le.s32.totalorder %v1559, 14
      %vm2311 = vcmp.le.s32.totalorder %v1560, 14
      %vm2312 = vcmp.le.s32.totalorder %v1561, 14
      %vm2313 = vcmp.le.s32.totalorder %v1562, 14
      %vm2314 = vcmp.le.s32.totalorder %v1563, 14
      %vm2315 = vcmp.le.s32.totalorder %v1564, 14
      %vm2316 = vcmp.le.s32.totalorder %v1565, 14
      %vm2317 = vcmp.le.s32.totalorder %v1566, 14
      %vm2318 = vcmp.le.s32.totalorder %v1567, 14
      %vm2319 = vcmp.le.s32.totalorder %v1568, 14
      %vm2320 = vcmp.le.s32.totalorder %v1569, 14
      %v2321 = vsel %vm2289, 1, 0
      %v2322 = vsel %vm2290, 1, 0
      %v2323 = vsel %vm2291, 1, 0
      %v2324 = vsel %vm2292, 1, 0
      %v2325 = vsel %vm2293, 1, 0
      %v2326 = vsel %vm2294, 1, 0
      %v2327 = vsel %vm2295, 1, 0
      %v2328 = vsel %vm2296, 1, 0
      %v2329 = vsel %vm2297, 1, 0
      %v2330 = vsel %vm2298, 1, 0
      %v2331 = vsel %vm2299, 1, 0
      %v2332 = vsel %vm2300, 1, 0
      %v2333 = vsel %vm2301, 1, 0
      %v2334 = vsel %vm2302, 1, 0
      %v2335 = vsel %vm2303, 1, 0
      %v2336 = vsel %vm2304, 1, 0
      %v2337 = vsel %vm2305, 1, 0
      %v2338 = vsel %vm2306, 1, 0
      %v2339 = vsel %vm2307, 1, 0
      %v2340 = vsel %vm2308, 1, 0
      %v2341 = vsel %vm2309, 1, 0
      %v2342 = vsel %vm2310, 1, 0
      %v2343 = vsel %vm2311, 1, 0
      %v2344 = vsel %vm2312, 1, 0
      %v2345 = vsel %vm2313, 1, 0
      %v2346 = vsel %vm2314, 1, 0
      %v2347 = vsel %vm2315, 1, 0
      %v2348 = vsel %vm2316, 1, 0
      %v2349 = vsel %vm2317, 1, 0
      %v2350 = vsel %vm2318, 1, 0
      %v2351 = vsel %vm2319, 1, 0
      %v2352 = vsel %vm2320, 1, 0
      %vm2353 = vcmp.eq.s32.totalorder %v2321, 1
      %vm2354 = vcmp.eq.s32.totalorder %v2322, 1
      %vm2355 = vcmp.eq.s32.totalorder %v2323, 1
      %vm2356 = vcmp.eq.s32.totalorder %v2324, 1
      %vm2357 = vcmp.eq.s32.totalorder %v2325, 1
      %vm2358 = vcmp.eq.s32.totalorder %v2326, 1
      %vm2359 = vcmp.eq.s32.totalorder %v2327, 1
      %vm2360 = vcmp.eq.s32.totalorder %v2328, 1
      %vm2361 = vcmp.eq.s32.totalorder %v2329, 1
      %vm2362 = vcmp.eq.s32.totalorder %v2330, 1
      %vm2363 = vcmp.eq.s32.totalorder %v2331, 1
      %vm2364 = vcmp.eq.s32.totalorder %v2332, 1
      %vm2365 = vcmp.eq.s32.totalorder %v2333, 1
      %vm2366 = vcmp.eq.s32.totalorder %v2334, 1
      %vm2367 = vcmp.eq.s32.totalorder %v2335, 1
      %vm2368 = vcmp.eq.s32.totalorder %v2336, 1
      %vm2369 = vcmp.eq.s32.totalorder %v2337, 1
      %vm2370 = vcmp.eq.s32.totalorder %v2338, 1
      %vm2371 = vcmp.eq.s32.totalorder %v2339, 1
      %vm2372 = vcmp.eq.s32.totalorder %v2340, 1
      %vm2373 = vcmp.eq.s32.totalorder %v2341, 1
      %vm2374 = vcmp.eq.s32.totalorder %v2342, 1
      %vm2375 = vcmp.eq.s32.totalorder %v2343, 1
      %vm2376 = vcmp.eq.s32.totalorder %v2344, 1
      %vm2377 = vcmp.eq.s32.totalorder %v2345, 1
      %vm2378 = vcmp.eq.s32.totalorder %v2346, 1
      %vm2379 = vcmp.eq.s32.totalorder %v2347, 1
      %vm2380 = vcmp.eq.s32.totalorder %v2348, 1
      %vm2381 = vcmp.eq.s32.totalorder %v2349, 1
      %vm2382 = vcmp.eq.s32.totalorder %v2350, 1
      %vm2383 = vcmp.eq.s32.totalorder %v2351, 1
      %vm2384 = vcmp.eq.s32.totalorder %v2352, 1
      %vm2386 = vcmask 1046528
      %v2387 = vrot.slane 0.0, 1
      %v2388 = vsel %vm2386, %v2387, %v2387
      %v2389 = vrot.slane %v1121, 1
      %v2390 = vsel %vm2386, %v2387, %v2389
      %v2391 = vrot.slane %v1122, 1
      %v2392 = vsel %vm2386, %v2389, %v2391
      %v2393 = vrot.slane %v1123, 1
      %v2394 = vsel %vm2386, %v2391, %v2393
      %v2395 = vrot.slane %v1124, 1
      %v2396 = vsel %vm2386, %v2393, %v2395
      %v2397 = vrot.slane %v1125, 1
      %v2398 = vsel %vm2386, %v2395, %v2397
      %v2399 = vrot.slane %v1126, 1
      %v2400 = vsel %vm2386, %v2397, %v2399
      %v2401 = vrot.slane %v1127, 1
      %v2402 = vsel %vm2386, %v2399, %v2401
      %v2403 = vrot.slane %v1128, 1
      %v2404 = vsel %vm2386, %v2401, %v2403
      %v2405 = vrot.slane %v1129, 1
      %v2406 = vsel %vm2386, %v2403, %v2405
      %v2407 = vrot.slane %v1130, 1
      %v2408 = vsel %vm2386, %v2405, %v2407
      %v2409 = vrot.slane %v1131, 1
      %v2410 = vsel %vm2386, %v2407, %v2409
      %v2411 = vrot.slane %v1132, 1
      %v2412 = vsel %vm2386, %v2409, %v2411
      %v2413 = vrot.slane %v1133, 1
      %v2414 = vsel %vm2386, %v2411, %v2413
      %v2415 = vrot.slane %v1134, 1
      %v2416 = vsel %vm2386, %v2413, %v2415
      %v2417 = vrot.slane %v1135, 1
      %v2418 = vsel %vm2386, %v2415, %v2417
      %v2419 = vrot.slane %v1136, 1
      %v2420 = vsel %vm2386, %v2417, %v2419
      %v2421 = vrot.slane %v1137, 1
      %v2422 = vsel %vm2386, %v2419, %v2421
      %v2423 = vrot.slane %v1138, 1
      %v2424 = vsel %vm2386, %v2421, %v2423
      %v2425 = vrot.slane %v1139, 1
      %v2426 = vsel %vm2386, %v2423, %v2425
      %v2427 = vrot.slane %v1140, 1
      %v2428 = vsel %vm2386, %v2425, %v2427
      %v2429 = vrot.slane %v1141, 1
      %v2430 = vsel %vm2386, %v2427, %v2429
      %v2431 = vrot.slane %v1142, 1
      %v2432 = vsel %vm2386, %v2429, %v2431
      %v2433 = vrot.slane %v1143, 1
      %v2434 = vsel %vm2386, %v2431, %v2433
      %v2435 = vrot.slane %v1144, 1
      %v2436 = vsel %vm2386, %v2433, %v2435
      %v2437 = vrot.slane %v1145, 1
      %v2438 = vsel %vm2386, %v2435, %v2437
      %v2439 = vrot.slane %v1146, 1
      %v2440 = vsel %vm2386, %v2437, %v2439
      %v2441 = vrot.slane %v1147, 1
      %v2442 = vsel %vm2386, %v2439, %v2441
      %v2443 = vrot.slane %v1148, 1
      %v2444 = vsel %vm2386, %v2441, %v2443
      %v2445 = vrot.slane %v1149, 1
      %v2446 = vsel %vm2386, %v2443, %v2445
      %v2447 = vrot.slane %v1150, 1
      %v2448 = vsel %vm2386, %v2445, %v2447
      %v2449 = vrot.slane %v1151, 1
      %v2450 = vsel %vm2386, %v2447, %v2449
      %v2483 = vsel %vm2353, %v2388, 0.0
      %v2484 = vsel %vm2354, %v2390, 0.0
      %v2485 = vsel %vm2355, %v2392, 0.0
      %v2486 = vsel %vm2356, %v2394, 0.0
      %v2487 = vsel %vm2357, %v2396, 0.0
      %v2488 = vsel %vm2358, %v2398, 0.0
      %v2489 = vsel %vm2359, %v2400, 0.0
      %v2490 = vsel %vm2360, %v2402, 0.0
      %v2491 = vsel %vm2361, %v2404, 0.0
      %v2492 = vsel %vm2362, %v2406, 0.0
      %v2493 = vsel %vm2363, %v2408, 0.0
      %v2494 = vsel %vm2364, %v2410, 0.0
      %v2495 = vsel %vm2365, %v2412, 0.0
      %v2496 = vsel %vm2366, %v2414, 0.0
      %v2497 = vsel %vm2367, %v2416, 0.0
      %v2498 = vsel %vm2368, %v2418, 0.0
      %v2499 = vsel %vm2369, %v2420, 0.0
      %v2500 = vsel %vm2370, %v2422, 0.0
      %v2501 = vsel %vm2371, %v2424, 0.0
      %v2502 = vsel %vm2372, %v2426, 0.0
      %v2503 = vsel %vm2373, %v2428, 0.0
      %v2504 = vsel %vm2374, %v2430, 0.0
      %v2505 = vsel %vm2375, %v2432, 0.0
      %v2506 = vsel %vm2376, %v2434, 0.0
      %v2507 = vsel %vm2377, %v2436, 0.0
      %v2508 = vsel %vm2378, %v2438, 0.0
      %v2509 = vsel %vm2379, %v2440, 0.0
      %v2510 = vsel %vm2380, %v2442, 0.0
      %v2511 = vsel %vm2381, %v2444, 0.0
      %v2512 = vsel %vm2382, %v2446, 0.0
      %v2513 = vsel %vm2383, %v2448, 0.0
      %v2514 = vsel %vm2384, %v2450, 0.0
      %v2515 = vpack.c.bf16 %v2484, %v2483
      %v2516 = vpack.c.bf16 %v2486, %v2485
      %v2517 = vpack.c.bf16 %v2488, %v2487
      %v2518 = vpack.c.bf16 %v2490, %v2489
      %v2519 = vpack.c.bf16 %v2492, %v2491
      %v2520 = vpack.c.bf16 %v2494, %v2493
      %v2521 = vpack.c.bf16 %v2496, %v2495
      %v2522 = vpack.c.bf16 %v2498, %v2497
      %v2523 = vpack.c.bf16 %v2500, %v2499
      %v2524 = vpack.c.bf16 %v2502, %v2501
      %v2525 = vpack.c.bf16 %v2504, %v2503
      %v2526 = vpack.c.bf16 %v2506, %v2505
      %v2527 = vpack.c.bf16 %v2508, %v2507
      %v2528 = vpack.c.bf16 %v2510, %v2509
      %v2529 = vpack.c.bf16 %v2512, %v2511
      %v2530 = vpack.c.bf16 %v2514, %v2513
      %v2531 = vld [vmem:[%s4 + $0x10] sm:$0xf]
      %v2532 = vld [vmem:[%s4 + $0x14] sm:$0xf]
      %v2535 = vunpack.c.l.b16 %v2531
      %v2536 = vunpack.c.l.b16 %v2532
      %v2537 = vpack.c.b16 %v2536, %v2535
      %v2540 = vsel %vm658, %v2515, 0
      %v2543 = vsel %vm658, %v2516, 0
      %v2546 = vsel %vm658, %v2517, 0
      %v2549 = vsel %vm658, %v2518, 0
      %v2552 = vsel %vm658, %v2519, 0
      %v2555 = vsel %vm658, %v2520, 0
      %v2558 = vsel %vm658, %v2521, 0
      %v2561 = vsel %vm658, %v2522, 0
      %v2564 = vsel %vm658, %v2523, 0
      %v2567 = vsel %vm658, %v2524, 0
      %v2570 = vsel %vm658, %v2525, 0
      %v2573 = vsel %vm658, %v2526, 0
      %v2576 = vsel %vm658, %v2527, 0
      %v2579 = vsel %vm658, %v2528, 0
      %v2582 = vsel %vm658, %v2529, 0
      %v2585 = vsel %vm658, %v2530, 0
      %2587 = vmatprep.subr.bf16.mxu0 0
      %2588 = vmatpush1.bf16.msra.mxu0 %v2537
      %2589 = vmatprep.subr.bf16.mxu0 0
      %2590 = vmatpush1.bf16.msra.mxu0 0
      %2591 = vmatprep.subr.bf16.mxu0 0
      %2592 = vmatpush1.bf16.msra.mxu0 0
      %2593 = vmatprep.subr.bf16.mxu0 0
      %2594 = vmatpush1.bf16.msra.mxu0 0
      %2595 = vmatprep.subr.bf16.mxu0 0
      %2596 = vmatpush1.bf16.msra.mxu0 0
      %2597 = vmatprep.subr.bf16.mxu0 0
      %2598 = vmatpush1.bf16.msra.mxu0 0
      %2599 = vmatprep.subr.bf16.mxu0 0
      %2600 = vmatpush1.bf16.msra.mxu0 0
      %2601 = vmatprep.subr.bf16.mxu0 0
      %2602 = vmatpush1.bf16.msra.mxu0 0
      %2603 = vmatprep.subr.bf16.mxu0 0
      %2604 = vmatpush1.bf16.msra.mxu0 0
      %2605 = vmatprep.subr.bf16.mxu0 0
      %2606 = vmatpush1.bf16.msra.mxu0 0
      %2607 = vmatprep.subr.bf16.mxu0 0
      %2608 = vmatpush1.bf16.msra.mxu0 0
      %2609 = vmatprep.subr.bf16.mxu0 0
      %2610 = vmatpush1.bf16.msra.mxu0 0
      %2611 = vmatprep.subr.bf16.mxu0 0
      %2612 = vmatpush1.bf16.msra.mxu0 0
      %2613 = vmatprep.subr.bf16.mxu0 0
      %2614 = vmatpush1.bf16.msra.mxu0 0
      %2615 = vmatprep.subr.bf16.mxu0 0
      %2616 = vmatpush1.bf16.msra.mxu0 0
      %2617 = vmatprep.subr.bf16.mxu0 0
      %2618 = vmatpush1.bf16.msra.mxu0 0
      %2619 = vmatprep.mubr.bf16.mxu0 0
      %2620 = vmatmul.mubr.bf16.gmra.mrb[0].mxu0 %v2540
      %v2621 = vpop.f32.mrb[0].mxu0
      %v2622 = vadd.f32 0.0, %v2621
      %v2623 = vpop.f32.mrb[0].mxu0
      %v2624 = vpop.f32.mrb[0].mxu0
      %v2625 = vadd.f32 0.0, %v2624
      %v2626 = vpop.f32.mrb[0].mxu0
      %2627 = vmatprep.mubr.bf16.mxu0 0
      %2628 = vmatmul.mubr.bf16.gmra.mrb[0].mxu0 %v2543
      %v2629 = vpop.f32.mrb[0].mxu0
      %v2630 = vadd.f32 0.0, %v2629
      %v2631 = vpop.f32.mrb[0].mxu0
      %v2632 = vpop.f32.mrb[0].mxu0
      %v2633 = vadd.f32 0.0, %v2632
      %v2634 = vpop.f32.mrb[0].mxu0
      %2635 = vmatprep.mubr.bf16.mxu0 0
      %2636 = vmatmul.mubr.bf16.gmra.mrb[0].mxu0 %v2546
      %v2637 = vpop.f32.mrb[0].mxu0
      %v2638 = vadd.f32 0.0, %v2637
      %v2639 = vpop.f32.mrb[0].mxu0
      %v2640 = vpop.f32.mrb[0].mxu0
      %v2641 = vadd.f32 0.0, %v2640
      %v2642 = vpop.f32.mrb[0].mxu0
      %2643 = vmatprep.mubr.bf16.mxu0 0
      %2644 = vmatmul.mubr.bf16.gmra.mrb[0].mxu0 %v2549
      %v2645 = vpop.f32.mrb[0].mxu0
      %v2646 = vadd.f32 0.0, %v2645
      %v2647 = vpop.f32.mrb[0].mxu0
      %v2648 = vpop.f32.mrb[0].mxu0
      %v2649 = vadd.f32 0.0, %v2648
      %v2650 = vpop.f32.mrb[0].mxu0
      %2651 = vmatprep.mubr.bf16.mxu0 0
      %2652 = vmatmul.mubr.bf16.gmra.mrb[0].mxu0 %v2552
      %v2653 = vpop.f32.mrb[0].mxu0
      %v2654 = vadd.f32 0.0, %v2653
      %v2655 = vpop.f32.mrb[0].mxu0
      %v2656 = vpop.f32.mrb[0].mxu0
      %v2657 = vadd.f32 0.0, %v2656
      %v2658 = vpop.f32.mrb[0].mxu0
      %2659 = vmatprep.mubr.bf16.mxu0 0
      %2660 = vmatmul.mubr.bf16.gmra.mrb[0].mxu0 %v2555
      %v2661 = vpop.f32.mrb[0].mxu0
      %v2662 = vadd.f32 0.0, %v2661
      %v2663 = vpop.f32.mrb[0].mxu0
      %v2664 = vpop.f32.mrb[0].mxu0
      %v2665 = vadd.f32 0.0, %v2664
      %v2666 = vpop.f32.mrb[0].mxu0
      %2667 = vmatprep.mubr.bf16.mxu0 0
      %2668 = vmatmul.mubr.bf16.gmra.mrb[0].mxu0 %v2558
      %v2669 = vpop.f32.mrb[0].mxu0
      %v2670 = vadd.f32 0.0, %v2669
      %v2671 = vpop.f32.mrb[0].mxu0
      %v2672 = vpop.f32.mrb[0].mxu0
      %v2673 = vadd.f32 0.0, %v2672
      %v2674 = vpop.f32.mrb[0].mxu0
      %2675 = vmatprep.mubr.bf16.mxu0 0
      %2676 = vmatmul.mubr.bf16.gmra.mrb[0].mxu0 %v2561
      %v2677 = vpop.f32.mrb[0].mxu0
      %v2678 = vadd.f32 0.0, %v2677
      %v2679 = vpop.f32.mrb[0].mxu0
      %v2680 = vpop.f32.mrb[0].mxu0
      %v2681 = vadd.f32 0.0, %v2680
      %v2682 = vpop.f32.mrb[0].mxu0
      %2683 = vmatprep.mubr.bf16.mxu0 0
      %2684 = vmatmul.mubr.bf16.gmra.mrb[0].mxu0 %v2564
      %v2685 = vpop.f32.mrb[0].mxu0
      %v2686 = vadd.f32 0.0, %v2685
      %v2687 = vpop.f32.mrb[0].mxu0
      %v2688 = vpop.f32.mrb[0].mxu0
      %v2689 = vadd.f32 0.0, %v2688
      %v2690 = vpop.f32.mrb[0].mxu0
      %2691 = vmatprep.mubr.bf16.mxu0 0
      %2692 = vmatmul.mubr.bf16.gmra.mrb[0].mxu0 %v2567
      %v2693 = vpop.f32.mrb[0].mxu0
      %v2694 = vadd.f32 0.0, %v2693
      %v2695 = vpop.f32.mrb[0].mxu0
      %v2696 = vpop.f32.mrb[0].mxu0
      %v2697 = vadd.f32 0.0, %v2696
      %v2698 = vpop.f32.mrb[0].mxu0
      %2699 = vmatprep.mubr.bf16.mxu0 0
      %2700 = vmatmul.mubr.bf16.gmra.mrb[0].mxu0 %v2570
      %v2701 = vpop.f32.mrb[0].mxu0
      %v2702 = vadd.f32 0.0, %v2701
      %v2703 = vpop.f32.mrb[0].mxu0
      %v2704 = vpop.f32.mrb[0].mxu0
      %v2705 = vadd.f32 0.0, %v2704
      %v2706 = vpop.f32.mrb[0].mxu0
      %2707 = vmatprep.mubr.bf16.mxu0 0
      %2708 = vmatmul.mubr.bf16.gmra.mrb[0].mxu0 %v2573
      %v2709 = vpop.f32.mrb[0].mxu0
      %v2710 = vadd.f32 0.0, %v2709
      %v2711 = vpop.f32.mrb[0].mxu0
      %v2712 = vpop.f32.mrb[0].mxu0
      %v2713 = vadd.f32 0.0, %v2712
      %v2714 = vpop.f32.mrb[0].mxu0
      %2715 = vmatprep.mubr.bf16.mxu0 0
      %2716 = vmatmul.mubr.bf16.gmra.mrb[0].mxu0 %v2576
      %v2717 = vpop.f32.mrb[0].mxu0
      %v2718 = vadd.f32 0.0, %v2717
      %v2719 = vpop.f32.mrb[0].mxu0
      %v2720 = vpop.f32.mrb[0].mxu0
      %v2721 = vadd.f32 0.0, %v2720
      %v2722 = vpop.f32.mrb[0].mxu0
      %2723 = vmatprep.mubr.bf16.mxu0 0
      %2724 = vmatmul.mubr.bf16.gmra.mrb[0].mxu0 %v2579
      %v2725 = vpop.f32.mrb[0].mxu0
      %v2726 = vadd.f32 0.0, %v2725
      %v2727 = vpop.f32.mrb[0].mxu0
      %v2728 = vpop.f32.mrb[0].mxu0
      %v2729 = vadd.f32 0.0, %v2728
      %v2730 = vpop.f32.mrb[0].mxu0
      %2731 = vmatprep.mubr.bf16.mxu0 0
      %2732 = vmatmul.mubr.bf16.gmra.mrb[0].mxu0 %v2582
      %v2733 = vpop.f32.mrb[0].mxu0
      %v2734 = vadd.f32 0.0, %v2733
      %v2735 = vpop.f32.mrb[0].mxu0
      %v2736 = vpop.f32.mrb[0].mxu0
      %v2737 = vadd.f32 0.0, %v2736
      %v2738 = vpop.f32.mrb[0].mxu0
      %2739 = vmatprep.mubr.bf16.mxu0 0
      %2740 = vmatmul.mubr.bf16.gmra.mrb[0].mxu0 %v2585
      %v2741 = vpop.f32.mrb[0].mxu0
      %v2742 = vadd.f32 0.0, %v2741
      %v2743 = vpop.f32.mrb[0].mxu0
      %v2744 = vpop.f32.mrb[0].mxu0
      %v2745 = vadd.f32 0.0, %v2744
      %v2746 = vpop.f32.mrb[0].mxu0
      %2747 = vdwg.mxu0
      %v2748 = vadd.f32 %v2163, %v2622
      %v2749 = vadd.f32 %v2166, %v2625
      %v2750 = vadd.f32 %v2171, %v2630
      %v2751 = vadd.f32 %v2174, %v2633
      %v2752 = vadd.f32 %v2179, %v2638
      %v2753 = vadd.f32 %v2182, %v2641
      %v2754 = vadd.f32 %v2187, %v2646
      %v2755 = vadd.f32 %v2190, %v2649
      %v2756 = vadd.f32 %v2195, %v2654
      %v2757 = vadd.f32 %v2198, %v2657
      %v2758 = vadd.f32 %v2203, %v2662
      %v2759 = vadd.f32 %v2206, %v2665
      %v2760 = vadd.f32 %v2211, %v2670
      %v2761 = vadd.f32 %v2214, %v2673
      %v2762 = vadd.f32 %v2219, %v2678
      %v2763 = vadd.f32 %v2222, %v2681
      %v2764 = vadd.f32 %v2227, %v2686
      %v2765 = vadd.f32 %v2230, %v2689
      %v2766 = vadd.f32 %v2235, %v2694
      %v2767 = vadd.f32 %v2238, %v2697
      %v2768 = vadd.f32 %v2243, %v2702
      %v2769 = vadd.f32 %v2246, %v2705
      %v2770 = vadd.f32 %v2251, %v2710
      %v2771 = vadd.f32 %v2254, %v2713
      %v2772 = vadd.f32 %v2259, %v2718
      %v2773 = vadd.f32 %v2262, %v2721
      %v2774 = vadd.f32 %v2267, %v2726
      %v2775 = vadd.f32 %v2270, %v2729
      %v2776 = vadd.f32 %v2275, %v2734
      %v2777 = vadd.f32 %v2278, %v2737
      %v2778 = vadd.f32 %v2283, %v2742
      %v2779 = vadd.f32 %v2286, %v2745
      %v2781 = vrot.slane %v1151, 7
      %v2782 = vsel %vm1697, %v1758, %v2781
      %v2783 = vrot.slane %v1152, 7
      %v2784 = vsel %vm1697, %v2781, %v2783
      %v2787 = vsel %vm1634, %v1701, 0.0
      %v2788 = vsel %vm1635, %v1703, 0.0
      %v2789 = vsel %vm1636, %v1705, 0.0
      %v2790 = vsel %vm1637, %v1707, 0.0
      %v2791 = vsel %vm1638, %v1709, 0.0
      %v2792 = vsel %vm1639, %v1711, 0.0
      %v2793 = vsel %vm1640, %v1713, 0.0
      %v2794 = vsel %vm1641, %v1715, 0.0
      %v2795 = vsel %vm1642, %v1717, 0.0
      %v2796 = vsel %vm1643, %v1719, 0.0
      %v2797 = vsel %vm1644, %v1721, 0.0
      %v2798 = vsel %vm1645, %v1723, 0.0
      %v2799 = vsel %vm1646, %v1725, 0.0
      %v2800 = vsel %vm1647, %v1727, 0.0
      %v2801 = vsel %vm1648, %v1729, 0.0
      %v2802 = vsel %vm1649, %v1731, 0.0
      %v2803 = vsel %vm1650, %v1733, 0.0
      %v2804 = vsel %vm1651, %v1735, 0.0
      %v2805 = vsel %vm1652, %v1737, 0.0
      %v2806 = vsel %vm1653, %v1739, 0.0
      %v2807 = vsel %vm1654, %v1741, 0.0
      %v2808 = vsel %vm1655, %v1743, 0.0
      %v2809 = vsel %vm1656, %v1745, 0.0
      %v2810 = vsel %vm1657, %v1747, 0.0
      %v2811 = vsel %vm1658, %v1749, 0.0
      %v2812 = vsel %vm1659, %v1751, 0.0
      %v2813 = vsel %vm1660, %v1753, 0.0
      %v2814 = vsel %vm1661, %v1755, 0.0
      %v2815 = vsel %vm1662, %v1757, 0.0
      %v2816 = vsel %vm1663, %v1759, 0.0
      %v2817 = vsel %vm1664, %v2782, 0.0
      %v2818 = vsel %vm1665, %v2784, 0.0
      %v2819 = vpack.c.bf16 %v2788, %v2787
      %v2820 = vpack.c.bf16 %v2790, %v2789
      %v2821 = vpack.c.bf16 %v2792, %v2791
      %v2822 = vpack.c.bf16 %v2794, %v2793
      %v2823 = vpack.c.bf16 %v2796, %v2795
      %v2824 = vpack.c.bf16 %v2798, %v2797
      %v2825 = vpack.c.bf16 %v2800, %v2799
      %v2826 = vpack.c.bf16 %v2802, %v2801
      %v2827 = vpack.c.bf16 %v2804, %v2803
      %v2828 = vpack.c.bf16 %v2806, %v2805
      %v2829 = vpack.c.bf16 %v2808, %v2807
      %v2830 = vpack.c.bf16 %v2810, %v2809
      %v2831 = vpack.c.bf16 %v2812, %v2811
      %v2832 = vpack.c.bf16 %v2814, %v2813
      %v2833 = vpack.c.bf16 %v2816, %v2815
      %v2834 = vpack.c.bf16 %v2818, %v2817
      %v2835 = vld [vmem:[%s4 + $0x18] sm:$0xf]
      %v2836 = vld [vmem:[%s4 + $0x1c] sm:$0xf]
      %v2839 = vunpack.c.l.b16 %v2835
      %v2840 = vunpack.c.l.b16 %v2836
      %v2841 = vpack.c.b16 %v2840, %v2839
      %v2844 = vsel %vm658, %v2819, 0
      %v2847 = vsel %vm658, %v2820, 0
      %v2850 = vsel %vm658, %v2821, 0
      %v2853 = vsel %vm658, %v2822, 0
      %v2856 = vsel %vm658, %v2823, 0
      %v2859 = vsel %vm658, %v2824, 0
      %v2862 = vsel %vm658, %v2825, 0
      %v2865 = vsel %vm658, %v2826, 0
      %v2868 = vsel %vm658, %v2827, 0
      %v2871 = vsel %vm658, %v2828, 0
      %v2874 = vsel %vm658, %v2829, 0
      %v2877 = vsel %vm658, %v2830, 0
      %v2880 = vsel %vm658, %v2831, 0
      %v2883 = vsel %vm658, %v2832, 0
      %v2886 = vsel %vm658, %v2833, 0
      %v2889 = vsel %vm658, %v2834, 0
      %2891 = vmatprep.subr.bf16.mxu0 0
      %2892 = vmatpush1.bf16.msra.mxu0 %v2841
      %2893 = vmatprep.subr.bf16.mxu0 0
      %2894 = vmatpush1.bf16.msra.mxu0 0
      %2895 = vmatprep.subr.bf16.mxu0 0
      %2896 = vmatpush1.bf16.msra.mxu0 0
      %2897 = vmatprep.subr.bf16.mxu0 0
      %2898 = vmatpush1.bf16.msra.mxu0 0
      %2899 = vmatprep.subr.bf16.mxu0 0
      %2900 = vmatpush1.bf16.msra.mxu0 0
      %2901 = vmatprep.subr.bf16.mxu0 0
      %2902 = vmatpush1.bf16.msra.mxu0 0
      %2903 = vmatprep.subr.bf16.mxu0 0
      %2904 = vmatpush1.bf16.msra.mxu0 0
      %2905 = vmatprep.subr.bf16.mxu0 0
      %2906 = vmatpush1.bf16.msra.mxu0 0
      %2907 = vmatprep.subr.bf16.mxu0 0
      %2908 = vmatpush1.bf16.msra.mxu0 0
      %2909 = vmatprep.subr.bf16.mxu0 0
      %2910 = vmatpush1.bf16.msra.mxu0 0
      %2911 = vmatprep.subr.bf16.mxu0 0
      %2912 = vmatpush1.bf16.msra.mxu0 0
      %2913 = vmatprep.subr.bf16.mxu0 0
      %2914 = vmatpush1.bf16.msra.mxu0 0
      %2915 = vmatprep.subr.bf16.mxu0 0
      %2916 = vmatpush1.bf16.msra.mxu0 0
      %2917 = vmatprep.subr.bf16.mxu0 0
      %2918 = vmatpush1.bf16.msra.mxu0 0
      %2919 = vmatprep.subr.bf16.mxu0 0
      %2920 = vmatpush1.bf16.msra.mxu0 0
      %2921 = vmatprep.subr.bf16.mxu0 0
      %2922 = vmatpush1.bf16.msra.mxu0 0
      %2923 = vmatprep.mubr.bf16.mxu0 0
      %2924 = vmatmul.mubr.bf16.gmra.mrb[0].mxu0 %v2844
      %v2925 = vpop.f32.mrb[0].mxu0
      %v2926 = vadd.f32 0.0, %v2925
      %v2927 = vpop.f32.mrb[0].mxu0
      %v2928 = vpop.f32.mrb[0].mxu0
      %v2929 = vadd.f32 0.0, %v2928
      %v2930 = vpop.f32.mrb[0].mxu0
      %2931 = vmatprep.mubr.bf16.mxu0 0
      %2932 = vmatmul.mubr.bf16.gmra.mrb[0].mxu0 %v2847
      %v2933 = vpop.f32.mrb[0].mxu0
      %v2934 = vadd.f32 0.0, %v2933
      %v2935 = vpop.f32.mrb[0].mxu0
      %v2936 = vpop.f32.mrb[0].mxu0
      %v2937 = vadd.f32 0.0, %v2936
      %v2938 = vpop.f32.mrb[0].mxu0
      %2939 = vmatprep.mubr.bf16.mxu0 0
      %2940 = vmatmul.mubr.bf16.gmra.mrb[0].mxu0 %v2850
      %v2941 = vpop.f32.mrb[0].mxu0
      %v2942 = vadd.f32 0.0, %v2941
      %v2943 = vpop.f32.mrb[0].mxu0
      %v2944 = vpop.f32.mrb[0].mxu0
      %v2945 = vadd.f32 0.0, %v2944
      %v2946 = vpop.f32.mrb[0].mxu0
      %2947 = vmatprep.mubr.bf16.mxu0 0
      %2948 = vmatmul.mubr.bf16.gmra.mrb[0].mxu0 %v2853
      %v2949 = vpop.f32.mrb[0].mxu0
      %v2950 = vadd.f32 0.0, %v2949
      %v2951 = vpop.f32.mrb[0].mxu0
      %v2952 = vpop.f32.mrb[0].mxu0
      %v2953 = vadd.f32 0.0, %v2952
      %v2954 = vpop.f32.mrb[0].mxu0
      %2955 = vmatprep.mubr.bf16.mxu0 0
      %2956 = vmatmul.mubr.bf16.gmra.mrb[0].mxu0 %v2856
      %v2957 = vpop.f32.mrb[0].mxu0
      %v2958 = vadd.f32 0.0, %v2957
      %v2959 = vpop.f32.mrb[0].mxu0
      %v2960 = vpop.f32.mrb[0].mxu0
      %v2961 = vadd.f32 0.0, %v2960
      %v2962 = vpop.f32.mrb[0].mxu0
      %2963 = vmatprep.mubr.bf16.mxu0 0
      %2964 = vmatmul.mubr.bf16.gmra.mrb[0].mxu0 %v2859
      %v2965 = vpop.f32.mrb[0].mxu0
      %v2966 = vadd.f32 0.0, %v2965
      %v2967 = vpop.f32.mrb[0].mxu0
      %v2968 = vpop.f32.mrb[0].mxu0
      %v2969 = vadd.f32 0.0, %v2968
      %v2970 = vpop.f32.mrb[0].mxu0
      %2971 = vmatprep.mubr.bf16.mxu0 0
      %2972 = vmatmul.mubr.bf16.gmra.mrb[0].mxu0 %v2862
      %v2973 = vpop.f32.mrb[0].mxu0
      %v2974 = vadd.f32 0.0, %v2973
      %v2975 = vpop.f32.mrb[0].mxu0
      %v2976 = vpop.f32.mrb[0].mxu0
      %v2977 = vadd.f32 0.0, %v2976
      %v2978 = vpop.f32.mrb[0].mxu0
      %2979 = vmatprep.mubr.bf16.mxu0 0
      %2980 = vmatmul.mubr.bf16.gmra.mrb[0].mxu0 %v2865
      %v2981 = vpop.f32.mrb[0].mxu0
      %v2982 = vadd.f32 0.0, %v2981
      %v2983 = vpop.f32.mrb[0].mxu0
      %v2984 = vpop.f32.mrb[0].mxu0
      %v2985 = vadd.f32 0.0, %v2984
      %v2986 = vpop.f32.mrb[0].mxu0
      %2987 = vmatprep.mubr.bf16.mxu0 0
      %2988 = vmatmul.mubr.bf16.gmra.mrb[0].mxu0 %v2868
      %v2989 = vpop.f32.mrb[0].mxu0
      %v2990 = vadd.f32 0.0, %v2989
      %v2991 = vpop.f32.mrb[0].mxu0
      %v2992 = vpop.f32.mrb[0].mxu0
      %v2993 = vadd.f32 0.0, %v2992
      %v2994 = vpop.f32.mrb[0].mxu0
      %2995 = vmatprep.mubr.bf16.mxu0 0
      %2996 = vmatmul.mubr.bf16.gmra.mrb[0].mxu0 %v2871
      %v2997 = vpop.f32.mrb[0].mxu0
      %v2998 = vadd.f32 0.0, %v2997
      %v2999 = vpop.f32.mrb[0].mxu0
      %v3000 = vpop.f32.mrb[0].mxu0
      %v3001 = vadd.f32 0.0, %v3000
      %v3002 = vpop.f32.mrb[0].mxu0
      %3003 = vmatprep.mubr.bf16.mxu0 0
      %3004 = vmatmul.mubr.bf16.gmra.mrb[0].mxu0 %v2874
      %v3005 = vpop.f32.mrb[0].mxu0
      %v3006 = vadd.f32 0.0, %v3005
      %v3007 = vpop.f32.mrb[0].mxu0
      %v3008 = vpop.f32.mrb[0].mxu0
      %v3009 = vadd.f32 0.0, %v3008
      %v3010 = vpop.f32.mrb[0].mxu0
      %3011 = vmatprep.mubr.bf16.mxu0 0
      %3012 = vmatmul.mubr.bf16.gmra.mrb[0].mxu0 %v2877
      %v3013 = vpop.f32.mrb[0].mxu0
      %v3014 = vadd.f32 0.0, %v3013
      %v3015 = vpop.f32.mrb[0].mxu0
      %v3016 = vpop.f32.mrb[0].mxu0
      %v3017 = vadd.f32 0.0, %v3016
      %v3018 = vpop.f32.mrb[0].mxu0
      %3019 = vmatprep.mubr.bf16.mxu0 0
      %3020 = vmatmul.mubr.bf16.gmra.mrb[0].mxu0 %v2880
      %v3021 = vpop.f32.mrb[0].mxu0
      %v3022 = vadd.f32 0.0, %v3021
      %v3023 = vpop.f32.mrb[0].mxu0
      %v3024 = vpop.f32.mrb[0].mxu0
      %v3025 = vadd.f32 0.0, %v3024
      %v3026 = vpop.f32.mrb[0].mxu0
      %3027 = vmatprep.mubr.bf16.mxu0 0
      %3028 = vmatmul.mubr.bf16.gmra.mrb[0].mxu0 %v2883
      %v3029 = vpop.f32.mrb[0].mxu0
      %v3030 = vadd.f32 0.0, %v3029
      %v3031 = vpop.f32.mrb[0].mxu0
      %v3032 = vpop.f32.mrb[0].mxu0
      %v3033 = vadd.f32 0.0, %v3032
      %v3034 = vpop.f32.mrb[0].mxu0
      %3035 = vmatprep.mubr.bf16.mxu0 0
      %3036 = vmatmul.mubr.bf16.gmra.mrb[0].mxu0 %v2886
      %v3037 = vpop.f32.mrb[0].mxu0
      %v3038 = vadd.f32 0.0, %v3037
      %v3039 = vpop.f32.mrb[0].mxu0
      %v3040 = vpop.f32.mrb[0].mxu0
      %v3041 = vadd.f32 0.0, %v3040
      %v3042 = vpop.f32.mrb[0].mxu0
      %3043 = vmatprep.mubr.bf16.mxu0 0
      %3044 = vmatmul.mubr.bf16.gmra.mrb[0].mxu0 %v2889
      %v3045 = vpop.f32.mrb[0].mxu0
      %v3046 = vadd.f32 0.0, %v3045
      %v3047 = vpop.f32.mrb[0].mxu0
      %v3048 = vpop.f32.mrb[0].mxu0
      %v3049 = vadd.f32 0.0, %v3048
      %v3050 = vpop.f32.mrb[0].mxu0
      %3051 = vdwg.mxu0
      %v3052 = vadd.f32 %v2748, %v2926
      %v3053 = vadd.f32 %v2749, %v2929
      %v3054 = vadd.f32 %v2750, %v2934
      %v3055 = vadd.f32 %v2751, %v2937
      %v3056 = vadd.f32 %v2752, %v2942
      %v3057 = vadd.f32 %v2753, %v2945
      %v3058 = vadd.f32 %v2754, %v2950
      %v3059 = vadd.f32 %v2755, %v2953
      %v3060 = vadd.f32 %v2756, %v2958
      %v3061 = vadd.f32 %v2757, %v2961
      %v3062 = vadd.f32 %v2758, %v2966
      %v3063 = vadd.f32 %v2759, %v2969
      %v3064 = vadd.f32 %v2760, %v2974
      %v3065 = vadd.f32 %v2761, %v2977
      %v3066 = vadd.f32 %v2762, %v2982
      %v3067 = vadd.f32 %v2763, %v2985
      %v3068 = vadd.f32 %v2764, %v2990
      %v3069 = vadd.f32 %v2765, %v2993
      %v3070 = vadd.f32 %v2766, %v2998
      %v3071 = vadd.f32 %v2767, %v3001
      %v3072 = vadd.f32 %v2768, %v3006
      %v3073 = vadd.f32 %v2769, %v3009
      %v3074 = vadd.f32 %v2770, %v3014
      %v3075 = vadd.f32 %v2771, %v3017
      %v3076 = vadd.f32 %v2772, %v3022
      %v3077 = vadd.f32 %v2773, %v3025
      %v3078 = vadd.f32 %v2774, %v3030
      %v3079 = vadd.f32 %v2775, %v3033
      %v3080 = vadd.f32 %v2776, %v3038
      %v3081 = vadd.f32 %v2777, %v3041
      %v3082 = vadd.f32 %v2778, %v3046
      %v3083 = vadd.f32 %v2779, %v3049
      %v3084 = vpack.c.bf16 %v1152, %v1151
      %v3085 = vld [vmem:[%s4 + $0x20] sm:$0xf]
      %v3086 = vld [vmem:[%s4 + $0x24] sm:$0xf]
      %v3089 = vunpack.c.l.b16 %v3085
      %v3090 = vunpack.c.l.b16 %v3086
      %v3091 = vpack.c.b16 %v3090, %v3089
      %v3094 = vsel %vm658, %v3084, 0
      %3096 = vmatprep.subr.bf16.mxu0 0
      %3097 = vmatpush1.bf16.msra.mxu0 %v3091
      %3098 = vmatprep.subr.bf16.mxu0 0
      %3099 = vmatpush1.bf16.msra.mxu0 0
      %3100 = vmatprep.subr.bf16.mxu0 0
      %3101 = vmatpush1.bf16.msra.mxu0 0
      %3102 = vmatprep.subr.bf16.mxu0 0
      %3103 = vmatpush1.bf16.msra.mxu0 0
      %3104 = vmatprep.subr.bf16.mxu0 0
      %3105 = vmatpush1.bf16.msra.mxu0 0
      %3106 = vmatprep.subr.bf16.mxu0 0
      %3107 = vmatpush1.bf16.msra.mxu0 0
      %3108 = vmatprep.subr.bf16.mxu0 0
      %3109 = vmatpush1.bf16.msra.mxu0 0
      %3110 = vmatprep.subr.bf16.mxu0 0
      %3111 = vmatpush1.bf16.msra.mxu0 0
      %3112 = vmatprep.subr.bf16.mxu0 0
      %3113 = vmatpush1.bf16.msra.mxu0 0
      %3114 = vmatprep.subr.bf16.mxu0 0
      %3115 = vmatpush1.bf16.msra.mxu0 0
      %3116 = vmatprep.subr.bf16.mxu0 0
      %3117 = vmatpush1.bf16.msra.mxu0 0
      %3118 = vmatprep.subr.bf16.mxu0 0
      %3119 = vmatpush1.bf16.msra.mxu0 0
      %3120 = vmatprep.subr.bf16.mxu0 0
      %3121 = vmatpush1.bf16.msra.mxu0 0
      %3122 = vmatprep.subr.bf16.mxu0 0
      %3123 = vmatpush1.bf16.msra.mxu0 0
      %3124 = vmatprep.subr.bf16.mxu0 0
      %3125 = vmatpush1.bf16.msra.mxu0 0
      %3126 = vmatprep.subr.bf16.mxu0 0
      %3127 = vmatpush1.bf16.msra.mxu0 0
      %3128 = vmatprep.mubr.bf16.mxu0 0
      %3129 = vmatmul.mubr.bf16.gmra.mrb[0].mxu0 %v1869
      %v3130 = vpop.f32.mrb[0].mxu0
      %v3131 = vadd.f32 0.0, %v3130
      %v3132 = vpop.f32.mrb[0].mxu0
      %v3133 = vpop.f32.mrb[0].mxu0
      %v3134 = vadd.f32 0.0, %v3133
      %v3135 = vpop.f32.mrb[0].mxu0
      %3136 = vmatprep.mubr.bf16.mxu0 0
      %3137 = vmatmul.mubr.bf16.gmra.mrb[0].mxu0 %v1872
      %v3138 = vpop.f32.mrb[0].mxu0
      %v3139 = vadd.f32 0.0, %v3138
      %v3140 = vpop.f32.mrb[0].mxu0
      %v3141 = vpop.f32.mrb[0].mxu0
      %v3142 = vadd.f32 0.0, %v3141
      %v3143 = vpop.f32.mrb[0].mxu0
      %3144 = vmatprep.mubr.bf16.mxu0 0
      %3145 = vmatmul.mubr.bf16.gmra.mrb[0].mxu0 %v1875
      %v3146 = vpop.f32.mrb[0].mxu0
      %v3147 = vadd.f32 0.0, %v3146
      %v3148 = vpop.f32.mrb[0].mxu0
      %v3149 = vpop.f32.mrb[0].mxu0
      %v3150 = vadd.f32 0.0, %v3149
      %v3151 = vpop.f32.mrb[0].mxu0
      %3152 = vmatprep.mubr.bf16.mxu0 0
      %3153 = vmatmul.mubr.bf16.gmra.mrb[0].mxu0 %v1878
      %v3154 = vpop.f32.mrb[0].mxu0
      %v3155 = vadd.f32 0.0, %v3154
      %v3156 = vpop.f32.mrb[0].mxu0
      %v3157 = vpop.f32.mrb[0].mxu0
      %v3158 = vadd.f32 0.0, %v3157
      %v3159 = vpop.f32.mrb[0].mxu0
      %3160 = vmatprep.mubr.bf16.mxu0 0
      %3161 = vmatmul.mubr.bf16.gmra.mrb[0].mxu0 %v1881
      %v3162 = vpop.f32.mrb[0].mxu0
      %v3163 = vadd.f32 0.0, %v3162
      %v3164 = vpop.f32.mrb[0].mxu0
      %v3165 = vpop.f32.mrb[0].mxu0
      %v3166 = vadd.f32 0.0, %v3165
      %v3167 = vpop.f32.mrb[0].mxu0
      %3168 = vmatprep.mubr.bf16.mxu0 0
      %3169 = vmatmul.mubr.bf16.gmra.mrb[0].mxu0 %v1884
      %v3170 = vpop.f32.mrb[0].mxu0
      %v3171 = vadd.f32 0.0, %v3170
      %v3172 = vpop.f32.mrb[0].mxu0
      %v3173 = vpop.f32.mrb[0].mxu0
      %v3174 = vadd.f32 0.0, %v3173
      %v3175 = vpop.f32.mrb[0].mxu0
      %3176 = vmatprep.mubr.bf16.mxu0 0
      %3177 = vmatmul.mubr.bf16.gmra.mrb[0].mxu0 %v1887
      %v3178 = vpop.f32.mrb[0].mxu0
      %v3179 = vadd.f32 0.0, %v3178
      %v3180 = vpop.f32.mrb[0].mxu0
      %v3181 = vpop.f32.mrb[0].mxu0
      %v3182 = vadd.f32 0.0, %v3181
      %v3183 = vpop.f32.mrb[0].mxu0
      %3184 = vmatprep.mubr.bf16.mxu0 0
      %3185 = vmatmul.mubr.bf16.gmra.mrb[0].mxu0 %v1890
      %v3186 = vpop.f32.mrb[0].mxu0
      %v3187 = vadd.f32 0.0, %v3186
      %v3188 = vpop.f32.mrb[0].mxu0
      %v3189 = vpop.f32.mrb[0].mxu0
      %v3190 = vadd.f32 0.0, %v3189
      %v3191 = vpop.f32.mrb[0].mxu0
      %3192 = vmatprep.mubr.bf16.mxu0 0
      %3193 = vmatmul.mubr.bf16.gmra.mrb[0].mxu0 %v1893
      %v3194 = vpop.f32.mrb[0].mxu0
      %v3195 = vadd.f32 0.0, %v3194
      %v3196 = vpop.f32.mrb[0].mxu0
      %v3197 = vpop.f32.mrb[0].mxu0
      %v3198 = vadd.f32 0.0, %v3197
      %v3199 = vpop.f32.mrb[0].mxu0
      %3200 = vmatprep.mubr.bf16.mxu0 0
      %3201 = vmatmul.mubr.bf16.gmra.mrb[0].mxu0 %v1896
      %v3202 = vpop.f32.mrb[0].mxu0
      %v3203 = vadd.f32 0.0, %v3202
      %v3204 = vpop.f32.mrb[0].mxu0
      %v3205 = vpop.f32.mrb[0].mxu0
      %v3206 = vadd.f32 0.0, %v3205
      %v3207 = vpop.f32.mrb[0].mxu0
      %3208 = vmatprep.mubr.bf16.mxu0 0
      %3209 = vmatmul.mubr.bf16.gmra.mrb[0].mxu0 %v1899
      %v3210 = vpop.f32.mrb[0].mxu0
      %v3211 = vadd.f32 0.0, %v3210
      %v3212 = vpop.f32.mrb[0].mxu0
      %v3213 = vpop.f32.mrb[0].mxu0
      %v3214 = vadd.f32 0.0, %v3213
      %v3215 = vpop.f32.mrb[0].mxu0
      %3216 = vmatprep.mubr.bf16.mxu0 0
      %3217 = vmatmul.mubr.bf16.gmra.mrb[0].mxu0 %v1902
      %v3218 = vpop.f32.mrb[0].mxu0
      %v3219 = vadd.f32 0.0, %v3218
      %v3220 = vpop.f32.mrb[0].mxu0
      %v3221 = vpop.f32.mrb[0].mxu0
      %v3222 = vadd.f32 0.0, %v3221
      %v3223 = vpop.f32.mrb[0].mxu0
      %3224 = vmatprep.mubr.bf16.mxu0 0
      %3225 = vmatmul.mubr.bf16.gmra.mrb[0].mxu0 %v1905
      %v3226 = vpop.f32.mrb[0].mxu0
      %v3227 = vadd.f32 0.0, %v3226
      %v3228 = vpop.f32.mrb[0].mxu0
      %v3229 = vpop.f32.mrb[0].mxu0
      %v3230 = vadd.f32 0.0, %v3229
      %v3231 = vpop.f32.mrb[0].mxu0
      %3232 = vmatprep.mubr.bf16.mxu0 0
      %3233 = vmatmul.mubr.bf16.gmra.mrb[0].mxu0 %v1908
      %v3234 = vpop.f32.mrb[0].mxu0
      %v3235 = vadd.f32 0.0, %v3234
      %v3236 = vpop.f32.mrb[0].mxu0
      %v3237 = vpop.f32.mrb[0].mxu0
      %v3238 = vadd.f32 0.0, %v3237
      %v3239 = vpop.f32.mrb[0].mxu0
      %3240 = vmatprep.mubr.bf16.mxu0 0
      %3241 = vmatmul.mubr.bf16.gmra.mrb[0].mxu0 %v1911
      %v3242 = vpop.f32.mrb[0].mxu0
      %v3243 = vadd.f32 0.0, %v3242
      %v3244 = vpop.f32.mrb[0].mxu0
      %v3245 = vpop.f32.mrb[0].mxu0
      %v3246 = vadd.f32 0.0, %v3245
      %v3247 = vpop.f32.mrb[0].mxu0
      %3248 = vmatprep.mubr.bf16.mxu0 0
      %3249 = vmatmul.mubr.bf16.gmra.mrb[0].mxu0 %v3094
      %v3250 = vpop.f32.mrb[0].mxu0
      %v3251 = vadd.f32 0.0, %v3250
      %v3252 = vpop.f32.mrb[0].mxu0
      %v3253 = vpop.f32.mrb[0].mxu0
      %v3254 = vadd.f32 0.0, %v3253
      %v3255 = vpop.f32.mrb[0].mxu0
      %3256 = vdwg.mxu0
      %v3257 = vadd.f32 %v3052, %v3131
      %v3258 = vadd.f32 %v3053, %v3134
      %v3259 = vadd.f32 %v3054, %v3139
      %v3260 = vadd.f32 %v3055, %v3142
      %v3261 = vadd.f32 %v3056, %v3147
      %v3262 = vadd.f32 %v3057, %v3150
      %v3263 = vadd.f32 %v3058, %v3155
      %v3264 = vadd.f32 %v3059, %v3158
      %v3265 = vadd.f32 %v3060, %v3163
      %v3266 = vadd.f32 %v3061, %v3166
      %v3267 = vadd.f32 %v3062, %v3171
      %v3268 = vadd.f32 %v3063, %v3174
      %v3269 = vadd.f32 %v3064, %v3179
      %v3270 = vadd.f32 %v3065, %v3182
      %v3271 = vadd.f32 %v3066, %v3187
      %v3272 = vadd.f32 %v3067, %v3190
      %v3273 = vadd.f32 %v3068, %v3195
      %v3274 = vadd.f32 %v3069, %v3198
      %v3275 = vadd.f32 %v3070, %v3203
      %v3276 = vadd.f32 %v3071, %v3206
      %v3277 = vadd.f32 %v3072, %v3211
      %v3278 = vadd.f32 %v3073, %v3214
      %v3279 = vadd.f32 %v3074, %v3219
      %v3280 = vadd.f32 %v3075, %v3222
      %v3281 = vadd.f32 %v3076, %v3227
      %v3282 = vadd.f32 %v3077, %v3230
      %v3283 = vadd.f32 %v3078, %v3235
      %v3284 = vadd.f32 %v3079, %v3238
      %v3285 = vadd.f32 %v3080, %v3243
      %v3286 = vadd.f32 %v3081, %v3246
      %v3287 = vadd.f32 %v3082, %v3251
      %v3288 = vadd.f32 %v3083, %v3254
      %v3289 = vrot.slane %v1152, 1
      %v3290 = vsel %vm2386, %v2449, %v3289
      %v3291 = vsel %vm2386, %v3289, %v2387
      %v3294 = vsel %vm2353, %v2392, 0.0
      %v3295 = vsel %vm2354, %v2394, 0.0
      %v3296 = vsel %vm2355, %v2396, 0.0
      %v3297 = vsel %vm2356, %v2398, 0.0
      %v3298 = vsel %vm2357, %v2400, 0.0
      %v3299 = vsel %vm2358, %v2402, 0.0
      %v3300 = vsel %vm2359, %v2404, 0.0
      %v3301 = vsel %vm2360, %v2406, 0.0
      %v3302 = vsel %vm2361, %v2408, 0.0
      %v3303 = vsel %vm2362, %v2410, 0.0
      %v3304 = vsel %vm2363, %v2412, 0.0
      %v3305 = vsel %vm2364, %v2414, 0.0
      %v3306 = vsel %vm2365, %v2416, 0.0
      %v3307 = vsel %vm2366, %v2418, 0.0
      %v3308 = vsel %vm2367, %v2420, 0.0
      %v3309 = vsel %vm2368, %v2422, 0.0
      %v3310 = vsel %vm2369, %v2424, 0.0
      %v3311 = vsel %vm2370, %v2426, 0.0
      %v3312 = vsel %vm2371, %v2428, 0.0
      %v3313 = vsel %vm2372, %v2430, 0.0
      %v3314 = vsel %vm2373, %v2432, 0.0
      %v3315 = vsel %vm2374, %v2434, 0.0
      %v3316 = vsel %vm2375, %v2436, 0.0
      %v3317 = vsel %vm2376, %v2438, 0.0
      %v3318 = vsel %vm2377, %v2440, 0.0
      %v3319 = vsel %vm2378, %v2442, 0.0
      %v3320 = vsel %vm2379, %v2444, 0.0
      %v3321 = vsel %vm2380, %v2446, 0.0
      %v3322 = vsel %vm2381, %v2448, 0.0
      %v3323 = vsel %vm2382, %v2450, 0.0
      %v3324 = vsel %vm2383, %v3290, 0.0
      %v3325 = vsel %vm2384, %v3291, 0.0
      %v3326 = vpack.c.bf16 %v3295, %v3294
      %v3327 = vpack.c.bf16 %v3297, %v3296
      %v3328 = vpack.c.bf16 %v3299, %v3298
      %v3329 = vpack.c.bf16 %v3301, %v3300
      %v3330 = vpack.c.bf16 %v3303, %v3302
      %v3331 = vpack.c.bf16 %v3305, %v3304
      %v3332 = vpack.c.bf16 %v3307, %v3306
      %v3333 = vpack.c.bf16 %v3309, %v3308
      %v3334 = vpack.c.bf16 %v3311, %v3310
      %v3335 = vpack.c.bf16 %v3313, %v3312
      %v3336 = vpack.c.bf16 %v3315, %v3314
      %v3337 = vpack.c.bf16 %v3317, %v3316
      %v3338 = vpack.c.bf16 %v3319, %v3318
      %v3339 = vpack.c.bf16 %v3321, %v3320
      %v3340 = vpack.c.bf16 %v3323, %v3322
      %v3341 = vpack.c.bf16 %v3325, %v3324
      %v3342 = vld [vmem:[%s4 + $0x28] sm:$0xf]
      %v3343 = vld [vmem:[%s4 + $0x2c] sm:$0xf]
      %v3346 = vunpack.c.l.b16 %v3342
      %v3347 = vunpack.c.l.b16 %v3343
      %v3348 = vpack.c.b16 %v3347, %v3346
      %v3351 = vsel %vm658, %v3326, 0
      %v3354 = vsel %vm658, %v3327, 0
      %v3357 = vsel %vm658, %v3328, 0
      %v3360 = vsel %vm658, %v3329, 0
      %v3363 = vsel %vm658, %v3330, 0
      %v3366 = vsel %vm658, %v3331, 0
      %v3369 = vsel %vm658, %v3332, 0
      %v3372 = vsel %vm658, %v3333, 0
      %v3375 = vsel %vm658, %v3334, 0
      %v3378 = vsel %vm658, %v3335, 0
      %v3381 = vsel %vm658, %v3336, 0
      %v3384 = vsel %vm658, %v3337, 0
      %v3387 = vsel %vm658, %v3338, 0
      %v3390 = vsel %vm658, %v3339, 0
      %v3393 = vsel %vm658, %v3340, 0
      %v3396 = vsel %vm658, %v3341, 0
      %3398 = vmatprep.subr.bf16.mxu0 0
      %3399 = vmatpush1.bf16.msra.mxu0 %v3348
      %3400 = vmatprep.subr.bf16.mxu0 0
      %3401 = vmatpush1.bf16.msra.mxu0 0
      %3402 = vmatprep.subr.bf16.mxu0 0
      %3403 = vmatpush1.bf16.msra.mxu0 0
      %3404 = vmatprep.subr.bf16.mxu0 0
      %3405 = vmatpush1.bf16.msra.mxu0 0
      %3406 = vmatprep.subr.bf16.mxu0 0
      %3407 = vmatpush1.bf16.msra.mxu0 0
      %3408 = vmatprep.subr.bf16.mxu0 0
      %3409 = vmatpush1.bf16.msra.mxu0 0
      %3410 = vmatprep.subr.bf16.mxu0 0
      %3411 = vmatpush1.bf16.msra.mxu0 0
      %3412 = vmatprep.subr.bf16.mxu0 0
      %3413 = vmatpush1.bf16.msra.mxu0 0
      %3414 = vmatprep.subr.bf16.mxu0 0
      %3415 = vmatpush1.bf16.msra.mxu0 0
      %3416 = vmatprep.subr.bf16.mxu0 0
      %3417 = vmatpush1.bf16.msra.mxu0 0
      %3418 = vmatprep.subr.bf16.mxu0 0
      %3419 = vmatpush1.bf16.msra.mxu0 0
      %3420 = vmatprep.subr.bf16.mxu0 0
      %3421 = vmatpush1.bf16.msra.mxu0 0
      %3422 = vmatprep.subr.bf16.mxu0 0
      %3423 = vmatpush1.bf16.msra.mxu0 0
      %3424 = vmatprep.subr.bf16.mxu0 0
      %3425 = vmatpush1.bf16.msra.mxu0 0
      %3426 = vmatprep.subr.bf16.mxu0 0
      %3427 = vmatpush1.bf16.msra.mxu0 0
      %3428 = vmatprep.subr.bf16.mxu0 0
      %3429 = vmatpush1.bf16.msra.mxu0 0
      %3430 = vmatprep.mubr.bf16.mxu0 0
      %3431 = vmatmul.mubr.bf16.gmra.mrb[0].mxu0 %v3351
      %v3432 = vpop.f32.mrb[0].mxu0
      %v3433 = vadd.f32 0.0, %v3432
      %v3434 = vpop.f32.mrb[0].mxu0
      %v3435 = vpop.f32.mrb[0].mxu0
      %v3436 = vadd.f32 0.0, %v3435
      %v3437 = vpop.f32.mrb[0].mxu0
      %3438 = vmatprep.mubr.bf16.mxu0 0
      %3439 = vmatmul.mubr.bf16.gmra.mrb[0].mxu0 %v3354
      %v3440 = vpop.f32.mrb[0].mxu0
      %v3441 = vadd.f32 0.0, %v3440
      %v3442 = vpop.f32.mrb[0].mxu0
      %v3443 = vpop.f32.mrb[0].mxu0
      %v3444 = vadd.f32 0.0, %v3443
      %v3445 = vpop.f32.mrb[0].mxu0
      %3446 = vmatprep.mubr.bf16.mxu0 0
      %3447 = vmatmul.mubr.bf16.gmra.mrb[0].mxu0 %v3357
      %v3448 = vpop.f32.mrb[0].mxu0
      %v3449 = vadd.f32 0.0, %v3448
      %v3450 = vpop.f32.mrb[0].mxu0
      %v3451 = vpop.f32.mrb[0].mxu0
      %v3452 = vadd.f32 0.0, %v3451
      %v3453 = vpop.f32.mrb[0].mxu0
      %3454 = vmatprep.mubr.bf16.mxu0 0
      %3455 = vmatmul.mubr.bf16.gmra.mrb[0].mxu0 %v3360
      %v3456 = vpop.f32.mrb[0].mxu0
      %v3457 = vadd.f32 0.0, %v3456
      %v3458 = vpop.f32.mrb[0].mxu0
      %v3459 = vpop.f32.mrb[0].mxu0
      %v3460 = vadd.f32 0.0, %v3459
      %v3461 = vpop.f32.mrb[0].mxu0
      %3462 = vmatprep.mubr.bf16.mxu0 0
      %3463 = vmatmul.mubr.bf16.gmra.mrb[0].mxu0 %v3363
      %v3464 = vpop.f32.mrb[0].mxu0
      %v3465 = vadd.f32 0.0, %v3464
      %v3466 = vpop.f32.mrb[0].mxu0
      %v3467 = vpop.f32.mrb[0].mxu0
      %v3468 = vadd.f32 0.0, %v3467
      %v3469 = vpop.f32.mrb[0].mxu0
      %3470 = vmatprep.mubr.bf16.mxu0 0
      %3471 = vmatmul.mubr.bf16.gmra.mrb[0].mxu0 %v3366
      %v3472 = vpop.f32.mrb[0].mxu0
      %v3473 = vadd.f32 0.0, %v3472
      %v3474 = vpop.f32.mrb[0].mxu0
      %v3475 = vpop.f32.mrb[0].mxu0
      %v3476 = vadd.f32 0.0, %v3475
      %v3477 = vpop.f32.mrb[0].mxu0
      %3478 = vmatprep.mubr.bf16.mxu0 0
      %3479 = vmatmul.mubr.bf16.gmra.mrb[0].mxu0 %v3369
      %v3480 = vpop.f32.mrb[0].mxu0
      %v3481 = vadd.f32 0.0, %v3480
      %v3482 = vpop.f32.mrb[0].mxu0
      %v3483 = vpop.f32.mrb[0].mxu0
      %v3484 = vadd.f32 0.0, %v3483
      %v3485 = vpop.f32.mrb[0].mxu0
      %3486 = vmatprep.mubr.bf16.mxu0 0
      %3487 = vmatmul.mubr.bf16.gmra.mrb[0].mxu0 %v3372
      %v3488 = vpop.f32.mrb[0].mxu0
      %v3489 = vadd.f32 0.0, %v3488
      %v3490 = vpop.f32.mrb[0].mxu0
      %v3491 = vpop.f32.mrb[0].mxu0
      %v3492 = vadd.f32 0.0, %v3491
      %v3493 = vpop.f32.mrb[0].mxu0
      %3494 = vmatprep.mubr.bf16.mxu0 0
      %3495 = vmatmul.mubr.bf16.gmra.mrb[0].mxu0 %v3375
      %v3496 = vpop.f32.mrb[0].mxu0
      %v3497 = vadd.f32 0.0, %v3496
      %v3498 = vpop.f32.mrb[0].mxu0
      %v3499 = vpop.f32.mrb[0].mxu0
      %v3500 = vadd.f32 0.0, %v3499
      %v3501 = vpop.f32.mrb[0].mxu0
      %3502 = vmatprep.mubr.bf16.mxu0 0
      %3503 = vmatmul.mubr.bf16.gmra.mrb[0].mxu0 %v3378
      %v3504 = vpop.f32.mrb[0].mxu0
      %v3505 = vadd.f32 0.0, %v3504
      %v3506 = vpop.f32.mrb[0].mxu0
      %v3507 = vpop.f32.mrb[0].mxu0
      %v3508 = vadd.f32 0.0, %v3507
      %v3509 = vpop.f32.mrb[0].mxu0
      %3510 = vmatprep.mubr.bf16.mxu0 0
      %3511 = vmatmul.mubr.bf16.gmra.mrb[0].mxu0 %v3381
      %v3512 = vpop.f32.mrb[0].mxu0
      %v3513 = vadd.f32 0.0, %v3512
      %v3514 = vpop.f32.mrb[0].mxu0
      %v3515 = vpop.f32.mrb[0].mxu0
      %v3516 = vadd.f32 0.0, %v3515
      %v3517 = vpop.f32.mrb[0].mxu0
      %3518 = vmatprep.mubr.bf16.mxu0 0
      %3519 = vmatmul.mubr.bf16.gmra.mrb[0].mxu0 %v3384
      %v3520 = vpop.f32.mrb[0].mxu0
      %v3521 = vadd.f32 0.0, %v3520
      %v3522 = vpop.f32.mrb[0].mxu0
      %v3523 = vpop.f32.mrb[0].mxu0
      %v3524 = vadd.f32 0.0, %v3523
      %v3525 = vpop.f32.mrb[0].mxu0
      %3526 = vmatprep.mubr.bf16.mxu0 0
      %3527 = vmatmul.mubr.bf16.gmra.mrb[0].mxu0 %v3387
      %v3528 = vpop.f32.mrb[0].mxu0
      %v3529 = vadd.f32 0.0, %v3528
      %v3530 = vpop.f32.mrb[0].mxu0
      %v3531 = vpop.f32.mrb[0].mxu0
      %v3532 = vadd.f32 0.0, %v3531
      %v3533 = vpop.f32.mrb[0].mxu0
      %3534 = vmatprep.mubr.bf16.mxu0 0
      %3535 = vmatmul.mubr.bf16.gmra.mrb[0].mxu0 %v3390
      %v3536 = vpop.f32.mrb[0].mxu0
      %v3537 = vadd.f32 0.0, %v3536
      %v3538 = vpop.f32.mrb[0].mxu0
      %v3539 = vpop.f32.mrb[0].mxu0
      %v3540 = vadd.f32 0.0, %v3539
      %v3541 = vpop.f32.mrb[0].mxu0
      %3542 = vmatprep.mubr.bf16.mxu0 0
      %3543 = vmatmul.mubr.bf16.gmra.mrb[0].mxu0 %v3393
      %v3544 = vpop.f32.mrb[0].mxu0
      %v3545 = vadd.f32 0.0, %v3544
      %v3546 = vpop.f32.mrb[0].mxu0
      %v3547 = vpop.f32.mrb[0].mxu0
      %v3548 = vadd.f32 0.0, %v3547
      %v3549 = vpop.f32.mrb[0].mxu0
      %3550 = vmatprep.mubr.bf16.mxu0 0
      %3551 = vmatmul.mubr.bf16.gmra.mrb[0].mxu0 %v3396
      %v3552 = vpop.f32.mrb[0].mxu0
      %v3553 = vadd.f32 0.0, %v3552
      %v3554 = vpop.f32.mrb[0].mxu0
      %v3555 = vpop.f32.mrb[0].mxu0
      %v3556 = vadd.f32 0.0, %v3555
      %v3557 = vpop.f32.mrb[0].mxu0
      %3558 = vdwg.mxu0
      %v3559 = vadd.f32 %v3257, %v3433
      %v3560 = vadd.f32 %v3258, %v3436
      %v3561 = vadd.f32 %v3259, %v3441
      %v3562 = vadd.f32 %v3260, %v3444
      %v3563 = vadd.f32 %v3261, %v3449
      %v3564 = vadd.f32 %v3262, %v3452
      %v3565 = vadd.f32 %v3263, %v3457
      %v3566 = vadd.f32 %v3264, %v3460
      %v3567 = vadd.f32 %v3265, %v3465
      %v3568 = vadd.f32 %v3266, %v3468
      %v3569 = vadd.f32 %v3267, %v3473
      %v3570 = vadd.f32 %v3268, %v3476
      %v3571 = vadd.f32 %v3269, %v3481
      %v3572 = vadd.f32 %v3270, %v3484
      %v3573 = vadd.f32 %v3271, %v3489
      %v3574 = vadd.f32 %v3272, %v3492
      %v3575 = vadd.f32 %v3273, %v3497
      %v3576 = vadd.f32 %v3274, %v3500
      %v3577 = vadd.f32 %v3275, %v3505
      %v3578 = vadd.f32 %v3276, %v3508
      %v3579 = vadd.f32 %v3277, %v3513
      %v3580 = vadd.f32 %v3278, %v3516
      %v3581 = vadd.f32 %v3279, %v3521
      %v3582 = vadd.f32 %v3280, %v3524
      %v3583 = vadd.f32 %v3281, %v3529
      %v3584 = vadd.f32 %v3282, %v3532
      %v3585 = vadd.f32 %v3283, %v3537
      %v3586 = vadd.f32 %v3284, %v3540
      %v3587 = vadd.f32 %v3285, %v3545
      %v3588 = vadd.f32 %v3286, %v3548
      %v3589 = vadd.f32 %v3287, %v3553
      %v3590 = vadd.f32 %v3288, %v3556
      %v3591 = vsel %vm1697, %v2783, %v1698
      %v3593 = vsel %vm1634, %v1705, 0.0
      %v3594 = vsel %vm1635, %v1707, 0.0
      %v3595 = vsel %vm1636, %v1709, 0.0
      %v3596 = vsel %vm1637, %v1711, 0.0
      %v3597 = vsel %vm1638, %v1713, 0.0
      %v3598 = vsel %vm1639, %v1715, 0.0
      %v3599 = vsel %vm1640, %v1717, 0.0
      %v3600 = vsel %vm1641, %v1719, 0.0
      %v3601 = vsel %vm1642, %v1721, 0.0
      %v3602 = vsel %vm1643, %v1723, 0.0
      %v3603 = vsel %vm1644, %v1725, 0.0
      %v3604 = vsel %vm1645, %v1727, 0.0
      %v3605 = vsel %vm1646, %v1729, 0.0
      %v3606 = vsel %vm1647, %v1731, 0.0
      %v3607 = vsel %vm1648, %v1733, 0.0
      %v3608 = vsel %vm1649, %v1735, 0.0
      %v3609 = vsel %vm1650, %v1737, 0.0
      %v3610 = vsel %vm1651, %v1739, 0.0
      %v3611 = vsel %vm1652, %v1741, 0.0
      %v3612 = vsel %vm1653, %v1743, 0.0
      %v3613 = vsel %vm1654, %v1745, 0.0
      %v3614 = vsel %vm1655, %v1747, 0.0
      %v3615 = vsel %vm1656, %v1749, 0.0
      %v3616 = vsel %vm1657, %v1751, 0.0
      %v3617 = vsel %vm1658, %v1753, 0.0
      %v3618 = vsel %vm1659, %v1755, 0.0
      %v3619 = vsel %vm1660, %v1757, 0.0
      %v3620 = vsel %vm1661, %v1759, 0.0
      %v3621 = vsel %vm1662, %v2782, 0.0
      %v3622 = vsel %vm1663, %v2784, 0.0
      %v3623 = vsel %vm1664, %v3591, 0.0
      %v3624 = vsel %vm1665, %v1699, 0.0
      %v3625 = vpack.c.bf16 %v3594, %v3593
      %v3626 = vpack.c.bf16 %v3596, %v3595
      %v3627 = vpack.c.bf16 %v3598, %v3597
      %v3628 = vpack.c.bf16 %v3600, %v3599
      %v3629 = vpack.c.bf16 %v3602, %v3601
      %v3630 = vpack.c.bf16 %v3604, %v3603
      %v3631 = vpack.c.bf16 %v3606, %v3605
      %v3632 = vpack.c.bf16 %v3608, %v3607
      %v3633 = vpack.c.bf16 %v3610, %v3609
      %v3634 = vpack.c.bf16 %v3612, %v3611
      %v3635 = vpack.c.bf16 %v3614, %v3613
      %v3636 = vpack.c.bf16 %v3616, %v3615
      %v3637 = vpack.c.bf16 %v3618, %v3617
      %v3638 = vpack.c.bf16 %v3620, %v3619
      %v3639 = vpack.c.bf16 %v3622, %v3621
      %v3640 = vpack.c.bf16 %v3624, %v3623
      %v3641 = vld [vmem:[%s4 + $0x30] sm:$0xf]
      %v3642 = vld [vmem:[%s4 + $0x34] sm:$0xf]
      %v3645 = vunpack.c.l.b16 %v3641
      %v3646 = vunpack.c.l.b16 %v3642
      %v3647 = vpack.c.b16 %v3646, %v3645
      %v3650 = vsel %vm658, %v3625, 0
      %v3653 = vsel %vm658, %v3626, 0
      %v3656 = vsel %vm658, %v3627, 0
      %v3659 = vsel %vm658, %v3628, 0
      %v3662 = vsel %vm658, %v3629, 0
      %v3665 = vsel %vm658, %v3630, 0
      %v3668 = vsel %vm658, %v3631, 0
      %v3671 = vsel %vm658, %v3632, 0
      %v3674 = vsel %vm658, %v3633, 0
      %v3677 = vsel %vm658, %v3634, 0
      %v3680 = vsel %vm658, %v3635, 0
      %v3683 = vsel %vm658, %v3636, 0
      %v3686 = vsel %vm658, %v3637, 0
      %v3689 = vsel %vm658, %v3638, 0
      %v3692 = vsel %vm658, %v3639, 0
      %v3695 = vsel %vm658, %v3640, 0
      %3697 = vmatprep.subr.bf16.mxu0 0
      %3698 = vmatpush1.bf16.msra.mxu0 %v3647
      %3699 = vmatprep.subr.bf16.mxu0 0
      %3700 = vmatpush1.bf16.msra.mxu0 0
      %3701 = vmatprep.subr.bf16.mxu0 0
      %3702 = vmatpush1.bf16.msra.mxu0 0
      %3703 = vmatprep.subr.bf16.mxu0 0
      %3704 = vmatpush1.bf16.msra.mxu0 0
      %3705 = vmatprep.subr.bf16.mxu0 0
      %3706 = vmatpush1.bf16.msra.mxu0 0
      %3707 = vmatprep.subr.bf16.mxu0 0
      %3708 = vmatpush1.bf16.msra.mxu0 0
      %3709 = vmatprep.subr.bf16.mxu0 0
      %3710 = vmatpush1.bf16.msra.mxu0 0
      %3711 = vmatprep.subr.bf16.mxu0 0
      %3712 = vmatpush1.bf16.msra.mxu0 0
      %3713 = vmatprep.subr.bf16.mxu0 0
      %3714 = vmatpush1.bf16.msra.mxu0 0
      %3715 = vmatprep.subr.bf16.mxu0 0
      %3716 = vmatpush1.bf16.msra.mxu0 0
      %3717 = vmatprep.subr.bf16.mxu0 0
      %3718 = vmatpush1.bf16.msra.mxu0 0
      %3719 = vmatprep.subr.bf16.mxu0 0
      %3720 = vmatpush1.bf16.msra.mxu0 0
      %3721 = vmatprep.subr.bf16.mxu0 0
      %3722 = vmatpush1.bf16.msra.mxu0 0
      %3723 = vmatprep.subr.bf16.mxu0 0
      %3724 = vmatpush1.bf16.msra.mxu0 0
      %3725 = vmatprep.subr.bf16.mxu0 0
      %3726 = vmatpush1.bf16.msra.mxu0 0
      %3727 = vmatprep.subr.bf16.mxu0 0
      %3728 = vmatpush1.bf16.msra.mxu0 0
      %3729 = vmatprep.mubr.bf16.mxu0 0
      %3730 = vmatmul.mubr.bf16.gmra.mrb[0].mxu0 %v3650
      %v3731 = vpop.f32.mrb[0].mxu0
      %v3732 = vadd.f32 0.0, %v3731
      %v3733 = vpop.f32.mrb[0].mxu0
      %v3734 = vpop.f32.mrb[0].mxu0
      %v3735 = vadd.f32 0.0, %v3734
      %v3736 = vpop.f32.mrb[0].mxu0
      %3737 = vmatprep.mubr.bf16.mxu0 0
      %3738 = vmatmul.mubr.bf16.gmra.mrb[0].mxu0 %v3653
      %v3739 = vpop.f32.mrb[0].mxu0
      %v3740 = vadd.f32 0.0, %v3739
      %v3741 = vpop.f32.mrb[0].mxu0
      %v3742 = vpop.f32.mrb[0].mxu0
      %v3743 = vadd.f32 0.0, %v3742
      %v3744 = vpop.f32.mrb[0].mxu0
      %3745 = vmatprep.mubr.bf16.mxu0 0
      %3746 = vmatmul.mubr.bf16.gmra.mrb[0].mxu0 %v3656
      %v3747 = vpop.f32.mrb[0].mxu0
      %v3748 = vadd.f32 0.0, %v3747
      %v3749 = vpop.f32.mrb[0].mxu0
      %v3750 = vpop.f32.mrb[0].mxu0
      %v3751 = vadd.f32 0.0, %v3750
      %v3752 = vpop.f32.mrb[0].mxu0
      %3753 = vmatprep.mubr.bf16.mxu0 0
      %3754 = vmatmul.mubr.bf16.gmra.mrb[0].mxu0 %v3659
      %v3755 = vpop.f32.mrb[0].mxu0
      %v3756 = vadd.f32 0.0, %v3755
      %v3757 = vpop.f32.mrb[0].mxu0
      %v3758 = vpop.f32.mrb[0].mxu0
      %v3759 = vadd.f32 0.0, %v3758
      %v3760 = vpop.f32.mrb[0].mxu0
      %3761 = vmatprep.mubr.bf16.mxu0 0
      %3762 = vmatmul.mubr.bf16.gmra.mrb[0].mxu0 %v3662
      %v3763 = vpop.f32.mrb[0].mxu0
      %v3764 = vadd.f32 0.0, %v3763
      %v3765 = vpop.f32.mrb[0].mxu0
      %v3766 = vpop.f32.mrb[0].mxu0
      %v3767 = vadd.f32 0.0, %v3766
      %v3768 = vpop.f32.mrb[0].mxu0
      %3769 = vmatprep.mubr.bf16.mxu0 0
      %3770 = vmatmul.mubr.bf16.gmra.mrb[0].mxu0 %v3665
      %v3771 = vpop.f32.mrb[0].mxu0
      %v3772 = vadd.f32 0.0, %v3771
      %v3773 = vpop.f32.mrb[0].mxu0
      %v3774 = vpop.f32.mrb[0].mxu0
      %v3775 = vadd.f32 0.0, %v3774
      %v3776 = vpop.f32.mrb[0].mxu0
      %3777 = vmatprep.mubr.bf16.mxu0 0
      %3778 = vmatmul.mubr.bf16.gmra.mrb[0].mxu0 %v3668
      %v3779 = vpop.f32.mrb[0].mxu0
      %v3780 = vadd.f32 0.0, %v3779
      %v3781 = vpop.f32.mrb[0].mxu0
      %v3782 = vpop.f32.mrb[0].mxu0
      %v3783 = vadd.f32 0.0, %v3782
      %v3784 = vpop.f32.mrb[0].mxu0
      %3785 = vmatprep.mubr.bf16.mxu0 0
      %3786 = vmatmul.mubr.bf16.gmra.mrb[0].mxu0 %v3671
      %v3787 = vpop.f32.mrb[0].mxu0
      %v3788 = vadd.f32 0.0, %v3787
      %v3789 = vpop.f32.mrb[0].mxu0
      %v3790 = vpop.f32.mrb[0].mxu0
      %v3791 = vadd.f32 0.0, %v3790
      %v3792 = vpop.f32.mrb[0].mxu0
      %3793 = vmatprep.mubr.bf16.mxu0 0
      %3794 = vmatmul.mubr.bf16.gmra.mrb[0].mxu0 %v3674
      %v3795 = vpop.f32.mrb[0].mxu0
      %v3796 = vadd.f32 0.0, %v3795
      %v3797 = vpop.f32.mrb[0].mxu0
      %v3798 = vpop.f32.mrb[0].mxu0
      %v3799 = vadd.f32 0.0, %v3798
      %v3800 = vpop.f32.mrb[0].mxu0
      %3801 = vmatprep.mubr.bf16.mxu0 0
      %3802 = vmatmul.mubr.bf16.gmra.mrb[0].mxu0 %v3677
      %v3803 = vpop.f32.mrb[0].mxu0
      %v3804 = vadd.f32 0.0, %v3803
      %v3805 = vpop.f32.mrb[0].mxu0
      %v3806 = vpop.f32.mrb[0].mxu0
      %v3807 = vadd.f32 0.0, %v3806
      %v3808 = vpop.f32.mrb[0].mxu0
      %3809 = vmatprep.mubr.bf16.mxu0 0
      %3810 = vmatmul.mubr.bf16.gmra.mrb[0].mxu0 %v3680
      %v3811 = vpop.f32.mrb[0].mxu0
      %v3812 = vadd.f32 0.0, %v3811
      %v3813 = vpop.f32.mrb[0].mxu0
      %v3814 = vpop.f32.mrb[0].mxu0
      %v3815 = vadd.f32 0.0, %v3814
      %v3816 = vpop.f32.mrb[0].mxu0
      %3817 = vmatprep.mubr.bf16.mxu0 0
      %3818 = vmatmul.mubr.bf16.gmra.mrb[0].mxu0 %v3683
      %v3819 = vpop.f32.mrb[0].mxu0
      %v3820 = vadd.f32 0.0, %v3819
      %v3821 = vpop.f32.mrb[0].mxu0
      %v3822 = vpop.f32.mrb[0].mxu0
      %v3823 = vadd.f32 0.0, %v3822
      %v3824 = vpop.f32.mrb[0].mxu0
      %3825 = vmatprep.mubr.bf16.mxu0 0
      %3826 = vmatmul.mubr.bf16.gmra.mrb[0].mxu0 %v3686
      %v3827 = vpop.f32.mrb[0].mxu0
      %v3828 = vadd.f32 0.0, %v3827
      %v3829 = vpop.f32.mrb[0].mxu0
      %v3830 = vpop.f32.mrb[0].mxu0
      %v3831 = vadd.f32 0.0, %v3830
      %v3832 = vpop.f32.mrb[0].mxu0
      %3833 = vmatprep.mubr.bf16.mxu0 0
      %3834 = vmatmul.mubr.bf16.gmra.mrb[0].mxu0 %v3689
      %v3835 = vpop.f32.mrb[0].mxu0
      %v3836 = vadd.f32 0.0, %v3835
      %v3837 = vpop.f32.mrb[0].mxu0
      %v3838 = vpop.f32.mrb[0].mxu0
      %v3839 = vadd.f32 0.0, %v3838
      %v3840 = vpop.f32.mrb[0].mxu0
      %3841 = vmatprep.mubr.bf16.mxu0 0
      %3842 = vmatmul.mubr.bf16.gmra.mrb[0].mxu0 %v3692
      %v3843 = vpop.f32.mrb[0].mxu0
      %v3844 = vadd.f32 0.0, %v3843
      %v3845 = vpop.f32.mrb[0].mxu0
      %v3846 = vpop.f32.mrb[0].mxu0
      %v3847 = vadd.f32 0.0, %v3846
      %v3848 = vpop.f32.mrb[0].mxu0
      %3849 = vmatprep.mubr.bf16.mxu0 0
      %3850 = vmatmul.mubr.bf16.gmra.mrb[0].mxu0 %v3695
      %v3851 = vpop.f32.mrb[0].mxu0
      %v3852 = vadd.f32 0.0, %v3851
      %v3853 = vpop.f32.mrb[0].mxu0
      %v3854 = vpop.f32.mrb[0].mxu0
      %v3855 = vadd.f32 0.0, %v3854
      %v3856 = vpop.f32.mrb[0].mxu0
      %3857 = vdwg.mxu0
      %v3858 = vadd.f32 %v3559, %v3732
      %v3859 = vadd.f32 %v3560, %v3735
      %v3860 = vadd.f32 %v3561, %v3740
      %v3861 = vadd.f32 %v3562, %v3743
      %v3862 = vadd.f32 %v3563, %v3748
      %v3863 = vadd.f32 %v3564, %v3751
      %v3864 = vadd.f32 %v3565, %v3756
      %v3865 = vadd.f32 %v3566, %v3759
      %v3866 = vadd.f32 %v3567, %v3764
      %v3867 = vadd.f32 %v3568, %v3767
      %v3868 = vadd.f32 %v3569, %v3772
      %v3869 = vadd.f32 %v3570, %v3775
      %v3870 = vadd.f32 %v3571, %v3780
      %v3871 = vadd.f32 %v3572, %v3783
      %v3872 = vadd.f32 %v3573, %v3788
      %v3873 = vadd.f32 %v3574, %v3791
      %v3874 = vadd.f32 %v3575, %v3796
      %v3875 = vadd.f32 %v3576, %v3799
      %v3876 = vadd.f32 %v3577, %v3804
      %v3877 = vadd.f32 %v3578, %v3807
      %v3878 = vadd.f32 %v3579, %v3812
      %v3879 = vadd.f32 %v3580, %v3815
      %v3880 = vadd.f32 %v3581, %v3820
      %v3881 = vadd.f32 %v3582, %v3823
      %v3882 = vadd.f32 %v3583, %v3828
      %v3883 = vadd.f32 %v3584, %v3831
      %v3884 = vadd.f32 %v3585, %v3836
      %v3885 = vadd.f32 %v3586, %v3839
      %v3886 = vadd.f32 %v3587, %v3844
      %v3887 = vadd.f32 %v3588, %v3847
      %v3888 = vadd.f32 %v3589, %v3852
      %v3889 = vadd.f32 %v3590, %v3855
      %v3890 = vld [vmem:[%s4 + $0x38] sm:$0xf]
      %v3891 = vld [vmem:[%s4 + $0x3c] sm:$0xf]
      %v3894 = vunpack.c.l.b16 %v3890
      %v3895 = vunpack.c.l.b16 %v3891
      %v3896 = vpack.c.b16 %v3895, %v3894
      %3898 = vmatprep.subr.bf16.mxu0 0
      %3899 = vmatpush1.bf16.msra.mxu0 %v3896
      %3900 = vmatprep.subr.bf16.mxu0 0
      %3901 = vmatpush1.bf16.msra.mxu0 0
      %3902 = vmatprep.subr.bf16.mxu0 0
      %3903 = vmatpush1.bf16.msra.mxu0 0
      %3904 = vmatprep.subr.bf16.mxu0 0
      %3905 = vmatpush1.bf16.msra.mxu0 0
      %3906 = vmatprep.subr.bf16.mxu0 0
      %3907 = vmatpush1.bf16.msra.mxu0 0
      %3908 = vmatprep.subr.bf16.mxu0 0
      %3909 = vmatpush1.bf16.msra.mxu0 0
      %3910 = vmatprep.subr.bf16.mxu0 0
      %3911 = vmatpush1.bf16.msra.mxu0 0
      %3912 = vmatprep.subr.bf16.mxu0 0
      %3913 = vmatpush1.bf16.msra.mxu0 0
      %3914 = vmatprep.subr.bf16.mxu0 0
      %3915 = vmatpush1.bf16.msra.mxu0 0
      %3916 = vmatprep.subr.bf16.mxu0 0
      %3917 = vmatpush1.bf16.msra.mxu0 0
      %3918 = vmatprep.subr.bf16.mxu0 0
      %3919 = vmatpush1.bf16.msra.mxu0 0
      %3920 = vmatprep.subr.bf16.mxu0 0
      %3921 = vmatpush1.bf16.msra.mxu0 0
      %3922 = vmatprep.subr.bf16.mxu0 0
      %3923 = vmatpush1.bf16.msra.mxu0 0
      %3924 = vmatprep.subr.bf16.mxu0 0
      %3925 = vmatpush1.bf16.msra.mxu0 0
      %3926 = vmatprep.subr.bf16.mxu0 0
      %3927 = vmatpush1.bf16.msra.mxu0 0
      %3928 = vmatprep.subr.bf16.mxu0 0
      %3929 = vmatpush1.bf16.msra.mxu0 0
      %3930 = vmatprep.mubr.bf16.mxu0 0
      %3931 = vmatmul.mubr.bf16.gmra.mrb[0].mxu0 %v1872
      %v3932 = vpop.f32.mrb[0].mxu0
      %v3933 = vadd.f32 0.0, %v3932
      %v3934 = vpop.f32.mrb[0].mxu0
      %v3935 = vpop.f32.mrb[0].mxu0
      %v3936 = vadd.f32 0.0, %v3935
      %v3937 = vpop.f32.mrb[0].mxu0
      %3938 = vmatprep.mubr.bf16.mxu0 0
      %3939 = vmatmul.mubr.bf16.gmra.mrb[0].mxu0 %v1875
      %v3940 = vpop.f32.mrb[0].mxu0
      %v3941 = vadd.f32 0.0, %v3940
      %v3942 = vpop.f32.mrb[0].mxu0
      %v3943 = vpop.f32.mrb[0].mxu0
      %v3944 = vadd.f32 0.0, %v3943
      %v3945 = vpop.f32.mrb[0].mxu0
      %3946 = vmatprep.mubr.bf16.mxu0 0
      %3947 = vmatmul.mubr.bf16.gmra.mrb[0].mxu0 %v1878
      %v3948 = vpop.f32.mrb[0].mxu0
      %v3949 = vadd.f32 0.0, %v3948
      %v3950 = vpop.f32.mrb[0].mxu0
      %v3951 = vpop.f32.mrb[0].mxu0
      %v3952 = vadd.f32 0.0, %v3951
      %v3953 = vpop.f32.mrb[0].mxu0
      %3954 = vmatprep.mubr.bf16.mxu0 0
      %3955 = vmatmul.mubr.bf16.gmra.mrb[0].mxu0 %v1881
      %v3956 = vpop.f32.mrb[0].mxu0
      %v3957 = vadd.f32 0.0, %v3956
      %v3958 = vpop.f32.mrb[0].mxu0
      %v3959 = vpop.f32.mrb[0].mxu0
      %v3960 = vadd.f32 0.0, %v3959
      %v3961 = vpop.f32.mrb[0].mxu0
      %3962 = vmatprep.mubr.bf16.mxu0 0
      %3963 = vmatmul.mubr.bf16.gmra.mrb[0].mxu0 %v1884
      %v3964 = vpop.f32.mrb[0].mxu0
      %v3965 = vadd.f32 0.0, %v3964
      %v3966 = vpop.f32.mrb[0].mxu0
      %v3967 = vpop.f32.mrb[0].mxu0
      %v3968 = vadd.f32 0.0, %v3967
      %v3969 = vpop.f32.mrb[0].mxu0
      %3970 = vmatprep.mubr.bf16.mxu0 0
      %3971 = vmatmul.mubr.bf16.gmra.mrb[0].mxu0 %v1887
      %v3972 = vpop.f32.mrb[0].mxu0
      %v3973 = vadd.f32 0.0, %v3972
      %v3974 = vpop.f32.mrb[0].mxu0
      %v3975 = vpop.f32.mrb[0].mxu0
      %v3976 = vadd.f32 0.0, %v3975
      %v3977 = vpop.f32.mrb[0].mxu0
      %3978 = vmatprep.mubr.bf16.mxu0 0
      %3979 = vmatmul.mubr.bf16.gmra.mrb[0].mxu0 %v1890
      %v3980 = vpop.f32.mrb[0].mxu0
      %v3981 = vadd.f32 0.0, %v3980
      %v3982 = vpop.f32.mrb[0].mxu0
      %v3983 = vpop.f32.mrb[0].mxu0
      %v3984 = vadd.f32 0.0, %v3983
      %v3985 = vpop.f32.mrb[0].mxu0
      %3986 = vmatprep.mubr.bf16.mxu0 0
      %3987 = vmatmul.mubr.bf16.gmra.mrb[0].mxu0 %v1893
      %v3988 = vpop.f32.mrb[0].mxu0
      %v3989 = vadd.f32 0.0, %v3988
      %v3990 = vpop.f32.mrb[0].mxu0
      %v3991 = vpop.f32.mrb[0].mxu0
      %v3992 = vadd.f32 0.0, %v3991
      %v3993 = vpop.f32.mrb[0].mxu0
      %3994 = vmatprep.mubr.bf16.mxu0 0
      %3995 = vmatmul.mubr.bf16.gmra.mrb[0].mxu0 %v1896
      %v3996 = vpop.f32.mrb[0].mxu0
      %v3997 = vadd.f32 0.0, %v3996
      %v3998 = vpop.f32.mrb[0].mxu0
      %v3999 = vpop.f32.mrb[0].mxu0
      %v4000 = vadd.f32 0.0, %v3999
      %v4001 = vpop.f32.mrb[0].mxu0
      %4002 = vmatprep.mubr.bf16.mxu0 0
      %4003 = vmatmul.mubr.bf16.gmra.mrb[0].mxu0 %v1899
      %v4004 = vpop.f32.mrb[0].mxu0
      %v4005 = vadd.f32 0.0, %v4004
      %v4006 = vpop.f32.mrb[0].mxu0
      %v4007 = vpop.f32.mrb[0].mxu0
      %v4008 = vadd.f32 0.0, %v4007
      %v4009 = vpop.f32.mrb[0].mxu0
      %4010 = vmatprep.mubr.bf16.mxu0 0
      %4011 = vmatmul.mubr.bf16.gmra.mrb[0].mxu0 %v1902
      %v4012 = vpop.f32.mrb[0].mxu0
      %v4013 = vadd.f32 0.0, %v4012
      %v4014 = vpop.f32.mrb[0].mxu0
      %v4015 = vpop.f32.mrb[0].mxu0
      %v4016 = vadd.f32 0.0, %v4015
      %v4017 = vpop.f32.mrb[0].mxu0
      %4018 = vmatprep.mubr.bf16.mxu0 0
      %4019 = vmatmul.mubr.bf16.gmra.mrb[0].mxu0 %v1905
      %v4020 = vpop.f32.mrb[0].mxu0
      %v4021 = vadd.f32 0.0, %v4020
      %v4022 = vpop.f32.mrb[0].mxu0
      %v4023 = vpop.f32.mrb[0].mxu0
      %v4024 = vadd.f32 0.0, %v4023
      %v4025 = vpop.f32.mrb[0].mxu0
      %4026 = vmatprep.mubr.bf16.mxu0 0
      %4027 = vmatmul.mubr.bf16.gmra.mrb[0].mxu0 %v1908
      %v4028 = vpop.f32.mrb[0].mxu0
      %v4029 = vadd.f32 0.0, %v4028
      %v4030 = vpop.f32.mrb[0].mxu0
      %v4031 = vpop.f32.mrb[0].mxu0
      %v4032 = vadd.f32 0.0, %v4031
      %v4033 = vpop.f32.mrb[0].mxu0
      %4034 = vmatprep.mubr.bf16.mxu0 0
      %4035 = vmatmul.mubr.bf16.gmra.mrb[0].mxu0 %v1911
      %v4036 = vpop.f32.mrb[0].mxu0
      %v4037 = vadd.f32 0.0, %v4036
      %v4038 = vpop.f32.mrb[0].mxu0
      %v4039 = vpop.f32.mrb[0].mxu0
      %v4040 = vadd.f32 0.0, %v4039
      %v4041 = vpop.f32.mrb[0].mxu0
      %4042 = vmatprep.mubr.bf16.mxu0 0
      %4043 = vmatmul.mubr.bf16.gmra.mrb[0].mxu0 %v3094
      %v4044 = vpop.f32.mrb[0].mxu0
      %v4045 = vadd.f32 0.0, %v4044
      %v4046 = vpop.f32.mrb[0].mxu0
      %v4047 = vpop.f32.mrb[0].mxu0
      %v4048 = vadd.f32 0.0, %v4047
      %v4049 = vpop.f32.mrb[0].mxu0
      %4050 = vmatprep.mubr.bf16.mxu0 0
      %4051 = vmatmul.mubr.bf16.gmra.mrb[0].mxu0 %v1866
      %v4052 = vpop.f32.mrb[0].mxu0
      %v4053 = vadd.f32 0.0, %v4052
      %v4054 = vpop.f32.mrb[0].mxu0
      %v4055 = vpop.f32.mrb[0].mxu0
      %v4056 = vadd.f32 0.0, %v4055
      %v4057 = vpop.f32.mrb[0].mxu0
      %4058 = vdwg.mxu0
      %v4059 = vadd.f32 %v3858, %v3933
      %v4060 = vadd.f32 %v3859, %v3936
      %v4061 = vadd.f32 %v3860, %v3941
      %v4062 = vadd.f32 %v3861, %v3944
      %v4063 = vadd.f32 %v3862, %v3949
      %v4064 = vadd.f32 %v3863, %v3952
      %v4065 = vadd.f32 %v3864, %v3957
      %v4066 = vadd.f32 %v3865, %v3960
      %v4067 = vadd.f32 %v3866, %v3965
      %v4068 = vadd.f32 %v3867, %v3968
      %v4069 = vadd.f32 %v3868, %v3973
      %v4070 = vadd.f32 %v3869, %v3976
      %v4071 = vadd.f32 %v3870, %v3981
      %v4072 = vadd.f32 %v3871, %v3984
      %v4073 = vadd.f32 %v3872, %v3989
      %v4074 = vadd.f32 %v3873, %v3992
      %v4075 = vadd.f32 %v3874, %v3997
      %v4076 = vadd.f32 %v3875, %v4000
      %v4077 = vadd.f32 %v3876, %v4005
      %v4078 = vadd.f32 %v3877, %v4008
      %v4079 = vadd.f32 %v3878, %v4013
      %v4080 = vadd.f32 %v3879, %v4016
      %v4081 = vadd.f32 %v3880, %v4021
      %v4082 = vadd.f32 %v3881, %v4024
      %v4083 = vadd.f32 %v3882, %v4029
      %v4084 = vadd.f32 %v3883, %v4032
      %v4085 = vadd.f32 %v3884, %v4037
      %v4086 = vadd.f32 %v3885, %v4040
      %v4087 = vadd.f32 %v3886, %v4045
      %v4088 = vadd.f32 %v3887, %v4048
      %v4089 = vadd.f32 %v3888, %v4053
      %v4090 = vadd.f32 %v3889, %v4056
      %v4091 = vsel %vm2353, %v2396, 0.0
      %v4092 = vsel %vm2354, %v2398, 0.0
      %v4093 = vsel %vm2355, %v2400, 0.0
      %v4094 = vsel %vm2356, %v2402, 0.0
      %v4095 = vsel %vm2357, %v2404, 0.0
      %v4096 = vsel %vm2358, %v2406, 0.0
      %v4097 = vsel %vm2359, %v2408, 0.0
      %v4098 = vsel %vm2360, %v2410, 0.0
      %v4099 = vsel %vm2361, %v2412, 0.0
      %v4100 = vsel %vm2362, %v2414, 0.0
      %v4101 = vsel %vm2363, %v2416, 0.0
      %v4102 = vsel %vm2364, %v2418, 0.0
      %v4103 = vsel %vm2365, %v2420, 0.0
      %v4104 = vsel %vm2366, %v2422, 0.0
      %v4105 = vsel %vm2367, %v2424, 0.0
      %v4106 = vsel %vm2368, %v2426, 0.0
      %v4107 = vsel %vm2369, %v2428, 0.0
      %v4108 = vsel %vm2370, %v2430, 0.0
      %v4109 = vsel %vm2371, %v2432, 0.0
      %v4110 = vsel %vm2372, %v2434, 0.0
      %v4111 = vsel %vm2373, %v2436, 0.0
      %v4112 = vsel %vm2374, %v2438, 0.0
      %v4113 = vsel %vm2375, %v2440, 0.0
      %v4114 = vsel %vm2376, %v2442, 0.0
      %v4115 = vsel %vm2377, %v2444, 0.0
      %v4116 = vsel %vm2378, %v2446, 0.0
      %v4117 = vsel %vm2379, %v2448, 0.0
      %v4118 = vsel %vm2380, %v2450, 0.0
      %v4119 = vsel %vm2381, %v3290, 0.0
      %v4120 = vsel %vm2382, %v3291, 0.0
      %v4121 = vsel %vm2383, %v2388, 0.0
      %v4122 = vsel %vm2384, %v2388, 0.0
      %v4123 = vpack.c.bf16 %v4092, %v4091
      %v4124 = vpack.c.bf16 %v4094, %v4093
      %v4125 = vpack.c.bf16 %v4096, %v4095
      %v4126 = vpack.c.bf16 %v4098, %v4097
      %v4127 = vpack.c.bf16 %v4100, %v4099
      %v4128 = vpack.c.bf16 %v4102, %v4101
      %v4129 = vpack.c.bf16 %v4104, %v4103
      %v4130 = vpack.c.bf16 %v4106, %v4105
      %v4131 = vpack.c.bf16 %v4108, %v4107
      %v4132 = vpack.c.bf16 %v4110, %v4109
      %v4133 = vpack.c.bf16 %v4112, %v4111
      %v4134 = vpack.c.bf16 %v4114, %v4113
      %v4135 = vpack.c.bf16 %v4116, %v4115
      %v4136 = vpack.c.bf16 %v4118, %v4117
      %v4137 = vpack.c.bf16 %v4120, %v4119
      %v4138 = vpack.c.bf16 %v4122, %v4121
      %v4139 = vld [vmem:[%s4 + $0x40] sm:$0xf]
      %v4140 = vld [vmem:[%s4 + $0x44] sm:$0xf]
      %v4143 = vunpack.c.l.b16 %v4139
      %v4144 = vunpack.c.l.b16 %v4140
      %v4145 = vpack.c.b16 %v4144, %v4143
      %v4148 = vsel %vm658, %v4123, 0
      %v4151 = vsel %vm658, %v4124, 0
      %v4154 = vsel %vm658, %v4125, 0
      %v4157 = vsel %vm658, %v4126, 0
      %v4160 = vsel %vm658, %v4127, 0
      %v4163 = vsel %vm658, %v4128, 0
      %v4166 = vsel %vm658, %v4129, 0
      %v4169 = vsel %vm658, %v4130, 0
      %v4172 = vsel %vm658, %v4131, 0
      %v4175 = vsel %vm658, %v4132, 0
      %v4178 = vsel %vm658, %v4133, 0
      %v4181 = vsel %vm658, %v4134, 0
      %v4184 = vsel %vm658, %v4135, 0
      %v4187 = vsel %vm658, %v4136, 0
      %v4190 = vsel %vm658, %v4137, 0
      %v4193 = vsel %vm658, %v4138, 0
      %4195 = vmatprep.subr.bf16.mxu0 0
      %4196 = vmatpush1.bf16.msra.mxu0 %v4145
      %4197 = vmatprep.subr.bf16.mxu0 0
      %4198 = vmatpush1.bf16.msra.mxu0 0
      %4199 = vmatprep.subr.bf16.mxu0 0
      %4200 = vmatpush1.bf16.msra.mxu0 0
      %4201 = vmatprep.subr.bf16.mxu0 0
      %4202 = vmatpush1.bf16.msra.mxu0 0
      %4203 = vmatprep.subr.bf16.mxu0 0
      %4204 = vmatpush1.bf16.msra.mxu0 0
      %4205 = vmatprep.subr.bf16.mxu0 0
      %4206 = vmatpush1.bf16.msra.mxu0 0
      %4207 = vmatprep.subr.bf16.mxu0 0
      %4208 = vmatpush1.bf16.msra.mxu0 0
      %4209 = vmatprep.subr.bf16.mxu0 0
      %4210 = vmatpush1.bf16.msra.mxu0 0
      %4211 = vmatprep.subr.bf16.mxu0 0
      %4212 = vmatpush1.bf16.msra.mxu0 0
      %4213 = vmatprep.subr.bf16.mxu0 0
      %4214 = vmatpush1.bf16.msra.mxu0 0
      %4215 = vmatprep.subr.bf16.mxu0 0
      %4216 = vmatpush1.bf16.msra.mxu0 0
      %4217 = vmatprep.subr.bf16.mxu0 0
      %4218 = vmatpush1.bf16.msra.mxu0 0
      %4219 = vmatprep.subr.bf16.mxu0 0
      %4220 = vmatpush1.bf16.msra.mxu0 0
      %4221 = vmatprep.subr.bf16.mxu0 0
      %4222 = vmatpush1.bf16.msra.mxu0 0
      %4223 = vmatprep.subr.bf16.mxu0 0
      %4224 = vmatpush1.bf16.msra.mxu0 0
      %4225 = vmatprep.subr.bf16.mxu0 0
      %4226 = vmatpush1.bf16.msra.mxu0 0
      %4227 = vmatprep.mubr.bf16.mxu0 0
      %4228 = vmatmul.mubr.bf16.gmra.mrb[0].mxu0 %v4148
      %v4229 = vpop.f32.mrb[0].mxu0
      %v4230 = vadd.f32 0.0, %v4229
      %v4231 = vpop.f32.mrb[0].mxu0
      %v4232 = vpop.f32.mrb[0].mxu0
      %v4233 = vadd.f32 0.0, %v4232
      %v4234 = vpop.f32.mrb[0].mxu0
      %4235 = vmatprep.mubr.bf16.mxu0 0
      %4236 = vmatmul.mubr.bf16.gmra.mrb[0].mxu0 %v4151
      %v4237 = vpop.f32.mrb[0].mxu0
      %v4238 = vadd.f32 0.0, %v4237
      %v4239 = vpop.f32.mrb[0].mxu0
      %v4240 = vpop.f32.mrb[0].mxu0
      %v4241 = vadd.f32 0.0, %v4240
      %v4242 = vpop.f32.mrb[0].mxu0
      %4243 = vmatprep.mubr.bf16.mxu0 0
      %4244 = vmatmul.mubr.bf16.gmra.mrb[0].mxu0 %v4154
      %v4245 = vpop.f32.mrb[0].mxu0
      %v4246 = vadd.f32 0.0, %v4245
      %v4247 = vpop.f32.mrb[0].mxu0
      %v4248 = vpop.f32.mrb[0].mxu0
      %v4249 = vadd.f32 0.0, %v4248
      %v4250 = vpop.f32.mrb[0].mxu0
      %4251 = vmatprep.mubr.bf16.mxu0 0
      %4252 = vmatmul.mubr.bf16.gmra.mrb[0].mxu0 %v4157
      %v4253 = vpop.f32.mrb[0].mxu0
      %v4254 = vadd.f32 0.0, %v4253
      %v4255 = vpop.f32.mrb[0].mxu0
      %v4256 = vpop.f32.mrb[0].mxu0
      %v4257 = vadd.f32 0.0, %v4256
      %v4258 = vpop.f32.mrb[0].mxu0
      %4259 = vmatprep.mubr.bf16.mxu0 0
      %4260 = vmatmul.mubr.bf16.gmra.mrb[0].mxu0 %v4160
      %v4261 = vpop.f32.mrb[0].mxu0
      %v4262 = vadd.f32 0.0, %v4261
      %v4263 = vpop.f32.mrb[0].mxu0
      %v4264 = vpop.f32.mrb[0].mxu0
      %v4265 = vadd.f32 0.0, %v4264
      %v4266 = vpop.f32.mrb[0].mxu0
      %4267 = vmatprep.mubr.bf16.mxu0 0
      %4268 = vmatmul.mubr.bf16.gmra.mrb[0].mxu0 %v4163
      %v4269 = vpop.f32.mrb[0].mxu0
      %v4270 = vadd.f32 0.0, %v4269
      %v4271 = vpop.f32.mrb[0].mxu0
      %v4272 = vpop.f32.mrb[0].mxu0
      %v4273 = vadd.f32 0.0, %v4272
      %v4274 = vpop.f32.mrb[0].mxu0
      %4275 = vmatprep.mubr.bf16.mxu0 0
      %4276 = vmatmul.mubr.bf16.gmra.mrb[0].mxu0 %v4166
      %v4277 = vpop.f32.mrb[0].mxu0
      %v4278 = vadd.f32 0.0, %v4277
      %v4279 = vpop.f32.mrb[0].mxu0
      %v4280 = vpop.f32.mrb[0].mxu0
      %v4281 = vadd.f32 0.0, %v4280
      %v4282 = vpop.f32.mrb[0].mxu0
      %4283 = vmatprep.mubr.bf16.mxu0 0
      %4284 = vmatmul.mubr.bf16.gmra.mrb[0].mxu0 %v4169
      %v4285 = vpop.f32.mrb[0].mxu0
      %v4286 = vadd.f32 0.0, %v4285
      %v4287 = vpop.f32.mrb[0].mxu0
      %v4288 = vpop.f32.mrb[0].mxu0
      %v4289 = vadd.f32 0.0, %v4288
      %v4290 = vpop.f32.mrb[0].mxu0
      %4291 = vmatprep.mubr.bf16.mxu0 0
      %4292 = vmatmul.mubr.bf16.gmra.mrb[0].mxu0 %v4172
      %v4293 = vpop.f32.mrb[0].mxu0
      %v4294 = vadd.f32 0.0, %v4293
      %v4295 = vpop.f32.mrb[0].mxu0
      %v4296 = vpop.f32.mrb[0].mxu0
      %v4297 = vadd.f32 0.0, %v4296
      %v4298 = vpop.f32.mrb[0].mxu0
      %4299 = vmatprep.mubr.bf16.mxu0 0
      %4300 = vmatmul.mubr.bf16.gmra.mrb[0].mxu0 %v4175
      %v4301 = vpop.f32.mrb[0].mxu0
      %v4302 = vadd.f32 0.0, %v4301
      %v4303 = vpop.f32.mrb[0].mxu0
      %v4304 = vpop.f32.mrb[0].mxu0
      %v4305 = vadd.f32 0.0, %v4304
      %v4306 = vpop.f32.mrb[0].mxu0
      %4307 = vmatprep.mubr.bf16.mxu0 0
      %4308 = vmatmul.mubr.bf16.gmra.mrb[0].mxu0 %v4178
      %v4309 = vpop.f32.mrb[0].mxu0
      %v4310 = vadd.f32 0.0, %v4309
      %v4311 = vpop.f32.mrb[0].mxu0
      %v4312 = vpop.f32.mrb[0].mxu0
      %v4313 = vadd.f32 0.0, %v4312
      %v4314 = vpop.f32.mrb[0].mxu0
      %4315 = vmatprep.mubr.bf16.mxu0 0
      %4316 = vmatmul.mubr.bf16.gmra.mrb[0].mxu0 %v4181
      %v4317 = vpop.f32.mrb[0].mxu0
      %v4318 = vadd.f32 0.0, %v4317
      %v4319 = vpop.f32.mrb[0].mxu0
      %v4320 = vpop.f32.mrb[0].mxu0
      %v4321 = vadd.f32 0.0, %v4320
      %v4322 = vpop.f32.mrb[0].mxu0
      %4323 = vmatprep.mubr.bf16.mxu0 0
      %4324 = vmatmul.mubr.bf16.gmra.mrb[0].mxu0 %v4184
      %v4325 = vpop.f32.mrb[0].mxu0
      %v4326 = vadd.f32 0.0, %v4325
      %v4327 = vpop.f32.mrb[0].mxu0
      %v4328 = vpop.f32.mrb[0].mxu0
      %v4329 = vadd.f32 0.0, %v4328
      %v4330 = vpop.f32.mrb[0].mxu0
      %4331 = vmatprep.mubr.bf16.mxu0 0
      %4332 = vmatmul.mubr.bf16.gmra.mrb[0].mxu0 %v4187
      %v4333 = vpop.f32.mrb[0].mxu0
      %v4334 = vadd.f32 0.0, %v4333
      %v4335 = vpop.f32.mrb[0].mxu0
      %v4336 = vpop.f32.mrb[0].mxu0
      %v4337 = vadd.f32 0.0, %v4336
      %v4338 = vpop.f32.mrb[0].mxu0
      %4339 = vmatprep.mubr.bf16.mxu0 0
      %4340 = vmatmul.mubr.bf16.gmra.mrb[0].mxu0 %v4190
      %v4341 = vpop.f32.mrb[0].mxu0
      %v4342 = vadd.f32 0.0, %v4341
      %v4343 = vpop.f32.mrb[0].mxu0
      %v4344 = vpop.f32.mrb[0].mxu0
      %v4345 = vadd.f32 0.0, %v4344
      %v4346 = vpop.f32.mrb[0].mxu0
      %4347 = vmatprep.mubr.bf16.mxu0 0
      %4348 = vmatmul.mubr.bf16.gmra.mrb[0].mxu0 %v4193
      %v4349 = vpop.f32.mrb[0].mxu0
      %v4350 = vadd.f32 0.0, %v4349
      %v4351 = vpop.f32.mrb[0].mxu0
      %v4352 = vpop.f32.mrb[0].mxu0
      %v4353 = vadd.f32 0.0, %v4352
      %v4354 = vpop.f32.mrb[0].mxu0
      %4355 = vdwg.mxu0
      %v4356 = vadd.f32 %v4059, %v4230
      %v4357 = vadd.f32 %v4060, %v4233
      %v4358 = vadd.f32 %v4061, %v4238
      %v4359 = vadd.f32 %v4062, %v4241
      %v4360 = vadd.f32 %v4063, %v4246
      %v4361 = vadd.f32 %v4064, %v4249
      %v4362 = vadd.f32 %v4065, %v4254
      %v4363 = vadd.f32 %v4066, %v4257
      %v4364 = vadd.f32 %v4067, %v4262
      %v4365 = vadd.f32 %v4068, %v4265
      %v4366 = vadd.f32 %v4069, %v4270
      %v4367 = vadd.f32 %v4070, %v4273
      %v4368 = vadd.f32 %v4071, %v4278
      %v4369 = vadd.f32 %v4072, %v4281
      %v4370 = vadd.f32 %v4073, %v4286
      %v4371 = vadd.f32 %v4074, %v4289
      %v4372 = vadd.f32 %v4075, %v4294
      %v4373 = vadd.f32 %v4076, %v4297
      %v4374 = vadd.f32 %v4077, %v4302
      %v4375 = vadd.f32 %v4078, %v4305
      %v4376 = vadd.f32 %v4079, %v4310
      %v4377 = vadd.f32 %v4080, %v4313
      %v4378 = vadd.f32 %v4081, %v4318
      %v4379 = vadd.f32 %v4082, %v4321
      %v4380 = vadd.f32 %v4083, %v4326
      %v4381 = vadd.f32 %v4084, %v4329
      %v4382 = vadd.f32 %v4085, %v4334
      %v4383 = vadd.f32 %v4086, %v4337
      %v4384 = vadd.f32 %v4087, %v4342
      %v4385 = vadd.f32 %v4088, %v4345
      %v4386 = vadd.f32 %v4089, %v4350
      %v4387 = vadd.f32 %v4090, %v4353
      %v4388 = vld [vmem:[%s5] sm:$0x1]
      %v4390 = vlaneseq
      %v4391 = vshrl.u32 %v4390, 7
      %v4392 = vsub.s32 0, %v4391
      %v4393 = vrot.slane %v4388, %v4392
      %v4395 = vadd.f32 %v4356, %v4393
      %v4396 = vadd.f32 %v4357, %v4393
      %v4397 = vadd.f32 %v4358, %v4393
      %v4398 = vadd.f32 %v4359, %v4393
      %v4399 = vadd.f32 %v4360, %v4393
      %v4400 = vadd.f32 %v4361, %v4393
      %v4401 = vadd.f32 %v4362, %v4393
      %v4402 = vadd.f32 %v4363, %v4393
      %v4403 = vadd.f32 %v4364, %v4393
      %v4404 = vadd.f32 %v4365, %v4393
      %v4405 = vadd.f32 %v4366, %v4393
      %v4406 = vadd.f32 %v4367, %v4393
      %v4407 = vadd.f32 %v4368, %v4393
      %v4408 = vadd.f32 %v4369, %v4393
      %v4409 = vadd.f32 %v4370, %v4393
      %v4410 = vadd.f32 %v4371, %v4393
      %v4411 = vadd.f32 %v4372, %v4393
      %v4412 = vadd.f32 %v4373, %v4393
      %v4413 = vadd.f32 %v4374, %v4393
      %v4414 = vadd.f32 %v4375, %v4393
      %v4415 = vadd.f32 %v4376, %v4393
      %v4416 = vadd.f32 %v4377, %v4393
      %v4417 = vadd.f32 %v4378, %v4393
      %v4418 = vadd.f32 %v4379, %v4393
      %v4419 = vadd.f32 %v4380, %v4393
      %v4420 = vadd.f32 %v4381, %v4393
      %v4421 = vadd.f32 %v4382, %v4393
      %v4422 = vadd.f32 %v4383, %v4393
      %v4423 = vadd.f32 %v4384, %v4393
      %v4424 = vadd.f32 %v4385, %v4393
      %v4425 = vadd.f32 %v4386, %v4393
      %v4426 = vadd.f32 %v4387, %v4393
      %v4427 = vmax.f32 %v4395, 0.0
      %v4428 = vmax.f32 %v4396, 0.0
      %v4429 = vmax.f32 %v4397, 0.0
      %v4430 = vmax.f32 %v4398, 0.0
      %v4431 = vmax.f32 %v4399, 0.0
      %v4432 = vmax.f32 %v4400, 0.0
      %v4433 = vmax.f32 %v4401, 0.0
      %v4434 = vmax.f32 %v4402, 0.0
      %v4435 = vmax.f32 %v4403, 0.0
      %v4436 = vmax.f32 %v4404, 0.0
      %v4437 = vmax.f32 %v4405, 0.0
      %v4438 = vmax.f32 %v4406, 0.0
      %v4439 = vmax.f32 %v4407, 0.0
      %v4440 = vmax.f32 %v4408, 0.0
      %v4441 = vmax.f32 %v4409, 0.0
      %v4442 = vmax.f32 %v4410, 0.0
      %v4443 = vmax.f32 %v4411, 0.0
      %v4444 = vmax.f32 %v4412, 0.0
      %v4445 = vmax.f32 %v4413, 0.0
      %v4446 = vmax.f32 %v4414, 0.0
      %v4447 = vmax.f32 %v4415, 0.0
      %v4448 = vmax.f32 %v4416, 0.0
      %v4449 = vmax.f32 %v4417, 0.0
      %v4450 = vmax.f32 %v4418, 0.0
      %v4451 = vmax.f32 %v4419, 0.0
      %v4452 = vmax.f32 %v4420, 0.0
      %v4453 = vmax.f32 %v4421, 0.0
      %v4454 = vmax.f32 %v4422, 0.0
      %v4455 = vmax.f32 %v4423, 0.0
      %v4456 = vmax.f32 %v4424, 0.0
      %v4457 = vmax.f32 %v4425, 0.0
      %v4458 = vmax.f32 %v4426, 0.0
      %v4489 = vrot.slane %v4427, 7
      %v4490 = vsel %vm1697, %v1698, %v4489
      %v4491 = vrot.slane %v4428, 7
      %v4492 = vsel %vm1697, %v4489, %v4491
      %v4493 = vrot.slane %v4429, 7
      %v4494 = vsel %vm1697, %v4491, %v4493
      %v4495 = vrot.slane %v4430, 7
      %v4496 = vsel %vm1697, %v4493, %v4495
      %v4497 = vrot.slane %v4431, 7
      %v4498 = vsel %vm1697, %v4495, %v4497
      %v4499 = vrot.slane %v4432, 7
      %v4500 = vsel %vm1697, %v4497, %v4499
      %v4501 = vrot.slane %v4433, 7
      %v4502 = vsel %vm1697, %v4499, %v4501
      %v4503 = vrot.slane %v4434, 7
      %v4504 = vsel %vm1697, %v4501, %v4503
      %v4505 = vrot.slane %v4435, 7
      %v4506 = vsel %vm1697, %v4503, %v4505
      %v4507 = vrot.slane %v4436, 7
      %v4508 = vsel %vm1697, %v4505, %v4507
      %v4509 = vrot.slane %v4437, 7
      %v4510 = vsel %vm1697, %v4507, %v4509
      %v4511 = vrot.slane %v4438, 7
      %v4512 = vsel %vm1697, %v4509, %v4511
      %v4513 = vrot.slane %v4439, 7
      %v4514 = vsel %vm1697, %v4511, %v4513
      %v4515 = vrot.slane %v4440, 7
      %v4516 = vsel %vm1697, %v4513, %v4515
      %v4517 = vrot.slane %v4441, 7
      %v4518 = vsel %vm1697, %v4515, %v4517
      %v4519 = vrot.slane %v4442, 7
      %v4520 = vsel %vm1697, %v4517, %v4519
      %v4521 = vrot.slane %v4443, 7
      %v4522 = vsel %vm1697, %v4519, %v4521
      %v4523 = vrot.slane %v4444, 7
      %v4524 = vsel %vm1697, %v4521, %v4523
      %v4525 = vrot.slane %v4445, 7
      %v4526 = vsel %vm1697, %v4523, %v4525
      %v4527 = vrot.slane %v4446, 7
      %v4528 = vsel %vm1697, %v4525, %v4527
      %v4529 = vrot.slane %v4447, 7
      %v4530 = vsel %vm1697, %v4527, %v4529
      %v4531 = vrot.slane %v4448, 7
      %v4532 = vsel %vm1697, %v4529, %v4531
      %v4533 = vrot.slane %v4449, 7
      %v4534 = vsel %vm1697, %v4531, %v4533
      %v4535 = vrot.slane %v4450, 7
      %v4536 = vsel %vm1697, %v4533, %v4535
      %v4537 = vrot.slane %v4451, 7
      %v4538 = vsel %vm1697, %v4535, %v4537
      %v4539 = vrot.slane %v4452, 7
      %v4540 = vsel %vm1697, %v4537, %v4539
      %v4541 = vrot.slane %v4453, 7
      %v4542 = vsel %vm1697, %v4539, %v4541
      %v4543 = vrot.slane %v4454, 7
      %v4544 = vsel %vm1697, %v4541, %v4543
      %v4545 = vrot.slane %v4455, 7
      %v4546 = vsel %vm1697, %v4543, %v4545
      %v4547 = vrot.slane %v4456, 7
      %v4548 = vsel %vm1697, %v4545, %v4547
      %v4579 = vsel %vm1636, %v4490, 0.0
      %v4580 = vsel %vm1637, %v4492, 0.0
      %v4581 = vsel %vm1638, %v4494, 0.0
      %v4582 = vsel %vm1639, %v4496, 0.0
      %v4583 = vsel %vm1640, %v4498, 0.0
      %v4584 = vsel %vm1641, %v4500, 0.0
      %v4585 = vsel %vm1642, %v4502, 0.0
      %v4586 = vsel %vm1643, %v4504, 0.0
      %v4587 = vsel %vm1644, %v4506, 0.0
      %v4588 = vsel %vm1645, %v4508, 0.0
      %v4589 = vsel %vm1646, %v4510, 0.0
      %v4590 = vsel %vm1647, %v4512, 0.0
      %v4591 = vsel %vm1648, %v4514, 0.0
      %v4592 = vsel %vm1649, %v4516, 0.0
      %v4593 = vsel %vm1650, %v4518, 0.0
      %v4594 = vsel %vm1651, %v4520, 0.0
      %v4595 = vsel %vm1652, %v4522, 0.0
      %v4596 = vsel %vm1653, %v4524, 0.0
      %v4597 = vsel %vm1654, %v4526, 0.0
      %v4598 = vsel %vm1655, %v4528, 0.0
      %v4599 = vsel %vm1656, %v4530, 0.0
      %v4600 = vsel %vm1657, %v4532, 0.0
      %v4601 = vsel %vm1658, %v4534, 0.0
      %v4602 = vsel %vm1659, %v4536, 0.0
      %v4603 = vsel %vm1660, %v4538, 0.0
      %v4604 = vsel %vm1661, %v4540, 0.0
      %v4605 = vsel %vm1662, %v4542, 0.0
      %v4606 = vsel %vm1663, %v4544, 0.0
      %v4607 = vsel %vm1664, %v4546, 0.0
      %v4608 = vsel %vm1665, %v4548, 0.0
      %v4609 = vpack.c.bf16 %v4580, %v4579
      %v4610 = vpack.c.bf16 %v4582, %v4581
      %v4611 = vpack.c.bf16 %v4584, %v4583
      %v4612 = vpack.c.bf16 %v4586, %v4585
      %v4613 = vpack.c.bf16 %v4588, %v4587
      %v4614 = vpack.c.bf16 %v4590, %v4589
      %v4615 = vpack.c.bf16 %v4592, %v4591
      %v4616 = vpack.c.bf16 %v4594, %v4593
      %v4617 = vpack.c.bf16 %v4596, %v4595
      %v4618 = vpack.c.bf16 %v4598, %v4597
      %v4619 = vpack.c.bf16 %v4600, %v4599
      %v4620 = vpack.c.bf16 %v4602, %v4601
      %v4621 = vpack.c.bf16 %v4604, %v4603
      %v4622 = vpack.c.bf16 %v4606, %v4605
      %v4623 = vpack.c.bf16 %v4608, %v4607
      %v4624 = vld [vmem:[%s6] sm:$0xf]
      %v4625 = vld [vmem:[%s6 + $0x4] sm:$0xf]
      %v4626 = vpack.c.bf16 %v4428, %v4427
      %v4627 = vpack.c.bf16 %v4430, %v4429
      %v4628 = vpack.c.bf16 %v4432, %v4431
      %v4629 = vpack.c.bf16 %v4434, %v4433
      %v4630 = vpack.c.bf16 %v4436, %v4435
      %v4631 = vpack.c.bf16 %v4438, %v4437
      %v4632 = vpack.c.bf16 %v4440, %v4439
      %v4633 = vpack.c.bf16 %v4442, %v4441
      %v4634 = vpack.c.bf16 %v4444, %v4443
      %v4635 = vpack.c.bf16 %v4446, %v4445
      %v4636 = vpack.c.bf16 %v4448, %v4447
      %v4637 = vpack.c.bf16 %v4450, %v4449
      %v4638 = vpack.c.bf16 %v4452, %v4451
      %v4639 = vpack.c.bf16 %v4454, %v4453
      %v4640 = vpack.c.bf16 %v4456, %v4455
      %v4641 = vld [vmem:[%s6 + $0x8] sm:$0xf]
      %v4642 = vld [vmem:[%s6 + $0xc] sm:$0xf]
      %v4645 = vunpack.c.l.b16 %v4641
      %v4646 = vunpack.c.l.b16 %v4642
      %v4647 = vpack.c.b16 %v4646, %v4645
      %v4650 = vsel %vm658, %v4626, 0
      %v4653 = vsel %vm658, %v4627, 0
      %v4656 = vsel %vm658, %v4628, 0
      %v4659 = vsel %vm658, %v4629, 0
      %v4662 = vsel %vm658, %v4630, 0
      %v4665 = vsel %vm658, %v4631, 0
      %v4668 = vsel %vm658, %v4632, 0
      %v4671 = vsel %vm658, %v4633, 0
      %v4674 = vsel %vm658, %v4634, 0
      %v4677 = vsel %vm658, %v4635, 0
      %v4680 = vsel %vm658, %v4636, 0
      %v4683 = vsel %vm658, %v4637, 0
      %v4686 = vsel %vm658, %v4638, 0
      %v4689 = vsel %vm658, %v4639, 0
      %v4692 = vsel %vm658, %v4640, 0
      %4694 = vmatprep.subr.bf16.mxu0 0
      %4695 = vmatpush1.bf16.msra.mxu0 %v4647
      %4696 = vmatprep.subr.bf16.mxu0 0
      %4697 = vmatpush1.bf16.msra.mxu0 0
      %4698 = vmatprep.subr.bf16.mxu0 0
      %4699 = vmatpush1.bf16.msra.mxu0 0
      %4700 = vmatprep.subr.bf16.mxu0 0
      %4701 = vmatpush1.bf16.msra.mxu0 0
      %4702 = vmatprep.subr.bf16.mxu0 0
      %4703 = vmatpush1.bf16.msra.mxu0 0
      %4704 = vmatprep.subr.bf16.mxu0 0
      %4705 = vmatpush1.bf16.msra.mxu0 0
      %4706 = vmatprep.subr.bf16.mxu0 0
      %4707 = vmatpush1.bf16.msra.mxu0 0
      %4708 = vmatprep.subr.bf16.mxu0 0
      %4709 = vmatpush1.bf16.msra.mxu0 0
      %4710 = vmatprep.subr.bf16.mxu0 0
      %4711 = vmatpush1.bf16.msra.mxu0 0
      %4712 = vmatprep.subr.bf16.mxu0 0
      %4713 = vmatpush1.bf16.msra.mxu0 0
      %4714 = vmatprep.subr.bf16.mxu0 0
      %4715 = vmatpush1.bf16.msra.mxu0 0
      %4716 = vmatprep.subr.bf16.mxu0 0
      %4717 = vmatpush1.bf16.msra.mxu0 0
      %4718 = vmatprep.subr.bf16.mxu0 0
      %4719 = vmatpush1.bf16.msra.mxu0 0
      %4720 = vmatprep.subr.bf16.mxu0 0
      %4721 = vmatpush1.bf16.msra.mxu0 0
      %4722 = vmatprep.subr.bf16.mxu0 0
      %4723 = vmatpush1.bf16.msra.mxu0 0
      %4724 = vmatprep.subr.bf16.mxu0 0
      %4725 = vmatpush1.bf16.msra.mxu0 0
      %4726 = vmatprep.mubr.bf16.mxu0 0
      %4727 = vmatmul.mubr.bf16.gmra.mrb[0].mxu0 %v1866
      %v4728 = vpop.f32.mrb[0].mxu0
      %v4729 = vadd.f32 0.0, %v4728
      %v4730 = vpop.f32.mrb[0].mxu0
      %v4731 = vpop.f32.mrb[0].mxu0
      %v4732 = vadd.f32 0.0, %v4731
      %v4733 = vpop.f32.mrb[0].mxu0
      %4734 = vmatprep.mubr.bf16.mxu0 0
      %4735 = vmatmul.mubr.bf16.gmra.mrb[0].mxu0 %v4650
      %v4736 = vpop.f32.mrb[0].mxu0
      %v4737 = vadd.f32 0.0, %v4736
      %v4738 = vpop.f32.mrb[0].mxu0
      %v4739 = vpop.f32.mrb[0].mxu0
      %v4740 = vadd.f32 0.0, %v4739
      %v4741 = vpop.f32.mrb[0].mxu0
      %4742 = vmatprep.mubr.bf16.mxu0 0
      %4743 = vmatmul.mubr.bf16.gmra.mrb[0].mxu0 %v4653
      %v4744 = vpop.f32.mrb[0].mxu0
      %v4745 = vadd.f32 0.0, %v4744
      %v4746 = vpop.f32.mrb[0].mxu0
      %v4747 = vpop.f32.mrb[0].mxu0
      %v4748 = vadd.f32 0.0, %v4747
      %v4749 = vpop.f32.mrb[0].mxu0
      %4750 = vmatprep.mubr.bf16.mxu0 0
      %4751 = vmatmul.mubr.bf16.gmra.mrb[0].mxu0 %v4656
      %v4752 = vpop.f32.mrb[0].mxu0
      %v4753 = vadd.f32 0.0, %v4752
      %v4754 = vpop.f32.mrb[0].mxu0
      %v4755 = vpop.f32.mrb[0].mxu0
      %v4756 = vadd.f32 0.0, %v4755
      %v4757 = vpop.f32.mrb[0].mxu0
      %4758 = vmatprep.mubr.bf16.mxu0 0
      %4759 = vmatmul.mubr.bf16.gmra.mrb[0].mxu0 %v4659
      %v4760 = vpop.f32.mrb[0].mxu0
      %v4761 = vadd.f32 0.0, %v4760
      %v4762 = vpop.f32.mrb[0].mxu0
      %v4763 = vpop.f32.mrb[0].mxu0
      %v4764 = vadd.f32 0.0, %v4763
      %v4765 = vpop.f32.mrb[0].mxu0
      %4766 = vmatprep.mubr.bf16.mxu0 0
      %4767 = vmatmul.mubr.bf16.gmra.mrb[0].mxu0 %v4662
      %v4768 = vpop.f32.mrb[0].mxu0
      %v4769 = vadd.f32 0.0, %v4768
      %v4770 = vpop.f32.mrb[0].mxu0
      %v4771 = vpop.f32.mrb[0].mxu0
      %v4772 = vadd.f32 0.0, %v4771
      %v4773 = vpop.f32.mrb[0].mxu0
      %4774 = vmatprep.mubr.bf16.mxu0 0
      %4775 = vmatmul.mubr.bf16.gmra.mrb[0].mxu0 %v4665
      %v4776 = vpop.f32.mrb[0].mxu0
      %v4777 = vadd.f32 0.0, %v4776
      %v4778 = vpop.f32.mrb[0].mxu0
      %v4779 = vpop.f32.mrb[0].mxu0
      %v4780 = vadd.f32 0.0, %v4779
      %v4781 = vpop.f32.mrb[0].mxu0
      %4782 = vmatprep.mubr.bf16.mxu0 0
      %4783 = vmatmul.mubr.bf16.gmra.mrb[0].mxu0 %v4668
      %v4784 = vpop.f32.mrb[0].mxu0
      %v4785 = vadd.f32 0.0, %v4784
      %v4786 = vpop.f32.mrb[0].mxu0
      %v4787 = vpop.f32.mrb[0].mxu0
      %v4788 = vadd.f32 0.0, %v4787
      %v4789 = vpop.f32.mrb[0].mxu0
      %4790 = vmatprep.mubr.bf16.mxu0 0
      %4791 = vmatmul.mubr.bf16.gmra.mrb[0].mxu0 %v4671
      %v4792 = vpop.f32.mrb[0].mxu0
      %v4793 = vadd.f32 0.0, %v4792
      %v4794 = vpop.f32.mrb[0].mxu0
      %v4795 = vpop.f32.mrb[0].mxu0
      %v4796 = vadd.f32 0.0, %v4795
      %v4797 = vpop.f32.mrb[0].mxu0
      %4798 = vmatprep.mubr.bf16.mxu0 0
      %4799 = vmatmul.mubr.bf16.gmra.mrb[0].mxu0 %v4674
      %v4800 = vpop.f32.mrb[0].mxu0
      %v4801 = vadd.f32 0.0, %v4800
      %v4802 = vpop.f32.mrb[0].mxu0
      %v4803 = vpop.f32.mrb[0].mxu0
      %v4804 = vadd.f32 0.0, %v4803
      %v4805 = vpop.f32.mrb[0].mxu0
      %4806 = vmatprep.mubr.bf16.mxu0 0
      %4807 = vmatmul.mubr.bf16.gmra.mrb[0].mxu0 %v4677
      %v4808 = vpop.f32.mrb[0].mxu0
      %v4809 = vadd.f32 0.0, %v4808
      %v4810 = vpop.f32.mrb[0].mxu0
      %v4811 = vpop.f32.mrb[0].mxu0
      %v4812 = vadd.f32 0.0, %v4811
      %v4813 = vpop.f32.mrb[0].mxu0
      %4814 = vmatprep.mubr.bf16.mxu0 0
      %4815 = vmatmul.mubr.bf16.gmra.mrb[0].mxu0 %v4680
      %v4816 = vpop.f32.mrb[0].mxu0
      %v4817 = vadd.f32 0.0, %v4816
      %v4818 = vpop.f32.mrb[0].mxu0
      %v4819 = vpop.f32.mrb[0].mxu0
      %v4820 = vadd.f32 0.0, %v4819
      %v4821 = vpop.f32.mrb[0].mxu0
      %4822 = vmatprep.mubr.bf16.mxu0 0
      %4823 = vmatmul.mubr.bf16.gmra.mrb[0].mxu0 %v4683
      %v4824 = vpop.f32.mrb[0].mxu0
      %v4825 = vadd.f32 0.0, %v4824
      %v4826 = vpop.f32.mrb[0].mxu0
      %v4827 = vpop.f32.mrb[0].mxu0
      %v4828 = vadd.f32 0.0, %v4827
      %v4829 = vpop.f32.mrb[0].mxu0
      %4830 = vmatprep.mubr.bf16.mxu0 0
      %4831 = vmatmul.mubr.bf16.gmra.mrb[0].mxu0 %v4686
      %v4832 = vpop.f32.mrb[0].mxu0
      %v4833 = vadd.f32 0.0, %v4832
      %v4834 = vpop.f32.mrb[0].mxu0
      %v4835 = vpop.f32.mrb[0].mxu0
      %v4836 = vadd.f32 0.0, %v4835
      %v4837 = vpop.f32.mrb[0].mxu0
      %4838 = vmatprep.mubr.bf16.mxu0 0
      %4839 = vmatmul.mubr.bf16.gmra.mrb[0].mxu0 %v4689
      %v4840 = vpop.f32.mrb[0].mxu0
      %v4841 = vadd.f32 0.0, %v4840
      %v4842 = vpop.f32.mrb[0].mxu0
      %v4843 = vpop.f32.mrb[0].mxu0
      %v4844 = vadd.f32 0.0, %v4843
      %v4845 = vpop.f32.mrb[0].mxu0
      %4846 = vmatprep.mubr.bf16.mxu0 0
      %4847 = vmatmul.mubr.bf16.gmra.mrb[0].mxu0 %v4692
      %v4848 = vpop.f32.mrb[0].mxu0
      %v4849 = vadd.f32 0.0, %v4848
      %v4850 = vpop.f32.mrb[0].mxu0
      %v4851 = vpop.f32.mrb[0].mxu0
      %v4852 = vadd.f32 0.0, %v4851
      %v4853 = vpop.f32.mrb[0].mxu0
      %4854 = vdwg.mxu0
      %v4857 = vunpack.c.l.b16 %v4624
      %v4858 = vunpack.c.l.b16 %v4625
      %v4859 = vpack.c.b16 %v4858, %v4857
      %v4862 = vsel %vm658, %v4609, 0
      %v4865 = vsel %vm658, %v4610, 0
      %v4868 = vsel %vm658, %v4611, 0
      %v4871 = vsel %vm658, %v4612, 0
      %v4874 = vsel %vm658, %v4613, 0
      %v4877 = vsel %vm658, %v4614, 0
      %v4880 = vsel %vm658, %v4615, 0
      %v4883 = vsel %vm658, %v4616, 0
      %v4886 = vsel %vm658, %v4617, 0
      %v4889 = vsel %vm658, %v4618, 0
      %v4892 = vsel %vm658, %v4619, 0
      %v4895 = vsel %vm658, %v4620, 0
      %v4898 = vsel %vm658, %v4621, 0
      %v4901 = vsel %vm658, %v4622, 0
      %v4904 = vsel %vm658, %v4623, 0
      %4906 = vmatprep.subr.bf16.mxu0 0
      %4907 = vmatpush1.bf16.msra.mxu0 %v4859
      %4908 = vmatprep.subr.bf16.mxu0 0
      %4909 = vmatpush1.bf16.msra.mxu0 0
      %4910 = vmatprep.subr.bf16.mxu0 0
      %4911 = vmatpush1.bf16.msra.mxu0 0
      %4912 = vmatprep.subr.bf16.mxu0 0
      %4913 = vmatpush1.bf16.msra.mxu0 0
      %4914 = vmatprep.subr.bf16.mxu0 0
      %4915 = vmatpush1.bf16.msra.mxu0 0
      %4916 = vmatprep.subr.bf16.mxu0 0
      %4917 = vmatpush1.bf16.msra.mxu0 0
      %4918 = vmatprep.subr.bf16.mxu0 0
      %4919 = vmatpush1.bf16.msra.mxu0 0
      %4920 = vmatprep.subr.bf16.mxu0 0
      %4921 = vmatpush1.bf16.msra.mxu0 0
      %4922 = vmatprep.subr.bf16.mxu0 0
      %4923 = vmatpush1.bf16.msra.mxu0 0
      %4924 = vmatprep.subr.bf16.mxu0 0
      %4925 = vmatpush1.bf16.msra.mxu0 0
      %4926 = vmatprep.subr.bf16.mxu0 0
      %4927 = vmatpush1.bf16.msra.mxu0 0
      %4928 = vmatprep.subr.bf16.mxu0 0
      %4929 = vmatpush1.bf16.msra.mxu0 0
      %4930 = vmatprep.subr.bf16.mxu0 0
      %4931 = vmatpush1.bf16.msra.mxu0 0
      %4932 = vmatprep.subr.bf16.mxu0 0
      %4933 = vmatpush1.bf16.msra.mxu0 0
      %4934 = vmatprep.subr.bf16.mxu0 0
      %4935 = vmatpush1.bf16.msra.mxu0 0
      %4936 = vmatprep.subr.bf16.mxu0 0
      %4937 = vmatpush1.bf16.msra.mxu0 0
      %4938 = vmatprep.mubr.bf16.mxu0 0
      %4939 = vmatmul.mubr.bf16.gmra.mrb[0].mxu0 %v2081
      %v4940 = vpop.f32.mrb[0].mxu0
      %v4941 = vadd.f32 %v4729, %v4940
      %v4942 = vpop.f32.mrb[0].mxu0
      %v4943 = vpop.f32.mrb[0].mxu0
      %v4944 = vadd.f32 %v4732, %v4943
      %v4945 = vpop.f32.mrb[0].mxu0
      %4946 = vmatprep.mubr.bf16.mxu0 0
      %4947 = vmatmul.mubr.bf16.gmra.mrb[0].mxu0 %v4862
      %v4948 = vpop.f32.mrb[0].mxu0
      %v4949 = vadd.f32 %v4737, %v4948
      %v4950 = vpop.f32.mrb[0].mxu0
      %v4951 = vpop.f32.mrb[0].mxu0
      %v4952 = vadd.f32 %v4740, %v4951
      %v4953 = vpop.f32.mrb[0].mxu0
      %4954 = vmatprep.mubr.bf16.mxu0 0
      %4955 = vmatmul.mubr.bf16.gmra.mrb[0].mxu0 %v4865
      %v4956 = vpop.f32.mrb[0].mxu0
      %v4957 = vadd.f32 %v4745, %v4956
      %v4958 = vpop.f32.mrb[0].mxu0
      %v4959 = vpop.f32.mrb[0].mxu0
      %v4960 = vadd.f32 %v4748, %v4959
      %v4961 = vpop.f32.mrb[0].mxu0
      %4962 = vmatprep.mubr.bf16.mxu0 0
      %4963 = vmatmul.mubr.bf16.gmra.mrb[0].mxu0 %v4868
      %v4964 = vpop.f32.mrb[0].mxu0
      %v4965 = vadd.f32 %v4753, %v4964
      %v4966 = vpop.f32.mrb[0].mxu0
      %v4967 = vpop.f32.mrb[0].mxu0
      %v4968 = vadd.f32 %v4756, %v4967
      %v4969 = vpop.f32.mrb[0].mxu0
      %4970 = vmatprep.mubr.bf16.mxu0 0
      %4971 = vmatmul.mubr.bf16.gmra.mrb[0].mxu0 %v4871
      %v4972 = vpop.f32.mrb[0].mxu0
      %v4973 = vadd.f32 %v4761, %v4972
      %v4974 = vpop.f32.mrb[0].mxu0
      %v4975 = vpop.f32.mrb[0].mxu0
      %v4976 = vadd.f32 %v4764, %v4975
      %v4977 = vpop.f32.mrb[0].mxu0
      %4978 = vmatprep.mubr.bf16.mxu0 0
      %4979 = vmatmul.mubr.bf16.gmra.mrb[0].mxu0 %v4874
      %v4980 = vpop.f32.mrb[0].mxu0
      %v4981 = vadd.f32 %v4769, %v4980
      %v4982 = vpop.f32.mrb[0].mxu0
      %v4983 = vpop.f32.mrb[0].mxu0
      %v4984 = vadd.f32 %v4772, %v4983
      %v4985 = vpop.f32.mrb[0].mxu0
      %4986 = vmatprep.mubr.bf16.mxu0 0
      %4987 = vmatmul.mubr.bf16.gmra.mrb[0].mxu0 %v4877
      %v4988 = vpop.f32.mrb[0].mxu0
      %v4989 = vadd.f32 %v4777, %v4988
      %v4990 = vpop.f32.mrb[0].mxu0
      %v4991 = vpop.f32.mrb[0].mxu0
      %v4992 = vadd.f32 %v4780, %v4991
      %v4993 = vpop.f32.mrb[0].mxu0
      %4994 = vmatprep.mubr.bf16.mxu0 0
      %4995 = vmatmul.mubr.bf16.gmra.mrb[0].mxu0 %v4880
      %v4996 = vpop.f32.mrb[0].mxu0
      %v4997 = vadd.f32 %v4785, %v4996
      %v4998 = vpop.f32.mrb[0].mxu0
      %v4999 = vpop.f32.mrb[0].mxu0
      %v5000 = vadd.f32 %v4788, %v4999
      %v5001 = vpop.f32.mrb[0].mxu0
      %5002 = vmatprep.mubr.bf16.mxu0 0
      %5003 = vmatmul.mubr.bf16.gmra.mrb[0].mxu0 %v4883
      %v5004 = vpop.f32.mrb[0].mxu0
      %v5005 = vadd.f32 %v4793, %v5004
      %v5006 = vpop.f32.mrb[0].mxu0
      %v5007 = vpop.f32.mrb[0].mxu0
      %v5008 = vadd.f32 %v4796, %v5007
      %v5009 = vpop.f32.mrb[0].mxu0
      %5010 = vmatprep.mubr.bf16.mxu0 0
      %5011 = vmatmul.mubr.bf16.gmra.mrb[0].mxu0 %v4886
      %v5012 = vpop.f32.mrb[0].mxu0
      %v5013 = vadd.f32 %v4801, %v5012
      %v5014 = vpop.f32.mrb[0].mxu0
      %v5015 = vpop.f32.mrb[0].mxu0
      %v5016 = vadd.f32 %v4804, %v5015
      %v5017 = vpop.f32.mrb[0].mxu0
      %5018 = vmatprep.mubr.bf16.mxu0 0
      %5019 = vmatmul.mubr.bf16.gmra.mrb[0].mxu0 %v4889
      %v5020 = vpop.f32.mrb[0].mxu0
      %v5021 = vadd.f32 %v4809, %v5020
      %v5022 = vpop.f32.mrb[0].mxu0
      %v5023 = vpop.f32.mrb[0].mxu0
      %v5024 = vadd.f32 %v4812, %v5023
      %v5025 = vpop.f32.mrb[0].mxu0
      %5026 = vmatprep.mubr.bf16.mxu0 0
      %5027 = vmatmul.mubr.bf16.gmra.mrb[0].mxu0 %v4892
      %v5028 = vpop.f32.mrb[0].mxu0
      %v5029 = vadd.f32 %v4817, %v5028
      %v5030 = vpop.f32.mrb[0].mxu0
      %v5031 = vpop.f32.mrb[0].mxu0
      %v5032 = vadd.f32 %v4820, %v5031
      %v5033 = vpop.f32.mrb[0].mxu0
      %5034 = vmatprep.mubr.bf16.mxu0 0
      %5035 = vmatmul.mubr.bf16.gmra.mrb[0].mxu0 %v4895
      %v5036 = vpop.f32.mrb[0].mxu0
      %v5037 = vadd.f32 %v4825, %v5036
      %v5038 = vpop.f32.mrb[0].mxu0
      %v5039 = vpop.f32.mrb[0].mxu0
      %v5040 = vadd.f32 %v4828, %v5039
      %v5041 = vpop.f32.mrb[0].mxu0
      %5042 = vmatprep.mubr.bf16.mxu0 0
      %5043 = vmatmul.mubr.bf16.gmra.mrb[0].mxu0 %v4898
      %v5044 = vpop.f32.mrb[0].mxu0
      %v5045 = vadd.f32 %v4833, %v5044
      %v5046 = vpop.f32.mrb[0].mxu0
      %v5047 = vpop.f32.mrb[0].mxu0
      %v5048 = vadd.f32 %v4836, %v5047
      %v5049 = vpop.f32.mrb[0].mxu0
      %5050 = vmatprep.mubr.bf16.mxu0 0
      %5051 = vmatmul.mubr.bf16.gmra.mrb[0].mxu0 %v4901
      %v5052 = vpop.f32.mrb[0].mxu0
      %v5053 = vadd.f32 %v4841, %v5052
      %v5054 = vpop.f32.mrb[0].mxu0
      %v5055 = vpop.f32.mrb[0].mxu0
      %v5056 = vadd.f32 %v4844, %v5055
      %v5057 = vpop.f32.mrb[0].mxu0
      %5058 = vmatprep.mubr.bf16.mxu0 0
      %5059 = vmatmul.mubr.bf16.gmra.mrb[0].mxu0 %v4904
      %v5060 = vpop.f32.mrb[0].mxu0
      %v5061 = vadd.f32 %v4849, %v5060
      %v5062 = vpop.f32.mrb[0].mxu0
      %v5063 = vpop.f32.mrb[0].mxu0
      %v5064 = vadd.f32 %v4852, %v5063
      %v5065 = vpop.f32.mrb[0].mxu0
      %5066 = vdwg.mxu0
      %v5068 = vrot.slane %v4427, 1
      %v5069 = vsel %vm2386, %v2387, %v5068
      %v5070 = vrot.slane %v4428, 1
      %v5071 = vsel %vm2386, %v5068, %v5070
      %v5072 = vrot.slane %v4429, 1
      %v5073 = vsel %vm2386, %v5070, %v5072
      %v5074 = vrot.slane %v4430, 1
      %v5075 = vsel %vm2386, %v5072, %v5074
      %v5076 = vrot.slane %v4431, 1
      %v5077 = vsel %vm2386, %v5074, %v5076
      %v5078 = vrot.slane %v4432, 1
      %v5079 = vsel %vm2386, %v5076, %v5078
      %v5080 = vrot.slane %v4433, 1
      %v5081 = vsel %vm2386, %v5078, %v5080
      %v5082 = vrot.slane %v4434, 1
      %v5083 = vsel %vm2386, %v5080, %v5082
      %v5084 = vrot.slane %v4435, 1
      %v5085 = vsel %vm2386, %v5082, %v5084
      %v5086 = vrot.slane %v4436, 1
      %v5087 = vsel %vm2386, %v5084, %v5086
      %v5088 = vrot.slane %v4437, 1
      %v5089 = vsel %vm2386, %v5086, %v5088
      %v5090 = vrot.slane %v4438, 1
      %v5091 = vsel %vm2386, %v5088, %v5090
      %v5092 = vrot.slane %v4439, 1
      %v5093 = vsel %vm2386, %v5090, %v5092
      %v5094 = vrot.slane %v4440, 1
      %v5095 = vsel %vm2386, %v5092, %v5094
      %v5096 = vrot.slane %v4441, 1
      %v5097 = vsel %vm2386, %v5094, %v5096
      %v5098 = vrot.slane %v4442, 1
      %v5099 = vsel %vm2386, %v5096, %v5098
      %v5100 = vrot.slane %v4443, 1
      %v5101 = vsel %vm2386, %v5098, %v5100
      %v5102 = vrot.slane %v4444, 1
      %v5103 = vsel %vm2386, %v5100, %v5102
      %v5104 = vrot.slane %v4445, 1
      %v5105 = vsel %vm2386, %v5102, %v5104
      %v5106 = vrot.slane %v4446, 1
      %v5107 = vsel %vm2386, %v5104, %v5106
      %v5108 = vrot.slane %v4447, 1
      %v5109 = vsel %vm2386, %v5106, %v5108
      %v5110 = vrot.slane %v4448, 1
      %v5111 = vsel %vm2386, %v5108, %v5110
      %v5112 = vrot.slane %v4449, 1
      %v5113 = vsel %vm2386, %v5110, %v5112
      %v5114 = vrot.slane %v4450, 1
      %v5115 = vsel %vm2386, %v5112, %v5114
      %v5116 = vrot.slane %v4451, 1
      %v5117 = vsel %vm2386, %v5114, %v5116
      %v5118 = vrot.slane %v4452, 1
      %v5119 = vsel %vm2386, %v5116, %v5118
      %v5120 = vrot.slane %v4453, 1
      %v5121 = vsel %vm2386, %v5118, %v5120
      %v5122 = vrot.slane %v4454, 1
      %v5123 = vsel %vm2386, %v5120, %v5122
      %v5124 = vrot.slane %v4455, 1
      %v5125 = vsel %vm2386, %v5122, %v5124
      %v5126 = vrot.slane %v4456, 1
      %v5127 = vsel %vm2386, %v5124, %v5126
      %v5128 = vrot.slane %v4457, 1
      %v5129 = vsel %vm2386, %v5126, %v5128
      %v5161 = vsel %vm2354, %v5069, 0.0
      %v5162 = vsel %vm2355, %v5071, 0.0
      %v5163 = vsel %vm2356, %v5073, 0.0
      %v5164 = vsel %vm2357, %v5075, 0.0
      %v5165 = vsel %vm2358, %v5077, 0.0
      %v5166 = vsel %vm2359, %v5079, 0.0
      %v5167 = vsel %vm2360, %v5081, 0.0
      %v5168 = vsel %vm2361, %v5083, 0.0
      %v5169 = vsel %vm2362, %v5085, 0.0
      %v5170 = vsel %vm2363, %v5087, 0.0
      %v5171 = vsel %vm2364, %v5089, 0.0
      %v5172 = vsel %vm2365, %v5091, 0.0
      %v5173 = vsel %vm2366, %v5093, 0.0
      %v5174 = vsel %vm2367, %v5095, 0.0
      %v5175 = vsel %vm2368, %v5097, 0.0
      %v5176 = vsel %vm2369, %v5099, 0.0
      %v5177 = vsel %vm2370, %v5101, 0.0
      %v5178 = vsel %vm2371, %v5103, 0.0
      %v5179 = vsel %vm2372, %v5105, 0.0
      %v5180 = vsel %vm2373, %v5107, 0.0
      %v5181 = vsel %vm2374, %v5109, 0.0
      %v5182 = vsel %vm2375, %v5111, 0.0
      %v5183 = vsel %vm2376, %v5113, 0.0
      %v5184 = vsel %vm2377, %v5115, 0.0
      %v5185 = vsel %vm2378, %v5117, 0.0
      %v5186 = vsel %vm2379, %v5119, 0.0
      %v5187 = vsel %vm2380, %v5121, 0.0
      %v5188 = vsel %vm2381, %v5123, 0.0
      %v5189 = vsel %vm2382, %v5125, 0.0
      %v5190 = vsel %vm2383, %v5127, 0.0
      %v5191 = vsel %vm2384, %v5129, 0.0
      %v5192 = vpack.c.bf16 %v5161, %v2483
      %v5193 = vpack.c.bf16 %v5163, %v5162
      %v5194 = vpack.c.bf16 %v5165, %v5164
      %v5195 = vpack.c.bf16 %v5167, %v5166
      %v5196 = vpack.c.bf16 %v5169, %v5168
      %v5197 = vpack.c.bf16 %v5171, %v5170
      %v5198 = vpack.c.bf16 %v5173, %v5172
      %v5199 = vpack.c.bf16 %v5175, %v5174
      %v5200 = vpack.c.bf16 %v5177, %v5176
      %v5201 = vpack.c.bf16 %v5179, %v5178
      %v5202 = vpack.c.bf16 %v5181, %v5180
      %v5203 = vpack.c.bf16 %v5183, %v5182
      %v5204 = vpack.c.bf16 %v5185, %v5184
      %v5205 = vpack.c.bf16 %v5187, %v5186
      %v5206 = vpack.c.bf16 %v5189, %v5188
      %v5207 = vpack.c.bf16 %v5191, %v5190
      %v5208 = vld [vmem:[%s6 + $0x10] sm:$0xf]
      %v5209 = vld [vmem:[%s6 + $0x14] sm:$0xf]
      %v5212 = vunpack.c.l.b16 %v5208
      %v5213 = vunpack.c.l.b16 %v5209
      %v5214 = vpack.c.b16 %v5213, %v5212
      %v5217 = vsel %vm658, %v5192, 0
      %v5220 = vsel %vm658, %v5193, 0
      %v5223 = vsel %vm658, %v5194, 0
      %v5226 = vsel %vm658, %v5195, 0
      %v5229 = vsel %vm658, %v5196, 0
      %v5232 = vsel %vm658, %v5197, 0
      %v5235 = vsel %vm658, %v5198, 0
      %v5238 = vsel %vm658, %v5199, 0
      %v5241 = vsel %vm658, %v5200, 0
      %v5244 = vsel %vm658, %v5201, 0
      %v5247 = vsel %vm658, %v5202, 0
      %v5250 = vsel %vm658, %v5203, 0
      %v5253 = vsel %vm658, %v5204, 0
      %v5256 = vsel %vm658, %v5205, 0
      %v5259 = vsel %vm658, %v5206, 0
      %v5262 = vsel %vm658, %v5207, 0
      %5264 = vmatprep.subr.bf16.mxu0 0
      %5265 = vmatpush1.bf16.msra.mxu0 %v5214
      %5266 = vmatprep.subr.bf16.mxu0 0
      %5267 = vmatpush1.bf16.msra.mxu0 0
      %5268 = vmatprep.subr.bf16.mxu0 0
      %5269 = vmatpush1.bf16.msra.mxu0 0
      %5270 = vmatprep.subr.bf16.mxu0 0
      %5271 = vmatpush1.bf16.msra.mxu0 0
      %5272 = vmatprep.subr.bf16.mxu0 0
      %5273 = vmatpush1.bf16.msra.mxu0 0
      %5274 = vmatprep.subr.bf16.mxu0 0
      %5275 = vmatpush1.bf16.msra.mxu0 0
      %5276 = vmatprep.subr.bf16.mxu0 0
      %5277 = vmatpush1.bf16.msra.mxu0 0
      %5278 = vmatprep.subr.bf16.mxu0 0
      %5279 = vmatpush1.bf16.msra.mxu0 0
      %5280 = vmatprep.subr.bf16.mxu0 0
      %5281 = vmatpush1.bf16.msra.mxu0 0
      %5282 = vmatprep.subr.bf16.mxu0 0
      %5283 = vmatpush1.bf16.msra.mxu0 0
      %5284 = vmatprep.subr.bf16.mxu0 0
      %5285 = vmatpush1.bf16.msra.mxu0 0
      %5286 = vmatprep.subr.bf16.mxu0 0
      %5287 = vmatpush1.bf16.msra.mxu0 0
      %5288 = vmatprep.subr.bf16.mxu0 0
      %5289 = vmatpush1.bf16.msra.mxu0 0
      %5290 = vmatprep.subr.bf16.mxu0 0
      %5291 = vmatpush1.bf16.msra.mxu0 0
      %5292 = vmatprep.subr.bf16.mxu0 0
      %5293 = vmatpush1.bf16.msra.mxu0 0
      %5294 = vmatprep.subr.bf16.mxu0 0
      %5295 = vmatpush1.bf16.msra.mxu0 0
      %5296 = vmatprep.mubr.bf16.mxu0 0
      %5297 = vmatmul.mubr.bf16.gmra.mrb[0].mxu0 %v5217
      %v5298 = vpop.f32.mrb[0].mxu0
      %v5299 = vadd.f32 0.0, %v5298
      %v5300 = vpop.f32.mrb[0].mxu0
      %v5301 = vpop.f32.mrb[0].mxu0
      %v5302 = vadd.f32 0.0, %v5301
      %v5303 = vpop.f32.mrb[0].mxu0
      %5304 = vmatprep.mubr.bf16.mxu0 0
      %5305 = vmatmul.mubr.bf16.gmra.mrb[0].mxu0 %v5220
      %v5306 = vpop.f32.mrb[0].mxu0
      %v5307 = vadd.f32 0.0, %v5306
      %v5308 = vpop.f32.mrb[0].mxu0
      %v5309 = vpop.f32.mrb[0].mxu0
      %v5310 = vadd.f32 0.0, %v5309
      %v5311 = vpop.f32.mrb[0].mxu0
      %5312 = vmatprep.mubr.bf16.mxu0 0
      %5313 = vmatmul.mubr.bf16.gmra.mrb[0].mxu0 %v5223
      %v5314 = vpop.f32.mrb[0].mxu0
      %v5315 = vadd.f32 0.0, %v5314
      %v5316 = vpop.f32.mrb[0].mxu0
      %v5317 = vpop.f32.mrb[0].mxu0
      %v5318 = vadd.f32 0.0, %v5317
      %v5319 = vpop.f32.mrb[0].mxu0
      %5320 = vmatprep.mubr.bf16.mxu0 0
      %5321 = vmatmul.mubr.bf16.gmra.mrb[0].mxu0 %v5226
      %v5322 = vpop.f32.mrb[0].mxu0
      %v5323 = vadd.f32 0.0, %v5322
      %v5324 = vpop.f32.mrb[0].mxu0
      %v5325 = vpop.f32.mrb[0].mxu0
      %v5326 = vadd.f32 0.0, %v5325
      %v5327 = vpop.f32.mrb[0].mxu0
      %5328 = vmatprep.mubr.bf16.mxu0 0
      %5329 = vmatmul.mubr.bf16.gmra.mrb[0].mxu0 %v5229
      %v5330 = vpop.f32.mrb[0].mxu0
      %v5331 = vadd.f32 0.0, %v5330
      %v5332 = vpop.f32.mrb[0].mxu0
      %v5333 = vpop.f32.mrb[0].mxu0
      %v5334 = vadd.f32 0.0, %v5333
      %v5335 = vpop.f32.mrb[0].mxu0
      %5336 = vmatprep.mubr.bf16.mxu0 0
      %5337 = vmatmul.mubr.bf16.gmra.mrb[0].mxu0 %v5232
      %v5338 = vpop.f32.mrb[0].mxu0
      %v5339 = vadd.f32 0.0, %v5338
      %v5340 = vpop.f32.mrb[0].mxu0
      %v5341 = vpop.f32.mrb[0].mxu0
      %v5342 = vadd.f32 0.0, %v5341
      %v5343 = vpop.f32.mrb[0].mxu0
      %5344 = vmatprep.mubr.bf16.mxu0 0
      %5345 = vmatmul.mubr.bf16.gmra.mrb[0].mxu0 %v5235
      %v5346 = vpop.f32.mrb[0].mxu0
      %v5347 = vadd.f32 0.0, %v5346
      %v5348 = vpop.f32.mrb[0].mxu0
      %v5349 = vpop.f32.mrb[0].mxu0
      %v5350 = vadd.f32 0.0, %v5349
      %v5351 = vpop.f32.mrb[0].mxu0
      %5352 = vmatprep.mubr.bf16.mxu0 0
      %5353 = vmatmul.mubr.bf16.gmra.mrb[0].mxu0 %v5238
      %v5354 = vpop.f32.mrb[0].mxu0
      %v5355 = vadd.f32 0.0, %v5354
      %v5356 = vpop.f32.mrb[0].mxu0
      %v5357 = vpop.f32.mrb[0].mxu0
      %v5358 = vadd.f32 0.0, %v5357
      %v5359 = vpop.f32.mrb[0].mxu0
      %5360 = vmatprep.mubr.bf16.mxu0 0
      %5361 = vmatmul.mubr.bf16.gmra.mrb[0].mxu0 %v5241
      %v5362 = vpop.f32.mrb[0].mxu0
      %v5363 = vadd.f32 0.0, %v5362
      %v5364 = vpop.f32.mrb[0].mxu0
      %v5365 = vpop.f32.mrb[0].mxu0
      %v5366 = vadd.f32 0.0, %v5365
      %v5367 = vpop.f32.mrb[0].mxu0
      %5368 = vmatprep.mubr.bf16.mxu0 0
      %5369 = vmatmul.mubr.bf16.gmra.mrb[0].mxu0 %v5244
      %v5370 = vpop.f32.mrb[0].mxu0
      %v5371 = vadd.f32 0.0, %v5370
      %v5372 = vpop.f32.mrb[0].mxu0
      %v5373 = vpop.f32.mrb[0].mxu0
      %v5374 = vadd.f32 0.0, %v5373
      %v5375 = vpop.f32.mrb[0].mxu0
      %5376 = vmatprep.mubr.bf16.mxu0 0
      %5377 = vmatmul.mubr.bf16.gmra.mrb[0].mxu0 %v5247
      %v5378 = vpop.f32.mrb[0].mxu0
      %v5379 = vadd.f32 0.0, %v5378
      %v5380 = vpop.f32.mrb[0].mxu0
      %v5381 = vpop.f32.mrb[0].mxu0
      %v5382 = vadd.f32 0.0, %v5381
      %v5383 = vpop.f32.mrb[0].mxu0
      %5384 = vmatprep.mubr.bf16.mxu0 0
      %5385 = vmatmul.mubr.bf16.gmra.mrb[0].mxu0 %v5250
      %v5386 = vpop.f32.mrb[0].mxu0
      %v5387 = vadd.f32 0.0, %v5386
      %v5388 = vpop.f32.mrb[0].mxu0
      %v5389 = vpop.f32.mrb[0].mxu0
      %v5390 = vadd.f32 0.0, %v5389
      %v5391 = vpop.f32.mrb[0].mxu0
      %5392 = vmatprep.mubr.bf16.mxu0 0
      %5393 = vmatmul.mubr.bf16.gmra.mrb[0].mxu0 %v5253
      %v5394 = vpop.f32.mrb[0].mxu0
      %v5395 = vadd.f32 0.0, %v5394
      %v5396 = vpop.f32.mrb[0].mxu0
      %v5397 = vpop.f32.mrb[0].mxu0
      %v5398 = vadd.f32 0.0, %v5397
      %v5399 = vpop.f32.mrb[0].mxu0
      %5400 = vmatprep.mubr.bf16.mxu0 0
      %5401 = vmatmul.mubr.bf16.gmra.mrb[0].mxu0 %v5256
      %v5402 = vpop.f32.mrb[0].mxu0
      %v5403 = vadd.f32 0.0, %v5402
      %v5404 = vpop.f32.mrb[0].mxu0
      %v5405 = vpop.f32.mrb[0].mxu0
      %v5406 = vadd.f32 0.0, %v5405
      %v5407 = vpop.f32.mrb[0].mxu0
      %5408 = vmatprep.mubr.bf16.mxu0 0
      %5409 = vmatmul.mubr.bf16.gmra.mrb[0].mxu0 %v5259
      %v5410 = vpop.f32.mrb[0].mxu0
      %v5411 = vadd.f32 0.0, %v5410
      %v5412 = vpop.f32.mrb[0].mxu0
      %v5413 = vpop.f32.mrb[0].mxu0
      %v5414 = vadd.f32 0.0, %v5413
      %v5415 = vpop.f32.mrb[0].mxu0
      %5416 = vmatprep.mubr.bf16.mxu0 0
      %5417 = vmatmul.mubr.bf16.gmra.mrb[0].mxu0 %v5262
      %v5418 = vpop.f32.mrb[0].mxu0
      %v5419 = vadd.f32 0.0, %v5418
      %v5420 = vpop.f32.mrb[0].mxu0
      %v5421 = vpop.f32.mrb[0].mxu0
      %v5422 = vadd.f32 0.0, %v5421
      %v5423 = vpop.f32.mrb[0].mxu0
      %5424 = vdwg.mxu0
      %v5425 = vadd.f32 %v4941, %v5299
      %v5426 = vadd.f32 %v4944, %v5302
      %v5427 = vadd.f32 %v4949, %v5307
      %v5428 = vadd.f32 %v4952, %v5310
      %v5429 = vadd.f32 %v4957, %v5315
      %v5430 = vadd.f32 %v4960, %v5318
      %v5431 = vadd.f32 %v4965, %v5323
      %v5432 = vadd.f32 %v4968, %v5326
      %v5433 = vadd.f32 %v4973, %v5331
      %v5434 = vadd.f32 %v4976, %v5334
      %v5435 = vadd.f32 %v4981, %v5339
      %v5436 = vadd.f32 %v4984, %v5342
      %v5437 = vadd.f32 %v4989, %v5347
      %v5438 = vadd.f32 %v4992, %v5350
      %v5439 = vadd.f32 %v4997, %v5355
      %v5440 = vadd.f32 %v5000, %v5358
      %v5441 = vadd.f32 %v5005, %v5363
      %v5442 = vadd.f32 %v5008, %v5366
      %v5443 = vadd.f32 %v5013, %v5371
      %v5444 = vadd.f32 %v5016, %v5374
      %v5445 = vadd.f32 %v5021, %v5379
      %v5446 = vadd.f32 %v5024, %v5382
      %v5447 = vadd.f32 %v5029, %v5387
      %v5448 = vadd.f32 %v5032, %v5390
      %v5449 = vadd.f32 %v5037, %v5395
      %v5450 = vadd.f32 %v5040, %v5398
      %v5451 = vadd.f32 %v5045, %v5403
      %v5452 = vadd.f32 %v5048, %v5406
      %v5453 = vadd.f32 %v5053, %v5411
      %v5454 = vadd.f32 %v5056, %v5414
      %v5455 = vadd.f32 %v5061, %v5419
      %v5456 = vadd.f32 %v5064, %v5422
      %v5458 = vrot.slane %v4457, 7
      %v5459 = vsel %vm1697, %v4547, %v5458
      %v5460 = vrot.slane %v4458, 7
      %v5461 = vsel %vm1697, %v5458, %v5460
      %v5464 = vsel %vm1634, %v4490, 0.0
      %v5465 = vsel %vm1635, %v4492, 0.0
      %v5466 = vsel %vm1636, %v4494, 0.0
      %v5467 = vsel %vm1637, %v4496, 0.0
      %v5468 = vsel %vm1638, %v4498, 0.0
      %v5469 = vsel %vm1639, %v4500, 0.0
      %v5470 = vsel %vm1640, %v4502, 0.0
      %v5471 = vsel %vm1641, %v4504, 0.0
      %v5472 = vsel %vm1642, %v4506, 0.0
      %v5473 = vsel %vm1643, %v4508, 0.0
      %v5474 = vsel %vm1644, %v4510, 0.0
      %v5475 = vsel %vm1645, %v4512, 0.0
      %v5476 = vsel %vm1646, %v4514, 0.0
      %v5477 = vsel %vm1647, %v4516, 0.0
      %v5478 = vsel %vm1648, %v4518, 0.0
      %v5479 = vsel %vm1649, %v4520, 0.0
      %v5480 = vsel %vm1650, %v4522, 0.0
      %v5481 = vsel %vm1651, %v4524, 0.0
      %v5482 = vsel %vm1652, %v4526, 0.0
      %v5483 = vsel %vm1653, %v4528, 0.0
      %v5484 = vsel %vm1654, %v4530, 0.0
      %v5485 = vsel %vm1655, %v4532, 0.0
      %v5486 = vsel %vm1656, %v4534, 0.0
      %v5487 = vsel %vm1657, %v4536, 0.0
      %v5488 = vsel %vm1658, %v4538, 0.0
      %v5489 = vsel %vm1659, %v4540, 0.0
      %v5490 = vsel %vm1660, %v4542, 0.0
      %v5491 = vsel %vm1661, %v4544, 0.0
      %v5492 = vsel %vm1662, %v4546, 0.0
      %v5493 = vsel %vm1663, %v4548, 0.0
      %v5494 = vsel %vm1664, %v5459, 0.0
      %v5495 = vsel %vm1665, %v5461, 0.0
      %v5496 = vpack.c.bf16 %v5465, %v5464
      %v5497 = vpack.c.bf16 %v5467, %v5466
      %v5498 = vpack.c.bf16 %v5469, %v5468
      %v5499 = vpack.c.bf16 %v5471, %v5470
      %v5500 = vpack.c.bf16 %v5473, %v5472
      %v5501 = vpack.c.bf16 %v5475, %v5474
      %v5502 = vpack.c.bf16 %v5477, %v5476
      %v5503 = vpack.c.bf16 %v5479, %v5478
      %v5504 = vpack.c.bf16 %v5481, %v5480
      %v5505 = vpack.c.bf16 %v5483, %v5482
      %v5506 = vpack.c.bf16 %v5485, %v5484
      %v5507 = vpack.c.bf16 %v5487, %v5486
      %v5508 = vpack.c.bf16 %v5489, %v5488
      %v5509 = vpack.c.bf16 %v5491, %v5490
      %v5510 = vpack.c.bf16 %v5493, %v5492
      %v5511 = vpack.c.bf16 %v5495, %v5494
      %v5512 = vld [vmem:[%s6 + $0x18] sm:$0xf]
      %v5513 = vld [vmem:[%s6 + $0x1c] sm:$0xf]
      %v5516 = vunpack.c.l.b16 %v5512
      %v5517 = vunpack.c.l.b16 %v5513
      %v5518 = vpack.c.b16 %v5517, %v5516
      %v5521 = vsel %vm658, %v5496, 0
      %v5524 = vsel %vm658, %v5497, 0
      %v5527 = vsel %vm658, %v5498, 0
      %v5530 = vsel %vm658, %v5499, 0
      %v5533 = vsel %vm658, %v5500, 0
      %v5536 = vsel %vm658, %v5501, 0
      %v5539 = vsel %vm658, %v5502, 0
      %v5542 = vsel %vm658, %v5503, 0
      %v5545 = vsel %vm658, %v5504, 0
      %v5548 = vsel %vm658, %v5505, 0
      %v5551 = vsel %vm658, %v5506, 0
      %v5554 = vsel %vm658, %v5507, 0
      %v5557 = vsel %vm658, %v5508, 0
      %v5560 = vsel %vm658, %v5509, 0
      %v5563 = vsel %vm658, %v5510, 0
      %v5566 = vsel %vm658, %v5511, 0
      %5568 = vmatprep.subr.bf16.mxu0 0
      %5569 = vmatpush1.bf16.msra.mxu0 %v5518
      %5570 = vmatprep.subr.bf16.mxu0 0
      %5571 = vmatpush1.bf16.msra.mxu0 0
      %5572 = vmatprep.subr.bf16.mxu0 0
      %5573 = vmatpush1.bf16.msra.mxu0 0
      %5574 = vmatprep.subr.bf16.mxu0 0
      %5575 = vmatpush1.bf16.msra.mxu0 0
      %5576 = vmatprep.subr.bf16.mxu0 0
      %5577 = vmatpush1.bf16.msra.mxu0 0
      %5578 = vmatprep.subr.bf16.mxu0 0
      %5579 = vmatpush1.bf16.msra.mxu0 0
      %5580 = vmatprep.subr.bf16.mxu0 0
      %5581 = vmatpush1.bf16.msra.mxu0 0
      %5582 = vmatprep.subr.bf16.mxu0 0
      %5583 = vmatpush1.bf16.msra.mxu0 0
      %5584 = vmatprep.subr.bf16.mxu0 0
      %5585 = vmatpush1.bf16.msra.mxu0 0
      %5586 = vmatprep.subr.bf16.mxu0 0
      %5587 = vmatpush1.bf16.msra.mxu0 0
      %5588 = vmatprep.subr.bf16.mxu0 0
      %5589 = vmatpush1.bf16.msra.mxu0 0
      %5590 = vmatprep.subr.bf16.mxu0 0
      %5591 = vmatpush1.bf16.msra.mxu0 0
      %5592 = vmatprep.subr.bf16.mxu0 0
      %5593 = vmatpush1.bf16.msra.mxu0 0
      %5594 = vmatprep.subr.bf16.mxu0 0
      %5595 = vmatpush1.bf16.msra.mxu0 0
      %5596 = vmatprep.subr.bf16.mxu0 0
      %5597 = vmatpush1.bf16.msra.mxu0 0
      %5598 = vmatprep.subr.bf16.mxu0 0
      %5599 = vmatpush1.bf16.msra.mxu0 0
      %5600 = vmatprep.mubr.bf16.mxu0 0
      %5601 = vmatmul.mubr.bf16.gmra.mrb[0].mxu0 %v5521
      %v5602 = vpop.f32.mrb[0].mxu0
      %v5603 = vadd.f32 0.0, %v5602
      %v5604 = vpop.f32.mrb[0].mxu0
      %v5605 = vpop.f32.mrb[0].mxu0
      %v5606 = vadd.f32 0.0, %v5605
      %v5607 = vpop.f32.mrb[0].mxu0
      %5608 = vmatprep.mubr.bf16.mxu0 0
      %5609 = vmatmul.mubr.bf16.gmra.mrb[0].mxu0 %v5524
      %v5610 = vpop.f32.mrb[0].mxu0
      %v5611 = vadd.f32 0.0, %v5610
      %v5612 = vpop.f32.mrb[0].mxu0
      %v5613 = vpop.f32.mrb[0].mxu0
      %v5614 = vadd.f32 0.0, %v5613
      %v5615 = vpop.f32.mrb[0].mxu0
      %5616 = vmatprep.mubr.bf16.mxu0 0
      %5617 = vmatmul.mubr.bf16.gmra.mrb[0].mxu0 %v5527
      %v5618 = vpop.f32.mrb[0].mxu0
      %v5619 = vadd.f32 0.0, %v5618
      %v5620 = vpop.f32.mrb[0].mxu0
      %v5621 = vpop.f32.mrb[0].mxu0
      %v5622 = vadd.f32 0.0, %v5621
      %v5623 = vpop.f32.mrb[0].mxu0
      %5624 = vmatprep.mubr.bf16.mxu0 0
      %5625 = vmatmul.mubr.bf16.gmra.mrb[0].mxu0 %v5530
      %v5626 = vpop.f32.mrb[0].mxu0
      %v5627 = vadd.f32 0.0, %v5626
      %v5628 = vpop.f32.mrb[0].mxu0
      %v5629 = vpop.f32.mrb[0].mxu0
      %v5630 = vadd.f32 0.0, %v5629
      %v5631 = vpop.f32.mrb[0].mxu0
      %5632 = vmatprep.mubr.bf16.mxu0 0
      %5633 = vmatmul.mubr.bf16.gmra.mrb[0].mxu0 %v5533
      %v5634 = vpop.f32.mrb[0].mxu0
      %v5635 = vadd.f32 0.0, %v5634
      %v5636 = vpop.f32.mrb[0].mxu0
      %v5637 = vpop.f32.mrb[0].mxu0
      %v5638 = vadd.f32 0.0, %v5637
      %v5639 = vpop.f32.mrb[0].mxu0
      %5640 = vmatprep.mubr.bf16.mxu0 0
      %5641 = vmatmul.mubr.bf16.gmra.mrb[0].mxu0 %v5536
      %v5642 = vpop.f32.mrb[0].mxu0
      %v5643 = vadd.f32 0.0, %v5642
      %v5644 = vpop.f32.mrb[0].mxu0
      %v5645 = vpop.f32.mrb[0].mxu0
      %v5646 = vadd.f32 0.0, %v5645
      %v5647 = vpop.f32.mrb[0].mxu0
      %5648 = vmatprep.mubr.bf16.mxu0 0
      %5649 = vmatmul.mubr.bf16.gmra.mrb[0].mxu0 %v5539
      %v5650 = vpop.f32.mrb[0].mxu0
      %v5651 = vadd.f32 0.0, %v5650
      %v5652 = vpop.f32.mrb[0].mxu0
      %v5653 = vpop.f32.mrb[0].mxu0
      %v5654 = vadd.f32 0.0, %v5653
      %v5655 = vpop.f32.mrb[0].mxu0
      %5656 = vmatprep.mubr.bf16.mxu0 0
      %5657 = vmatmul.mubr.bf16.gmra.mrb[0].mxu0 %v5542
      %v5658 = vpop.f32.mrb[0].mxu0
      %v5659 = vadd.f32 0.0, %v5658
      %v5660 = vpop.f32.mrb[0].mxu0
      %v5661 = vpop.f32.mrb[0].mxu0
      %v5662 = vadd.f32 0.0, %v5661
      %v5663 = vpop.f32.mrb[0].mxu0
      %5664 = vmatprep.mubr.bf16.mxu0 0
      %5665 = vmatmul.mubr.bf16.gmra.mrb[0].mxu0 %v5545
      %v5666 = vpop.f32.mrb[0].mxu0
      %v5667 = vadd.f32 0.0, %v5666
      %v5668 = vpop.f32.mrb[0].mxu0
      %v5669 = vpop.f32.mrb[0].mxu0
      %v5670 = vadd.f32 0.0, %v5669
      %v5671 = vpop.f32.mrb[0].mxu0
      %5672 = vmatprep.mubr.bf16.mxu0 0
      %5673 = vmatmul.mubr.bf16.gmra.mrb[0].mxu0 %v5548
      %v5674 = vpop.f32.mrb[0].mxu0
      %v5675 = vadd.f32 0.0, %v5674
      %v5676 = vpop.f32.mrb[0].mxu0
      %v5677 = vpop.f32.mrb[0].mxu0
      %v5678 = vadd.f32 0.0, %v5677
      %v5679 = vpop.f32.mrb[0].mxu0
      %5680 = vmatprep.mubr.bf16.mxu0 0
      %5681 = vmatmul.mubr.bf16.gmra.mrb[0].mxu0 %v5551
      %v5682 = vpop.f32.mrb[0].mxu0
      %v5683 = vadd.f32 0.0, %v5682
      %v5684 = vpop.f32.mrb[0].mxu0
      %v5685 = vpop.f32.mrb[0].mxu0
      %v5686 = vadd.f32 0.0, %v5685
      %v5687 = vpop.f32.mrb[0].mxu0
      %5688 = vmatprep.mubr.bf16.mxu0 0
      %5689 = vmatmul.mubr.bf16.gmra.mrb[0].mxu0 %v5554
      %v5690 = vpop.f32.mrb[0].mxu0
      %v5691 = vadd.f32 0.0, %v5690
      %v5692 = vpop.f32.mrb[0].mxu0
      %v5693 = vpop.f32.mrb[0].mxu0
      %v5694 = vadd.f32 0.0, %v5693
      %v5695 = vpop.f32.mrb[0].mxu0
      %5696 = vmatprep.mubr.bf16.mxu0 0
      %5697 = vmatmul.mubr.bf16.gmra.mrb[0].mxu0 %v5557
      %v5698 = vpop.f32.mrb[0].mxu0
      %v5699 = vadd.f32 0.0, %v5698
      %v5700 = vpop.f32.mrb[0].mxu0
      %v5701 = vpop.f32.mrb[0].mxu0
      %v5702 = vadd.f32 0.0, %v5701
      %v5703 = vpop.f32.mrb[0].mxu0
      %5704 = vmatprep.mubr.bf16.mxu0 0
      %5705 = vmatmul.mubr.bf16.gmra.mrb[0].mxu0 %v5560
      %v5706 = vpop.f32.mrb[0].mxu0
      %v5707 = vadd.f32 0.0, %v5706
      %v5708 = vpop.f32.mrb[0].mxu0
      %v5709 = vpop.f32.mrb[0].mxu0
      %v5710 = vadd.f32 0.0, %v5709
      %v5711 = vpop.f32.mrb[0].mxu0
      %5712 = vmatprep.mubr.bf16.mxu0 0
      %5713 = vmatmul.mubr.bf16.gmra.mrb[0].mxu0 %v5563
      %v5714 = vpop.f32.mrb[0].mxu0
      %v5715 = vadd.f32 0.0, %v5714
      %v5716 = vpop.f32.mrb[0].mxu0
      %v5717 = vpop.f32.mrb[0].mxu0
      %v5718 = vadd.f32 0.0, %v5717
      %v5719 = vpop.f32.mrb[0].mxu0
      %5720 = vmatprep.mubr.bf16.mxu0 0
      %5721 = vmatmul.mubr.bf16.gmra.mrb[0].mxu0 %v5566
      %v5722 = vpop.f32.mrb[0].mxu0
      %v5723 = vadd.f32 0.0, %v5722
      %v5724 = vpop.f32.mrb[0].mxu0
      %v5725 = vpop.f32.mrb[0].mxu0
      %v5726 = vadd.f32 0.0, %v5725
      %v5727 = vpop.f32.mrb[0].mxu0
      %5728 = vdwg.mxu0
      %v5729 = vadd.f32 %v5425, %v5603
      %v5730 = vadd.f32 %v5426, %v5606
      %v5731 = vadd.f32 %v5427, %v5611
      %v5732 = vadd.f32 %v5428, %v5614
      %v5733 = vadd.f32 %v5429, %v5619
      %v5734 = vadd.f32 %v5430, %v5622
      %v5735 = vadd.f32 %v5431, %v5627
      %v5736 = vadd.f32 %v5432, %v5630
      %v5737 = vadd.f32 %v5433, %v5635
      %v5738 = vadd.f32 %v5434, %v5638
      %v5739 = vadd.f32 %v5435, %v5643
      %v5740 = vadd.f32 %v5436, %v5646
      %v5741 = vadd.f32 %v5437, %v5651
      %v5742 = vadd.f32 %v5438, %v5654
      %v5743 = vadd.f32 %v5439, %v5659
      %v5744 = vadd.f32 %v5440, %v5662
      %v5745 = vadd.f32 %v5441, %v5667
      %v5746 = vadd.f32 %v5442, %v5670
      %v5747 = vadd.f32 %v5443, %v5675
      %v5748 = vadd.f32 %v5444, %v5678
      %v5749 = vadd.f32 %v5445, %v5683
      %v5750 = vadd.f32 %v5446, %v5686
      %v5751 = vadd.f32 %v5447, %v5691
      %v5752 = vadd.f32 %v5448, %v5694
      %v5753 = vadd.f32 %v5449, %v5699
      %v5754 = vadd.f32 %v5450, %v5702
      %v5755 = vadd.f32 %v5451, %v5707
      %v5756 = vadd.f32 %v5452, %v5710
      %v5757 = vadd.f32 %v5453, %v5715
      %v5758 = vadd.f32 %v5454, %v5718
      %v5759 = vadd.f32 %v5455, %v5723
      %v5760 = vadd.f32 %v5456, %v5726
      %v5761 = vpack.c.bf16 %v4458, %v4457
      %v5762 = vld [vmem:[%s6 + $0x20] sm:$0xf]
      %v5763 = vld [vmem:[%s6 + $0x24] sm:$0xf]
      %v5766 = vunpack.c.l.b16 %v5762
      %v5767 = vunpack.c.l.b16 %v5763
      %v5768 = vpack.c.b16 %v5767, %v5766
      %v5771 = vsel %vm658, %v5761, 0
      %5773 = vmatprep.subr.bf16.mxu0 0
      %5774 = vmatpush1.bf16.msra.mxu0 %v5768
      %5775 = vmatprep.subr.bf16.mxu0 0
      %5776 = vmatpush1.bf16.msra.mxu0 0
      %5777 = vmatprep.subr.bf16.mxu0 0
      %5778 = vmatpush1.bf16.msra.mxu0 0
      %5779 = vmatprep.subr.bf16.mxu0 0
      %5780 = vmatpush1.bf16.msra.mxu0 0
      %5781 = vmatprep.subr.bf16.mxu0 0
      %5782 = vmatpush1.bf16.msra.mxu0 0
      %5783 = vmatprep.subr.bf16.mxu0 0
      %5784 = vmatpush1.bf16.msra.mxu0 0
      %5785 = vmatprep.subr.bf16.mxu0 0
      %5786 = vmatpush1.bf16.msra.mxu0 0
      %5787 = vmatprep.subr.bf16.mxu0 0
      %5788 = vmatpush1.bf16.msra.mxu0 0
      %5789 = vmatprep.subr.bf16.mxu0 0
      %5790 = vmatpush1.bf16.msra.mxu0 0
      %5791 = vmatprep.subr.bf16.mxu0 0
      %5792 = vmatpush1.bf16.msra.mxu0 0
      %5793 = vmatprep.subr.bf16.mxu0 0
      %5794 = vmatpush1.bf16.msra.mxu0 0
      %5795 = vmatprep.subr.bf16.mxu0 0
      %5796 = vmatpush1.bf16.msra.mxu0 0
      %5797 = vmatprep.subr.bf16.mxu0 0
      %5798 = vmatpush1.bf16.msra.mxu0 0
      %5799 = vmatprep.subr.bf16.mxu0 0
      %5800 = vmatpush1.bf16.msra.mxu0 0
      %5801 = vmatprep.subr.bf16.mxu0 0
      %5802 = vmatpush1.bf16.msra.mxu0 0
      %5803 = vmatprep.subr.bf16.mxu0 0
      %5804 = vmatpush1.bf16.msra.mxu0 0
      %5805 = vmatprep.mubr.bf16.mxu0 0
      %5806 = vmatmul.mubr.bf16.gmra.mrb[0].mxu0 %v4650
      %v5807 = vpop.f32.mrb[0].mxu0
      %v5808 = vadd.f32 0.0, %v5807
      %v5809 = vpop.f32.mrb[0].mxu0
      %v5810 = vpop.f32.mrb[0].mxu0
      %v5811 = vadd.f32 0.0, %v5810
      %v5812 = vpop.f32.mrb[0].mxu0
      %5813 = vmatprep.mubr.bf16.mxu0 0
      %5814 = vmatmul.mubr.bf16.gmra.mrb[0].mxu0 %v4653
      %v5815 = vpop.f32.mrb[0].mxu0
      %v5816 = vadd.f32 0.0, %v5815
      %v5817 = vpop.f32.mrb[0].mxu0
      %v5818 = vpop.f32.mrb[0].mxu0
      %v5819 = vadd.f32 0.0, %v5818
      %v5820 = vpop.f32.mrb[0].mxu0
      %5821 = vmatprep.mubr.bf16.mxu0 0
      %5822 = vmatmul.mubr.bf16.gmra.mrb[0].mxu0 %v4656
      %v5823 = vpop.f32.mrb[0].mxu0
      %v5824 = vadd.f32 0.0, %v5823
      %v5825 = vpop.f32.mrb[0].mxu0
      %v5826 = vpop.f32.mrb[0].mxu0
      %v5827 = vadd.f32 0.0, %v5826
      %v5828 = vpop.f32.mrb[0].mxu0
      %5829 = vmatprep.mubr.bf16.mxu0 0
      %5830 = vmatmul.mubr.bf16.gmra.mrb[0].mxu0 %v4659
      %v5831 = vpop.f32.mrb[0].mxu0
      %v5832 = vadd.f32 0.0, %v5831
      %v5833 = vpop.f32.mrb[0].mxu0
      %v5834 = vpop.f32.mrb[0].mxu0
      %v5835 = vadd.f32 0.0, %v5834
      %v5836 = vpop.f32.mrb[0].mxu0
      %5837 = vmatprep.mubr.bf16.mxu0 0
      %5838 = vmatmul.mubr.bf16.gmra.mrb[0].mxu0 %v4662
      %v5839 = vpop.f32.mrb[0].mxu0
      %v5840 = vadd.f32 0.0, %v5839
      %v5841 = vpop.f32.mrb[0].mxu0
      %v5842 = vpop.f32.mrb[0].mxu0
      %v5843 = vadd.f32 0.0, %v5842
      %v5844 = vpop.f32.mrb[0].mxu0
      %5845 = vmatprep.mubr.bf16.mxu0 0
      %5846 = vmatmul.mubr.bf16.gmra.mrb[0].mxu0 %v4665
      %v5847 = vpop.f32.mrb[0].mxu0
      %v5848 = vadd.f32 0.0, %v5847
      %v5849 = vpop.f32.mrb[0].mxu0
      %v5850 = vpop.f32.mrb[0].mxu0
      %v5851 = vadd.f32 0.0, %v5850
      %v5852 = vpop.f32.mrb[0].mxu0
      %5853 = vmatprep.mubr.bf16.mxu0 0
      %5854 = vmatmul.mubr.bf16.gmra.mrb[0].mxu0 %v4668
      %v5855 = vpop.f32.mrb[0].mxu0
      %v5856 = vadd.f32 0.0, %v5855
      %v5857 = vpop.f32.mrb[0].mxu0
      %v5858 = vpop.f32.mrb[0].mxu0
      %v5859 = vadd.f32 0.0, %v5858
      %v5860 = vpop.f32.mrb[0].mxu0
      %5861 = vmatprep.mubr.bf16.mxu0 0
      %5862 = vmatmul.mubr.bf16.gmra.mrb[0].mxu0 %v4671
      %v5863 = vpop.f32.mrb[0].mxu0
      %v5864 = vadd.f32 0.0, %v5863
      %v5865 = vpop.f32.mrb[0].mxu0
      %v5866 = vpop.f32.mrb[0].mxu0
      %v5867 = vadd.f32 0.0, %v5866
      %v5868 = vpop.f32.mrb[0].mxu0
      %5869 = vmatprep.mubr.bf16.mxu0 0
      %5870 = vmatmul.mubr.bf16.gmra.mrb[0].mxu0 %v4674
      %v5871 = vpop.f32.mrb[0].mxu0
      %v5872 = vadd.f32 0.0, %v5871
      %v5873 = vpop.f32.mrb[0].mxu0
      %v5874 = vpop.f32.mrb[0].mxu0
      %v5875 = vadd.f32 0.0, %v5874
      %v5876 = vpop.f32.mrb[0].mxu0
      %5877 = vmatprep.mubr.bf16.mxu0 0
      %5878 = vmatmul.mubr.bf16.gmra.mrb[0].mxu0 %v4677
      %v5879 = vpop.f32.mrb[0].mxu0
      %v5880 = vadd.f32 0.0, %v5879
      %v5881 = vpop.f32.mrb[0].mxu0
      %v5882 = vpop.f32.mrb[0].mxu0
      %v5883 = vadd.f32 0.0, %v5882
      %v5884 = vpop.f32.mrb[0].mxu0
      %5885 = vmatprep.mubr.bf16.mxu0 0
      %5886 = vmatmul.mubr.bf16.gmra.mrb[0].mxu0 %v4680
      %v5887 = vpop.f32.mrb[0].mxu0
      %v5888 = vadd.f32 0.0, %v5887
      %v5889 = vpop.f32.mrb[0].mxu0
      %v5890 = vpop.f32.mrb[0].mxu0
      %v5891 = vadd.f32 0.0, %v5890
      %v5892 = vpop.f32.mrb[0].mxu0
      %5893 = vmatprep.mubr.bf16.mxu0 0
      %5894 = vmatmul.mubr.bf16.gmra.mrb[0].mxu0 %v4683
      %v5895 = vpop.f32.mrb[0].mxu0
      %v5896 = vadd.f32 0.0, %v5895
      %v5897 = vpop.f32.mrb[0].mxu0
      %v5898 = vpop.f32.mrb[0].mxu0
      %v5899 = vadd.f32 0.0, %v5898
      %v5900 = vpop.f32.mrb[0].mxu0
      %5901 = vmatprep.mubr.bf16.mxu0 0
      %5902 = vmatmul.mubr.bf16.gmra.mrb[0].mxu0 %v4686
      %v5903 = vpop.f32.mrb[0].mxu0
      %v5904 = vadd.f32 0.0, %v5903
      %v5905 = vpop.f32.mrb[0].mxu0
      %v5906 = vpop.f32.mrb[0].mxu0
      %v5907 = vadd.f32 0.0, %v5906
      %v5908 = vpop.f32.mrb[0].mxu0
      %5909 = vmatprep.mubr.bf16.mxu0 0
      %5910 = vmatmul.mubr.bf16.gmra.mrb[0].mxu0 %v4689
      %v5911 = vpop.f32.mrb[0].mxu0
      %v5912 = vadd.f32 0.0, %v5911
      %v5913 = vpop.f32.mrb[0].mxu0
      %v5914 = vpop.f32.mrb[0].mxu0
      %v5915 = vadd.f32 0.0, %v5914
      %v5916 = vpop.f32.mrb[0].mxu0
      %5917 = vmatprep.mubr.bf16.mxu0 0
      %5918 = vmatmul.mubr.bf16.gmra.mrb[0].mxu0 %v4692
      %v5919 = vpop.f32.mrb[0].mxu0
      %v5920 = vadd.f32 0.0, %v5919
      %v5921 = vpop.f32.mrb[0].mxu0
      %v5922 = vpop.f32.mrb[0].mxu0
      %v5923 = vadd.f32 0.0, %v5922
      %v5924 = vpop.f32.mrb[0].mxu0
      %5925 = vmatprep.mubr.bf16.mxu0 0
      %5926 = vmatmul.mubr.bf16.gmra.mrb[0].mxu0 %v5771
      %v5927 = vpop.f32.mrb[0].mxu0
      %v5928 = vadd.f32 0.0, %v5927
      %v5929 = vpop.f32.mrb[0].mxu0
      %v5930 = vpop.f32.mrb[0].mxu0
      %v5931 = vadd.f32 0.0, %v5930
      %v5932 = vpop.f32.mrb[0].mxu0
      %5933 = vdwg.mxu0
      %v5934 = vadd.f32 %v5729, %v5808
      %v5935 = vadd.f32 %v5730, %v5811
      %v5936 = vadd.f32 %v5731, %v5816
      %v5937 = vadd.f32 %v5732, %v5819
      %v5938 = vadd.f32 %v5733, %v5824
      %v5939 = vadd.f32 %v5734, %v5827
      %v5940 = vadd.f32 %v5735, %v5832
      %v5941 = vadd.f32 %v5736, %v5835
      %v5942 = vadd.f32 %v5737, %v5840
      %v5943 = vadd.f32 %v5738, %v5843
      %v5944 = vadd.f32 %v5739, %v5848
      %v5945 = vadd.f32 %v5740, %v5851
      %v5946 = vadd.f32 %v5741, %v5856
      %v5947 = vadd.f32 %v5742, %v5859
      %v5948 = vadd.f32 %v5743, %v5864
      %v5949 = vadd.f32 %v5744, %v5867
      %v5950 = vadd.f32 %v5745, %v5872
      %v5951 = vadd.f32 %v5746, %v5875
      %v5952 = vadd.f32 %v5747, %v5880
      %v5953 = vadd.f32 %v5748, %v5883
      %v5954 = vadd.f32 %v5749, %v5888
      %v5955 = vadd.f32 %v5750, %v5891
      %v5956 = vadd.f32 %v5751, %v5896
      %v5957 = vadd.f32 %v5752, %v5899
      %v5958 = vadd.f32 %v5753, %v5904
      %v5959 = vadd.f32 %v5754, %v5907
      %v5960 = vadd.f32 %v5755, %v5912
      %v5961 = vadd.f32 %v5756, %v5915
      %v5962 = vadd.f32 %v5757, %v5920
      %v5963 = vadd.f32 %v5758, %v5923
      %v5964 = vadd.f32 %v5759, %v5928
      %v5965 = vadd.f32 %v5760, %v5931
      %v5966 = vrot.slane %v4458, 1
      %v5967 = vsel %vm2386, %v5128, %v5966
      %v5968 = vsel %vm2386, %v5966, %v2387
      %v5971 = vsel %vm2353, %v5071, 0.0
      %v5972 = vsel %vm2354, %v5073, 0.0
      %v5973 = vsel %vm2355, %v5075, 0.0
      %v5974 = vsel %vm2356, %v5077, 0.0
      %v5975 = vsel %vm2357, %v5079, 0.0
      %v5976 = vsel %vm2358, %v5081, 0.0
      %v5977 = vsel %vm2359, %v5083, 0.0
      %v5978 = vsel %vm2360, %v5085, 0.0
      %v5979 = vsel %vm2361, %v5087, 0.0
      %v5980 = vsel %vm2362, %v5089, 0.0
      %v5981 = vsel %vm2363, %v5091, 0.0
      %v5982 = vsel %vm2364, %v5093, 0.0
      %v5983 = vsel %vm2365, %v5095, 0.0
      %v5984 = vsel %vm2366, %v5097, 0.0
      %v5985 = vsel %vm2367, %v5099, 0.0
      %v5986 = vsel %vm2368, %v5101, 0.0
      %v5987 = vsel %vm2369, %v5103, 0.0
      %v5988 = vsel %vm2370, %v5105, 0.0
      %v5989 = vsel %vm2371, %v5107, 0.0
      %v5990 = vsel %vm2372, %v5109, 0.0
      %v5991 = vsel %vm2373, %v5111, 0.0
      %v5992 = vsel %vm2374, %v5113, 0.0
      %v5993 = vsel %vm2375, %v5115, 0.0
      %v5994 = vsel %vm2376, %v5117, 0.0
      %v5995 = vsel %vm2377, %v5119, 0.0
      %v5996 = vsel %vm2378, %v5121, 0.0
      %v5997 = vsel %vm2379, %v5123, 0.0
      %v5998 = vsel %vm2380, %v5125, 0.0
      %v5999 = vsel %vm2381, %v5127, 0.0
      %v6000 = vsel %vm2382, %v5129, 0.0
      %v6001 = vsel %vm2383, %v5967, 0.0
      %v6002 = vsel %vm2384, %v5968, 0.0
      %v6003 = vpack.c.bf16 %v5972, %v5971
      %v6004 = vpack.c.bf16 %v5974, %v5973
      %v6005 = vpack.c.bf16 %v5976, %v5975
      %v6006 = vpack.c.bf16 %v5978, %v5977
      %v6007 = vpack.c.bf16 %v5980, %v5979
      %v6008 = vpack.c.bf16 %v5982, %v5981
      %v6009 = vpack.c.bf16 %v5984, %v5983
      %v6010 = vpack.c.bf16 %v5986, %v5985
      %v6011 = vpack.c.bf16 %v5988, %v5987
      %v6012 = vpack.c.bf16 %v5990, %v5989
      %v6013 = vpack.c.bf16 %v5992, %v5991
      %v6014 = vpack.c.bf16 %v5994, %v5993
      %v6015 = vpack.c.bf16 %v5996, %v5995
      %v6016 = vpack.c.bf16 %v5998, %v5997
      %v6017 = vpack.c.bf16 %v6000, %v5999
      %v6018 = vpack.c.bf16 %v6002, %v6001
      %v6019 = vld [vmem:[%s6 + $0x28] sm:$0xf]
      %v6020 = vld [vmem:[%s6 + $0x2c] sm:$0xf]
      %v6023 = vunpack.c.l.b16 %v6019
      %v6024 = vunpack.c.l.b16 %v6020
      %v6025 = vpack.c.b16 %v6024, %v6023
      %v6028 = vsel %vm658, %v6003, 0
      %v6031 = vsel %vm658, %v6004, 0
      %v6034 = vsel %vm658, %v6005, 0
      %v6037 = vsel %vm658, %v6006, 0
      %v6040 = vsel %vm658, %v6007, 0
      %v6043 = vsel %vm658, %v6008, 0
      %v6046 = vsel %vm658, %v6009, 0
      %v6049 = vsel %vm658, %v6010, 0
      %v6052 = vsel %vm658, %v6011, 0
      %v6055 = vsel %vm658, %v6012, 0
      %v6058 = vsel %vm658, %v6013, 0
      %v6061 = vsel %vm658, %v6014, 0
      %v6064 = vsel %vm658, %v6015, 0
      %v6067 = vsel %vm658, %v6016, 0
      %v6070 = vsel %vm658, %v6017, 0
      %v6073 = vsel %vm658, %v6018, 0
      %6075 = vmatprep.subr.bf16.mxu0 0
      %6076 = vmatpush1.bf16.msra.mxu0 %v6025
      %6077 = vmatprep.subr.bf16.mxu0 0
      %6078 = vmatpush1.bf16.msra.mxu0 0
      %6079 = vmatprep.subr.bf16.mxu0 0
      %6080 = vmatpush1.bf16.msra.mxu0 0
      %6081 = vmatprep.subr.bf16.mxu0 0
      %6082 = vmatpush1.bf16.msra.mxu0 0
      %6083 = vmatprep.subr.bf16.mxu0 0
      %6084 = vmatpush1.bf16.msra.mxu0 0
      %6085 = vmatprep.subr.bf16.mxu0 0
      %6086 = vmatpush1.bf16.msra.mxu0 0
      %6087 = vmatprep.subr.bf16.mxu0 0
      %6088 = vmatpush1.bf16.msra.mxu0 0
      %6089 = vmatprep.subr.bf16.mxu0 0
      %6090 = vmatpush1.bf16.msra.mxu0 0
      %6091 = vmatprep.subr.bf16.mxu0 0
      %6092 = vmatpush1.bf16.msra.mxu0 0
      %6093 = vmatprep.subr.bf16.mxu0 0
      %6094 = vmatpush1.bf16.msra.mxu0 0
      %6095 = vmatprep.subr.bf16.mxu0 0
      %6096 = vmatpush1.bf16.msra.mxu0 0
      %6097 = vmatprep.subr.bf16.mxu0 0
      %6098 = vmatpush1.bf16.msra.mxu0 0
      %6099 = vmatprep.subr.bf16.mxu0 0
      %6100 = vmatpush1.bf16.msra.mxu0 0
      %6101 = vmatprep.subr.bf16.mxu0 0
      %6102 = vmatpush1.bf16.msra.mxu0 0
      %6103 = vmatprep.subr.bf16.mxu0 0
      %6104 = vmatpush1.bf16.msra.mxu0 0
      %6105 = vmatprep.subr.bf16.mxu0 0
      %6106 = vmatpush1.bf16.msra.mxu0 0
      %6107 = vmatprep.mubr.bf16.mxu0 0
      %6108 = vmatmul.mubr.bf16.gmra.mrb[0].mxu0 %v6028
      %v6109 = vpop.f32.mrb[0].mxu0
      %v6110 = vadd.f32 0.0, %v6109
      %v6111 = vpop.f32.mrb[0].mxu0
      %v6112 = vpop.f32.mrb[0].mxu0
      %v6113 = vadd.f32 0.0, %v6112
      %v6114 = vpop.f32.mrb[0].mxu0
      %6115 = vmatprep.mubr.bf16.mxu0 0
      %6116 = vmatmul.mubr.bf16.gmra.mrb[0].mxu0 %v6031
      %v6117 = vpop.f32.mrb[0].mxu0
      %v6118 = vadd.f32 0.0, %v6117
      %v6119 = vpop.f32.mrb[0].mxu0
      %v6120 = vpop.f32.mrb[0].mxu0
      %v6121 = vadd.f32 0.0, %v6120
      %v6122 = vpop.f32.mrb[0].mxu0
      %6123 = vmatprep.mubr.bf16.mxu0 0
      %6124 = vmatmul.mubr.bf16.gmra.mrb[0].mxu0 %v6034
      %v6125 = vpop.f32.mrb[0].mxu0
      %v6126 = vadd.f32 0.0, %v6125
      %v6127 = vpop.f32.mrb[0].mxu0
      %v6128 = vpop.f32.mrb[0].mxu0
      %v6129 = vadd.f32 0.0, %v6128
      %v6130 = vpop.f32.mrb[0].mxu0
      %6131 = vmatprep.mubr.bf16.mxu0 0
      %6132 = vmatmul.mubr.bf16.gmra.mrb[0].mxu0 %v6037
      %v6133 = vpop.f32.mrb[0].mxu0
      %v6134 = vadd.f32 0.0, %v6133
      %v6135 = vpop.f32.mrb[0].mxu0
      %v6136 = vpop.f32.mrb[0].mxu0
      %v6137 = vadd.f32 0.0, %v6136
      %v6138 = vpop.f32.mrb[0].mxu0
      %6139 = vmatprep.mubr.bf16.mxu0 0
      %6140 = vmatmul.mubr.bf16.gmra.mrb[0].mxu0 %v6040
      %v6141 = vpop.f32.mrb[0].mxu0
      %v6142 = vadd.f32 0.0, %v6141
      %v6143 = vpop.f32.mrb[0].mxu0
      %v6144 = vpop.f32.mrb[0].mxu0
      %v6145 = vadd.f32 0.0, %v6144
      %v6146 = vpop.f32.mrb[0].mxu0
      %6147 = vmatprep.mubr.bf16.mxu0 0
      %6148 = vmatmul.mubr.bf16.gmra.mrb[0].mxu0 %v6043
      %v6149 = vpop.f32.mrb[0].mxu0
      %v6150 = vadd.f32 0.0, %v6149
      %v6151 = vpop.f32.mrb[0].mxu0
      %v6152 = vpop.f32.mrb[0].mxu0
      %v6153 = vadd.f32 0.0, %v6152
      %v6154 = vpop.f32.mrb[0].mxu0
      %6155 = vmatprep.mubr.bf16.mxu0 0
      %6156 = vmatmul.mubr.bf16.gmra.mrb[0].mxu0 %v6046
      %v6157 = vpop.f32.mrb[0].mxu0
      %v6158 = vadd.f32 0.0, %v6157
      %v6159 = vpop.f32.mrb[0].mxu0
      %v6160 = vpop.f32.mrb[0].mxu0
      %v6161 = vadd.f32 0.0, %v6160
      %v6162 = vpop.f32.mrb[0].mxu0
      %6163 = vmatprep.mubr.bf16.mxu0 0
      %6164 = vmatmul.mubr.bf16.gmra.mrb[0].mxu0 %v6049
      %v6165 = vpop.f32.mrb[0].mxu0
      %v6166 = vadd.f32 0.0, %v6165
      %v6167 = vpop.f32.mrb[0].mxu0
      %v6168 = vpop.f32.mrb[0].mxu0
      %v6169 = vadd.f32 0.0, %v6168
      %v6170 = vpop.f32.mrb[0].mxu0
      %6171 = vmatprep.mubr.bf16.mxu0 0
      %6172 = vmatmul.mubr.bf16.gmra.mrb[0].mxu0 %v6052
      %v6173 = vpop.f32.mrb[0].mxu0
      %v6174 = vadd.f32 0.0, %v6173
      %v6175 = vpop.f32.mrb[0].mxu0
      %v6176 = vpop.f32.mrb[0].mxu0
      %v6177 = vadd.f32 0.0, %v6176
      %v6178 = vpop.f32.mrb[0].mxu0
      %6179 = vmatprep.mubr.bf16.mxu0 0
      %6180 = vmatmul.mubr.bf16.gmra.mrb[0].mxu0 %v6055
      %v6181 = vpop.f32.mrb[0].mxu0
      %v6182 = vadd.f32 0.0, %v6181
      %v6183 = vpop.f32.mrb[0].mxu0
      %v6184 = vpop.f32.mrb[0].mxu0
      %v6185 = vadd.f32 0.0, %v6184
      %v6186 = vpop.f32.mrb[0].mxu0
      %6187 = vmatprep.mubr.bf16.mxu0 0
      %6188 = vmatmul.mubr.bf16.gmra.mrb[0].mxu0 %v6058
      %v6189 = vpop.f32.mrb[0].mxu0
      %v6190 = vadd.f32 0.0, %v6189
      %v6191 = vpop.f32.mrb[0].mxu0
      %v6192 = vpop.f32.mrb[0].mxu0
      %v6193 = vadd.f32 0.0, %v6192
      %v6194 = vpop.f32.mrb[0].mxu0
      %6195 = vmatprep.mubr.bf16.mxu0 0
      %6196 = vmatmul.mubr.bf16.gmra.mrb[0].mxu0 %v6061
      %v6197 = vpop.f32.mrb[0].mxu0
      %v6198 = vadd.f32 0.0, %v6197
      %v6199 = vpop.f32.mrb[0].mxu0
      %v6200 = vpop.f32.mrb[0].mxu0
      %v6201 = vadd.f32 0.0, %v6200
      %v6202 = vpop.f32.mrb[0].mxu0
      %6203 = vmatprep.mubr.bf16.mxu0 0
      %6204 = vmatmul.mubr.bf16.gmra.mrb[0].mxu0 %v6064
      %v6205 = vpop.f32.mrb[0].mxu0
      %v6206 = vadd.f32 0.0, %v6205
      %v6207 = vpop.f32.mrb[0].mxu0
      %v6208 = vpop.f32.mrb[0].mxu0
      %v6209 = vadd.f32 0.0, %v6208
      %v6210 = vpop.f32.mrb[0].mxu0
      %6211 = vmatprep.mubr.bf16.mxu0 0
      %6212 = vmatmul.mubr.bf16.gmra.mrb[0].mxu0 %v6067
      %v6213 = vpop.f32.mrb[0].mxu0
      %v6214 = vadd.f32 0.0, %v6213
      %v6215 = vpop.f32.mrb[0].mxu0
      %v6216 = vpop.f32.mrb[0].mxu0
      %v6217 = vadd.f32 0.0, %v6216
      %v6218 = vpop.f32.mrb[0].mxu0
      %6219 = vmatprep.mubr.bf16.mxu0 0
      %6220 = vmatmul.mubr.bf16.gmra.mrb[0].mxu0 %v6070
      %v6221 = vpop.f32.mrb[0].mxu0
      %v6222 = vadd.f32 0.0, %v6221
      %v6223 = vpop.f32.mrb[0].mxu0
      %v6224 = vpop.f32.mrb[0].mxu0
      %v6225 = vadd.f32 0.0, %v6224
      %v6226 = vpop.f32.mrb[0].mxu0
      %6227 = vmatprep.mubr.bf16.mxu0 0
      %6228 = vmatmul.mubr.bf16.gmra.mrb[0].mxu0 %v6073
      %v6229 = vpop.f32.mrb[0].mxu0
      %v6230 = vadd.f32 0.0, %v6229
      %v6231 = vpop.f32.mrb[0].mxu0
      %v6232 = vpop.f32.mrb[0].mxu0
      %v6233 = vadd.f32 0.0, %v6232
      %v6234 = vpop.f32.mrb[0].mxu0
      %6235 = vdwg.mxu0
      %v6236 = vadd.f32 %v5934, %v6110
      %v6237 = vadd.f32 %v5935, %v6113
      %v6238 = vadd.f32 %v5936, %v6118
      %v6239 = vadd.f32 %v5937, %v6121
      %v6240 = vadd.f32 %v5938, %v6126
      %v6241 = vadd.f32 %v5939, %v6129
      %v6242 = vadd.f32 %v5940, %v6134
      %v6243 = vadd.f32 %v5941, %v6137
      %v6244 = vadd.f32 %v5942, %v6142
      %v6245 = vadd.f32 %v5943, %v6145
      %v6246 = vadd.f32 %v5944, %v6150
      %v6247 = vadd.f32 %v5945, %v6153
      %v6248 = vadd.f32 %v5946, %v6158
      %v6249 = vadd.f32 %v5947, %v6161
      %v6250 = vadd.f32 %v5948, %v6166
      %v6251 = vadd.f32 %v5949, %v6169
      %v6252 = vadd.f32 %v5950, %v6174
      %v6253 = vadd.f32 %v5951, %v6177
      %v6254 = vadd.f32 %v5952, %v6182
      %v6255 = vadd.f32 %v5953, %v6185
      %v6256 = vadd.f32 %v5954, %v6190
      %v6257 = vadd.f32 %v5955, %v6193
      %v6258 = vadd.f32 %v5956, %v6198
      %v6259 = vadd.f32 %v5957, %v6201
      %v6260 = vadd.f32 %v5958, %v6206
      %v6261 = vadd.f32 %v5959, %v6209
      %v6262 = vadd.f32 %v5960, %v6214
      %v6263 = vadd.f32 %v5961, %v6217
      %v6264 = vadd.f32 %v5962, %v6222
      %v6265 = vadd.f32 %v5963, %v6225
      %v6266 = vadd.f32 %v5964, %v6230
      %v6267 = vadd.f32 %v5965, %v6233
      %v6268 = vsel %vm1697, %v5460, %v1698
      %v6270 = vsel %vm1634, %v4494, 0.0
      %v6271 = vsel %vm1635, %v4496, 0.0
      %v6272 = vsel %vm1636, %v4498, 0.0
      %v6273 = vsel %vm1637, %v4500, 0.0
      %v6274 = vsel %vm1638, %v4502, 0.0
      %v6275 = vsel %vm1639, %v4504, 0.0
      %v6276 = vsel %vm1640, %v4506, 0.0
      %v6277 = vsel %vm1641, %v4508, 0.0
      %v6278 = vsel %vm1642, %v4510, 0.0
      %v6279 = vsel %vm1643, %v4512, 0.0
      %v6280 = vsel %vm1644, %v4514, 0.0
      %v6281 = vsel %vm1645, %v4516, 0.0
      %v6282 = vsel %vm1646, %v4518, 0.0
      %v6283 = vsel %vm1647, %v4520, 0.0
      %v6284 = vsel %vm1648, %v4522, 0.0
      %v6285 = vsel %vm1649, %v4524, 0.0
      %v6286 = vsel %vm1650, %v4526, 0.0
      %v6287 = vsel %vm1651, %v4528, 0.0
      %v6288 = vsel %vm1652, %v4530, 0.0
      %v6289 = vsel %vm1653, %v4532, 0.0
      %v6290 = vsel %vm1654, %v4534, 0.0
      %v6291 = vsel %vm1655, %v4536, 0.0
      %v6292 = vsel %vm1656, %v4538, 0.0
      %v6293 = vsel %vm1657, %v4540, 0.0
      %v6294 = vsel %vm1658, %v4542, 0.0
      %v6295 = vsel %vm1659, %v4544, 0.0
      %v6296 = vsel %vm1660, %v4546, 0.0
      %v6297 = vsel %vm1661, %v4548, 0.0
      %v6298 = vsel %vm1662, %v5459, 0.0
      %v6299 = vsel %vm1663, %v5461, 0.0
      %v6300 = vsel %vm1664, %v6268, 0.0
      %v6301 = vpack.c.bf16 %v6271, %v6270
      %v6302 = vpack.c.bf16 %v6273, %v6272
      %v6303 = vpack.c.bf16 %v6275, %v6274
      %v6304 = vpack.c.bf16 %v6277, %v6276
      %v6305 = vpack.c.bf16 %v6279, %v6278
      %v6306 = vpack.c.bf16 %v6281, %v6280
      %v6307 = vpack.c.bf16 %v6283, %v6282
      %v6308 = vpack.c.bf16 %v6285, %v6284
      %v6309 = vpack.c.bf16 %v6287, %v6286
      %v6310 = vpack.c.bf16 %v6289, %v6288
      %v6311 = vpack.c.bf16 %v6291, %v6290
      %v6312 = vpack.c.bf16 %v6293, %v6292
      %v6313 = vpack.c.bf16 %v6295, %v6294
      %v6314 = vpack.c.bf16 %v6297, %v6296
      %v6315 = vpack.c.bf16 %v6299, %v6298
      %v6316 = vpack.c.bf16 %v3624, %v6300
      %v6317 = vld [vmem:[%s6 + $0x30] sm:$0xf]
      %v6318 = vld [vmem:[%s6 + $0x34] sm:$0xf]
      %v6321 = vunpack.c.l.b16 %v6317
      %v6322 = vunpack.c.l.b16 %v6318
      %v6323 = vpack.c.b16 %v6322, %v6321
      %v6326 = vsel %vm658, %v6301, 0
      %v6329 = vsel %vm658, %v6302, 0
      %v6332 = vsel %vm658, %v6303, 0
      %v6335 = vsel %vm658, %v6304, 0
      %v6338 = vsel %vm658, %v6305, 0
      %v6341 = vsel %vm658, %v6306, 0
      %v6344 = vsel %vm658, %v6307, 0
      %v6347 = vsel %vm658, %v6308, 0
      %v6350 = vsel %vm658, %v6309, 0
      %v6353 = vsel %vm658, %v6310, 0
      %v6356 = vsel %vm658, %v6311, 0
      %v6359 = vsel %vm658, %v6312, 0
      %v6362 = vsel %vm658, %v6313, 0
      %v6365 = vsel %vm658, %v6314, 0
      %v6368 = vsel %vm658, %v6315, 0
      %v6371 = vsel %vm658, %v6316, 0
      %6373 = vmatprep.subr.bf16.mxu0 0
      %6374 = vmatpush1.bf16.msra.mxu0 %v6323
      %6375 = vmatprep.subr.bf16.mxu0 0
      %6376 = vmatpush1.bf16.msra.mxu0 0
      %6377 = vmatprep.subr.bf16.mxu0 0
      %6378 = vmatpush1.bf16.msra.mxu0 0
      %6379 = vmatprep.subr.bf16.mxu0 0
      %6380 = vmatpush1.bf16.msra.mxu0 0
      %6381 = vmatprep.subr.bf16.mxu0 0
      %6382 = vmatpush1.bf16.msra.mxu0 0
      %6383 = vmatprep.subr.bf16.mxu0 0
      %6384 = vmatpush1.bf16.msra.mxu0 0
      %6385 = vmatprep.subr.bf16.mxu0 0
      %6386 = vmatpush1.bf16.msra.mxu0 0
      %6387 = vmatprep.subr.bf16.mxu0 0
      %6388 = vmatpush1.bf16.msra.mxu0 0
      %6389 = vmatprep.subr.bf16.mxu0 0
      %6390 = vmatpush1.bf16.msra.mxu0 0
      %6391 = vmatprep.subr.bf16.mxu0 0
      %6392 = vmatpush1.bf16.msra.mxu0 0
      %6393 = vmatprep.subr.bf16.mxu0 0
      %6394 = vmatpush1.bf16.msra.mxu0 0
      %6395 = vmatprep.subr.bf16.mxu0 0
      %6396 = vmatpush1.bf16.msra.mxu0 0
      %6397 = vmatprep.subr.bf16.mxu0 0
      %6398 = vmatpush1.bf16.msra.mxu0 0
      %6399 = vmatprep.subr.bf16.mxu0 0
      %6400 = vmatpush1.bf16.msra.mxu0 0
      %6401 = vmatprep.subr.bf16.mxu0 0
      %6402 = vmatpush1.bf16.msra.mxu0 0
      %6403 = vmatprep.subr.bf16.mxu0 0
      %6404 = vmatpush1.bf16.msra.mxu0 0
      %6405 = vmatprep.mubr.bf16.mxu0 0
      %6406 = vmatmul.mubr.bf16.gmra.mrb[0].mxu0 %v6326
      %v6407 = vpop.f32.mrb[0].mxu0
      %v6408 = vadd.f32 0.0, %v6407
      %v6409 = vpop.f32.mrb[0].mxu0
      %v6410 = vpop.f32.mrb[0].mxu0
      %v6411 = vadd.f32 0.0, %v6410
      %v6412 = vpop.f32.mrb[0].mxu0
      %6413 = vmatprep.mubr.bf16.mxu0 0
      %6414 = vmatmul.mubr.bf16.gmra.mrb[0].mxu0 %v6329
      %v6415 = vpop.f32.mrb[0].mxu0
      %v6416 = vadd.f32 0.0, %v6415
      %v6417 = vpop.f32.mrb[0].mxu0
      %v6418 = vpop.f32.mrb[0].mxu0
      %v6419 = vadd.f32 0.0, %v6418
      %v6420 = vpop.f32.mrb[0].mxu0
      %6421 = vmatprep.mubr.bf16.mxu0 0
      %6422 = vmatmul.mubr.bf16.gmra.mrb[0].mxu0 %v6332
      %v6423 = vpop.f32.mrb[0].mxu0
      %v6424 = vadd.f32 0.0, %v6423
      %v6425 = vpop.f32.mrb[0].mxu0
      %v6426 = vpop.f32.mrb[0].mxu0
      %v6427 = vadd.f32 0.0, %v6426
      %v6428 = vpop.f32.mrb[0].mxu0
      %6429 = vmatprep.mubr.bf16.mxu0 0
      %6430 = vmatmul.mubr.bf16.gmra.mrb[0].mxu0 %v6335
      %v6431 = vpop.f32.mrb[0].mxu0
      %v6432 = vadd.f32 0.0, %v6431
      %v6433 = vpop.f32.mrb[0].mxu0
      %v6434 = vpop.f32.mrb[0].mxu0
      %v6435 = vadd.f32 0.0, %v6434
      %v6436 = vpop.f32.mrb[0].mxu0
      %6437 = vmatprep.mubr.bf16.mxu0 0
      %6438 = vmatmul.mubr.bf16.gmra.mrb[0].mxu0 %v6338
      %v6439 = vpop.f32.mrb[0].mxu0
      %v6440 = vadd.f32 0.0, %v6439
      %v6441 = vpop.f32.mrb[0].mxu0
      %v6442 = vpop.f32.mrb[0].mxu0
      %v6443 = vadd.f32 0.0, %v6442
      %v6444 = vpop.f32.mrb[0].mxu0
      %6445 = vmatprep.mubr.bf16.mxu0 0
      %6446 = vmatmul.mubr.bf16.gmra.mrb[0].mxu0 %v6341
      %v6447 = vpop.f32.mrb[0].mxu0
      %v6448 = vadd.f32 0.0, %v6447
      %v6449 = vpop.f32.mrb[0].mxu0
      %v6450 = vpop.f32.mrb[0].mxu0
      %v6451 = vadd.f32 0.0, %v6450
      %v6452 = vpop.f32.mrb[0].mxu0
      %6453 = vmatprep.mubr.bf16.mxu0 0
      %6454 = vmatmul.mubr.bf16.gmra.mrb[0].mxu0 %v6344
      %v6455 = vpop.f32.mrb[0].mxu0
      %v6456 = vadd.f32 0.0, %v6455
      %v6457 = vpop.f32.mrb[0].mxu0
      %v6458 = vpop.f32.mrb[0].mxu0
      %v6459 = vadd.f32 0.0, %v6458
      %v6460 = vpop.f32.mrb[0].mxu0
      %6461 = vmatprep.mubr.bf16.mxu0 0
      %6462 = vmatmul.mubr.bf16.gmra.mrb[0].mxu0 %v6347
      %v6463 = vpop.f32.mrb[0].mxu0
      %v6464 = vadd.f32 0.0, %v6463
      %v6465 = vpop.f32.mrb[0].mxu0
      %v6466 = vpop.f32.mrb[0].mxu0
      %v6467 = vadd.f32 0.0, %v6466
      %v6468 = vpop.f32.mrb[0].mxu0
      %6469 = vmatprep.mubr.bf16.mxu0 0
      %6470 = vmatmul.mubr.bf16.gmra.mrb[0].mxu0 %v6350
      %v6471 = vpop.f32.mrb[0].mxu0
      %v6472 = vadd.f32 0.0, %v6471
      %v6473 = vpop.f32.mrb[0].mxu0
      %v6474 = vpop.f32.mrb[0].mxu0
      %v6475 = vadd.f32 0.0, %v6474
      %v6476 = vpop.f32.mrb[0].mxu0
      %6477 = vmatprep.mubr.bf16.mxu0 0
      %6478 = vmatmul.mubr.bf16.gmra.mrb[0].mxu0 %v6353
      %v6479 = vpop.f32.mrb[0].mxu0
      %v6480 = vadd.f32 0.0, %v6479
      %v6481 = vpop.f32.mrb[0].mxu0
      %v6482 = vpop.f32.mrb[0].mxu0
      %v6483 = vadd.f32 0.0, %v6482
      %v6484 = vpop.f32.mrb[0].mxu0
      %6485 = vmatprep.mubr.bf16.mxu0 0
      %6486 = vmatmul.mubr.bf16.gmra.mrb[0].mxu0 %v6356
      %v6487 = vpop.f32.mrb[0].mxu0
      %v6488 = vadd.f32 0.0, %v6487
      %v6489 = vpop.f32.mrb[0].mxu0
      %v6490 = vpop.f32.mrb[0].mxu0
      %v6491 = vadd.f32 0.0, %v6490
      %v6492 = vpop.f32.mrb[0].mxu0
      %6493 = vmatprep.mubr.bf16.mxu0 0
      %6494 = vmatmul.mubr.bf16.gmra.mrb[0].mxu0 %v6359
      %v6495 = vpop.f32.mrb[0].mxu0
      %v6496 = vadd.f32 0.0, %v6495
      %v6497 = vpop.f32.mrb[0].mxu0
      %v6498 = vpop.f32.mrb[0].mxu0
      %v6499 = vadd.f32 0.0, %v6498
      %v6500 = vpop.f32.mrb[0].mxu0
      %6501 = vmatprep.mubr.bf16.mxu0 0
      %6502 = vmatmul.mubr.bf16.gmra.mrb[0].mxu0 %v6362
      %v6503 = vpop.f32.mrb[0].mxu0
      %v6504 = vadd.f32 0.0, %v6503
      %v6505 = vpop.f32.mrb[0].mxu0
      %v6506 = vpop.f32.mrb[0].mxu0
      %v6507 = vadd.f32 0.0, %v6506
      %v6508 = vpop.f32.mrb[0].mxu0
      %6509 = vmatprep.mubr.bf16.mxu0 0
      %6510 = vmatmul.mubr.bf16.gmra.mrb[0].mxu0 %v6365
      %v6511 = vpop.f32.mrb[0].mxu0
      %v6512 = vadd.f32 0.0, %v6511
      %v6513 = vpop.f32.mrb[0].mxu0
      %v6514 = vpop.f32.mrb[0].mxu0
      %v6515 = vadd.f32 0.0, %v6514
      %v6516 = vpop.f32.mrb[0].mxu0
      %6517 = vmatprep.mubr.bf16.mxu0 0
      %6518 = vmatmul.mubr.bf16.gmra.mrb[0].mxu0 %v6368
      %v6519 = vpop.f32.mrb[0].mxu0
      %v6520 = vadd.f32 0.0, %v6519
      %v6521 = vpop.f32.mrb[0].mxu0
      %v6522 = vpop.f32.mrb[0].mxu0
      %v6523 = vadd.f32 0.0, %v6522
      %v6524 = vpop.f32.mrb[0].mxu0
      %6525 = vmatprep.mubr.bf16.mxu0 0
      %6526 = vmatmul.mubr.bf16.gmra.mrb[0].mxu0 %v6371
      %v6527 = vpop.f32.mrb[0].mxu0
      %v6528 = vadd.f32 0.0, %v6527
      %v6529 = vpop.f32.mrb[0].mxu0
      %v6530 = vpop.f32.mrb[0].mxu0
      %v6531 = vadd.f32 0.0, %v6530
      %v6532 = vpop.f32.mrb[0].mxu0
      %6533 = vdwg.mxu0
      %v6534 = vadd.f32 %v6236, %v6408
      %v6535 = vadd.f32 %v6237, %v6411
      %v6536 = vadd.f32 %v6238, %v6416
      %v6537 = vadd.f32 %v6239, %v6419
      %v6538 = vadd.f32 %v6240, %v6424
      %v6539 = vadd.f32 %v6241, %v6427
      %v6540 = vadd.f32 %v6242, %v6432
      %v6541 = vadd.f32 %v6243, %v6435
      %v6542 = vadd.f32 %v6244, %v6440
      %v6543 = vadd.f32 %v6245, %v6443
      %v6544 = vadd.f32 %v6246, %v6448
      %v6545 = vadd.f32 %v6247, %v6451
      %v6546 = vadd.f32 %v6248, %v6456
      %v6547 = vadd.f32 %v6249, %v6459
      %v6548 = vadd.f32 %v6250, %v6464
      %v6549 = vadd.f32 %v6251, %v6467
      %v6550 = vadd.f32 %v6252, %v6472
      %v6551 = vadd.f32 %v6253, %v6475
      %v6552 = vadd.f32 %v6254, %v6480
      %v6553 = vadd.f32 %v6255, %v6483
      %v6554 = vadd.f32 %v6256, %v6488
      %v6555 = vadd.f32 %v6257, %v6491
      %v6556 = vadd.f32 %v6258, %v6496
      %v6557 = vadd.f32 %v6259, %v6499
      %v6558 = vadd.f32 %v6260, %v6504
      %v6559 = vadd.f32 %v6261, %v6507
      %v6560 = vadd.f32 %v6262, %v6512
      %v6561 = vadd.f32 %v6263, %v6515
      %v6562 = vadd.f32 %v6264, %v6520
      %v6563 = vadd.f32 %v6265, %v6523
      %v6564 = vadd.f32 %v6266, %v6528
      %v6565 = vadd.f32 %v6267, %v6531
      %v6566 = vld [vmem:[%s6 + $0x38] sm:$0xf]
      %v6567 = vld [vmem:[%s6 + $0x3c] sm:$0xf]
      %v6570 = vunpack.c.l.b16 %v6566
      %v6571 = vunpack.c.l.b16 %v6567
      %v6572 = vpack.c.b16 %v6571, %v6570
      %6574 = vmatprep.subr.bf16.mxu0 0
      %6575 = vmatpush1.bf16.msra.mxu0 %v6572
      %6576 = vmatprep.subr.bf16.mxu0 0
      %6577 = vmatpush1.bf16.msra.mxu0 0
      %6578 = vmatprep.subr.bf16.mxu0 0
      %6579 = vmatpush1.bf16.msra.mxu0 0
      %6580 = vmatprep.subr.bf16.mxu0 0
      %6581 = vmatpush1.bf16.msra.mxu0 0
      %6582 = vmatprep.subr.bf16.mxu0 0
      %6583 = vmatpush1.bf16.msra.mxu0 0
      %6584 = vmatprep.subr.bf16.mxu0 0
      %6585 = vmatpush1.bf16.msra.mxu0 0
      %6586 = vmatprep.subr.bf16.mxu0 0
      %6587 = vmatpush1.bf16.msra.mxu0 0
      %6588 = vmatprep.subr.bf16.mxu0 0
      %6589 = vmatpush1.bf16.msra.mxu0 0
      %6590 = vmatprep.subr.bf16.mxu0 0
      %6591 = vmatpush1.bf16.msra.mxu0 0
      %6592 = vmatprep.subr.bf16.mxu0 0
      %6593 = vmatpush1.bf16.msra.mxu0 0
      %6594 = vmatprep.subr.bf16.mxu0 0
      %6595 = vmatpush1.bf16.msra.mxu0 0
      %6596 = vmatprep.subr.bf16.mxu0 0
      %6597 = vmatpush1.bf16.msra.mxu0 0
      %6598 = vmatprep.subr.bf16.mxu0 0
      %6599 = vmatpush1.bf16.msra.mxu0 0
      %6600 = vmatprep.subr.bf16.mxu0 0
      %6601 = vmatpush1.bf16.msra.mxu0 0
      %6602 = vmatprep.subr.bf16.mxu0 0
      %6603 = vmatpush1.bf16.msra.mxu0 0
      %6604 = vmatprep.subr.bf16.mxu0 0
      %6605 = vmatpush1.bf16.msra.mxu0 0
      %6606 = vmatprep.mubr.bf16.mxu0 0
      %6607 = vmatmul.mubr.bf16.gmra.mrb[0].mxu0 %v4653
      %v6608 = vpop.f32.mrb[0].mxu0
      %v6609 = vadd.f32 0.0, %v6608
      %v6610 = vpop.f32.mrb[0].mxu0
      %v6611 = vpop.f32.mrb[0].mxu0
      %v6612 = vadd.f32 0.0, %v6611
      %v6613 = vpop.f32.mrb[0].mxu0
      %6614 = vmatprep.mubr.bf16.mxu0 0
      %6615 = vmatmul.mubr.bf16.gmra.mrb[0].mxu0 %v4656
      %v6616 = vpop.f32.mrb[0].mxu0
      %v6617 = vadd.f32 0.0, %v6616
      %v6618 = vpop.f32.mrb[0].mxu0
      %v6619 = vpop.f32.mrb[0].mxu0
      %v6620 = vadd.f32 0.0, %v6619
      %v6621 = vpop.f32.mrb[0].mxu0
      %6622 = vmatprep.mubr.bf16.mxu0 0
      %6623 = vmatmul.mubr.bf16.gmra.mrb[0].mxu0 %v4659
      %v6624 = vpop.f32.mrb[0].mxu0
      %v6625 = vadd.f32 0.0, %v6624
      %v6626 = vpop.f32.mrb[0].mxu0
      %v6627 = vpop.f32.mrb[0].mxu0
      %v6628 = vadd.f32 0.0, %v6627
      %v6629 = vpop.f32.mrb[0].mxu0
      %6630 = vmatprep.mubr.bf16.mxu0 0
      %6631 = vmatmul.mubr.bf16.gmra.mrb[0].mxu0 %v4662
      %v6632 = vpop.f32.mrb[0].mxu0
      %v6633 = vadd.f32 0.0, %v6632
      %v6634 = vpop.f32.mrb[0].mxu0
      %v6635 = vpop.f32.mrb[0].mxu0
      %v6636 = vadd.f32 0.0, %v6635
      %v6637 = vpop.f32.mrb[0].mxu0
      %6638 = vmatprep.mubr.bf16.mxu0 0
      %6639 = vmatmul.mubr.bf16.gmra.mrb[0].mxu0 %v4665
      %v6640 = vpop.f32.mrb[0].mxu0
      %v6641 = vadd.f32 0.0, %v6640
      %v6642 = vpop.f32.mrb[0].mxu0
      %v6643 = vpop.f32.mrb[0].mxu0
      %v6644 = vadd.f32 0.0, %v6643
      %v6645 = vpop.f32.mrb[0].mxu0
      %6646 = vmatprep.mubr.bf16.mxu0 0
      %6647 = vmatmul.mubr.bf16.gmra.mrb[0].mxu0 %v4668
      %v6648 = vpop.f32.mrb[0].mxu0
      %v6649 = vadd.f32 0.0, %v6648
      %v6650 = vpop.f32.mrb[0].mxu0
      %v6651 = vpop.f32.mrb[0].mxu0
      %v6652 = vadd.f32 0.0, %v6651
      %v6653 = vpop.f32.mrb[0].mxu0
      %6654 = vmatprep.mubr.bf16.mxu0 0
      %6655 = vmatmul.mubr.bf16.gmra.mrb[0].mxu0 %v4671
      %v6656 = vpop.f32.mrb[0].mxu0
      %v6657 = vadd.f32 0.0, %v6656
      %v6658 = vpop.f32.mrb[0].mxu0
      %v6659 = vpop.f32.mrb[0].mxu0
      %v6660 = vadd.f32 0.0, %v6659
      %v6661 = vpop.f32.mrb[0].mxu0
      %6662 = vmatprep.mubr.bf16.mxu0 0
      %6663 = vmatmul.mubr.bf16.gmra.mrb[0].mxu0 %v4674
      %v6664 = vpop.f32.mrb[0].mxu0
      %v6665 = vadd.f32 0.0, %v6664
      %v6666 = vpop.f32.mrb[0].mxu0
      %v6667 = vpop.f32.mrb[0].mxu0
      %v6668 = vadd.f32 0.0, %v6667
      %v6669 = vpop.f32.mrb[0].mxu0
      %6670 = vmatprep.mubr.bf16.mxu0 0
      %6671 = vmatmul.mubr.bf16.gmra.mrb[0].mxu0 %v4677
      %v6672 = vpop.f32.mrb[0].mxu0
      %v6673 = vadd.f32 0.0, %v6672
      %v6674 = vpop.f32.mrb[0].mxu0
      %v6675 = vpop.f32.mrb[0].mxu0
      %v6676 = vadd.f32 0.0, %v6675
      %v6677 = vpop.f32.mrb[0].mxu0
      %6678 = vmatprep.mubr.bf16.mxu0 0
      %6679 = vmatmul.mubr.bf16.gmra.mrb[0].mxu0 %v4680
      %v6680 = vpop.f32.mrb[0].mxu0
      %v6681 = vadd.f32 0.0, %v6680
      %v6682 = vpop.f32.mrb[0].mxu0
      %v6683 = vpop.f32.mrb[0].mxu0
      %v6684 = vadd.f32 0.0, %v6683
      %v6685 = vpop.f32.mrb[0].mxu0
      %6686 = vmatprep.mubr.bf16.mxu0 0
      %6687 = vmatmul.mubr.bf16.gmra.mrb[0].mxu0 %v4683
      %v6688 = vpop.f32.mrb[0].mxu0
      %v6689 = vadd.f32 0.0, %v6688
      %v6690 = vpop.f32.mrb[0].mxu0
      %v6691 = vpop.f32.mrb[0].mxu0
      %v6692 = vadd.f32 0.0, %v6691
      %v6693 = vpop.f32.mrb[0].mxu0
      %6694 = vmatprep.mubr.bf16.mxu0 0
      %6695 = vmatmul.mubr.bf16.gmra.mrb[0].mxu0 %v4686
      %v6696 = vpop.f32.mrb[0].mxu0
      %v6697 = vadd.f32 0.0, %v6696
      %v6698 = vpop.f32.mrb[0].mxu0
      %v6699 = vpop.f32.mrb[0].mxu0
      %v6700 = vadd.f32 0.0, %v6699
      %v6701 = vpop.f32.mrb[0].mxu0
      %6702 = vmatprep.mubr.bf16.mxu0 0
      %6703 = vmatmul.mubr.bf16.gmra.mrb[0].mxu0 %v4689
      %v6704 = vpop.f32.mrb[0].mxu0
      %v6705 = vadd.f32 0.0, %v6704
      %v6706 = vpop.f32.mrb[0].mxu0
      %v6707 = vpop.f32.mrb[0].mxu0
      %v6708 = vadd.f32 0.0, %v6707
      %v6709 = vpop.f32.mrb[0].mxu0
      %6710 = vmatprep.mubr.bf16.mxu0 0
      %6711 = vmatmul.mubr.bf16.gmra.mrb[0].mxu0 %v4692
      %v6712 = vpop.f32.mrb[0].mxu0
      %v6713 = vadd.f32 0.0, %v6712
      %v6714 = vpop.f32.mrb[0].mxu0
      %v6715 = vpop.f32.mrb[0].mxu0
      %v6716 = vadd.f32 0.0, %v6715
      %v6717 = vpop.f32.mrb[0].mxu0
      %6718 = vmatprep.mubr.bf16.mxu0 0
      %6719 = vmatmul.mubr.bf16.gmra.mrb[0].mxu0 %v5771
      %v6720 = vpop.f32.mrb[0].mxu0
      %v6721 = vadd.f32 0.0, %v6720
      %v6722 = vpop.f32.mrb[0].mxu0
      %v6723 = vpop.f32.mrb[0].mxu0
      %v6724 = vadd.f32 0.0, %v6723
      %v6725 = vpop.f32.mrb[0].mxu0
      %6726 = vmatprep.mubr.bf16.mxu0 0
      %6727 = vmatmul.mubr.bf16.gmra.mrb[0].mxu0 %v1866
      %v6728 = vpop.f32.mrb[0].mxu0
      %v6729 = vadd.f32 0.0, %v6728
      %v6730 = vpop.f32.mrb[0].mxu0
      %v6731 = vpop.f32.mrb[0].mxu0
      %v6732 = vadd.f32 0.0, %v6731
      %v6733 = vpop.f32.mrb[0].mxu0
      %6734 = vdwg.mxu0
      %v6735 = vadd.f32 %v6534, %v6609
      %v6736 = vadd.f32 %v6535, %v6612
      %v6737 = vadd.f32 %v6536, %v6617
      %v6738 = vadd.f32 %v6537, %v6620
      %v6739 = vadd.f32 %v6538, %v6625
      %v6740 = vadd.f32 %v6539, %v6628
      %v6741 = vadd.f32 %v6540, %v6633
      %v6742 = vadd.f32 %v6541, %v6636
      %v6743 = vadd.f32 %v6542, %v6641
      %v6744 = vadd.f32 %v6543, %v6644
      %v6745 = vadd.f32 %v6544, %v6649
      %v6746 = vadd.f32 %v6545, %v6652
      %v6747 = vadd.f32 %v6546, %v6657
      %v6748 = vadd.f32 %v6547, %v6660
      %v6749 = vadd.f32 %v6548, %v6665
      %v6750 = vadd.f32 %v6549, %v6668
      %v6751 = vadd.f32 %v6550, %v6673
      %v6752 = vadd.f32 %v6551, %v6676
      %v6753 = vadd.f32 %v6552, %v6681
      %v6754 = vadd.f32 %v6553, %v6684
      %v6755 = vadd.f32 %v6554, %v6689
      %v6756 = vadd.f32 %v6555, %v6692
      %v6757 = vadd.f32 %v6556, %v6697
      %v6758 = vadd.f32 %v6557, %v6700
      %v6759 = vadd.f32 %v6558, %v6705
      %v6760 = vadd.f32 %v6559, %v6708
      %v6761 = vadd.f32 %v6560, %v6713
      %v6762 = vadd.f32 %v6561, %v6716
      %v6763 = vadd.f32 %v6562, %v6721
      %v6764 = vadd.f32 %v6563, %v6724
      %v6765 = vadd.f32 %v6564, %v6729
      %v6766 = vadd.f32 %v6565, %v6732
      %v6767 = vsel %vm2353, %v5075, 0.0
      %v6768 = vsel %vm2354, %v5077, 0.0
      %v6769 = vsel %vm2355, %v5079, 0.0
      %v6770 = vsel %vm2356, %v5081, 0.0
      %v6771 = vsel %vm2357, %v5083, 0.0
      %v6772 = vsel %vm2358, %v5085, 0.0
      %v6773 = vsel %vm2359, %v5087, 0.0
      %v6774 = vsel %vm2360, %v5089, 0.0
      %v6775 = vsel %vm2361, %v5091, 0.0
      %v6776 = vsel %vm2362, %v5093, 0.0
      %v6777 = vsel %vm2363, %v5095, 0.0
      %v6778 = vsel %vm2364, %v5097, 0.0
      %v6779 = vsel %vm2365, %v5099, 0.0
      %v6780 = vsel %vm2366, %v5101, 0.0
      %v6781 = vsel %vm2367, %v5103, 0.0
      %v6782 = vsel %vm2368, %v5105, 0.0
      %v6783 = vsel %vm2369, %v5107, 0.0
      %v6784 = vsel %vm2370, %v5109, 0.0
      %v6785 = vsel %vm2371, %v5111, 0.0
      %v6786 = vsel %vm2372, %v5113, 0.0
      %v6787 = vsel %vm2373, %v5115, 0.0
      %v6788 = vsel %vm2374, %v5117, 0.0
      %v6789 = vsel %vm2375, %v5119, 0.0
      %v6790 = vsel %vm2376, %v5121, 0.0
      %v6791 = vsel %vm2377, %v5123, 0.0
      %v6792 = vsel %vm2378, %v5125, 0.0
      %v6793 = vsel %vm2379, %v5127, 0.0
      %v6794 = vsel %vm2380, %v5129, 0.0
      %v6795 = vsel %vm2381, %v5967, 0.0
      %v6796 = vsel %vm2382, %v5968, 0.0
      %v6797 = vpack.c.bf16 %v6768, %v6767
      %v6798 = vpack.c.bf16 %v6770, %v6769
      %v6799 = vpack.c.bf16 %v6772, %v6771
      %v6800 = vpack.c.bf16 %v6774, %v6773
      %v6801 = vpack.c.bf16 %v6776, %v6775
      %v6802 = vpack.c.bf16 %v6778, %v6777
      %v6803 = vpack.c.bf16 %v6780, %v6779
      %v6804 = vpack.c.bf16 %v6782, %v6781
      %v6805 = vpack.c.bf16 %v6784, %v6783
      %v6806 = vpack.c.bf16 %v6786, %v6785
      %v6807 = vpack.c.bf16 %v6788, %v6787
      %v6808 = vpack.c.bf16 %v6790, %v6789
      %v6809 = vpack.c.bf16 %v6792, %v6791
      %v6810 = vpack.c.bf16 %v6794, %v6793
      %v6811 = vpack.c.bf16 %v6796, %v6795
      %v6812 = vld [vmem:[%s6 + $0x40] sm:$0xf]
      %v6813 = vld [vmem:[%s6 + $0x44] sm:$0xf]
      %v6816 = vunpack.c.l.b16 %v6812
      %v6817 = vunpack.c.l.b16 %v6813
      %v6818 = vpack.c.b16 %v6817, %v6816
      %v6821 = vsel %vm658, %v6797, 0
      %v6824 = vsel %vm658, %v6798, 0
      %v6827 = vsel %vm658, %v6799, 0
      %v6830 = vsel %vm658, %v6800, 0
      %v6833 = vsel %vm658, %v6801, 0
      %v6836 = vsel %vm658, %v6802, 0
      %v6839 = vsel %vm658, %v6803, 0
      %v6842 = vsel %vm658, %v6804, 0
      %v6845 = vsel %vm658, %v6805, 0
      %v6848 = vsel %vm658, %v6806, 0
      %v6851 = vsel %vm658, %v6807, 0
      %v6854 = vsel %vm658, %v6808, 0
      %v6857 = vsel %vm658, %v6809, 0
      %v6860 = vsel %vm658, %v6810, 0
      %v6863 = vsel %vm658, %v6811, 0
      %6865 = vmatprep.subr.bf16.mxu0 0
      %6866 = vmatpush1.bf16.msra.mxu0 %v6818
      %6867 = vmatprep.subr.bf16.mxu0 0
      %6868 = vmatpush1.bf16.msra.mxu0 0
      %6869 = vmatprep.subr.bf16.mxu0 0
      %6870 = vmatpush1.bf16.msra.mxu0 0
      %6871 = vmatprep.subr.bf16.mxu0 0
      %6872 = vmatpush1.bf16.msra.mxu0 0
      %6873 = vmatprep.subr.bf16.mxu0 0
      %6874 = vmatpush1.bf16.msra.mxu0 0
      %6875 = vmatprep.subr.bf16.mxu0 0
      %6876 = vmatpush1.bf16.msra.mxu0 0
      %6877 = vmatprep.subr.bf16.mxu0 0
      %6878 = vmatpush1.bf16.msra.mxu0 0
      %6879 = vmatprep.subr.bf16.mxu0 0
      %6880 = vmatpush1.bf16.msra.mxu0 0
      %6881 = vmatprep.subr.bf16.mxu0 0
      %6882 = vmatpush1.bf16.msra.mxu0 0
      %6883 = vmatprep.subr.bf16.mxu0 0
      %6884 = vmatpush1.bf16.msra.mxu0 0
      %6885 = vmatprep.subr.bf16.mxu0 0
      %6886 = vmatpush1.bf16.msra.mxu0 0
      %6887 = vmatprep.subr.bf16.mxu0 0
      %6888 = vmatpush1.bf16.msra.mxu0 0
      %6889 = vmatprep.subr.bf16.mxu0 0
      %6890 = vmatpush1.bf16.msra.mxu0 0
      %6891 = vmatprep.subr.bf16.mxu0 0
      %6892 = vmatpush1.bf16.msra.mxu0 0
      %6893 = vmatprep.subr.bf16.mxu0 0
      %6894 = vmatpush1.bf16.msra.mxu0 0
      %6895 = vmatprep.subr.bf16.mxu0 0
      %6896 = vmatpush1.bf16.msra.mxu0 0
      %6897 = vmatprep.mubr.bf16.mxu0 0
      %6898 = vmatmul.mubr.bf16.gmra.mrb[0].mxu0 %v6821
      %v6899 = vpop.f32.mrb[0].mxu0
      %v6900 = vadd.f32 0.0, %v6899
      %v6901 = vpop.f32.mrb[0].mxu0
      %v6902 = vpop.f32.mrb[0].mxu0
      %v6903 = vadd.f32 0.0, %v6902
      %v6904 = vpop.f32.mrb[0].mxu0
      %6905 = vmatprep.mubr.bf16.mxu0 0
      %6906 = vmatmul.mubr.bf16.gmra.mrb[0].mxu0 %v6824
      %v6907 = vpop.f32.mrb[0].mxu0
      %v6908 = vadd.f32 0.0, %v6907
      %v6909 = vpop.f32.mrb[0].mxu0
      %v6910 = vpop.f32.mrb[0].mxu0
      %v6911 = vadd.f32 0.0, %v6910
      %v6912 = vpop.f32.mrb[0].mxu0
      %6913 = vmatprep.mubr.bf16.mxu0 0
      %6914 = vmatmul.mubr.bf16.gmra.mrb[0].mxu0 %v6827
      %v6915 = vpop.f32.mrb[0].mxu0
      %v6916 = vadd.f32 0.0, %v6915
      %v6917 = vpop.f32.mrb[0].mxu0
      %v6918 = vpop.f32.mrb[0].mxu0
      %v6919 = vadd.f32 0.0, %v6918
      %v6920 = vpop.f32.mrb[0].mxu0
      %6921 = vmatprep.mubr.bf16.mxu0 0
      %6922 = vmatmul.mubr.bf16.gmra.mrb[0].mxu0 %v6830
      %v6923 = vpop.f32.mrb[0].mxu0
      %v6924 = vadd.f32 0.0, %v6923
      %v6925 = vpop.f32.mrb[0].mxu0
      %v6926 = vpop.f32.mrb[0].mxu0
      %v6927 = vadd.f32 0.0, %v6926
      %v6928 = vpop.f32.mrb[0].mxu0
      %6929 = vmatprep.mubr.bf16.mxu0 0
      %6930 = vmatmul.mubr.bf16.gmra.mrb[0].mxu0 %v6833
      %v6931 = vpop.f32.mrb[0].mxu0
      %v6932 = vadd.f32 0.0, %v6931
      %v6933 = vpop.f32.mrb[0].mxu0
      %v6934 = vpop.f32.mrb[0].mxu0
      %v6935 = vadd.f32 0.0, %v6934
      %v6936 = vpop.f32.mrb[0].mxu0
      %6937 = vmatprep.mubr.bf16.mxu0 0
      %6938 = vmatmul.mubr.bf16.gmra.mrb[0].mxu0 %v6836
      %v6939 = vpop.f32.mrb[0].mxu0
      %v6940 = vadd.f32 0.0, %v6939
      %v6941 = vpop.f32.mrb[0].mxu0
      %v6942 = vpop.f32.mrb[0].mxu0
      %v6943 = vadd.f32 0.0, %v6942
      %v6944 = vpop.f32.mrb[0].mxu0
      %6945 = vmatprep.mubr.bf16.mxu0 0
      %6946 = vmatmul.mubr.bf16.gmra.mrb[0].mxu0 %v6839
      %v6947 = vpop.f32.mrb[0].mxu0
      %v6948 = vadd.f32 0.0, %v6947
      %v6949 = vpop.f32.mrb[0].mxu0
      %v6950 = vpop.f32.mrb[0].mxu0
      %v6951 = vadd.f32 0.0, %v6950
      %v6952 = vpop.f32.mrb[0].mxu0
      %6953 = vmatprep.mubr.bf16.mxu0 0
      %6954 = vmatmul.mubr.bf16.gmra.mrb[0].mxu0 %v6842
      %v6955 = vpop.f32.mrb[0].mxu0
      %v6956 = vadd.f32 0.0, %v6955
      %v6957 = vpop.f32.mrb[0].mxu0
      %v6958 = vpop.f32.mrb[0].mxu0
      %v6959 = vadd.f32 0.0, %v6958
      %v6960 = vpop.f32.mrb[0].mxu0
      %6961 = vmatprep.mubr.bf16.mxu0 0
      %6962 = vmatmul.mubr.bf16.gmra.mrb[0].mxu0 %v6845
      %v6963 = vpop.f32.mrb[0].mxu0
      %v6964 = vadd.f32 0.0, %v6963
      %v6965 = vpop.f32.mrb[0].mxu0
      %v6966 = vpop.f32.mrb[0].mxu0
      %v6967 = vadd.f32 0.0, %v6966
      %v6968 = vpop.f32.mrb[0].mxu0
      %6969 = vmatprep.mubr.bf16.mxu0 0
      %6970 = vmatmul.mubr.bf16.gmra.mrb[0].mxu0 %v6848
      %v6971 = vpop.f32.mrb[0].mxu0
      %v6972 = vadd.f32 0.0, %v6971
      %v6973 = vpop.f32.mrb[0].mxu0
      %v6974 = vpop.f32.mrb[0].mxu0
      %v6975 = vadd.f32 0.0, %v6974
      %v6976 = vpop.f32.mrb[0].mxu0
      %6977 = vmatprep.mubr.bf16.mxu0 0
      %6978 = vmatmul.mubr.bf16.gmra.mrb[0].mxu0 %v6851
      %v6979 = vpop.f32.mrb[0].mxu0
      %v6980 = vadd.f32 0.0, %v6979
      %v6981 = vpop.f32.mrb[0].mxu0
      %v6982 = vpop.f32.mrb[0].mxu0
      %v6983 = vadd.f32 0.0, %v6982
      %v6984 = vpop.f32.mrb[0].mxu0
      %6985 = vmatprep.mubr.bf16.mxu0 0
      %6986 = vmatmul.mubr.bf16.gmra.mrb[0].mxu0 %v6854
      %v6987 = vpop.f32.mrb[0].mxu0
      %v6988 = vadd.f32 0.0, %v6987
      %v6989 = vpop.f32.mrb[0].mxu0
      %v6990 = vpop.f32.mrb[0].mxu0
      %v6991 = vadd.f32 0.0, %v6990
      %v6992 = vpop.f32.mrb[0].mxu0
      %6993 = vmatprep.mubr.bf16.mxu0 0
      %6994 = vmatmul.mubr.bf16.gmra.mrb[0].mxu0 %v6857
      %v6995 = vpop.f32.mrb[0].mxu0
      %v6996 = vadd.f32 0.0, %v6995
      %v6997 = vpop.f32.mrb[0].mxu0
      %v6998 = vpop.f32.mrb[0].mxu0
      %v6999 = vadd.f32 0.0, %v6998
      %v7000 = vpop.f32.mrb[0].mxu0
      %7001 = vmatprep.mubr.bf16.mxu0 0
      %7002 = vmatmul.mubr.bf16.gmra.mrb[0].mxu0 %v6860
      %v7003 = vpop.f32.mrb[0].mxu0
      %v7004 = vadd.f32 0.0, %v7003
      %v7005 = vpop.f32.mrb[0].mxu0
      %v7006 = vpop.f32.mrb[0].mxu0
      %v7007 = vadd.f32 0.0, %v7006
      %v7008 = vpop.f32.mrb[0].mxu0
      %7009 = vmatprep.mubr.bf16.mxu0 0
      %7010 = vmatmul.mubr.bf16.gmra.mrb[0].mxu0 %v6863
      %v7011 = vpop.f32.mrb[0].mxu0
      %v7012 = vadd.f32 0.0, %v7011
      %v7013 = vpop.f32.mrb[0].mxu0
      %v7014 = vpop.f32.mrb[0].mxu0
      %v7015 = vadd.f32 0.0, %v7014
      %v7016 = vpop.f32.mrb[0].mxu0
      %7017 = vmatprep.mubr.bf16.mxu0 0
      %7018 = vmatmul.mubr.bf16.gmra.mrb[0].mxu0 %v4193
      %v7019 = vpop.f32.mrb[0].mxu0
      %v7020 = vadd.f32 0.0, %v7019
      %v7021 = vpop.f32.mrb[0].mxu0
      %v7022 = vpop.f32.mrb[0].mxu0
      %v7023 = vadd.f32 0.0, %v7022
      %v7024 = vpop.f32.mrb[0].mxu0
      %7025 = vdwg.mxu0
      %v7026 = vadd.f32 %v6735, %v6900
      %v7027 = vadd.f32 %v6736, %v6903
      %v7028 = vadd.f32 %v6737, %v6908
      %v7029 = vadd.f32 %v6738, %v6911
      %v7030 = vadd.f32 %v6739, %v6916
      %v7031 = vadd.f32 %v6740, %v6919
      %v7032 = vadd.f32 %v6741, %v6924
      %v7033 = vadd.f32 %v6742, %v6927
      %v7034 = vadd.f32 %v6743, %v6932
      %v7035 = vadd.f32 %v6744, %v6935
      %v7036 = vadd.f32 %v6745, %v6940
      %v7037 = vadd.f32 %v6746, %v6943
      %v7038 = vadd.f32 %v6747, %v6948
      %v7039 = vadd.f32 %v6748, %v6951
      %v7040 = vadd.f32 %v6749, %v6956
      %v7041 = vadd.f32 %v6750, %v6959
      %v7042 = vadd.f32 %v6751, %v6964
      %v7043 = vadd.f32 %v6752, %v6967
      %v7044 = vadd.f32 %v6753, %v6972
      %v7045 = vadd.f32 %v6754, %v6975
      %v7046 = vadd.f32 %v6755, %v6980
      %v7047 = vadd.f32 %v6756, %v6983
      %v7048 = vadd.f32 %v6757, %v6988
      %v7049 = vadd.f32 %v6758, %v6991
      %v7050 = vadd.f32 %v6759, %v6996
      %v7051 = vadd.f32 %v6760, %v6999
      %v7052 = vadd.f32 %v6761, %v7004
      %v7053 = vadd.f32 %v6762, %v7007
      %v7054 = vadd.f32 %v6763, %v7012
      %v7055 = vadd.f32 %v6764, %v7015
      %v7056 = vadd.f32 %v6765, %v7020
      %v7057 = vadd.f32 %v6766, %v7023
      %v7058 = vld [vmem:[%s7] sm:$0x1]
      %v7060 = vlaneseq
      %v7061 = vshrl.u32 %v7060, 7
      %v7062 = vsub.s32 0, %v7061
      %v7063 = vrot.slane %v7058, %v7062
      %v7065 = vadd.f32 %v7026, %v7063
      %v7066 = vadd.f32 %v7027, %v7063
      %v7067 = vadd.f32 %v7028, %v7063
      %v7068 = vadd.f32 %v7029, %v7063
      %v7069 = vadd.f32 %v7030, %v7063
      %v7070 = vadd.f32 %v7031, %v7063
      %v7071 = vadd.f32 %v7032, %v7063
      %v7072 = vadd.f32 %v7033, %v7063
      %v7073 = vadd.f32 %v7034, %v7063
      %v7074 = vadd.f32 %v7035, %v7063
      %v7075 = vadd.f32 %v7036, %v7063
      %v7076 = vadd.f32 %v7037, %v7063
      %v7077 = vadd.f32 %v7038, %v7063
      %v7078 = vadd.f32 %v7039, %v7063
      %v7079 = vadd.f32 %v7040, %v7063
      %v7080 = vadd.f32 %v7041, %v7063
      %v7081 = vadd.f32 %v7042, %v7063
      %v7082 = vadd.f32 %v7043, %v7063
      %v7083 = vadd.f32 %v7044, %v7063
      %v7084 = vadd.f32 %v7045, %v7063
      %v7085 = vadd.f32 %v7046, %v7063
      %v7086 = vadd.f32 %v7047, %v7063
      %v7087 = vadd.f32 %v7048, %v7063
      %v7088 = vadd.f32 %v7049, %v7063
      %v7089 = vadd.f32 %v7050, %v7063
      %v7090 = vadd.f32 %v7051, %v7063
      %v7091 = vadd.f32 %v7052, %v7063
      %v7092 = vadd.f32 %v7053, %v7063
      %v7093 = vadd.f32 %v7054, %v7063
      %v7094 = vadd.f32 %v7055, %v7063
      %v7095 = vadd.f32 %v7056, %v7063
      %v7096 = vadd.f32 %v7057, %v7063
      %v7097 = vmax.f32 %v7065, 0.0
      %v7098 = vmax.f32 %v7066, 0.0
      %v7099 = vmax.f32 %v7067, 0.0
      %v7100 = vmax.f32 %v7068, 0.0
      %v7101 = vmax.f32 %v7069, 0.0
      %v7102 = vmax.f32 %v7070, 0.0
      %v7103 = vmax.f32 %v7071, 0.0
      %v7104 = vmax.f32 %v7072, 0.0
      %v7105 = vmax.f32 %v7073, 0.0
      %v7106 = vmax.f32 %v7074, 0.0
      %v7107 = vmax.f32 %v7075, 0.0
      %v7108 = vmax.f32 %v7076, 0.0
      %v7109 = vmax.f32 %v7077, 0.0
      %v7110 = vmax.f32 %v7078, 0.0
      %v7111 = vmax.f32 %v7079, 0.0
      %v7112 = vmax.f32 %v7080, 0.0
      %v7113 = vmax.f32 %v7081, 0.0
      %v7114 = vmax.f32 %v7082, 0.0
      %v7115 = vmax.f32 %v7083, 0.0
      %v7116 = vmax.f32 %v7084, 0.0
      %v7117 = vmax.f32 %v7085, 0.0
      %v7118 = vmax.f32 %v7086, 0.0
      %v7119 = vmax.f32 %v7087, 0.0
      %v7120 = vmax.f32 %v7088, 0.0
      %v7121 = vmax.f32 %v7089, 0.0
      %v7122 = vmax.f32 %v7090, 0.0
      %v7123 = vmax.f32 %v7091, 0.0
      %v7124 = vmax.f32 %v7092, 0.0
      %v7125 = vmax.f32 %v7093, 0.0
      %v7126 = vmax.f32 %v7094, 0.0
      %v7127 = vmax.f32 %v7095, 0.0
      %v7128 = vmax.f32 %v7096, 0.0
      %v7129 = vld [vmem:[%s8] sm:$0xf]
      %v7130 = vld [vmem:[%s8 + $0x4] sm:$0xf]
      %v7131 = vld [vmem:[%s8 + $0x8] sm:$0xf]
      %v7132 = vld [vmem:[%s8 + $0xc] sm:$0xf]
      %v7133 = vld [vmem:[%s9] sm:$0xf]
      %v7134 = vld [vmem:[%s9 + $0x4] sm:$0xf]
      %v7135 = vld [vmem:[%s9 + $0x8] sm:$0xf]
      %v7136 = vld [vmem:[%s9 + $0xc] sm:$0xf]
      %v7137 = vpack.c.bf16 %v7098, %v7097
      %v7138 = vpack.c.bf16 %v7100, %v7099
      %v7139 = vpack.c.bf16 %v7102, %v7101
      %v7140 = vpack.c.bf16 %v7104, %v7103
      %v7141 = vpack.c.bf16 %v7106, %v7105
      %v7142 = vpack.c.bf16 %v7108, %v7107
      %v7143 = vpack.c.bf16 %v7110, %v7109
      %v7144 = vpack.c.bf16 %v7112, %v7111
      %v7145 = vpack.c.bf16 %v7114, %v7113
      %v7146 = vpack.c.bf16 %v7116, %v7115
      %v7147 = vpack.c.bf16 %v7118, %v7117
      %v7148 = vpack.c.bf16 %v7120, %v7119
      %v7149 = vpack.c.bf16 %v7122, %v7121
      %v7150 = vpack.c.bf16 %v7124, %v7123
      %v7151 = vpack.c.bf16 %v7126, %v7125
      %v7152 = vpack.c.bf16 %v7128, %v7127
      %v7157 = vunpack.c.l.b16 %v7133
      %v7158 = vunpack.c.l.b16 %v7134
      %v7159 = vunpack.c.l.b16 %v7135
      %v7160 = vunpack.c.l.b16 %v7136
      %v7161 = vpack.c.b16 %v7158, %v7157
      %v7162 = vpack.c.b16 %v7160, %v7159
      %v7164 = vsel %vm658, %v7161, 0
      %v7167 = vsel %vm658, %v7162, 0
      %v7170 = vsel %vm658, %v7137, 0
      %v7173 = vsel %vm658, %v7138, 0
      %v7176 = vsel %vm658, %v7139, 0
      %v7179 = vsel %vm658, %v7140, 0
      %v7182 = vsel %vm658, %v7141, 0
      %v7185 = vsel %vm658, %v7142, 0
      %v7188 = vsel %vm658, %v7143, 0
      %v7191 = vsel %vm658, %v7144, 0
      %v7194 = vsel %vm658, %v7145, 0
      %v7197 = vsel %vm658, %v7146, 0
      %v7200 = vsel %vm658, %v7147, 0
      %v7203 = vsel %vm658, %v7148, 0
      %v7206 = vsel %vm658, %v7149, 0
      %v7209 = vsel %vm658, %v7150, 0
      %v7212 = vsel %vm658, %v7151, 0
      %v7215 = vsel %vm658, %v7152, 0
      %7217 = vmatprep.subr.bf16.mxu0 0
      %7218 = vmatpush1.bf16.xpose.msra.mxu0 %v7170
      %7219 = vmatprep.subr.bf16.mxu0 0
      %7220 = vmatpush1.bf16.xpose.msra.mxu0 %v7173
      %7221 = vmatprep.subr.bf16.mxu0 0
      %7222 = vmatpush1.bf16.xpose.msra.mxu0 %v7176
      %7223 = vmatprep.subr.bf16.mxu0 0
      %7224 = vmatpush1.bf16.xpose.msra.mxu0 %v7179
      %7225 = vmatprep.subr.bf16.mxu0 0
      %7226 = vmatpush1.bf16.xpose.msra.mxu0 %v7182
      %7227 = vmatprep.subr.bf16.mxu0 0
      %7228 = vmatpush1.bf16.xpose.msra.mxu0 %v7185
      %7229 = vmatprep.subr.bf16.mxu0 0
      %7230 = vmatpush1.bf16.xpose.msra.mxu0 %v7188
      %7231 = vmatprep.subr.bf16.mxu0 0
      %7232 = vmatpush1.bf16.xpose.msra.mxu0 %v7191
      %7233 = vmatprep.subr.bf16.mxu0 0
      %7234 = vmatpush1.bf16.xpose.msra.mxu0 %v7194
      %7235 = vmatprep.subr.bf16.mxu0 0
      %7236 = vmatpush1.bf16.xpose.msra.mxu0 %v7197
      %7237 = vmatprep.subr.bf16.mxu0 0
      %7238 = vmatpush1.bf16.xpose.msra.mxu0 %v7200
      %7239 = vmatprep.subr.bf16.mxu0 0
      %7240 = vmatpush1.bf16.xpose.msra.mxu0 %v7203
      %7241 = vmatprep.subr.bf16.mxu0 0
      %7242 = vmatpush1.bf16.xpose.msra.mxu0 %v7206
      %7243 = vmatprep.subr.bf16.mxu0 0
      %7244 = vmatpush1.bf16.xpose.msra.mxu0 %v7209
      %7245 = vmatprep.subr.bf16.mxu0 0
      %7246 = vmatpush1.bf16.xpose.msra.mxu0 %v7212
      %7247 = vmatprep.subr.bf16.mxu0 0
      %7248 = vmatpush1.bf16.xpose.msra.mxu0 %v7215
      %7249 = vmatprep.mubr.bf16.mxu0 0
      %7250 = vmatmul.mubr.bf16.gmra.mrb[0].mxu0 %v7164
      %v7251 = vpop.f32.mrb[0].mxu0
      %v7252 = vadd.f32 0.0, %v7251
      %v7253 = vpop.f32.mrb[0].mxu0
      %v7254 = vadd.f32 0.0, %v7253
      %v7255 = vpop.f32.mrb[0].mxu0
      %v7256 = vadd.f32 0.0, %v7255
      %v7257 = vpop.f32.mrb[0].mxu0
      %v7258 = vadd.f32 0.0, %v7257
      %7259 = vmatprep.mubr.bf16.mxu0 0
      %7260 = vmatmul.mubr.bf16.gmra.mrb[0].mxu0 %v7167
      %v7261 = vpop.f32.mrb[0].mxu0
      %v7262 = vadd.f32 0.0, %v7261
      %v7263 = vpop.f32.mrb[0].mxu0
      %v7264 = vadd.f32 0.0, %v7263
      %v7265 = vpop.f32.mrb[0].mxu0
      %v7266 = vadd.f32 0.0, %v7265
      %v7267 = vpop.f32.mrb[0].mxu0
      %v7268 = vadd.f32 0.0, %v7267
      %7269 = vdwg.mxu0
      %v7274 = vunpack.c.l.b16 %v7129
      %v7275 = vunpack.c.l.b16 %v7130
      %v7276 = vunpack.c.l.b16 %v7131
      %v7277 = vunpack.c.l.b16 %v7132
      %v7278 = vpack.c.b16 %v7275, %v7274
      %v7279 = vpack.c.b16 %v7277, %v7276
      %v7281 = vsel %vm658, %v7278, 0
      %v7284 = vsel %vm658, %v7279, 0
      %7286 = vmatprep.subr.bf16.mxu0 0
      %7287 = vmatpush1.bf16.xpose.msra.mxu0 %v1869
      %7288 = vmatprep.subr.bf16.mxu0 0
      %7289 = vmatpush1.bf16.xpose.msra.mxu0 %v1872
      %7290 = vmatprep.subr.bf16.mxu0 0
      %7291 = vmatpush1.bf16.xpose.msra.mxu0 %v1875
      %7292 = vmatprep.subr.bf16.mxu0 0
      %7293 = vmatpush1.bf16.xpose.msra.mxu0 %v1878
      %7294 = vmatprep.subr.bf16.mxu0 0
      %7295 = vmatpush1.bf16.xpose.msra.mxu0 %v1881
      %7296 = vmatprep.subr.bf16.mxu0 0
      %7297 = vmatpush1.bf16.xpose.msra.mxu0 %v1884
      %7298 = vmatprep.subr.bf16.mxu0 0
      %7299 = vmatpush1.bf16.xpose.msra.mxu0 %v1887
      %7300 = vmatprep.subr.bf16.mxu0 0
      %7301 = vmatpush1.bf16.xpose.msra.mxu0 %v1890
      %7302 = vmatprep.subr.bf16.mxu0 0
      %7303 = vmatpush1.bf16.xpose.msra.mxu0 %v1893
      %7304 = vmatprep.subr.bf16.mxu0 0
      %7305 = vmatpush1.bf16.xpose.msra.mxu0 %v1896
      %7306 = vmatprep.subr.bf16.mxu0 0
      %7307 = vmatpush1.bf16.xpose.msra.mxu0 %v1899
      %7308 = vmatprep.subr.bf16.mxu0 0
      %7309 = vmatpush1.bf16.xpose.msra.mxu0 %v1902
      %7310 = vmatprep.subr.bf16.mxu0 0
      %7311 = vmatpush1.bf16.xpose.msra.mxu0 %v1905
      %7312 = vmatprep.subr.bf16.mxu0 0
      %7313 = vmatpush1.bf16.xpose.msra.mxu0 %v1908
      %7314 = vmatprep.subr.bf16.mxu0 0
      %7315 = vmatpush1.bf16.xpose.msra.mxu0 %v1911
      %7316 = vmatprep.subr.bf16.mxu0 0
      %7317 = vmatpush1.bf16.xpose.msra.mxu0 %v3094
      %7318 = vmatprep.mubr.bf16.mxu0 0
      %7319 = vmatmul.mubr.bf16.gmra.mrb[0].mxu0 %v7281
      %v7320 = vpop.f32.mrb[0].mxu0
      %v7321 = vadd.f32 %v7252, %v7320
      %v7322 = vpop.f32.mrb[0].mxu0
      %v7323 = vadd.f32 %v7254, %v7322
      %v7324 = vpop.f32.mrb[0].mxu0
      %v7325 = vadd.f32 %v7256, %v7324
      %v7326 = vpop.f32.mrb[0].mxu0
      %v7327 = vadd.f32 %v7258, %v7326
      %7328 = vmatprep.mubr.bf16.mxu0 0
      %7329 = vmatmul.mubr.bf16.gmra.mrb[0].mxu0 %v7284
      %v7330 = vpop.f32.mrb[0].mxu0
      %v7331 = vadd.f32 %v7262, %v7330
      %v7332 = vpop.f32.mrb[0].mxu0
      %v7333 = vadd.f32 %v7264, %v7332
      %v7334 = vpop.f32.mrb[0].mxu0
      %v7335 = vadd.f32 %v7266, %v7334
      %v7336 = vpop.f32.mrb[0].mxu0
      %v7337 = vadd.f32 %v7268, %v7336
      %7338 = vdwg.mxu0
      %v7339 = vld [vmem:[%s10] sm:$0xff]
      %v7340 = vld [vmem:[%s10 + $0x8] sm:$0xff]
      %v7341 = vld [vmem:[%s10 + $0x10] sm:$0xff]
      %v7342 = vld [vmem:[%s10 + $0x18] sm:$0xff]
      %7344 = vset.pattern.permute.xlu0 0
      %7345 = vperm.xlu0 %7344, %v7339
      %v7346 = vpop.permute.xlu0 %7345
      %7349 = vset.pattern.permute.xlu0 0
      %7350 = vperm.xlu0 %7349, %v7340
      %v7351 = vpop.permute.xlu0 %7350
      %7354 = vset.pattern.permute.xlu0 0
      %7355 = vperm.xlu0 %7354, %v7341
      %v7356 = vpop.permute.xlu0 %7355
      %7359 = vset.pattern.permute.xlu0 0
      %7360 = vperm.xlu0 %7359, %v7342
      %v7361 = vpop.permute.xlu0 %7360
      %v7363 = vadd.f32 %v7321, %v7346
      %v7364 = vadd.f32 %v7323, %v7346
      %v7365 = vadd.f32 %v7325, %v7351
      %v7366 = vadd.f32 %v7327, %v7351
      %v7367 = vadd.f32 %v7331, %v7356
      %v7368 = vadd.f32 %v7333, %v7356
      %v7369 = vadd.f32 %v7335, %v7361
      %v7370 = vadd.f32 %v7337, %v7361
      %7371 = vst [vmem:[%s386] sm:$0xff] %v7363
      %7372 = vst [vmem:[%s386 + $0x8] sm:$0xff] %v7364
      %7373 = vst [vmem:[%s386 + $0x10] sm:$0xff] %v7365
      %7374 = vst [vmem:[%s386 + $0x18] sm:$0xff] %v7366
      %7375 = vst [vmem:[%s386 + $0x20] sm:$0xff] %v7367
      %7376 = vst [vmem:[%s386 + $0x28] sm:$0xff] %v7368
      %7377 = vst [vmem:[%s386 + $0x30] sm:$0xff] %v7369
      %7378 = vst [vmem:[%s386 + $0x38] sm:$0xff] %v7370
      %p7379 = scmp.lt.s32.totalorder %s22, 1
      %s7380 = scalar_select %p7379, %s22, 1
      %s7381 = smul.addr %s7380, 8
      %s7382 = smul.addr %s7381, 8
      %s7383 = scalar_lea.vmem %s11, %s7382
      // Predicated region
      $region65: #{my_conv_block1.1} parent=63 // pred_check
        %p7384 = pneg %p276
      $region66: #{my_conv_block1.1} parent=63 // pred_check_branch
        %7386 = sbr.rel (%p7384) target = $region68
      $region67: #{my_conv_block1.1} parent=63 // pred_region
        _
      $region68: #{my_conv_block1.1} parent=63 // pred_fallthru
        _
    $region64: #{my_conv_block1.1} parent=5 // pred_fallthru
      _
    %p7387 = scmp.le.s32.totalorder 2, %s17
    // Predicated region
    $region69: #{my_conv_block1.1} parent=5 // pred_check
      %p7388 = pneg %p7387
    $region70: #{my_conv_block1.1} parent=5 // pred_check_branch
      %7390 = sbr.rel (%p7388) target = $region72
    $region71: #{my_conv_block1.1} parent=5 // pred_region
      %s7391 = ssub.s32 %s17, 2
      // Predicated region
      $region73: #{my_conv_block1.1} parent=71 // pred_check
        %p7392 = pneg %p282
      $region74: #{my_conv_block1.1} parent=71 // pred_check_branch
        %7394 = sbr.rel (%p7392) target = $region76
      $region75: #{my_conv_block1.1} parent=71 // pred_region
        %p7395 = scmp.lt.s32.totalorder %s23, 1
        %s7396 = scalar_select %p7395, %s23, 1
        %s7397 = smul.addr %s7396, 8
        %s7398 = smul.addr %s7397, 8
        %s7399 = scalar_lea.vmem %s11, %s7398
      $region76: #{my_conv_block1.1} parent=71 // pred_fallthru
        _
    $region72: #{my_conv_block1.1} parent=5 // pred_fallthru
      _
  $region6: #{my_conv_block1.1} parent=0 // loop_footer
    %s21 = sadd.s32 1, %s17
  $region7: #{my_conv_block1.1} parent=0 // loop_footer_branch
    %16 = sbr.rel target = $region3
  $region8: #{my_conv_block1.1} parent=0 // loop_exit
    _

</llo_original>
